<compile_context>
chip_gen: v7x
topology: tpu7x:2x2x1
jax: 0.10.0
libtpu: 0.0.40
codegen_flags: <defaults>
</compile_context>

<pallas_src>
import functools

import jax
import jax.numpy as jnp
from jax.experimental import pallas as pl
from jax.experimental.pallas import tpu as pltpu

NEG_SLOPE = 0.01  # nn.LeakyReLU default


def _leaky(v):
    return jnp.where(v >= 0, v, NEG_SLOPE * v)


# ----------------------------- kernel ---------------------------------------


def vae_kernel(num_experts, latent_dim, input_dim,
               x_ref, eps_ref,
               e1w_ref, e1b_ref, e2w_ref, e2b_ref,
               xw1_ref, xb1_ref, xw2_ref, xb2_ref, xw3_ref, xb3_ref,
               gw_ref, gb_ref,
               d1w_ref, d1b_ref, d2w_ref, d2b_ref, d3w_ref, d3b_ref,
               h_ref, mulv_ref):
    f32 = jnp.float32
    D = input_dim
    L = latent_dim
    E = num_experts

    x = x_ref[...].astype(f32)

    # ---------- encode ----------
    # F.normalize(x): L2 normalize along feature dim (eps=1e-12) -> rsqrt (EUP)
    sumsq = jnp.sum(x * x, axis=1, keepdims=True)
    xn = x * jax.lax.rsqrt(jnp.maximum(sumsq, 1e-24))
    # TODO(synk): train-mode dropout(p=0.2) omitted (eval semantics: identity)
    h1 = _leaky(jnp.dot(xn, e1w_ref[...], preferred_element_type=f32) + e1b_ref[...])
    h2 = _leaky(jnp.dot(h1, e2w_ref[...], preferred_element_type=f32) + e2b_ref[...])
    mulv_ref[...] = h2                      # single lane-dense (TB, 2L) store
    mu = h2[:, :L]
    logvar = h2[:, L:]

    # ---------- reparameterize ----------
    z = mu + eps_ref[...] * jnp.exp(0.5 * logvar)

    # ---------- ElementWiseGating: fused expert MLPs (3 matmuls total) ----------
    # xw1 = concat_e ew1[e] -> (L, E*128); xw2/xw3 block-diagonal, so each
    # expert's 128/64/D-wide segment only sees its own weights; LeakyReLU is
    # elementwise, preserving per-expert equality with the unfused model.
    a1 = _leaky(jnp.dot(z, xw1_ref[...], preferred_element_type=f32) + xb1_ref[...])   # (TB, E*128)
    a2 = _leaky(jnp.dot(a1, xw2_ref[...], preferred_element_type=f32) + xb2_ref[...])  # (TB, E*64)
    eo = jnp.dot(a2, xw3_ref[...], preferred_element_type=f32) + xb3_ref[...]          # (TB, E*D)

    # gating: one lane-dense dot; softmax over experts on D-wide segments.
    # gate.view(B, E, D) row-major <=> segment e is columns [e*D, (e+1)*D).
    gl = jnp.dot(z, gw_ref[...], preferred_element_type=f32) + gb_ref[...]             # (TB, E*D)
    m = gl[:, 0:D]
    for e in range(1, E):
        m = jnp.maximum(m, gl[:, e * D:(e + 1) * D])
    acc = jnp.zeros((x.shape[0], D), f32)
    denom = jnp.zeros((x.shape[0], D), f32)
    for e in range(E):
        w = jnp.exp(gl[:, e * D:(e + 1) * D] - m)
        denom = denom + w
        acc = acc + w * eo[:, e * D:(e + 1) * D]
    # einsum('boe,beo->bo') == sum_e expert_out_e * softmax_gate_e (elementwise)
    zg = _leaky(acc / denom)

    # ---------- decoder ----------
    dh1 = _leaky(jnp.dot(zg, d1w_ref[...], preferred_element_type=f32) + d1b_ref[...])
    dh2 = _leaky(jnp.dot(dh1, d2w_ref[...], preferred_element_type=f32) + d2b_ref[...])
    h_ref[...] = jnp.dot(dh2, d3w_ref[...], preferred_element_type=f32) + d3b_ref[...]


# ----------------------------- wrapper ---------------------------------------


def pack_params(p, num_experts):
    """Host-side one-time packing of per-expert weights into fused matrices."""
    E = num_experts
    q = {k: p[k] for k in ("e1w", "e1b", "e2w", "e2b", "gw", "gb",
                           "d1w", "d1b", "d2w", "d2b", "d3w", "d3b")}
    q["xw1"] = jnp.concatenate([p["ew1"][e] for e in range(E)], axis=1)        # (L, E*128)
    q["xb1"] = jnp.concatenate([p["eb1"][e] for e in range(E)], axis=1)        # (1, E*128)
    q["xw2"] = jax.scipy.linalg.block_diag(*[p["ew2"][e] for e in range(E)])   # (E*128, E*64)
    q["xb2"] = jnp.concatenate([p["eb2"][e] for e in range(E)], axis=1)        # (1, E*64)
    q["xw3"] = jax.scipy.linalg.block_diag(*[p["ew3"][e] for e in range(E)])   # (E*64, E*D)
    q["xb3"] = jnp.concatenate([p["eb3"][e] for e in range(E)], axis=1)        # (1, E*D)
    return q


def vae_forward(x, eps, q, latent_dim, num_experts, block_b=128):
    B, D = x.shape
    L = latent_dim
    TB = min(block_b, B)
    nb = pl.cdiv(B, TB)
    Bp = nb * TB
    if Bp != B:                        # pad batch to a multiple of the tile
        x = jnp.pad(x, ((0, Bp - B), (0, 0)))
        eps = jnp.pad(eps, ((0, Bp - B), (0, 0)))

    weights = (q["e1w"], q["e1b"], q["e2w"], q["e2b"],
               q["xw1"], q["xb1"], q["xw2"], q["xb2"], q["xw3"], q["xb3"],
               q["gw"], q["gb"],
               q["d1w"], q["d1b"], q["d2w"], q["d2b"], q["d3w"], q["d3b"])

    def const_spec(a):
        # constant block index => weight DMA'd once, resident across grid steps
        return pl.BlockSpec(a.shape, lambda i: (0,) * a.ndim)

    in_specs = ([pl.BlockSpec((TB, D), lambda i: (i, 0)),
                 pl.BlockSpec((TB, L), lambda i: (i, 0))]
                + [const_spec(w) for w in weights])

    kernel = functools.partial(vae_kernel, num_experts, L, D)
    h, mulv = pl.pallas_call(
        kernel,
        out_shape=(jax.ShapeDtypeStruct((Bp, D), jnp.float32),
                   jax.ShapeDtypeStruct((Bp, 2 * L), jnp.float32)),
        grid=(nb,),
        in_specs=in_specs,
        out_specs=(pl.BlockSpec((TB, D), lambda i: (i, 0)),
                   pl.BlockSpec((TB, 2 * L), lambda i: (i, 0))),
        compiler_params=pltpu.CompilerParams(
            dimension_semantics=("parallel",)),
    )(x, eps, *weights)

    return h[:B], mulv[:B, :L], mulv[:B, L:]


# ---------------- parameter construction (deterministic, synthetic) ----------


def _linear(key, fan_in, fan_out, scale=0.1):
    kw, kb = jax.random.split(key)
    w_t = scale * jax.random.normal(kw, (fan_in, fan_out), jnp.float32)  # (in, out)
    b = scale * jax.random.normal(kb, (1, fan_out), jnp.float32)
    return w_t, b


def init_params(key, input_dim, latent_dim, num_experts):
    keys = jax.random.split(key, 8 + 3 * num_experts)
    ki = iter(keys)
    p = {}
    p["e1w"], p["e1b"] = _linear(next(ki), input_dim, 256)
    p["e2w"], p["e2b"] = _linear(next(ki), 256, 2 * latent_dim)

    ew1, eb1, ew2, eb2, ew3, eb3 = [], [], [], [], [], []
    for _ in range(num_experts):
        w, b = _linear(next(ki), latent_dim, 128); ew1.append(w); eb1.append(b)
        w, b = _linear(next(ki), 128, 64);         ew2.append(w); eb2.append(b)
        w, b = _linear(next(ki), 64, input_dim);   ew3.append(w); eb3.append(b)
    p["ew1"] = jnp.stack(ew1); p["eb1"] = jnp.stack(eb1)   # (E, L, 128), (E, 1, 128)
    p["ew2"] = jnp.stack(ew2); p["eb2"] = jnp.stack(eb2)   # (E, 128, 64), (E, 1, 64)
    p["ew3"] = jnp.stack(ew3); p["eb3"] = jnp.stack(eb3)   # (E, 64, D),  (E, 1, D)

    p["gw"], p["gb"] = _linear(next(ki), latent_dim, num_experts * input_dim)
    p["d1w"], p["d1b"] = _linear(next(ki), input_dim, 128)
    p["d2w"], p["d2b"] = _linear(next(ki), 128, 64)
    p["d3w"], p["d3b"] = _linear(next(ki), 64, input_dim)
    return p


# ---------------- pure-JAX reference for verification ----------------


def vae_reference(x, eps, p, latent_dim, num_experts):
    D = x.shape[1]
    norm = jnp.sqrt(jnp.sum(x * x, axis=1, keepdims=True))
    xn = x / jnp.maximum(norm, 1e-12)
    h1 = _leaky(xn @ p["e1w"] + p["e1b"])
    h2 = _leaky(h1 @ p["e2w"] + p["e2b"])
    mu, logvar = h2[:, :latent_dim], h2[:, latent_dim:]
    z = mu + eps * jnp.exp(0.5 * logvar)

    expert_outs = []
    for e in range(num_experts):
        a1 = _leaky(z @ p["ew1"][e] + p["eb1"][e])
        a2 = _leaky(a1 @ p["ew2"][e] + p["eb2"][e])
        expert_outs.append(a2 @ p["ew3"][e] + p["eb3"][e])
    expert_outs = jnp.stack(expert_outs, axis=2)                 # (B, D, E)
    gate = (z @ p["gw"] + p["gb"]).reshape(x.shape[0], num_experts, D)
    gate = jax.nn.softmax(gate, axis=1)                          # (B, E, D)
    out = jnp.einsum("boe,beo->bo", expert_outs, gate)
    zg = _leaky(out)
    dh1 = _leaky(zg @ p["d1w"] + p["d1b"])
    dh2 = _leaky(dh1 @ p["d2w"] + p["d2b"])
    h = dh2 @ p["d3w"] + p["d3b"]
    return h, mu, logvar


if __name__ == "__main__":
    # batch (gridded, 2 tiles of 128), input_dim, latent_dim, num_experts
    B, D, L, E = 256, 32, 16, 8
    key = jax.random.PRNGKey(0)
    kx, keps, kp = jax.random.split(key, 3)
    x = jax.random.normal(kx, (B, D), jnp.float32)
    eps = jax.random.normal(keps, (B, L), jnp.float32)   # reparameterization noise
    params = init_params(kp, D, L, E)
    packed = pack_params(params, E)                      # one-time host packing

    h, mu, logvar = vae_forward(x, eps, packed, L, E, block_b=128)
    jax.block_until_ready((h, mu, logvar))

    h_r, mu_r, lv_r = vae_reference(x, eps, params, L, E)
    assert jnp.allclose(mu, mu_r, rtol=2e-4, atol=2e-5)
    assert jnp.allclose(logvar, lv_r, rtol=2e-4, atol=2e-5)
    assert jnp.allclose(h, h_r, rtol=2e-4, atol=2e-5)
    print("KERNEL_OK")
</pallas_src>

<mosaic_0001>
module attributes {stable_mosaic.version = 11 : i64} {
  func.func @vae_kernel(%arg0: i32, %arg1: memref<128x32xf32, #tpu.memory_space<vmem>>, %arg2: memref<128x16xf32, #tpu.memory_space<vmem>>, %arg3: memref<32x256xf32, #tpu.memory_space<vmem>>, %arg4: memref<1x256xf32, #tpu.memory_space<vmem>>, %arg5: memref<256x32xf32, #tpu.memory_space<vmem>>, %arg6: memref<1x32xf32, #tpu.memory_space<vmem>>, %arg7: memref<16x1024xf32, #tpu.memory_space<vmem>>, %arg8: memref<1x1024xf32, #tpu.memory_space<vmem>>, %arg9: memref<1024x512xf32, #tpu.memory_space<vmem>>, %arg10: memref<1x512xf32, #tpu.memory_space<vmem>>, %arg11: memref<512x256xf32, #tpu.memory_space<vmem>>, %arg12: memref<1x256xf32, #tpu.memory_space<vmem>>, %arg13: memref<16x256xf32, #tpu.memory_space<vmem>>, %arg14: memref<1x256xf32, #tpu.memory_space<vmem>>, %arg15: memref<32x128xf32, #tpu.memory_space<vmem>>, %arg16: memref<1x128xf32, #tpu.memory_space<vmem>>, %arg17: memref<128x64xf32, #tpu.memory_space<vmem>>, %arg18: memref<1x64xf32, #tpu.memory_space<vmem>>, %arg19: memref<64x32xf32, #tpu.memory_space<vmem>>, %arg20: memref<1x32xf32, #tpu.memory_space<vmem>>, %arg21: memref<128x32xf32, #tpu.memory_space<vmem>>, %arg22: memref<128x32xf32, #tpu.memory_space<vmem>>) attributes {dimension_semantics = [#tpu.dimension_semantics<parallel>], iteration_bounds = array<i64: 2>, scalar_prefetch = 0 : i64, scratch_operands = 0 : i64, tpu.core_type = #tpu.core_type<tc>, window_params = [{transform_indices = @transform_0, window_bounds = array<i64: 128, 32>}, {transform_indices = @transform_1, window_bounds = array<i64: 128, 16>}, {pipeline_mode = #tpu.pipeline_mode<synchronous>, transform_indices = @transform_2, window_bounds = array<i64: 32, 256>}, {pipeline_mode = #tpu.pipeline_mode<synchronous>, transform_indices = @transform_3, window_bounds = array<i64: 1, 256>}, {pipeline_mode = #tpu.pipeline_mode<synchronous>, transform_indices = @transform_4, window_bounds = array<i64: 256, 32>}, {pipeline_mode = #tpu.pipeline_mode<synchronous>, transform_indices = @transform_5, window_bounds = array<i64: 1, 32>}, {pipeline_mode = #tpu.pipeline_mode<synchronous>, transform_indices = @transform_6, window_bounds = array<i64: 16, 1024>}, {pipeline_mode = #tpu.pipeline_mode<synchronous>, transform_indices = @transform_7, window_bounds = array<i64: 1, 1024>}, {pipeline_mode = #tpu.pipeline_mode<synchronous>, transform_indices = @transform_8, window_bounds = array<i64: 1024, 512>}, {pipeline_mode = #tpu.pipeline_mode<synchronous>, transform_indices = @transform_9, window_bounds = array<i64: 1, 512>}, {pipeline_mode = #tpu.pipeline_mode<synchronous>, transform_indices = @transform_10, window_bounds = array<i64: 512, 256>}, {pipeline_mode = #tpu.pipeline_mode<synchronous>, transform_indices = @transform_11, window_bounds = array<i64: 1, 256>}, {pipeline_mode = #tpu.pipeline_mode<synchronous>, transform_indices = @transform_12, window_bounds = array<i64: 16, 256>}, {pipeline_mode = #tpu.pipeline_mode<synchronous>, transform_indices = @transform_13, window_bounds = array<i64: 1, 256>}, {pipeline_mode = #tpu.pipeline_mode<synchronous>, transform_indices = @transform_14, window_bounds = array<i64: 32, 128>}, {pipeline_mode = #tpu.pipeline_mode<synchronous>, transform_indices = @transform_15, window_bounds = array<i64: 1, 128>}, {pipeline_mode = #tpu.pipeline_mode<synchronous>, transform_indices = @transform_16, window_bounds = array<i64: 128, 64>}, {pipeline_mode = #tpu.pipeline_mode<synchronous>, transform_indices = @transform_17, window_bounds = array<i64: 1, 64>}, {pipeline_mode = #tpu.pipeline_mode<synchronous>, transform_indices = @transform_18, window_bounds = array<i64: 64, 32>}, {pipeline_mode = #tpu.pipeline_mode<synchronous>, transform_indices = @transform_19, window_bounds = array<i64: 1, 32>}, {transform_indices = @transform_20, window_bounds = array<i64: 128, 32>}, {transform_indices = @transform_21, window_bounds = array<i64: 128, 32>}]} {
    %c0 = arith.constant 0 : index
    %c0_0 = arith.constant 0 : index
    %0 = vector.load %arg1[%c0, %c0_0] : memref<128x32xf32, #tpu.memory_space<vmem>>, vector<128x32xf32>
    %1 = arith.mulf %0, %0 : vector<128x32xf32>
    %cst = arith.constant dense<0.000000e+00> : vector<128xf32>
    %2 = vector.multi_reduction <add>, %1, %cst [1] : vector<128x32xf32> to vector<128xf32>
    %3 = vector.shape_cast %2 : vector<128xf32> to vector<128x1xf32>
    %cst_1 = arith.constant 1.000000e-24 : f32
    %4 = vector.broadcast %cst_1 : f32 to vector<128x1xf32>
    %5 = arith.maximumf %3, %4 : vector<128x1xf32>
    %6 = math.rsqrt %5 : vector<128x1xf32>
    %7 = vector.broadcast %6 : vector<128x1xf32> to vector<128x32xf32>
    %8 = arith.mulf %0, %7 : vector<128x32xf32>
    %c0_2 = arith.constant 0 : index
    %c0_3 = arith.constant 0 : index
    %9 = vector.load %arg3[%c0_2, %c0_3] : memref<32x256xf32, #tpu.memory_space<vmem>>, vector<32x256xf32>
    %cst_4 = arith.constant dense<0.000000e+00> : vector<128x256xf32>
    %10 = tpu.matmul %8, %9, %cst_4 {dimension_numbers = #tpu.dot_dimension_numbers<[1], [0], [0], [1], [0, 0, 1, 1], [], []>} : vector<128x32xf32>, vector<32x256xf32>, vector<128x256xf32> -> vector<128x256xf32>
    %c0_5 = arith.constant 0 : index
    %c0_6 = arith.constant 0 : index
    %11 = vector.load %arg4[%c0_5, %c0_6] : memref<1x256xf32, #tpu.memory_space<vmem>>, vector<1x256xf32>
    %12 = vector.broadcast %11 : vector<1x256xf32> to vector<128x256xf32>
    %13 = arith.addf %10, %12 : vector<128x256xf32>
    %cst_7 = arith.constant 0.000000e+00 : f32
    %14 = vector.broadcast %cst_7 : f32 to vector<128x256xf32>
    %15 = arith.cmpf oge, %13, %14 : vector<128x256xf32>
    %cst_8 = arith.constant 0.00999999977 : f32
    %16 = vector.broadcast %cst_8 : f32 to vector<128x256xf32>
    %17 = arith.mulf %16, %13 : vector<128x256xf32>
    %18 = arith.select %15, %13, %17 : vector<128x256xi1>, vector<128x256xf32>
    %c0_9 = arith.constant 0 : index
    %c0_10 = arith.constant 0 : index
    %19 = vector.load %arg5[%c0_9, %c0_10] : memref<256x32xf32, #tpu.memory_space<vmem>>, vector<256x32xf32>
    %cst_11 = arith.constant dense<0.000000e+00> : vector<128x32xf32>
    %20 = tpu.matmul %18, %19, %cst_11 {dimension_numbers = #tpu.dot_dimension_numbers<[1], [0], [0], [1], [0, 0, 1, 1], [], []>} : vector<128x256xf32>, vector<256x32xf32>, vector<128x32xf32> -> vector<128x32xf32>
    %c0_12 = arith.constant 0 : index
    %c0_13 = arith.constant 0 : index
    %21 = vector.load %arg6[%c0_12, %c0_13] : memref<1x32xf32, #tpu.memory_space<vmem>>, vector<1x32xf32>
    %22 = vector.broadcast %21 : vector<1x32xf32> to vector<128x32xf32>
    %23 = arith.addf %20, %22 : vector<128x32xf32>
    %cst_14 = arith.constant 0.000000e+00 : f32
    %24 = vector.broadcast %cst_14 : f32 to vector<128x32xf32>
    %25 = arith.cmpf oge, %23, %24 : vector<128x32xf32>
    %cst_15 = arith.constant 0.00999999977 : f32
    %26 = vector.broadcast %cst_15 : f32 to vector<128x32xf32>
    %27 = arith.mulf %26, %23 : vector<128x32xf32>
    %28 = arith.select %25, %23, %27 : vector<128x32xi1>, vector<128x32xf32>
    %c0_16 = arith.constant 0 : index
    %c0_17 = arith.constant 0 : index
    %29 = vector.load %arg22[%c0_16, %c0_17] : memref<128x32xf32, #tpu.memory_space<vmem>>, vector<128x32xf32>
    tpu.vector_store %arg22[%c0_16, %c0_17], %28 {strides = array<i32>} : memref<128x32xf32, #tpu.memory_space<vmem>>, vector<128x32xf32>,
    %30 = vector.extract_strided_slice %28 {offsets = [0, 0], sizes = [128, 16], strides = [1, 1]} : vector<128x32xf32> to vector<128x16xf32>
    %31 = vector.extract_strided_slice %28 {offsets = [0, 16], sizes = [128, 16], strides = [1, 1]} : vector<128x32xf32> to vector<128x16xf32>
    %c0_18 = arith.constant 0 : index
    %c0_19 = arith.constant 0 : index
    %32 = vector.load %arg2[%c0_18, %c0_19] : memref<128x16xf32, #tpu.memory_space<vmem>>, vector<128x16xf32>
    %cst_20 = arith.constant 5.000000e-01 : f32
    %33 = vector.broadcast %cst_20 : f32 to vector<128x16xf32>
    %34 = arith.mulf %33, %31 : vector<128x16xf32>
    %35 = math.exp %34 : vector<128x16xf32>
    %36 = arith.mulf %32, %35 : vector<128x16xf32>
    %37 = arith.addf %30, %36 : vector<128x16xf32>
    %c0_21 = arith.constant 0 : index
    %c0_22 = arith.constant 0 : index
    %38 = vector.load %arg7[%c0_21, %c0_22] : memref<16x1024xf32, #tpu.memory_space<vmem>>, vector<16x1024xf32>
    %cst_23 = arith.constant dense<0.000000e+00> : vector<128x1024xf32>
    %39 = tpu.matmul %37, %38, %cst_23 {dimension_numbers = #tpu.dot_dimension_numbers<[1], [0], [0], [1], [0, 0, 1, 1], [], []>} : vector<128x16xf32>, vector<16x1024xf32>, vector<128x1024xf32> -> vector<128x1024xf32>
    %c0_24 = arith.constant 0 : index
    %c0_25 = arith.constant 0 : index
    %40 = vector.load %arg8[%c0_24, %c0_25] : memref<1x1024xf32, #tpu.memory_space<vmem>>, vector<1x1024xf32>
    %41 = vector.broadcast %40 : vector<1x1024xf32> to vector<128x1024xf32>
    %42 = arith.addf %39, %41 : vector<128x1024xf32>
    %cst_26 = arith.constant 0.000000e+00 : f32
    %43 = vector.broadcast %cst_26 : f32 to vector<128x1024xf32>
    %44 = arith.cmpf oge, %42, %43 : vector<128x1024xf32>
    %cst_27 = arith.constant 0.00999999977 : f32
    %45 = vector.broadcast %cst_27 : f32 to vector<128x1024xf32>
    %46 = arith.mulf %45, %42 : vector<128x1024xf32>
    %47 = arith.select %44, %42, %46 : vector<128x1024xi1>, vector<128x1024xf32>
    %c0_28 = arith.constant 0 : index
    %c0_29 = arith.constant 0 : index
    %48 = vector.load %arg9[%c0_28, %c0_29] : memref<1024x512xf32, #tpu.memory_space<vmem>>, vector<1024x512xf32>
    %cst_30 = arith.constant dense<0.000000e+00> : vector<128x512xf32>
    %49 = tpu.matmul %47, %48, %cst_30 {dimension_numbers = #tpu.dot_dimension_numbers<[1], [0], [0], [1], [0, 0, 1, 1], [], []>} : vector<128x1024xf32>, vector<1024x512xf32>, vector<128x512xf32> -> vector<128x512xf32>
    %c0_31 = arith.constant 0 : index
    %c0_32 = arith.constant 0 : index
    %50 = vector.load %arg10[%c0_31, %c0_32] : memref<1x512xf32, #tpu.memory_space<vmem>>, vector<1x512xf32>
    %51 = vector.broadcast %50 : vector<1x512xf32> to vector<128x512xf32>
    %52 = arith.addf %49, %51 : vector<128x512xf32>
    %cst_33 = arith.constant 0.000000e+00 : f32
    %53 = vector.broadcast %cst_33 : f32 to vector<128x512xf32>
    %54 = arith.cmpf oge, %52, %53 : vector<128x512xf32>
    %cst_34 = arith.constant 0.00999999977 : f32
    %55 = vector.broadcast %cst_34 : f32 to vector<128x512xf32>
    %56 = arith.mulf %55, %52 : vector<128x512xf32>
    %57 = arith.select %54, %52, %56 : vector<128x512xi1>, vector<128x512xf32>
    %c0_35 = arith.constant 0 : index
    %c0_36 = arith.constant 0 : index
    %58 = vector.load %arg11[%c0_35, %c0_36] : memref<512x256xf32, #tpu.memory_space<vmem>>, vector<512x256xf32>
    %cst_37 = arith.constant dense<0.000000e+00> : vector<128x256xf32>
    %59 = tpu.matmul %57, %58, %cst_37 {dimension_numbers = #tpu.dot_dimension_numbers<[1], [0], [0], [1], [0, 0, 1, 1], [], []>} : vector<128x512xf32>, vector<512x256xf32>, vector<128x256xf32> -> vector<128x256xf32>
    %c0_38 = arith.constant 0 : index
    %c0_39 = arith.constant 0 : index
    %60 = vector.load %arg12[%c0_38, %c0_39] : memref<1x256xf32, #tpu.memory_space<vmem>>, vector<1x256xf32>
    %61 = vector.broadcast %60 : vector<1x256xf32> to vector<128x256xf32>
    %62 = arith.addf %59, %61 : vector<128x256xf32>
    %c0_40 = arith.constant 0 : index
    %c0_41 = arith.constant 0 : index
    %63 = vector.load %arg13[%c0_40, %c0_41] : memref<16x256xf32, #tpu.memory_space<vmem>>, vector<16x256xf32>
    %cst_42 = arith.constant dense<0.000000e+00> : vector<128x256xf32>
    %64 = tpu.matmul %37, %63, %cst_42 {dimension_numbers = #tpu.dot_dimension_numbers<[1], [0], [0], [1], [0, 0, 1, 1], [], []>} : vector<128x16xf32>, vector<16x256xf32>, vector<128x256xf32> -> vector<128x256xf32>
    %c0_43 = arith.constant 0 : index
    %c0_44 = arith.constant 0 : index
    %65 = vector.load %arg14[%c0_43, %c0_44] : memref<1x256xf32, #tpu.memory_space<vmem>>, vector<1x256xf32>
    %66 = vector.broadcast %65 : vector<1x256xf32> to vector<128x256xf32>
    %67 = arith.addf %64, %66 : vector<128x256xf32>
    %68 = vector.extract_strided_slice %67 {offsets = [0, 0], sizes = [128, 32], strides = [1, 1]} : vector<128x256xf32> to vector<128x32xf32>
    %69 = vector.extract_strided_slice %67 {offsets = [0, 32], sizes = [128, 32], strides = [1, 1]} : vector<128x256xf32> to vector<128x32xf32>
    %70 = arith.maximumf %68, %69 : vector<128x32xf32>
    %71 = vector.extract_strided_slice %67 {offsets = [0, 64], sizes = [128, 32], strides = [1, 1]} : vector<128x256xf32> to vector<128x32xf32>
    %72 = arith.maximumf %70, %71 : vector<128x32xf32>
    %73 = vector.extract_strided_slice %67 {offsets = [0, 96], sizes = [128, 32], strides = [1, 1]} : vector<128x256xf32> to vector<128x32xf32>
    %74 = arith.maximumf %72, %73 : vector<128x32xf32>
    %75 = vector.extract_strided_slice %67 {offsets = [0, 128], sizes = [128, 32], strides = [1, 1]} : vector<128x256xf32> to vector<128x32xf32>
    %76 = arith.maximumf %74, %75 : vector<128x32xf32>
    %77 = vector.extract_strided_slice %67 {offsets = [0, 160], sizes = [128, 32], strides = [1, 1]} : vector<128x256xf32> to vector<128x32xf32>
    %78 = arith.maximumf %76, %77 : vector<128x32xf32>
    %79 = vector.extract_strided_slice %67 {offsets = [0, 192], sizes = [128, 32], strides = [1, 1]} : vector<128x256xf32> to vector<128x32xf32>
    %80 = arith.maximumf %78, %79 : vector<128x32xf32>
    %81 = vector.extract_strided_slice %67 {offsets = [0, 224], sizes = [128, 32], strides = [1, 1]} : vector<128x256xf32> to vector<128x32xf32>
    %82 = arith.maximumf %80, %81 : vector<128x32xf32>
    %cst_45 = arith.constant 0.000000e+00 : f32
    %83 = vector.broadcast %cst_45 : f32 to vector<128x32xf32>
    %cst_46 = arith.constant 0.000000e+00 : f32
    %84 = vector.broadcast %cst_46 : f32 to vector<128x32xf32>
    %85 = vector.extract_strided_slice %67 {offsets = [0, 0], sizes = [128, 32], strides = [1, 1]} : vector<128x256xf32> to vector<128x32xf32>
    %86 = arith.subf %85, %82 : vector<128x32xf32>
    %87 = math.exp %86 : vector<128x32xf32>
    %88 = arith.addf %84, %87 : vector<128x32xf32>
    %89 = vector.extract_strided_slice %62 {offsets = [0, 0], sizes = [128, 32], strides = [1, 1]} : vector<128x256xf32> to vector<128x32xf32>
    %90 = arith.mulf %87, %89 : vector<128x32xf32>
    %91 = arith.addf %83, %90 : vector<128x32xf32>
    %92 = vector.extract_strided_slice %67 {offsets = [0, 32], sizes = [128, 32], strides = [1, 1]} : vector<128x256xf32> to vector<128x32xf32>
    %93 = arith.subf %92, %82 : vector<128x32xf32>
    %94 = math.exp %93 : vector<128x32xf32>
    %95 = arith.addf %88, %94 : vector<128x32xf32>
    %96 = vector.extract_strided_slice %62 {offsets = [0, 32], sizes = [128, 32], strides = [1, 1]} : vector<128x256xf32> to vector<128x32xf32>
    %97 = arith.mulf %94, %96 : vector<128x32xf32>
    %98 = arith.addf %91, %97 : vector<128x32xf32>
    %99 = vector.extract_strided_slice %67 {offsets = [0, 64], sizes = [128, 32], strides = [1, 1]} : vector<128x256xf32> to vector<128x32xf32>
    %100 = arith.subf %99, %82 : vector<128x32xf32>
    %101 = math.exp %100 : vector<128x32xf32>
    %102 = arith.addf %95, %101 : vector<128x32xf32>
    %103 = vector.extract_strided_slice %62 {offsets = [0, 64], sizes = [128, 32], strides = [1, 1]} : vector<128x256xf32> to vector<128x32xf32>
    %104 = arith.mulf %101, %103 : vector<128x32xf32>
    %105 = arith.addf %98, %104 : vector<128x32xf32>
    %106 = vector.extract_strided_slice %67 {offsets = [0, 96], sizes = [128, 32], strides = [1, 1]} : vector<128x256xf32> to vector<128x32xf32>
    %107 = arith.subf %106, %82 : vector<128x32xf32>
    %108 = math.exp %107 : vector<128x32xf32>
    %109 = arith.addf %102, %108 : vector<128x32xf32>
    %110 = vector.extract_strided_slice %62 {offsets = [0, 96], sizes = [128, 32], strides = [1, 1]} : vector<128x256xf32> to vector<128x32xf32>
    %111 = arith.mulf %108, %110 : vector<128x32xf32>
    %112 = arith.addf %105, %111 : vector<128x32xf32>
    %113 = vector.extract_strided_slice %67 {offsets = [0, 128], sizes = [128, 32], strides = [1, 1]} : vector<128x256xf32> to vector<128x32xf32>
    %114 = arith.subf %113, %82 : vector<128x32xf32>
    %115 = math.exp %114 : vector<128x32xf32>
    %116 = arith.addf %109, %115 : vector<128x32xf32>
    %117 = vector.extract_strided_slice %62 {offsets = [0, 128], sizes = [128, 32], strides = [1, 1]} : vector<128x256xf32> to vector<128x32xf32>
    %118 = arith.mulf %115, %117 : vector<128x32xf32>
    %119 = arith.addf %112, %118 : vector<128x32xf32>
    %120 = vector.extract_strided_slice %67 {offsets = [0, 160], sizes = [128, 32], strides = [1, 1]} : vector<128x256xf32> to vector<128x32xf32>
    %121 = arith.subf %120, %82 : vector<128x32xf32>
    %122 = math.exp %121 : vector<128x32xf32>
    %123 = arith.addf %116, %122 : vector<128x32xf32>
    %124 = vector.extract_strided_slice %62 {offsets = [0, 160], sizes = [128, 32], strides = [1, 1]} : vector<128x256xf32> to vector<128x32xf32>
    %125 = arith.mulf %122, %124 : vector<128x32xf32>
    %126 = arith.addf %119, %125 : vector<128x32xf32>
    %127 = vector.extract_strided_slice %67 {offsets = [0, 192], sizes = [128, 32], strides = [1, 1]} : vector<128x256xf32> to vector<128x32xf32>
    %128 = arith.subf %127, %82 : vector<128x32xf32>
    %129 = math.exp %128 : vector<128x32xf32>
    %130 = arith.addf %123, %129 : vector<128x32xf32>
    %131 = vector.extract_strided_slice %62 {offsets = [0, 192], sizes = [128, 32], strides = [1, 1]} : vector<128x256xf32> to vector<128x32xf32>
    %132 = arith.mulf %129, %131 : vector<128x32xf32>
    %133 = arith.addf %126, %132 : vector<128x32xf32>
    %134 = vector.extract_strided_slice %67 {offsets = [0, 224], sizes = [128, 32], strides = [1, 1]} : vector<128x256xf32> to vector<128x32xf32>
    %135 = arith.subf %134, %82 : vector<128x32xf32>
    %136 = math.exp %135 : vector<128x32xf32>
    %137 = arith.addf %130, %136 : vector<128x32xf32>
    %138 = vector.extract_strided_slice %62 {offsets = [0, 224], sizes = [128, 32], strides = [1, 1]} : vector<128x256xf32> to vector<128x32xf32>
    %139 = arith.mulf %136, %138 : vector<128x32xf32>
    %140 = arith.addf %133, %139 : vector<128x32xf32>
    %141 = arith.divf %140, %137 : vector<128x32xf32>
    %cst_47 = arith.constant 0.000000e+00 : f32
    %142 = vector.broadcast %cst_47 : f32 to vector<128x32xf32>
    %143 = arith.cmpf oge, %141, %142 : vector<128x32xf32>
    %cst_48 = arith.constant 0.00999999977 : f32
    %144 = vector.broadcast %cst_48 : f32 to vector<128x32xf32>
    %145 = arith.mulf %144, %141 : vector<128x32xf32>
    %146 = arith.select %143, %141, %145 : vector<128x32xi1>, vector<128x32xf32>
    %c0_49 = arith.constant 0 : index
    %c0_50 = arith.constant 0 : index
    %147 = vector.load %arg15[%c0_49, %c0_50] : memref<32x128xf32, #tpu.memory_space<vmem>>, vector<32x128xf32>
    %cst_51 = arith.constant dense<0.000000e+00> : vector<128x128xf32>
    %148 = tpu.matmul %146, %147, %cst_51 {dimension_numbers = #tpu.dot_dimension_numbers<[1], [0], [0], [1], [0, 0, 1, 1], [], []>} : vector<128x32xf32>, vector<32x128xf32>, vector<128x128xf32> -> vector<128x128xf32>
    %c0_52 = arith.constant 0 : index
    %c0_53 = arith.constant 0 : index
    %149 = vector.load %arg16[%c0_52, %c0_53] : memref<1x128xf32, #tpu.memory_space<vmem>>, vector<1x128xf32>
    %150 = vector.broadcast %149 : vector<1x128xf32> to vector<128x128xf32>
    %151 = arith.addf %148, %150 : vector<128x128xf32>
    %cst_54 = arith.constant 0.000000e+00 : f32
    %152 = vector.broadcast %cst_54 : f32 to vector<128x128xf32>
    %153 = arith.cmpf oge, %151, %152 : vector<128x128xf32>
    %cst_55 = arith.constant 0.00999999977 : f32
    %154 = vector.broadcast %cst_55 : f32 to vector<128x128xf32>
    %155 = arith.mulf %154, %151 : vector<128x128xf32>
    %156 = arith.select %153, %151, %155 : vector<128x128xi1>, vector<128x128xf32>
    %c0_56 = arith.constant 0 : index
    %c0_57 = arith.constant 0 : index
    %157 = vector.load %arg17[%c0_56, %c0_57] : memref<128x64xf32, #tpu.memory_space<vmem>>, vector<128x64xf32>
    %cst_58 = arith.constant dense<0.000000e+00> : vector<128x64xf32>
    %158 = tpu.matmul %156, %157, %cst_58 {dimension_numbers = #tpu.dot_dimension_numbers<[1], [0], [0], [1], [0, 0, 1, 1], [], []>} : vector<128x128xf32>, vector<128x64xf32>, vector<128x64xf32> -> vector<128x64xf32>
    %c0_59 = arith.constant 0 : index
    %c0_60 = arith.constant 0 : index
    %159 = vector.load %arg18[%c0_59, %c0_60] : memref<1x64xf32, #tpu.memory_space<vmem>>, vector<1x64xf32>
    %160 = vector.broadcast %159 : vector<1x64xf32> to vector<128x64xf32>
    %161 = arith.addf %158, %160 : vector<128x64xf32>
    %cst_61 = arith.constant 0.000000e+00 : f32
    %162 = vector.broadcast %cst_61 : f32 to vector<128x64xf32>
    %163 = arith.cmpf oge, %161, %162 : vector<128x64xf32>
    %cst_62 = arith.constant 0.00999999977 : f32
    %164 = vector.broadcast %cst_62 : f32 to vector<128x64xf32>
    %165 = arith.mulf %164, %161 : vector<128x64xf32>
    %166 = arith.select %163, %161, %165 : vector<128x64xi1>, vector<128x64xf32>
    %c0_63 = arith.constant 0 : index
    %c0_64 = arith.constant 0 : index
    %167 = vector.load %arg19[%c0_63, %c0_64] : memref<64x32xf32, #tpu.memory_space<vmem>>, vector<64x32xf32>
    %cst_65 = arith.constant dense<0.000000e+00> : vector<128x32xf32>
    %168 = tpu.matmul %166, %167, %cst_65 {dimension_numbers = #tpu.dot_dimension_numbers<[1], [0], [0], [1], [0, 0, 1, 1], [], []>} : vector<128x64xf32>, vector<64x32xf32>, vector<128x32xf32> -> vector<128x32xf32>
    %c0_66 = arith.constant 0 : index
    %c0_67 = arith.constant 0 : index
    %169 = vector.load %arg20[%c0_66, %c0_67] : memref<1x32xf32, #tpu.memory_space<vmem>>, vector<1x32xf32>
    %170 = vector.broadcast %169 : vector<1x32xf32> to vector<128x32xf32>
    %171 = arith.addf %168, %170 : vector<128x32xf32>
    %c0_68 = arith.constant 0 : index
    %c0_69 = arith.constant 0 : index
    %172 = vector.load %arg21[%c0_68, %c0_69] : memref<128x32xf32, #tpu.memory_space<vmem>>, vector<128x32xf32>
    tpu.vector_store %arg21[%c0_68, %c0_69], %171 {strides = array<i32>} : memref<128x32xf32, #tpu.memory_space<vmem>>, vector<128x32xf32>,
    return
  }
  func.func @transform_0(%arg0: i32) -> (i32, i32) {
    %c0_i32 = arith.constant 0 : i32
    %c0_i32_0 = arith.constant 0 : i32
    return %arg0, %c0_i32 : i32, i32
  }
  func.func @transform_1(%arg0: i32) -> (i32, i32) {
    %c0_i32 = arith.constant 0 : i32
    %c0_i32_0 = arith.constant 0 : i32
    return %arg0, %c0_i32 : i32, i32
  }
  func.func @transform_2(%arg0: i32) -> (i32, i32) {
    %c0_i32 = arith.constant 0 : i32
    %c0_i32_0 = arith.constant 0 : i32
    %c0_i32_1 = arith.constant 0 : i32
    return %c0_i32, %c0_i32_0 : i32, i32
  }
  func.func @transform_3(%arg0: i32) -> (i32, i32) {
    %c0_i32 = arith.constant 0 : i32
    %c0_i32_0 = arith.constant 0 : i32
    %c0_i32_1 = arith.constant 0 : i32
    return %c0_i32, %c0_i32_0 : i32, i32
  }
  func.func @transform_4(%arg0: i32) -> (i32, i32) {
    %c0_i32 = arith.constant 0 : i32
    %c0_i32_0 = arith.constant 0 : i32
    %c0_i32_1 = arith.constant 0 : i32
    return %c0_i32, %c0_i32_0 : i32, i32
  }
  func.func @transform_5(%arg0: i32) -> (i32, i32) {
    %c0_i32 = arith.constant 0 : i32
    %c0_i32_0 = arith.constant 0 : i32
    %c0_i32_1 = arith.constant 0 : i32
    return %c0_i32, %c0_i32_0 : i32, i32
  }
  func.func @transform_6(%arg0: i32) -> (i32, i32) {
    %c0_i32 = arith.constant 0 : i32
    %c0_i32_0 = arith.constant 0 : i32
    %c0_i32_1 = arith.constant 0 : i32
    return %c0_i32, %c0_i32_0 : i32, i32
  }
  func.func @transform_7(%arg0: i32) -> (i32, i32) {
    %c0_i32 = arith.constant 0 : i32
    %c0_i32_0 = arith.constant 0 : i32
    %c0_i32_1 = arith.constant 0 : i32
    return %c0_i32, %c0_i32_0 : i32, i32
  }
  func.func @transform_8(%arg0: i32) -> (i32, i32) {
    %c0_i32 = arith.constant 0 : i32
    %c0_i32_0 = arith.constant 0 : i32
    %c0_i32_1 = arith.constant 0 : i32
    return %c0_i32, %c0_i32_0 : i32, i32
  }
  func.func @transform_9(%arg0: i32) -> (i32, i32) {
    %c0_i32 = arith.constant 0 : i32
    %c0_i32_0 = arith.constant 0 : i32
    %c0_i32_1 = arith.constant 0 : i32
    return %c0_i32, %c0_i32_0 : i32, i32
  }
  func.func @transform_10(%arg0: i32) -> (i32, i32) {
    %c0_i32 = arith.constant 0 : i32
    %c0_i32_0 = arith.constant 0 : i32
    %c0_i32_1 = arith.constant 0 : i32
    return %c0_i32, %c0_i32_0 : i32, i32
  }
  func.func @transform_11(%arg0: i32) -> (i32, i32) {
    %c0_i32 = arith.constant 0 : i32
    %c0_i32_0 = arith.constant 0 : i32
    %c0_i32_1 = arith.constant 0 : i32
    return %c0_i32, %c0_i32_0 : i32, i32
  }
  func.func @transform_12(%arg0: i32) -> (i32, i32) {
    %c0_i32 = arith.constant 0 : i32
    %c0_i32_0 = arith.constant 0 : i32
    %c0_i32_1 = arith.constant 0 : i32
    return %c0_i32, %c0_i32_0 : i32, i32
  }
  func.func @transform_13(%arg0: i32) -> (i32, i32) {
    %c0_i32 = arith.constant 0 : i32
    %c0_i32_0 = arith.constant 0 : i32
    %c0_i32_1 = arith.constant 0 : i32
    return %c0_i32, %c0_i32_0 : i32, i32
  }
  func.func @transform_14(%arg0: i32) -> (i32, i32) {
    %c0_i32 = arith.constant 0 : i32
    %c0_i32_0 = arith.constant 0 : i32
    %c0_i32_1 = arith.constant 0 : i32
    return %c0_i32, %c0_i32_0 : i32, i32
  }
  func.func @transform_15(%arg0: i32) -> (i32, i32) {
    %c0_i32 = arith.constant 0 : i32
    %c0_i32_0 = arith.constant 0 : i32
    %c0_i32_1 = arith.constant 0 : i32
    return %c0_i32, %c0_i32_0 : i32, i32
  }
  func.func @transform_16(%arg0: i32) -> (i32, i32) {
    %c0_i32 = arith.constant 0 : i32
    %c0_i32_0 = arith.constant 0 : i32
    %c0_i32_1 = arith.constant 0 : i32
    return %c0_i32, %c0_i32_0 : i32, i32
  }
  func.func @transform_17(%arg0: i32) -> (i32, i32) {
    %c0_i32 = arith.constant 0 : i32
    %c0_i32_0 = arith.constant 0 : i32
    %c0_i32_1 = arith.constant 0 : i32
    return %c0_i32, %c0_i32_0 : i32, i32
  }
  func.func @transform_18(%arg0: i32) -> (i32, i32) {
    %c0_i32 = arith.constant 0 : i32
    %c0_i32_0 = arith.constant 0 : i32
    %c0_i32_1 = arith.constant 0 : i32
    return %c0_i32, %c0_i32_0 : i32, i32
  }
  func.func @transform_19(%arg0: i32) -> (i32, i32) {
    %c0_i32 = arith.constant 0 : i32
    %c0_i32_0 = arith.constant 0 : i32
    %c0_i32_1 = arith.constant 0 : i32
    return %c0_i32, %c0_i32_0 : i32, i32
  }
  func.func @transform_20(%arg0: i32) -> (i32, i32) {
    %c0_i32 = arith.constant 0 : i32
    %c0_i32_0 = arith.constant 0 : i32
    return %arg0, %c0_i32 : i32, i32
  }
  func.func @transform_21(%arg0: i32) -> (i32, i32) {
    %c0_i32 = arith.constant 0 : i32
    %c0_i32_0 = arith.constant 0 : i32
    return %arg0, %c0_i32 : i32, i32
  }
}

</mosaic_0001>

<llo_original>
// kernel: tpu_custom_call.1
$region0: #{tpu_custom_call.1}
  #allocation0 [shape = 'u32[]', space=smem, size = 0x4, offset = 0x4, fixed_abs, tag = 'smem constant byte address 0x4 - core index']
  #allocation1 [shape = 'u32[144,128]{1,0:T(1,128)}', space=vmem, size = 0x12000, scoped, tag = 'internal scratch']
  %s0 = inlined_call_operand.vmem [shape: f32[256,32], index: 0, kind: input, shape index: {}]
  %s1 = inlined_call_operand.vmem [shape: f32[256,16], index: 1, kind: input, shape index: {}]
  %s2 = inlined_call_operand.hbm [shape: f32[32,256], index: 2, kind: input, shape index: {}]
  %s3 = inlined_call_operand.hbm [shape: f32[1,256], index: 3, kind: input, shape index: {}]
  %s4 = inlined_call_operand.vmem [shape: f32[256,32], index: 4, kind: input, shape index: {}]
  %s5 = inlined_call_operand.hbm [shape: f32[1,32], index: 5, kind: input, shape index: {}]
  %s6 = inlined_call_operand.hbm [shape: f32[16,1024], index: 6, kind: input, shape index: {}]
  %s7 = inlined_call_operand.hbm [shape: f32[1,1024], index: 7, kind: input, shape index: {}]
  %s8 = inlined_call_operand.hbm [shape: f32[1024,512], index: 8, kind: input, shape index: {}]
  %s9 = inlined_call_operand.hbm [shape: f32[1,512], index: 9, kind: input, shape index: {}]
  %s10 = inlined_call_operand.hbm [shape: f32[512,256], index: 10, kind: input, shape index: {}]
  %s11 = inlined_call_operand.hbm [shape: f32[1,256], index: 11, kind: input, shape index: {}]
  %s12 = inlined_call_operand.hbm [shape: f32[16,256], index: 12, kind: input, shape index: {}]
  %s13 = inlined_call_operand.hbm [shape: f32[1,256], index: 13, kind: input, shape index: {}]
  %s14 = inlined_call_operand.hbm [shape: f32[32,128], index: 14, kind: input, shape index: {}]
  %s15 = inlined_call_operand.hbm [shape: f32[1,128], index: 15, kind: input, shape index: {}]
  %s16 = inlined_call_operand.vmem [shape: f32[128,64], index: 16, kind: input, shape index: {}]
  %s17 = inlined_call_operand.hbm [shape: f32[1,64], index: 17, kind: input, shape index: {}]
  %s18 = inlined_call_operand.vmem [shape: f32[64,32], index: 18, kind: input, shape index: {}]
  %s19 = inlined_call_operand.hbm [shape: f32[1,32], index: 19, kind: input, shape index: {}]
  %s20 = inlined_call_operand.vmem [shape: f32[256,32], index: 20, kind: output, shape index: {0}]
  %s21 = inlined_call_operand.vmem [shape: f32[256,32], index: 21, kind: output, shape index: {1}]
  %22 = xla_tuple %s20, %s21
  %s23 = sld [smem:[#allocation0]]
  $region181: #{tpu_custom_call.1} parent=0
    _
  %s25 = ssub.s32 1, %s23
  %s26 = scalar_select 0, %s25, %s23
  $region1: #{tpu_custom_call.1} parent=0
    #allocation2 [shape = 'u8[32768]{0}', space=vmem, size = 0x8000, scoped, tag = 'input window, operand 2, single buffered']
    #allocation3 [shape = 's32[2]{0}', space=sflag, size = 0x8, scoped, tag = 'scoped memory for tpu_custom_call.1']
    #allocation4 [shape = 'u8[1024]{0}', space=vmem, size = 0x400, scoped, tag = 'input window, operand 3, single buffered']
    #allocation5 [shape = 's32[1]{0}', space=sflag, size = 0x4, scoped, tag = 'scoped memory for tpu_custom_call.1']
    #allocation6 [shape = 'u8[512]{0}', space=vmem, size = 0x400, scoped, tag = 'input window, operand 5, single buffered']
    #allocation7 [shape = 'u8[65536]{0}', space=vmem, size = 0x10000, scoped, tag = 'input window, operand 6, single buffered']
    #allocation8 [shape = 's32[1]{0}', space=sflag, size = 0x4, scoped, tag = 'scoped memory for tpu_custom_call.1']
    #allocation9 [shape = 'u8[4096]{0}', space=vmem, size = 0x1000, scoped, tag = 'input window, operand 7, single buffered']
    #allocation10 [shape = 'u8[2097152]{0}', space=vmem, size = 0x200000, scoped, tag = 'input window, operand 8, single buffered']
    #allocation11 [shape = 's32[1]{0}', space=sflag, size = 0x4, scoped, tag = 'scoped memory for tpu_custom_call.1']
    #allocation12 [shape = 'u8[2048]{0}', space=vmem, size = 0x800, scoped, tag = 'input window, operand 9, single buffered']
    #allocation13 [shape = 'u8[524288]{0}', space=vmem, size = 0x80000, scoped, tag = 'input window, operand 10, single buffered']
    #allocation14 [shape = 's32[1]{0}', space=sflag, size = 0x4, scoped, tag = 'scoped memory for tpu_custom_call.1']
    #allocation15 [shape = 'u8[1024]{0}', space=vmem, size = 0x400, scoped, tag = 'input window, operand 11, single buffered']
    #allocation16 [shape = 'u8[16384]{0}', space=vmem, size = 0x4000, scoped, tag = 'input window, operand 12, single buffered']
    #allocation17 [shape = 's32[1]{0}', space=sflag, size = 0x4, scoped, tag = 'scoped memory for tpu_custom_call.1']
    #allocation18 [shape = 'u8[1024]{0}', space=vmem, size = 0x400, scoped, tag = 'input window, operand 13, single buffered']
    #allocation19 [shape = 'u8[16384]{0}', space=vmem, size = 0x4000, scoped, tag = 'input window, operand 14, single buffered']
    #allocation20 [shape = 's32[1]{0}', space=sflag, size = 0x4, scoped, tag = 'scoped memory for tpu_custom_call.1']
    #allocation21 [shape = 'u8[512]{0}', space=vmem, size = 0x400, scoped, tag = 'input window, operand 15, single buffered']
    #allocation22 [shape = 'u8[512]{0}', space=vmem, size = 0x400, scoped, tag = 'input window, operand 17, single buffered']
    #allocation23 [shape = 's32[1]{0}', space=sflag, size = 0x4, scoped, tag = 'scoped memory for tpu_custom_call.1']
    #allocation24 [shape = 'u8[512]{0}', space=vmem, size = 0x400, scoped, tag = 'input window, operand 19, single buffered']
    %27 = vsyncpa [#allocation3], 0
    %28 = vsyncpa [#allocation5], 0
    %29 = vsyncpa [#allocation8], 0
    %30 = vsyncpa [#allocation11], 0
    %31 = vsyncpa [#allocation14], 0
    %32 = vsyncpa [#allocation17], 0
    %33 = vsyncpa [#allocation20], 0
    %34 = vsyncpa [#allocation23], 0
    loop: start=0, step=1, limit=4
    $region2: #{tpu_custom_call.1} parent=1 // loop_pre_header
      _
    $region3: #{tpu_custom_call.1} parent=1 // loop_header
      %s36 = sphi 0, %s40
      %p37 = scmp.ge.s32.totalorder %s36, 4
      %s46 = sphi 0, %s48
      %s49 = sphi 0, %s46
      %s50 = sphi 0, %s49
      %s66 = sphi 0, %s50
      %s72 = sphi 0, %s74
      %s75 = sphi 0, %s72
      %s76 = sphi 0, %s75
      %s92 = sphi 0, %s76
      %s96 = sphi 0, %s96
      %s98 = sphi 0, %s96
      %s99 = sphi 0, %s98
      %s113 = sphi 0, %s99
      %s117 = sphi 0, %s117
      %s119 = sphi 0, %s117
      %s120 = sphi 0, %s119
      %s134 = sphi 0, %s120
      %s138 = sphi 0, %s138
      %s140 = sphi 0, %s138
      %s141 = sphi 0, %s140
      %s155 = sphi 0, %s141
      %s159 = sphi 0, %s159
      %s161 = sphi 0, %s159
      %s162 = sphi 0, %s161
      %s176 = sphi 0, %s162
      %s180 = sphi 0, %s180
      %s182 = sphi 0, %s180
      %s183 = sphi 0, %s182
      %s197 = sphi 0, %s183
      %s201 = sphi 0, %s201
      %s203 = sphi 0, %s201
      %s204 = sphi 0, %s203
      %s218 = sphi 0, %s204
      %s222 = sphi 0, %s222
      %s224 = sphi 0, %s222
      %s225 = sphi 0, %s224
      %s239 = sphi 0, %s225
      %s243 = sphi 0, %s243
      %s245 = sphi 0, %s243
      %s246 = sphi 0, %s245
      %s260 = sphi 0, %s246
      %s264 = sphi 0, %s264
      %s266 = sphi 0, %s264
      %s267 = sphi 0, %s266
      %s281 = sphi 0, %s267
      %s285 = sphi 0, %s285
      %s287 = sphi 0, %s285
      %s288 = sphi 0, %s287
      %s302 = sphi 0, %s288
      %s306 = sphi 0, %s306
      %s308 = sphi 0, %s306
      %s309 = sphi 0, %s308
      %s323 = sphi 0, %s309
      %s327 = sphi 0, %s327
      %s329 = sphi 0, %s327
      %s330 = sphi 0, %s329
      %s344 = sphi 0, %s330
      %s348 = sphi 0, %s348
      %s350 = sphi 0, %s348
      %s351 = sphi 0, %s350
      %s365 = sphi 0, %s351
      %s369 = sphi 0, %s369
      %s371 = sphi 0, %s369
      %s372 = sphi 0, %s371
      %s386 = sphi 0, %s372
      %s390 = sphi 0, %s390
      %s392 = sphi 0, %s390
      %s393 = sphi 0, %s392
      %s407 = sphi 0, %s393
      %s411 = sphi 0, %s411
      %s413 = sphi 0, %s411
      %s414 = sphi 0, %s413
      %s428 = sphi 0, %s414
      %s432 = sphi 0, %s432
      %s434 = sphi 0, %s432
      %s435 = sphi 0, %s434
      %s449 = sphi 0, %s435
      %s453 = sphi 0, %s453
      %s455 = sphi 0, %s453
      %s456 = sphi 0, %s455
      %s470 = sphi 0, %s456
      %s476 = sphi 0, %s478
      %s479 = sphi 0, %s476
      %s480 = sphi 0, %s479
      %s496 = sphi 0, %s480
      %s502 = sphi 0, %s504
      %s505 = sphi 0, %s502
      %s506 = sphi 0, %s505
      %s522 = sphi 0, %s506
    $region4: #{tpu_custom_call.1} parent=1 // loop_header_branch
      %39 = sbr.rel (%p37) target = $region8
    $region5: #{tpu_custom_call.1} parent=1 // loop_body
      %s41 = ssub.s32 %s36, 1
      %s42 = ssub.s32 %s36, 2
      %s43 = sadd.s32 %s36, 1
      %s44 = ssub.s32 %s36, %s43
      %p45 = scmp.eq.s32.totalorder %s44, 0
      %s47 = sadd.s32 %s46, 1
      %s48 = scalar_select %p45, %s46, %s47
      %p51 = pneg %p45
      %p52 = scmp.eq.s32.totalorder %s36, 1
      %p53 = por %p51, %p52
      %p54 = scmp.ne.s32.totalorder %s46, %s49
      %p55 = scmp.eq.s32.totalorder %s36, 0
      %p56 = por %p54, %p55
      %p57 = scmp.ne.s32.totalorder %s46, %s49
      %p58 = scmp.eq.s32.totalorder %s41, 1
      %p59 = por %p57, %p58
      %p60 = scmp.ne.s32.totalorder %s49, %s50
      %p61 = scmp.eq.s32.totalorder %s41, 0
      %p62 = por %p60, %p61
      %p63 = scmp.ne.s32.totalorder %s49, %s50
      %p64 = scmp.eq.s32.totalorder %s42, 1
      %p65 = por %p63, %p64
      %p67 = scmp.ne.s32.totalorder %s50, %s66
      %p68 = scmp.eq.s32.totalorder %s42, 0
      %p69 = por %p67, %p68
      %s70 = ssub.s32 %s36, %s43
      %p71 = scmp.eq.s32.totalorder %s70, 0
      %s73 = sadd.s32 %s72, 1
      %s74 = scalar_select %p71, %s72, %s73
      %p77 = pneg %p71
      %p78 = scmp.eq.s32.totalorder %s36, 1
      %p79 = por %p77, %p78
      %p80 = scmp.ne.s32.totalorder %s72, %s75
      %p81 = scmp.eq.s32.totalorder %s36, 0
      %p82 = por %p80, %p81
      %p83 = scmp.ne.s32.totalorder %s72, %s75
      %p84 = scmp.eq.s32.totalorder %s41, 1
      %p85 = por %p83, %p84
      %p86 = scmp.ne.s32.totalorder %s75, %s76
      %p87 = scmp.eq.s32.totalorder %s41, 0
      %p88 = por %p86, %p87
      %p89 = scmp.ne.s32.totalorder %s75, %s76
      %p90 = scmp.eq.s32.totalorder %s42, 1
      %p91 = por %p89, %p90
      %p93 = scmp.ne.s32.totalorder %s76, %s92
      %p94 = scmp.eq.s32.totalorder %s42, 0
      %p95 = por %p93, %p94
      %s97 = sadd.s32 %s96, 1
      %p100 = scmp.eq.s32.totalorder %s36, 1
      %p101 = scmp.ne.s32.totalorder %s96, %s98
      %p102 = scmp.eq.s32.totalorder %s36, 0
      %p103 = por %p101, %p102
      %p104 = scmp.ne.s32.totalorder %s96, %s98
      %p105 = scmp.eq.s32.totalorder %s41, 1
      %p106 = por %p104, %p105
      %p107 = scmp.ne.s32.totalorder %s98, %s99
      %p108 = scmp.eq.s32.totalorder %s41, 0
      %p109 = por %p107, %p108
      %p110 = scmp.ne.s32.totalorder %s98, %s99
      %p111 = scmp.eq.s32.totalorder %s42, 1
      %p112 = por %p110, %p111
      %p114 = scmp.ne.s32.totalorder %s99, %s113
      %p115 = scmp.eq.s32.totalorder %s42, 0
      %p116 = por %p114, %p115
      %s118 = sadd.s32 %s117, 1
      %p121 = scmp.eq.s32.totalorder %s36, 1
      %p122 = scmp.ne.s32.totalorder %s117, %s119
      %p123 = scmp.eq.s32.totalorder %s36, 0
      %p124 = por %p122, %p123
      %p125 = scmp.ne.s32.totalorder %s117, %s119
      %p126 = scmp.eq.s32.totalorder %s41, 1
      %p127 = por %p125, %p126
      %p128 = scmp.ne.s32.totalorder %s119, %s120
      %p129 = scmp.eq.s32.totalorder %s41, 0
      %p130 = por %p128, %p129
      %p131 = scmp.ne.s32.totalorder %s119, %s120
      %p132 = scmp.eq.s32.totalorder %s42, 1
      %p133 = por %p131, %p132
      %p135 = scmp.ne.s32.totalorder %s120, %s134
      %p136 = scmp.eq.s32.totalorder %s42, 0
      %p137 = por %p135, %p136
      %s139 = sadd.s32 %s138, 1
      %p142 = scmp.eq.s32.totalorder %s36, 1
      %p143 = scmp.ne.s32.totalorder %s138, %s140
      %p144 = scmp.eq.s32.totalorder %s36, 0
      %p145 = por %p143, %p144
      %p146 = scmp.ne.s32.totalorder %s138, %s140
      %p147 = scmp.eq.s32.totalorder %s41, 1
      %p148 = por %p146, %p147
      %p149 = scmp.ne.s32.totalorder %s140, %s141
      %p150 = scmp.eq.s32.totalorder %s41, 0
      %p151 = por %p149, %p150
      %p152 = scmp.ne.s32.totalorder %s140, %s141
      %p153 = scmp.eq.s32.totalorder %s42, 1
      %p154 = por %p152, %p153
      %p156 = scmp.ne.s32.totalorder %s141, %s155
      %p157 = scmp.eq.s32.totalorder %s42, 0
      %p158 = por %p156, %p157
      %s160 = sadd.s32 %s159, 1
      %p163 = scmp.eq.s32.totalorder %s36, 1
      %p164 = scmp.ne.s32.totalorder %s159, %s161
      %p165 = scmp.eq.s32.totalorder %s36, 0
      %p166 = por %p164, %p165
      %p167 = scmp.ne.s32.totalorder %s159, %s161
      %p168 = scmp.eq.s32.totalorder %s41, 1
      %p169 = por %p167, %p168
      %p170 = scmp.ne.s32.totalorder %s161, %s162
      %p171 = scmp.eq.s32.totalorder %s41, 0
      %p172 = por %p170, %p171
      %p173 = scmp.ne.s32.totalorder %s161, %s162
      %p174 = scmp.eq.s32.totalorder %s42, 1
      %p175 = por %p173, %p174
      %p177 = scmp.ne.s32.totalorder %s162, %s176
      %p178 = scmp.eq.s32.totalorder %s42, 0
      %p179 = por %p177, %p178
      %s181 = sadd.s32 %s180, 1
      %p184 = scmp.eq.s32.totalorder %s36, 1
      %p185 = scmp.ne.s32.totalorder %s180, %s182
      %p186 = scmp.eq.s32.totalorder %s36, 0
      %p187 = por %p185, %p186
      %p188 = scmp.ne.s32.totalorder %s180, %s182
      %p189 = scmp.eq.s32.totalorder %s41, 1
      %p190 = por %p188, %p189
      %p191 = scmp.ne.s32.totalorder %s182, %s183
      %p192 = scmp.eq.s32.totalorder %s41, 0
      %p193 = por %p191, %p192
      %p194 = scmp.ne.s32.totalorder %s182, %s183
      %p195 = scmp.eq.s32.totalorder %s42, 1
      %p196 = por %p194, %p195
      %p198 = scmp.ne.s32.totalorder %s183, %s197
      %p199 = scmp.eq.s32.totalorder %s42, 0
      %p200 = por %p198, %p199
      %s202 = sadd.s32 %s201, 1
      %p205 = scmp.eq.s32.totalorder %s36, 1
      %p206 = scmp.ne.s32.totalorder %s201, %s203
      %p207 = scmp.eq.s32.totalorder %s36, 0
      %p208 = por %p206, %p207
      %p209 = scmp.ne.s32.totalorder %s201, %s203
      %p210 = scmp.eq.s32.totalorder %s41, 1
      %p211 = por %p209, %p210
      %p212 = scmp.ne.s32.totalorder %s203, %s204
      %p213 = scmp.eq.s32.totalorder %s41, 0
      %p214 = por %p212, %p213
      %p215 = scmp.ne.s32.totalorder %s203, %s204
      %p216 = scmp.eq.s32.totalorder %s42, 1
      %p217 = por %p215, %p216
      %p219 = scmp.ne.s32.totalorder %s204, %s218
      %p220 = scmp.eq.s32.totalorder %s42, 0
      %p221 = por %p219, %p220
      %s223 = sadd.s32 %s222, 1
      %p226 = scmp.eq.s32.totalorder %s36, 1
      %p227 = scmp.ne.s32.totalorder %s222, %s224
      %p228 = scmp.eq.s32.totalorder %s36, 0
      %p229 = por %p227, %p228
      %p230 = scmp.ne.s32.totalorder %s222, %s224
      %p231 = scmp.eq.s32.totalorder %s41, 1
      %p232 = por %p230, %p231
      %p233 = scmp.ne.s32.totalorder %s224, %s225
      %p234 = scmp.eq.s32.totalorder %s41, 0
      %p235 = por %p233, %p234
      %p236 = scmp.ne.s32.totalorder %s224, %s225
      %p237 = scmp.eq.s32.totalorder %s42, 1
      %p238 = por %p236, %p237
      %p240 = scmp.ne.s32.totalorder %s225, %s239
      %p241 = scmp.eq.s32.totalorder %s42, 0
      %p242 = por %p240, %p241
      %s244 = sadd.s32 %s243, 1
      %p247 = scmp.eq.s32.totalorder %s36, 1
      %p248 = scmp.ne.s32.totalorder %s243, %s245
      %p249 = scmp.eq.s32.totalorder %s36, 0
      %p250 = por %p248, %p249
      %p251 = scmp.ne.s32.totalorder %s243, %s245
      %p252 = scmp.eq.s32.totalorder %s41, 1
      %p253 = por %p251, %p252
      %p254 = scmp.ne.s32.totalorder %s245, %s246
      %p255 = scmp.eq.s32.totalorder %s41, 0
      %p256 = por %p254, %p255
      %p257 = scmp.ne.s32.totalorder %s245, %s246
      %p258 = scmp.eq.s32.totalorder %s42, 1
      %p259 = por %p257, %p258
      %p261 = scmp.ne.s32.totalorder %s246, %s260
      %p262 = scmp.eq.s32.totalorder %s42, 0
      %p263 = por %p261, %p262
      %s265 = sadd.s32 %s264, 1
      %p268 = scmp.eq.s32.totalorder %s36, 1
      %p269 = scmp.ne.s32.totalorder %s264, %s266
      %p270 = scmp.eq.s32.totalorder %s36, 0
      %p271 = por %p269, %p270
      %p272 = scmp.ne.s32.totalorder %s264, %s266
      %p273 = scmp.eq.s32.totalorder %s41, 1
      %p274 = por %p272, %p273
      %p275 = scmp.ne.s32.totalorder %s266, %s267
      %p276 = scmp.eq.s32.totalorder %s41, 0
      %p277 = por %p275, %p276
      %p278 = scmp.ne.s32.totalorder %s266, %s267
      %p279 = scmp.eq.s32.totalorder %s42, 1
      %p280 = por %p278, %p279
      %p282 = scmp.ne.s32.totalorder %s267, %s281
      %p283 = scmp.eq.s32.totalorder %s42, 0
      %p284 = por %p282, %p283
      %s286 = sadd.s32 %s285, 1
      %p289 = scmp.eq.s32.totalorder %s36, 1
      %p290 = scmp.ne.s32.totalorder %s285, %s287
      %p291 = scmp.eq.s32.totalorder %s36, 0
      %p292 = por %p290, %p291
      %p293 = scmp.ne.s32.totalorder %s285, %s287
      %p294 = scmp.eq.s32.totalorder %s41, 1
      %p295 = por %p293, %p294
      %p296 = scmp.ne.s32.totalorder %s287, %s288
      %p297 = scmp.eq.s32.totalorder %s41, 0
      %p298 = por %p296, %p297
      %p299 = scmp.ne.s32.totalorder %s287, %s288
      %p300 = scmp.eq.s32.totalorder %s42, 1
      %p301 = por %p299, %p300
      %p303 = scmp.ne.s32.totalorder %s288, %s302
      %p304 = scmp.eq.s32.totalorder %s42, 0
      %p305 = por %p303, %p304
      %s307 = sadd.s32 %s306, 1
      %p310 = scmp.eq.s32.totalorder %s36, 1
      %p311 = scmp.ne.s32.totalorder %s306, %s308
      %p312 = scmp.eq.s32.totalorder %s36, 0
      %p313 = por %p311, %p312
      %p314 = scmp.ne.s32.totalorder %s306, %s308
      %p315 = scmp.eq.s32.totalorder %s41, 1
      %p316 = por %p314, %p315
      %p317 = scmp.ne.s32.totalorder %s308, %s309
      %p318 = scmp.eq.s32.totalorder %s41, 0
      %p319 = por %p317, %p318
      %p320 = scmp.ne.s32.totalorder %s308, %s309
      %p321 = scmp.eq.s32.totalorder %s42, 1
      %p322 = por %p320, %p321
      %p324 = scmp.ne.s32.totalorder %s309, %s323
      %p325 = scmp.eq.s32.totalorder %s42, 0
      %p326 = por %p324, %p325
      %s328 = sadd.s32 %s327, 1
      %p331 = scmp.eq.s32.totalorder %s36, 1
      %p332 = scmp.ne.s32.totalorder %s327, %s329
      %p333 = scmp.eq.s32.totalorder %s36, 0
      %p334 = por %p332, %p333
      %p335 = scmp.ne.s32.totalorder %s327, %s329
      %p336 = scmp.eq.s32.totalorder %s41, 1
      %p337 = por %p335, %p336
      %p338 = scmp.ne.s32.totalorder %s329, %s330
      %p339 = scmp.eq.s32.totalorder %s41, 0
      %p340 = por %p338, %p339
      %p341 = scmp.ne.s32.totalorder %s329, %s330
      %p342 = scmp.eq.s32.totalorder %s42, 1
      %p343 = por %p341, %p342
      %p345 = scmp.ne.s32.totalorder %s330, %s344
      %p346 = scmp.eq.s32.totalorder %s42, 0
      %p347 = por %p345, %p346
      %s349 = sadd.s32 %s348, 1
      %p352 = scmp.eq.s32.totalorder %s36, 1
      %p353 = scmp.ne.s32.totalorder %s348, %s350
      %p354 = scmp.eq.s32.totalorder %s36, 0
      %p355 = por %p353, %p354
      %p356 = scmp.ne.s32.totalorder %s348, %s350
      %p357 = scmp.eq.s32.totalorder %s41, 1
      %p358 = por %p356, %p357
      %p359 = scmp.ne.s32.totalorder %s350, %s351
      %p360 = scmp.eq.s32.totalorder %s41, 0
      %p361 = por %p359, %p360
      %p362 = scmp.ne.s32.totalorder %s350, %s351
      %p363 = scmp.eq.s32.totalorder %s42, 1
      %p364 = por %p362, %p363
      %p366 = scmp.ne.s32.totalorder %s351, %s365
      %p367 = scmp.eq.s32.totalorder %s42, 0
      %p368 = por %p366, %p367
      %s370 = sadd.s32 %s369, 1
      %p373 = scmp.eq.s32.totalorder %s36, 1
      %p374 = scmp.ne.s32.totalorder %s369, %s371
      %p375 = scmp.eq.s32.totalorder %s36, 0
      %p376 = por %p374, %p375
      %p377 = scmp.ne.s32.totalorder %s369, %s371
      %p378 = scmp.eq.s32.totalorder %s41, 1
      %p379 = por %p377, %p378
      %p380 = scmp.ne.s32.totalorder %s371, %s372
      %p381 = scmp.eq.s32.totalorder %s41, 0
      %p382 = por %p380, %p381
      %p383 = scmp.ne.s32.totalorder %s371, %s372
      %p384 = scmp.eq.s32.totalorder %s42, 1
      %p385 = por %p383, %p384
      %p387 = scmp.ne.s32.totalorder %s372, %s386
      %p388 = scmp.eq.s32.totalorder %s42, 0
      %p389 = por %p387, %p388
      %s391 = sadd.s32 %s390, 1
      %p394 = scmp.eq.s32.totalorder %s36, 1
      %p395 = scmp.ne.s32.totalorder %s390, %s392
      %p396 = scmp.eq.s32.totalorder %s36, 0
      %p397 = por %p395, %p396
      %p398 = scmp.ne.s32.totalorder %s390, %s392
      %p399 = scmp.eq.s32.totalorder %s41, 1
      %p400 = por %p398, %p399
      %p401 = scmp.ne.s32.totalorder %s392, %s393
      %p402 = scmp.eq.s32.totalorder %s41, 0
      %p403 = por %p401, %p402
      %p404 = scmp.ne.s32.totalorder %s392, %s393
      %p405 = scmp.eq.s32.totalorder %s42, 1
      %p406 = por %p404, %p405
      %p408 = scmp.ne.s32.totalorder %s393, %s407
      %p409 = scmp.eq.s32.totalorder %s42, 0
      %p410 = por %p408, %p409
      %s412 = sadd.s32 %s411, 1
      %p415 = scmp.eq.s32.totalorder %s36, 1
      %p416 = scmp.ne.s32.totalorder %s411, %s413
      %p417 = scmp.eq.s32.totalorder %s36, 0
      %p418 = por %p416, %p417
      %p419 = scmp.ne.s32.totalorder %s411, %s413
      %p420 = scmp.eq.s32.totalorder %s41, 1
      %p421 = por %p419, %p420
      %p422 = scmp.ne.s32.totalorder %s413, %s414
      %p423 = scmp.eq.s32.totalorder %s41, 0
      %p424 = por %p422, %p423
      %p425 = scmp.ne.s32.totalorder %s413, %s414
      %p426 = scmp.eq.s32.totalorder %s42, 1
      %p427 = por %p425, %p426
      %p429 = scmp.ne.s32.totalorder %s414, %s428
      %p430 = scmp.eq.s32.totalorder %s42, 0
      %p431 = por %p429, %p430
      %s433 = sadd.s32 %s432, 1
      %p436 = scmp.eq.s32.totalorder %s36, 1
      %p437 = scmp.ne.s32.totalorder %s432, %s434
      %p438 = scmp.eq.s32.totalorder %s36, 0
      %p439 = por %p437, %p438
      %p440 = scmp.ne.s32.totalorder %s432, %s434
      %p441 = scmp.eq.s32.totalorder %s41, 1
      %p442 = por %p440, %p441
      %p443 = scmp.ne.s32.totalorder %s434, %s435
      %p444 = scmp.eq.s32.totalorder %s41, 0
      %p445 = por %p443, %p444
      %p446 = scmp.ne.s32.totalorder %s434, %s435
      %p447 = scmp.eq.s32.totalorder %s42, 1
      %p448 = por %p446, %p447
      %p450 = scmp.ne.s32.totalorder %s435, %s449
      %p451 = scmp.eq.s32.totalorder %s42, 0
      %p452 = por %p450, %p451
      %s454 = sadd.s32 %s453, 1
      %p457 = scmp.eq.s32.totalorder %s36, 1
      %p458 = scmp.ne.s32.totalorder %s453, %s455
      %p459 = scmp.eq.s32.totalorder %s36, 0
      %p460 = por %p458, %p459
      %p461 = scmp.ne.s32.totalorder %s453, %s455
      %p462 = scmp.eq.s32.totalorder %s41, 1
      %p463 = por %p461, %p462
      %p464 = scmp.ne.s32.totalorder %s455, %s456
      %p465 = scmp.eq.s32.totalorder %s41, 0
      %p466 = por %p464, %p465
      %p467 = scmp.ne.s32.totalorder %s455, %s456
      %p468 = scmp.eq.s32.totalorder %s42, 1
      %p469 = por %p467, %p468
      %p471 = scmp.ne.s32.totalorder %s456, %s470
      %p472 = scmp.eq.s32.totalorder %s42, 0
      %p473 = por %p471, %p472
      %s474 = ssub.s32 %s36, %s43
      %p475 = scmp.eq.s32.totalorder %s474, 0
      %s477 = sadd.s32 %s476, 1
      %s478 = scalar_select %p475, %s476, %s477
      %p481 = pneg %p475
      %p482 = scmp.eq.s32.totalorder %s36, 1
      %p483 = por %p481, %p482
      %p484 = scmp.ne.s32.totalorder %s476, %s479
      %p485 = scmp.eq.s32.totalorder %s36, 0
      %p486 = por %p484, %p485
      %p487 = scmp.ne.s32.totalorder %s476, %s479
      %p488 = scmp.eq.s32.totalorder %s41, 1
      %p489 = por %p487, %p488
      %p490 = scmp.ne.s32.totalorder %s479, %s480
      %p491 = scmp.eq.s32.totalorder %s41, 0
      %p492 = por %p490, %p491
      %p493 = scmp.ne.s32.totalorder %s479, %s480
      %p494 = scmp.eq.s32.totalorder %s42, 1
      %p495 = por %p493, %p494
      %p497 = scmp.ne.s32.totalorder %s480, %s496
      %p498 = scmp.eq.s32.totalorder %s42, 0
      %p499 = por %p497, %p498
      %s500 = ssub.s32 %s36, %s43
      %p501 = scmp.eq.s32.totalorder %s500, 0
      %s503 = sadd.s32 %s502, 1
      %s504 = scalar_select %p501, %s502, %s503
      %p507 = pneg %p501
      %p508 = scmp.eq.s32.totalorder %s36, 1
      %p509 = por %p507, %p508
      %p510 = scmp.ne.s32.totalorder %s502, %s505
      %p511 = scmp.eq.s32.totalorder %s36, 0
      %p512 = por %p510, %p511
      %p513 = scmp.ne.s32.totalorder %s502, %s505
      %p514 = scmp.eq.s32.totalorder %s41, 1
      %p515 = por %p513, %p514
      %p516 = scmp.ne.s32.totalorder %s505, %s506
      %p517 = scmp.eq.s32.totalorder %s41, 0
      %p518 = por %p516, %p517
      %p519 = scmp.ne.s32.totalorder %s505, %s506
      %p520 = scmp.eq.s32.totalorder %s42, 1
      %p521 = por %p519, %p520
      %p523 = scmp.ne.s32.totalorder %s506, %s522
      %p524 = scmp.eq.s32.totalorder %s42, 0
      %p525 = por %p523, %p524
      %p526 = scmp.le.s32.totalorder 1, %s36
      %p527 = scmp.lt.s32.totalorder %s36, 3
      %p528 = pnand %p526, %p527
      %p529 = pneg %p528
      // Predicated region
      $region9: #{tpu_custom_call.1} parent=5 // pred_check
        _
      $region10: #{tpu_custom_call.1} parent=5 // pred_check_branch
        %531 = sbr.rel (%p528) target = $region12
      $region11: #{tpu_custom_call.1} parent=5 // pred_region
        %s532 = ssub.s32 %s36, 1
        // Predicated region
        $region13: #{tpu_custom_call.1} parent=11 // pred_check
          %p533 = pneg %p109
        $region14: #{tpu_custom_call.1} parent=11 // pred_check_branch
          %535 = sbr.rel (%p533) target = $region16
        $region15: #{tpu_custom_call.1} parent=11 // pred_region
          %s537 = ssub.s32 1024, 1024
          %538 = vsyncadd [#allocation3], %s537
          %s539 = sshll.u32 [#allocation2], 4
          %s540 = int_to_ptr.vmem [resolvable:$true] %s539
          %545 = dma.hbm_to_vmem [thread:$0]  %s2, 1024, %s540, [#allocation3], 256, 256, 16
        $region16: #{tpu_custom_call.1} parent=11 // pred_fallthru
          _
        // Predicated region
        $region17: #{tpu_custom_call.1} parent=11 // pred_check
          %p546 = pneg %p130
        $region18: #{tpu_custom_call.1} parent=11 // pred_check_branch
          %548 = sbr.rel (%p546) target = $region20
        $region19: #{tpu_custom_call.1} parent=11 // pred_region
          %s550 = ssub.s32 32, 32
          %551 = vsyncadd [#allocation5], %s550
          %s553 = sshll.u32 [#allocation4], 4
          %s554 = int_to_ptr.vmem [resolvable:$true] %s553
          %556 = dma.hbm_to_vmem [thread:$0]  %s3, 32, %s554, [#allocation5]
        $region20: #{tpu_custom_call.1} parent=11 // pred_fallthru
          _
        // Predicated region
        $region21: #{tpu_custom_call.1} parent=11 // pred_check
          %p557 = pneg %p151
        $region22: #{tpu_custom_call.1} parent=11 // pred_check_branch
          %559 = sbr.rel (%p557) target = $region24
        $region23: #{tpu_custom_call.1} parent=11 // pred_region
          _
        $region24: #{tpu_custom_call.1} parent=11 // pred_fallthru
          _
        // Predicated region
        $region25: #{tpu_custom_call.1} parent=11 // pred_check
          %p560 = pneg %p172
        $region26: #{tpu_custom_call.1} parent=11 // pred_check_branch
          %562 = sbr.rel (%p560) target = $region28
        $region27: #{tpu_custom_call.1} parent=11 // pred_region
          %s564 = ssub.s32 16, 16
          %565 = vsyncadd [#allocation5], %s564
          %s567 = sshll.u32 [#allocation6], 4
          %s568 = int_to_ptr.vmem [resolvable:$true] %s567
          %570 = dma.hbm_to_vmem [thread:$0]  %s5, 16, %s568, [#allocation5]
        $region28: #{tpu_custom_call.1} parent=11 // pred_fallthru
          _
        // Predicated region
        $region29: #{tpu_custom_call.1} parent=11 // pred_check
          %p571 = pneg %p193
        $region30: #{tpu_custom_call.1} parent=11 // pred_check_branch
          %573 = sbr.rel (%p571) target = $region32
        $region31: #{tpu_custom_call.1} parent=11 // pred_region
          %s575 = ssub.s32 2048, 2048
          %576 = vsyncadd [#allocation8], %s575
          %s577 = sshll.u32 [#allocation7], 4
          %s578 = int_to_ptr.vmem [resolvable:$true] %s577
          %583 = dma.hbm_to_vmem [thread:$0]  %s6, 2048, %s578, [#allocation8], 1024, 1024, 64
        $region32: #{tpu_custom_call.1} parent=11 // pred_fallthru
          _
        // Predicated region
        $region33: #{tpu_custom_call.1} parent=11 // pred_check
          %p584 = pneg %p214
        $region34: #{tpu_custom_call.1} parent=11 // pred_check_branch
          %586 = sbr.rel (%p584) target = $region36
        $region35: #{tpu_custom_call.1} parent=11 // pred_region
          %s588 = ssub.s32 128, 128
          %589 = vsyncadd [#allocation8], %s588
          %s591 = sshll.u32 [#allocation9], 4
          %s592 = int_to_ptr.vmem [resolvable:$true] %s591
          %594 = dma.hbm_to_vmem [thread:$0]  %s7, 128, %s592, [#allocation8]
        $region36: #{tpu_custom_call.1} parent=11 // pred_fallthru
          _
        // Predicated region
        $region37: #{tpu_custom_call.1} parent=11 // pred_check
          %p595 = pneg %p235
        $region38: #{tpu_custom_call.1} parent=11 // pred_check_branch
          %597 = sbr.rel (%p595) target = $region40
        $region39: #{tpu_custom_call.1} parent=11 // pred_region
          %s599 = ssub.s32 65536, 65536
          %600 = vsyncadd [#allocation11], %s599
          %s601 = sshll.u32 [#allocation10], 4
          %s602 = int_to_ptr.vmem [resolvable:$true] %s601
          %607 = dma.hbm_to_vmem [thread:$0]  %s8, 65536, %s602, [#allocation11], 512, 512, 32
        $region40: #{tpu_custom_call.1} parent=11 // pred_fallthru
          _
        // Predicated region
        $region41: #{tpu_custom_call.1} parent=11 // pred_check
          %p608 = pneg %p256
        $region42: #{tpu_custom_call.1} parent=11 // pred_check_branch
          %610 = sbr.rel (%p608) target = $region44
        $region43: #{tpu_custom_call.1} parent=11 // pred_region
          %s612 = ssub.s32 64, 64
          %613 = vsyncadd [#allocation11], %s612
          %s615 = sshll.u32 [#allocation12], 4
          %s616 = int_to_ptr.vmem [resolvable:$true] %s615
          %618 = dma.hbm_to_vmem [thread:$0]  %s9, 64, %s616, [#allocation11]
        $region44: #{tpu_custom_call.1} parent=11 // pred_fallthru
          _
        // Predicated region
        $region45: #{tpu_custom_call.1} parent=11 // pred_check
          %p619 = pneg %p277
        $region46: #{tpu_custom_call.1} parent=11 // pred_check_branch
          %621 = sbr.rel (%p619) target = $region48
        $region47: #{tpu_custom_call.1} parent=11 // pred_region
          %s623 = ssub.s32 16384, 16384
          %624 = vsyncadd [#allocation14], %s623
          %s625 = sshll.u32 [#allocation13], 4
          %s626 = int_to_ptr.vmem [resolvable:$true] %s625
          %631 = dma.hbm_to_vmem [thread:$0]  %s10, 16384, %s626, [#allocation14], 256, 256, 16
        $region48: #{tpu_custom_call.1} parent=11 // pred_fallthru
          _
        // Predicated region
        $region49: #{tpu_custom_call.1} parent=11 // pred_check
          %p632 = pneg %p298
        $region50: #{tpu_custom_call.1} parent=11 // pred_check_branch
          %634 = sbr.rel (%p632) target = $region52
        $region51: #{tpu_custom_call.1} parent=11 // pred_region
          %s636 = ssub.s32 32, 32
          %637 = vsyncadd [#allocation14], %s636
          %s639 = sshll.u32 [#allocation15], 4
          %s640 = int_to_ptr.vmem [resolvable:$true] %s639
          %642 = dma.hbm_to_vmem [thread:$0]  %s11, 32, %s640, [#allocation14]
        $region52: #{tpu_custom_call.1} parent=11 // pred_fallthru
          _
        // Predicated region
        $region53: #{tpu_custom_call.1} parent=11 // pred_check
          %p643 = pneg %p319
        $region54: #{tpu_custom_call.1} parent=11 // pred_check_branch
          %645 = sbr.rel (%p643) target = $region56
        $region55: #{tpu_custom_call.1} parent=11 // pred_region
          %s647 = ssub.s32 512, 512
          %648 = vsyncadd [#allocation17], %s647
          %s649 = sshll.u32 [#allocation16], 4
          %s650 = int_to_ptr.vmem [resolvable:$true] %s649
          %655 = dma.hbm_to_vmem [thread:$0]  %s12, 512, %s650, [#allocation17], 256, 256, 16
        $region56: #{tpu_custom_call.1} parent=11 // pred_fallthru
          _
        // Predicated region
        $region57: #{tpu_custom_call.1} parent=11 // pred_check
          %p656 = pneg %p340
        $region58: #{tpu_custom_call.1} parent=11 // pred_check_branch
          %658 = sbr.rel (%p656) target = $region60
        $region59: #{tpu_custom_call.1} parent=11 // pred_region
          %s660 = ssub.s32 32, 32
          %661 = vsyncadd [#allocation17], %s660
          %s663 = sshll.u32 [#allocation18], 4
          %s664 = int_to_ptr.vmem [resolvable:$true] %s663
          %666 = dma.hbm_to_vmem [thread:$0]  %s13, 32, %s664, [#allocation17]
        $region60: #{tpu_custom_call.1} parent=11 // pred_fallthru
          _
        // Predicated region
        $region61: #{tpu_custom_call.1} parent=11 // pred_check
          %p667 = pneg %p361
        $region62: #{tpu_custom_call.1} parent=11 // pred_check_branch
          %669 = sbr.rel (%p667) target = $region64
        $region63: #{tpu_custom_call.1} parent=11 // pred_region
          %s671 = ssub.s32 512, 512
          %672 = vsyncadd [#allocation20], %s671
          %s673 = sshll.u32 [#allocation19], 4
          %s674 = int_to_ptr.vmem [resolvable:$true] %s673
          %679 = dma.hbm_to_vmem [thread:$0]  %s14, 512, %s674, [#allocation20], 128, 128, 8
        $region64: #{tpu_custom_call.1} parent=11 // pred_fallthru
          _
        // Predicated region
        $region65: #{tpu_custom_call.1} parent=11 // pred_check
          %p680 = pneg %p382
        $region66: #{tpu_custom_call.1} parent=11 // pred_check_branch
          %682 = sbr.rel (%p680) target = $region68
        $region67: #{tpu_custom_call.1} parent=11 // pred_region
          %s684 = ssub.s32 16, 16
          %685 = vsyncadd [#allocation20], %s684
          %s687 = sshll.u32 [#allocation21], 4
          %s688 = int_to_ptr.vmem [resolvable:$true] %s687
          %690 = dma.hbm_to_vmem [thread:$0]  %s15, 16, %s688, [#allocation20]
        $region68: #{tpu_custom_call.1} parent=11 // pred_fallthru
          _
        // Predicated region
        $region69: #{tpu_custom_call.1} parent=11 // pred_check
          %p691 = pneg %p403
        $region70: #{tpu_custom_call.1} parent=11 // pred_check_branch
          %693 = sbr.rel (%p691) target = $region72
        $region71: #{tpu_custom_call.1} parent=11 // pred_region
          _
        $region72: #{tpu_custom_call.1} parent=11 // pred_fallthru
          _
        // Predicated region
        $region73: #{tpu_custom_call.1} parent=11 // pred_check
          %p694 = pneg %p424
        $region74: #{tpu_custom_call.1} parent=11 // pred_check_branch
          %696 = sbr.rel (%p694) target = $region76
        $region75: #{tpu_custom_call.1} parent=11 // pred_region
          %s698 = ssub.s32 16, 16
          %699 = vsyncadd [#allocation23], %s698
          %s701 = sshll.u32 [#allocation22], 4
          %s702 = int_to_ptr.vmem [resolvable:$true] %s701
          %704 = dma.hbm_to_vmem [thread:$0]  %s17, 16, %s702, [#allocation23]
        $region76: #{tpu_custom_call.1} parent=11 // pred_fallthru
          _
        // Predicated region
        $region77: #{tpu_custom_call.1} parent=11 // pred_check
          %p705 = pneg %p445
        $region78: #{tpu_custom_call.1} parent=11 // pred_check_branch
          %707 = sbr.rel (%p705) target = $region80
        $region79: #{tpu_custom_call.1} parent=11 // pred_region
          _
        $region80: #{tpu_custom_call.1} parent=11 // pred_fallthru
          _
        // Predicated region
        $region81: #{tpu_custom_call.1} parent=11 // pred_check
          %p708 = pneg %p466
        $region82: #{tpu_custom_call.1} parent=11 // pred_check_branch
          %710 = sbr.rel (%p708) target = $region84
        $region83: #{tpu_custom_call.1} parent=11 // pred_region
          %s712 = ssub.s32 16, 16
          %713 = vsyncadd [#allocation23], %s712
          %s715 = sshll.u32 [#allocation24], 4
          %s716 = int_to_ptr.vmem [resolvable:$true] %s715
          %718 = dma.hbm_to_vmem [thread:$0]  %s19, 16, %s716, [#allocation23]
        $region84: #{tpu_custom_call.1} parent=11 // pred_fallthru
          _
      $region12: #{tpu_custom_call.1} parent=5 // pred_fallthru
        _
      %p719 = scmp.lt.s32.totalorder %s36, 2
      // Predicated region
      $region85: #{tpu_custom_call.1} parent=5 // pred_check
        %p720 = pneg %p719
      $region86: #{tpu_custom_call.1} parent=5 // pred_check_branch
        %722 = sbr.rel (%p720) target = $region88
      $region87: #{tpu_custom_call.1} parent=5 // pred_region
        // Predicated region
        $region89: #{tpu_custom_call.1} parent=87 // pred_check
          %p723 = pneg %p56
        $region90: #{tpu_custom_call.1} parent=87 // pred_check_branch
          %725 = sbr.rel (%p723) target = $region92
        $region91: #{tpu_custom_call.1} parent=87 // pred_region
          %s726 = smul.u32 16, %s36
          %p727 = scmp.lt.s32.totalorder %s726, 31
          %s728 = scalar_select %p727, %s726, 31
          %s729 = smul.addr %s728, 8
          %s730 = scalar_lea.vmem %s0, %s729
          %s731 = smul.u32 16, %s36
        $region92: #{tpu_custom_call.1} parent=87 // pred_fallthru
          _
        // Predicated region
        $region93: #{tpu_custom_call.1} parent=87 // pred_check
          %p732 = pneg %p82
        $region94: #{tpu_custom_call.1} parent=87 // pred_check_branch
          %734 = sbr.rel (%p732) target = $region96
        $region95: #{tpu_custom_call.1} parent=87 // pred_region
          %s735 = smul.u32 16, %s36
          %p736 = scmp.lt.s32.totalorder %s735, 31
          %s737 = scalar_select %p736, %s735, 31
          %s738 = smul.addr %s737, 8
          %s739 = scalar_lea.vmem %s1, %s738
          %s740 = smul.u32 16, %s36
        $region96: #{tpu_custom_call.1} parent=87 // pred_fallthru
          _
      $region88: #{tpu_custom_call.1} parent=5 // pred_fallthru
        _
      %p741 = scmp.le.s32.totalorder 1, %s36
      %p742 = scmp.lt.s32.totalorder %s36, 3
      %p743 = pnand %p741, %p742
      %p744 = pneg %p743
      // Predicated region
      $region97: #{tpu_custom_call.1} parent=5 // pred_check
        _
      $region98: #{tpu_custom_call.1} parent=5 // pred_check_branch
        %746 = sbr.rel (%p743) target = $region100
      $region99: #{tpu_custom_call.1} parent=5 // pred_region
        %s747 = ssub.s32 %s36, 1
        // Predicated region
        $region101: #{tpu_custom_call.1} parent=99 // pred_check
          %p748 = pneg %p109
        $region102: #{tpu_custom_call.1} parent=99 // pred_check_branch
          %750 = sbr.rel (%p748) target = $region104
        $region103: #{tpu_custom_call.1} parent=99 // pred_region
          %751 = dma.done [#allocation3], 1024
        $region104: #{tpu_custom_call.1} parent=99 // pred_fallthru
          _
        // Predicated region
        $region105: #{tpu_custom_call.1} parent=99 // pred_check
          %p752 = pneg %p130
        $region106: #{tpu_custom_call.1} parent=99 // pred_check_branch
          %754 = sbr.rel (%p752) target = $region108
        $region107: #{tpu_custom_call.1} parent=99 // pred_region
          %755 = dma.done [#allocation5], 32
        $region108: #{tpu_custom_call.1} parent=99 // pred_fallthru
          _
        // Predicated region
        $region109: #{tpu_custom_call.1} parent=99 // pred_check
          %p756 = pneg %p172
        $region110: #{tpu_custom_call.1} parent=99 // pred_check_branch
          %758 = sbr.rel (%p756) target = $region112
        $region111: #{tpu_custom_call.1} parent=99 // pred_region
          %759 = dma.done [#allocation5], 16
        $region112: #{tpu_custom_call.1} parent=99 // pred_fallthru
          _
        // Predicated region
        $region113: #{tpu_custom_call.1} parent=99 // pred_check
          %p760 = pneg %p193
        $region114: #{tpu_custom_call.1} parent=99 // pred_check_branch
          %762 = sbr.rel (%p760) target = $region116
        $region115: #{tpu_custom_call.1} parent=99 // pred_region
          %763 = dma.done [#allocation8], 2048
        $region116: #{tpu_custom_call.1} parent=99 // pred_fallthru
          _
        // Predicated region
        $region117: #{tpu_custom_call.1} parent=99 // pred_check
          %p764 = pneg %p214
        $region118: #{tpu_custom_call.1} parent=99 // pred_check_branch
          %766 = sbr.rel (%p764) target = $region120
        $region119: #{tpu_custom_call.1} parent=99 // pred_region
          %767 = dma.done [#allocation8], 128
        $region120: #{tpu_custom_call.1} parent=99 // pred_fallthru
          _
        // Predicated region
        $region121: #{tpu_custom_call.1} parent=99 // pred_check
          %p768 = pneg %p235
        $region122: #{tpu_custom_call.1} parent=99 // pred_check_branch
          %770 = sbr.rel (%p768) target = $region124
        $region123: #{tpu_custom_call.1} parent=99 // pred_region
          %771 = dma.done [#allocation11], 65536
        $region124: #{tpu_custom_call.1} parent=99 // pred_fallthru
          _
        // Predicated region
        $region125: #{tpu_custom_call.1} parent=99 // pred_check
          %p772 = pneg %p256
        $region126: #{tpu_custom_call.1} parent=99 // pred_check_branch
          %774 = sbr.rel (%p772) target = $region128
        $region127: #{tpu_custom_call.1} parent=99 // pred_region
          %775 = dma.done [#allocation11], 64
        $region128: #{tpu_custom_call.1} parent=99 // pred_fallthru
          _
        // Predicated region
        $region129: #{tpu_custom_call.1} parent=99 // pred_check
          %p776 = pneg %p277
        $region130: #{tpu_custom_call.1} parent=99 // pred_check_branch
          %778 = sbr.rel (%p776) target = $region132
        $region131: #{tpu_custom_call.1} parent=99 // pred_region
          %779 = dma.done [#allocation14], 16384
        $region132: #{tpu_custom_call.1} parent=99 // pred_fallthru
          _
        // Predicated region
        $region133: #{tpu_custom_call.1} parent=99 // pred_check
          %p780 = pneg %p298
        $region134: #{tpu_custom_call.1} parent=99 // pred_check_branch
          %782 = sbr.rel (%p780) target = $region136
        $region135: #{tpu_custom_call.1} parent=99 // pred_region
          %783 = dma.done [#allocation14], 32
        $region136: #{tpu_custom_call.1} parent=99 // pred_fallthru
          _
        // Predicated region
        $region137: #{tpu_custom_call.1} parent=99 // pred_check
          %p784 = pneg %p319
        $region138: #{tpu_custom_call.1} parent=99 // pred_check_branch
          %786 = sbr.rel (%p784) target = $region140
        $region139: #{tpu_custom_call.1} parent=99 // pred_region
          %787 = dma.done [#allocation17], 512
        $region140: #{tpu_custom_call.1} parent=99 // pred_fallthru
          _
        // Predicated region
        $region141: #{tpu_custom_call.1} parent=99 // pred_check
          %p788 = pneg %p340
        $region142: #{tpu_custom_call.1} parent=99 // pred_check_branch
          %790 = sbr.rel (%p788) target = $region144
        $region143: #{tpu_custom_call.1} parent=99 // pred_region
          %791 = dma.done [#allocation17], 32
        $region144: #{tpu_custom_call.1} parent=99 // pred_fallthru
          _
        // Predicated region
        $region145: #{tpu_custom_call.1} parent=99 // pred_check
          %p792 = pneg %p361
        $region146: #{tpu_custom_call.1} parent=99 // pred_check_branch
          %794 = sbr.rel (%p792) target = $region148
        $region147: #{tpu_custom_call.1} parent=99 // pred_region
          %795 = dma.done [#allocation20], 512
        $region148: #{tpu_custom_call.1} parent=99 // pred_fallthru
          _
        // Predicated region
        $region149: #{tpu_custom_call.1} parent=99 // pred_check
          %p796 = pneg %p382
        $region150: #{tpu_custom_call.1} parent=99 // pred_check_branch
          %798 = sbr.rel (%p796) target = $region152
        $region151: #{tpu_custom_call.1} parent=99 // pred_region
          %799 = dma.done [#allocation20], 16
        $region152: #{tpu_custom_call.1} parent=99 // pred_fallthru
          _
        // Predicated region
        $region153: #{tpu_custom_call.1} parent=99 // pred_check
          %p800 = pneg %p424
        $region154: #{tpu_custom_call.1} parent=99 // pred_check_branch
          %802 = sbr.rel (%p800) target = $region156
        $region155: #{tpu_custom_call.1} parent=99 // pred_region
          %803 = dma.done [#allocation23], 16
        $region156: #{tpu_custom_call.1} parent=99 // pred_fallthru
          _
        // Predicated region
        $region157: #{tpu_custom_call.1} parent=99 // pred_check
          %p804 = pneg %p466
        $region158: #{tpu_custom_call.1} parent=99 // pred_check_branch
          %806 = sbr.rel (%p804) target = $region160
        $region159: #{tpu_custom_call.1} parent=99 // pred_region
          %807 = dma.done [#allocation23], 16
        $region160: #{tpu_custom_call.1} parent=99 // pred_fallthru
          _
        %s808 = smul.u32 16, %s41
        %p809 = scmp.lt.s32.totalorder %s808, 31
        %s810 = scalar_select %p809, %s808, 31
        %s811 = smul.addr %s810, 8
        %s812 = scalar_lea.vmem %s0, %s811
        %p813 = pneg %p62
        %p814 = pneg %p59
        %s815 = smul.u32 16, %s41
        %p816 = scmp.lt.s32.totalorder %s815, 31
        %s817 = scalar_select %p816, %s815, 31
        %s818 = smul.addr %s817, 8
        %s819 = scalar_lea.vmem %s1, %s818
        %p820 = pneg %p88
        %p821 = pneg %p85
        %p822 = pneg %p109
        %p823 = pneg %p106
        %p824 = pneg %p130
        %p825 = pneg %p127
        %p826 = pneg %p151
        %p827 = pneg %p148
        %p828 = pneg %p172
        %p829 = pneg %p169
        %p830 = pneg %p193
        %p831 = pneg %p190
        %p832 = pneg %p214
        %p833 = pneg %p211
        %p834 = pneg %p235
        %p835 = pneg %p232
        %p836 = pneg %p256
        %p837 = pneg %p253
        %p838 = pneg %p277
        %p839 = pneg %p274
        %p840 = pneg %p298
        %p841 = pneg %p295
        %p842 = pneg %p319
        %p843 = pneg %p316
        %p844 = pneg %p340
        %p845 = pneg %p337
        %p846 = pneg %p361
        %p847 = pneg %p358
        %p848 = pneg %p382
        %p849 = pneg %p379
        %p850 = pneg %p403
        %p851 = pneg %p400
        %p852 = pneg %p424
        %p853 = pneg %p421
        %p854 = pneg %p445
        %p855 = pneg %p442
        %p856 = pneg %p466
        %p857 = pneg %p463
        %p858 = pneg %p492
        %p859 = pneg %p489
        %s860 = smul.u32 16, %s41
        %p861 = scmp.lt.s32.totalorder %s860, 31
        %s862 = scalar_select %p861, %s860, 31
        %s863 = smul.addr %s862, 8
        %s864 = scalar_lea.vmem %s20, %s863
        %p865 = pneg %p518
        %p866 = pneg %p515
        %s867 = smul.u32 16, %s41
        %p868 = scmp.lt.s32.totalorder %s867, 31
        %s869 = scalar_select %p868, %s867, 31
        %s870 = smul.addr %s869, 8
        %s871 = scalar_lea.vmem %s21, %s870
        %s872 = smul.u32 16, %s41
        %p873 = scmp.lt.s32.totalorder %s872, 31
        %s874 = scalar_select %p873, %s872, 31
        %s875 = smul.addr %s874, 8
        %s876 = scalar_lea.vmem %s0, %s875
        %s877 = smul.u32 16, %s41
        %s878 = smul.u32 16, %s41
        %p879 = scmp.lt.s32.totalorder %s878, 31
        %s880 = scalar_select %p879, %s878, 31
        %s881 = smul.addr %s880, 8
        %s882 = scalar_lea.vmem %s1, %s881
        %s883 = smul.u32 16, %s41
        %s884 = smul.u32 16, %s41
        %p885 = scmp.lt.s32.totalorder %s884, 31
        %s886 = scalar_select %p885, %s884, 31
        %s887 = smul.addr %s886, 8
        %s888 = scalar_lea.vmem %s20, %s887
        %s889 = smul.u32 16, %s41
        %s890 = smul.u32 16, %s41
        %p891 = scmp.lt.s32.totalorder %s890, 31
        %s892 = scalar_select %p891, %s890, 31
        %s893 = smul.addr %s892, 8
        %s894 = scalar_lea.vmem %s21, %s893
        %s895 = smul.u32 16, %s41
        %v896 = vld [vmem:[%s876] sm:$0xff]
        %v897 = vld [vmem:[%s876 + $0x8] sm:$0xff]
        %v898 = vld [vmem:[%s876 + $0x10] sm:$0xff]
        %v899 = vld [vmem:[%s876 + $0x18] sm:$0xff]
        %v900 = vld [vmem:[%s876 + $0x20] sm:$0xff]
        %v901 = vld [vmem:[%s876 + $0x28] sm:$0xff]
        %v902 = vld [vmem:[%s876 + $0x30] sm:$0xff]
        %v903 = vld [vmem:[%s876 + $0x38] sm:$0xff]
        %v904 = vld [vmem:[%s876 + $0x40] sm:$0xff]
        %v905 = vld [vmem:[%s876 + $0x48] sm:$0xff]
        %v906 = vld [vmem:[%s876 + $0x50] sm:$0xff]
        %v907 = vld [vmem:[%s876 + $0x58] sm:$0xff]
        %v908 = vld [vmem:[%s876 + $0x60] sm:$0xff]
        %v909 = vld [vmem:[%s876 + $0x68] sm:$0xff]
        %v910 = vld [vmem:[%s876 + $0x70] sm:$0xff]
        %v911 = vld [vmem:[%s876 + $0x78] sm:$0xff]
        %v912 = vmul.f32 %v896, %v896
        %v913 = vmul.f32 %v897, %v897
        %v914 = vmul.f32 %v898, %v898
        %v915 = vmul.f32 %v899, %v899
        %v916 = vmul.f32 %v900, %v900
        %v917 = vmul.f32 %v901, %v901
        %v918 = vmul.f32 %v902, %v902
        %v919 = vmul.f32 %v903, %v903
        %v920 = vmul.f32 %v904, %v904
        %v921 = vmul.f32 %v905, %v905
        %v922 = vmul.f32 %v906, %v906
        %v923 = vmul.f32 %v907, %v907
        %v924 = vmul.f32 %v908, %v908
        %v925 = vmul.f32 %v909, %v909
        %v926 = vmul.f32 %v910, %v910
        %v927 = vmul.f32 %v911, %v911
        %vm928 = vcmask 261120
        %v929 = vsel %vm928, %v912, 0.0
        %930 = vadd.xlane.f32.xlu0 %v929
        %v931 = vpop.xlane.xlu0 %930
        %v932 = vsel %vm928, %v913, 0.0
        %933 = vadd.xlane.f32.xlu0 %v932
        %v934 = vpop.xlane.xlu0 %933
        %v935 = vsel %vm928, %v914, 0.0
        %936 = vadd.xlane.f32.xlu0 %v935
        %v937 = vpop.xlane.xlu0 %936
        %v938 = vsel %vm928, %v915, 0.0
        %939 = vadd.xlane.f32.xlu0 %v938
        %v940 = vpop.xlane.xlu0 %939
        %v941 = vsel %vm928, %v916, 0.0
        %942 = vadd.xlane.f32.xlu0 %v941
        %v943 = vpop.xlane.xlu0 %942
        %v944 = vsel %vm928, %v917, 0.0
        %945 = vadd.xlane.f32.xlu0 %v944
        %v946 = vpop.xlane.xlu0 %945
        %v947 = vsel %vm928, %v918, 0.0
        %948 = vadd.xlane.f32.xlu0 %v947
        %v949 = vpop.xlane.xlu0 %948
        %v950 = vsel %vm928, %v919, 0.0
        %951 = vadd.xlane.f32.xlu0 %v950
        %v952 = vpop.xlane.xlu0 %951
        %v953 = vsel %vm928, %v920, 0.0
        %954 = vadd.xlane.f32.xlu0 %v953
        %v955 = vpop.xlane.xlu0 %954
        %v956 = vsel %vm928, %v921, 0.0
        %957 = vadd.xlane.f32.xlu0 %v956
        %v958 = vpop.xlane.xlu0 %957
        %v959 = vsel %vm928, %v922, 0.0
        %960 = vadd.xlane.f32.xlu0 %v959
        %v961 = vpop.xlane.xlu0 %960
        %v962 = vsel %vm928, %v923, 0.0
        %963 = vadd.xlane.f32.xlu0 %v962
        %v964 = vpop.xlane.xlu0 %963
        %v965 = vsel %vm928, %v924, 0.0
        %966 = vadd.xlane.f32.xlu0 %v965
        %v967 = vpop.xlane.xlu0 %966
        %v968 = vsel %vm928, %v925, 0.0
        %969 = vadd.xlane.f32.xlu0 %v968
        %v970 = vpop.xlane.xlu0 %969
        %v971 = vsel %vm928, %v926, 0.0
        %972 = vadd.xlane.f32.xlu0 %v971
        %v973 = vpop.xlane.xlu0 %972
        %v974 = vsel %vm928, %v927, 0.0
        %975 = vadd.xlane.f32.xlu0 %v974
        %v976 = vpop.xlane.xlu0 %975
        %v977 = vmax.f32 %v931, 1e-24
        %v978 = vmax.f32 %v934, 1e-24
        %v979 = vmax.f32 %v937, 1e-24
        %v980 = vmax.f32 %v940, 1e-24
        %v981 = vmax.f32 %v943, 1e-24
        %v982 = vmax.f32 %v946, 1e-24
        %v983 = vmax.f32 %v949, 1e-24
        %v984 = vmax.f32 %v952, 1e-24
        %v985 = vmax.f32 %v955, 1e-24
        %v986 = vmax.f32 %v958, 1e-24
        %v987 = vmax.f32 %v961, 1e-24
        %v988 = vmax.f32 %v964, 1e-24
        %v989 = vmax.f32 %v967, 1e-24
        %v990 = vmax.f32 %v970, 1e-24
        %v991 = vmax.f32 %v973, 1e-24
        %v992 = vmax.f32 %v976, 1e-24
        %v993 = vrsqrt.pop %v977
        %v994 = vrsqrt.pop %v978
        %v995 = vrsqrt.pop %v979
        %v996 = vrsqrt.pop %v980
        %v997 = vrsqrt.pop %v981
        %v998 = vrsqrt.pop %v982
        %v999 = vrsqrt.pop %v983
        %v1000 = vrsqrt.pop %v984
        %v1001 = vrsqrt.pop %v985
        %v1002 = vrsqrt.pop %v986
        %v1003 = vrsqrt.pop %v987
        %v1004 = vrsqrt.pop %v988
        %v1005 = vrsqrt.pop %v989
        %v1006 = vrsqrt.pop %v990
        %v1007 = vrsqrt.pop %v991
        %v1008 = vrsqrt.pop %v992
        %v1009 = vmul.f32 %v896, %v993
        %v1010 = vmul.f32 %v897, %v994
        %v1011 = vmul.f32 %v898, %v995
        %v1012 = vmul.f32 %v899, %v996
        %v1013 = vmul.f32 %v900, %v997
        %v1014 = vmul.f32 %v901, %v998
        %v1015 = vmul.f32 %v902, %v999
        %v1016 = vmul.f32 %v903, %v1000
        %v1017 = vmul.f32 %v904, %v1001
        %v1018 = vmul.f32 %v905, %v1002
        %v1019 = vmul.f32 %v906, %v1003
        %v1020 = vmul.f32 %v907, %v1004
        %v1021 = vmul.f32 %v908, %v1005
        %v1022 = vmul.f32 %v909, %v1006
        %v1023 = vmul.f32 %v910, %v1007
        %v1024 = vmul.f32 %v911, %v1008
        %v1025 = vld [vmem:[#allocation2] sm:$0xff]
        %v1026 = vld [vmem:[#allocation2 + $0x8] sm:$0xff]
        %v1027 = vld [vmem:[#allocation2 + $0x10] sm:$0xff]
        %v1028 = vld [vmem:[#allocation2 + $0x18] sm:$0xff]
        %v1029 = vld [vmem:[#allocation2 + $0x20] sm:$0xff]
        %v1030 = vld [vmem:[#allocation2 + $0x28] sm:$0xff]
        %v1031 = vld [vmem:[#allocation2 + $0x30] sm:$0xff]
        %v1032 = vld [vmem:[#allocation2 + $0x38] sm:$0xff]
        %v1033 = vld [vmem:[#allocation4] sm:$0x3]
        %v1035 = vlaneseq
        %v1036 = vshrl.u32 %v1035, 7
        %v1037 = vsub.s32 0, %v1036
        %v1038 = vrot.slane %v1033, %v1037
        %v1039 = vlaneseq
        %v1040 = vshrl.u32 %v1039, 7
        %v1041 = vsub.s32 1, %v1040
        %v1042 = vrot.slane %v1033, %v1041
        %v1046 = vsel %vm928, %v1009, 0
        %v1049 = vsel %vm928, %v1010, 0
        %v1052 = vsel %vm928, %v1011, 0
        %v1055 = vsel %vm928, %v1012, 0
        %v1058 = vsel %vm928, %v1013, 0
        %v1061 = vsel %vm928, %v1014, 0
        %v1064 = vsel %vm928, %v1015, 0
        %v1067 = vsel %vm928, %v1016, 0
        %v1070 = vsel %vm928, %v1017, 0
        %v1073 = vsel %vm928, %v1018, 0
        %v1076 = vsel %vm928, %v1019, 0
        %v1079 = vsel %vm928, %v1020, 0
        %v1082 = vsel %vm928, %v1021, 0
        %v1085 = vsel %vm928, %v1022, 0
        %v1088 = vsel %vm928, %v1023, 0
        %v1091 = vsel %vm928, %v1024, 0
        %1093 = vmatprep.subr.mxu0 %v1026
        %1094 = vmatpush1.msra.mxu0 %v1025
        %1095 = vmatprep.subr.mxu0 %v1028
        %1096 = vmatpush1.msra.mxu0 %v1027
        %1097 = vmatprep.subr.mxu0 %v1030
        %1098 = vmatpush1.msra.mxu0 %v1029
        %1099 = vmatprep.subr.mxu0 %v1032
        %1100 = vmatpush1.msra.mxu0 %v1031
        %1101 = vmatprep.subr.mxu0 0.0
        %1102 = vmatpush1.msra.mxu0 0.0
        %1103 = vmatprep.subr.mxu0 0.0
        %1104 = vmatpush1.msra.mxu0 0.0
        %1105 = vmatprep.subr.mxu0 0.0
        %1106 = vmatpush1.msra.mxu0 0.0
        %1107 = vmatprep.subr.mxu0 0.0
        %1108 = vmatpush1.msra.mxu0 0.0
        %1109 = vmatprep.subr.mxu0 0.0
        %1110 = vmatpush1.msra.mxu0 0.0
        %1111 = vmatprep.subr.mxu0 0.0
        %1112 = vmatpush1.msra.mxu0 0.0
        %1113 = vmatprep.subr.mxu0 0.0
        %1114 = vmatpush1.msra.mxu0 0.0
        %1115 = vmatprep.subr.mxu0 0.0
        %1116 = vmatpush1.msra.mxu0 0.0
        %1117 = vmatprep.subr.mxu0 0.0
        %1118 = vmatpush1.msra.mxu0 0.0
        %1119 = vmatprep.subr.mxu0 0.0
        %1120 = vmatpush1.msra.mxu0 0.0
        %1121 = vmatprep.subr.mxu0 0.0
        %1122 = vmatpush1.msra.mxu0 0.0
        %1123 = vmatprep.subr.mxu0 0.0
        %1124 = vmatpush1.msra.mxu0 0.0
        %1125 = vmatprep.subr.mxu0 0.0
        %1126 = vmatpush1.msra.mxu0 0.0
        %1127 = vmatprep.subr.mxu0 0.0
        %1128 = vmatpush1.msra.mxu0 0.0
        %1129 = vmatprep.subr.mxu0 0.0
        %1130 = vmatpush1.msra.mxu0 0.0
        %1131 = vmatprep.subr.mxu0 0.0
        %1132 = vmatpush1.msra.mxu0 0.0
        %1133 = vmatprep.subr.mxu0 0.0
        %1134 = vmatpush1.msra.mxu0 0.0
        %1135 = vmatprep.subr.mxu0 0.0
        %1136 = vmatpush1.msra.mxu0 0.0
        %1137 = vmatprep.subr.mxu0 0.0
        %1138 = vmatpush1.msra.mxu0 0.0
        %1139 = vmatprep.subr.mxu0 0.0
        %1140 = vmatpush1.msra.mxu0 0.0
        %1141 = vmatprep.subr.mxu0 0.0
        %1142 = vmatpush1.msra.mxu0 0.0
        %1143 = vmatprep.subr.mxu0 0.0
        %1144 = vmatpush1.msra.mxu0 0.0
        %1145 = vmatprep.subr.mxu0 0.0
        %1146 = vmatpush1.msra.mxu0 0.0
        %1147 = vmatprep.subr.mxu0 0.0
        %1148 = vmatpush1.msra.mxu0 0.0
        %1149 = vmatprep.subr.mxu0 0.0
        %1150 = vmatpush1.msra.mxu0 0.0
        %1151 = vmatprep.subr.mxu0 0.0
        %1152 = vmatpush1.msra.mxu0 0.0
        %1153 = vmatprep.subr.mxu0 0.0
        %1154 = vmatpush1.msra.mxu0 0.0
        %1155 = vmatprep.subr.mxu0 0.0
        %1156 = vmatpush1.msra.mxu0 0.0
        %1157 = vmatprep.mubr.f32.mxu0 0.0
        %1158 = vmatmul.mubr.f32.gmra.mrb[0].mxu0 %v1046
        %v1159 = vpop.f32.mrb[0].mxu0
        %v1160 = vadd.f32 %v1038, %v1159
        %v1161 = vpop.f32.mrb[0].mxu0
        %v1162 = vadd.f32 %v1042, %v1161
        %1163 = vmatprep.mubr.f32.mxu0 0.0
        %1164 = vmatmul.mubr.f32.gmra.mrb[0].mxu0 %v1049
        %v1165 = vpop.f32.mrb[0].mxu0
        %v1166 = vadd.f32 %v1038, %v1165
        %v1167 = vpop.f32.mrb[0].mxu0
        %v1168 = vadd.f32 %v1042, %v1167
        %1169 = vmatprep.mubr.f32.mxu0 0.0
        %1170 = vmatmul.mubr.f32.gmra.mrb[0].mxu0 %v1052
        %v1171 = vpop.f32.mrb[0].mxu0
        %v1172 = vadd.f32 %v1038, %v1171
        %v1173 = vpop.f32.mrb[0].mxu0
        %v1174 = vadd.f32 %v1042, %v1173
        %1175 = vmatprep.mubr.f32.mxu0 0.0
        %1176 = vmatmul.mubr.f32.gmra.mrb[0].mxu0 %v1055
        %v1177 = vpop.f32.mrb[0].mxu0
        %v1178 = vadd.f32 %v1038, %v1177
        %v1179 = vpop.f32.mrb[0].mxu0
        %v1180 = vadd.f32 %v1042, %v1179
        %1181 = vmatprep.mubr.f32.mxu0 0.0
        %1182 = vmatmul.mubr.f32.gmra.mrb[0].mxu0 %v1058
        %v1183 = vpop.f32.mrb[0].mxu0
        %v1184 = vadd.f32 %v1038, %v1183
        %v1185 = vpop.f32.mrb[0].mxu0
        %v1186 = vadd.f32 %v1042, %v1185
        %1187 = vmatprep.mubr.f32.mxu0 0.0
        %1188 = vmatmul.mubr.f32.gmra.mrb[0].mxu0 %v1061
        %v1189 = vpop.f32.mrb[0].mxu0
        %v1190 = vadd.f32 %v1038, %v1189
        %v1191 = vpop.f32.mrb[0].mxu0
        %v1192 = vadd.f32 %v1042, %v1191
        %1193 = vmatprep.mubr.f32.mxu0 0.0
        %1194 = vmatmul.mubr.f32.gmra.mrb[0].mxu0 %v1064
        %v1195 = vpop.f32.mrb[0].mxu0
        %v1196 = vadd.f32 %v1038, %v1195
        %v1197 = vpop.f32.mrb[0].mxu0
        %v1198 = vadd.f32 %v1042, %v1197
        %1199 = vmatprep.mubr.f32.mxu0 0.0
        %1200 = vmatmul.mubr.f32.gmra.mrb[0].mxu0 %v1067
        %v1201 = vpop.f32.mrb[0].mxu0
        %v1202 = vadd.f32 %v1038, %v1201
        %v1203 = vpop.f32.mrb[0].mxu0
        %v1204 = vadd.f32 %v1042, %v1203
        %1205 = vmatprep.mubr.f32.mxu0 0.0
        %1206 = vmatmul.mubr.f32.gmra.mrb[0].mxu0 %v1070
        %v1207 = vpop.f32.mrb[0].mxu0
        %v1208 = vadd.f32 %v1038, %v1207
        %v1209 = vpop.f32.mrb[0].mxu0
        %v1210 = vadd.f32 %v1042, %v1209
        %1211 = vmatprep.mubr.f32.mxu0 0.0
        %1212 = vmatmul.mubr.f32.gmra.mrb[0].mxu0 %v1073
        %v1213 = vpop.f32.mrb[0].mxu0
        %v1214 = vadd.f32 %v1038, %v1213
        %v1215 = vpop.f32.mrb[0].mxu0
        %v1216 = vadd.f32 %v1042, %v1215
        %1217 = vmatprep.mubr.f32.mxu0 0.0
        %1218 = vmatmul.mubr.f32.gmra.mrb[0].mxu0 %v1076
        %v1219 = vpop.f32.mrb[0].mxu0
        %v1220 = vadd.f32 %v1038, %v1219
        %v1221 = vpop.f32.mrb[0].mxu0
        %v1222 = vadd.f32 %v1042, %v1221
        %1223 = vmatprep.mubr.f32.mxu0 0.0
        %1224 = vmatmul.mubr.f32.gmra.mrb[0].mxu0 %v1079
        %v1225 = vpop.f32.mrb[0].mxu0
        %v1226 = vadd.f32 %v1038, %v1225
        %v1227 = vpop.f32.mrb[0].mxu0
        %v1228 = vadd.f32 %v1042, %v1227
        %1229 = vmatprep.mubr.f32.mxu0 0.0
        %1230 = vmatmul.mubr.f32.gmra.mrb[0].mxu0 %v1082
        %v1231 = vpop.f32.mrb[0].mxu0
        %v1232 = vadd.f32 %v1038, %v1231
        %v1233 = vpop.f32.mrb[0].mxu0
        %v1234 = vadd.f32 %v1042, %v1233
        %1235 = vmatprep.mubr.f32.mxu0 0.0
        %1236 = vmatmul.mubr.f32.gmra.mrb[0].mxu0 %v1085
        %v1237 = vpop.f32.mrb[0].mxu0
        %v1238 = vadd.f32 %v1038, %v1237
        %v1239 = vpop.f32.mrb[0].mxu0
        %v1240 = vadd.f32 %v1042, %v1239
        %1241 = vmatprep.mubr.f32.mxu0 0.0
        %1242 = vmatmul.mubr.f32.gmra.mrb[0].mxu0 %v1088
        %v1243 = vpop.f32.mrb[0].mxu0
        %v1244 = vadd.f32 %v1038, %v1243
        %v1245 = vpop.f32.mrb[0].mxu0
        %v1246 = vadd.f32 %v1042, %v1245
        %1247 = vmatprep.mubr.f32.mxu0 0.0
        %1248 = vmatmul.mubr.f32.gmra.mrb[0].mxu0 %v1091
        %v1249 = vpop.f32.mrb[0].mxu0
        %v1250 = vadd.f32 %v1038, %v1249
        %v1251 = vpop.f32.mrb[0].mxu0
        %v1252 = vadd.f32 %v1042, %v1251
        %1253 = vdwg.mxu0
        %vm1254 = vcmp.ge.f32.partialorder %v1160, 0.0
        %vm1255 = vcmp.ge.f32.partialorder %v1162, 0.0
        %vm1256 = vcmp.ge.f32.partialorder %v1166, 0.0
        %vm1257 = vcmp.ge.f32.partialorder %v1168, 0.0
        %vm1258 = vcmp.ge.f32.partialorder %v1172, 0.0
        %vm1259 = vcmp.ge.f32.partialorder %v1174, 0.0
        %vm1260 = vcmp.ge.f32.partialorder %v1178, 0.0
        %vm1261 = vcmp.ge.f32.partialorder %v1180, 0.0
        %vm1262 = vcmp.ge.f32.partialorder %v1184, 0.0
        %vm1263 = vcmp.ge.f32.partialorder %v1186, 0.0
        %vm1264 = vcmp.ge.f32.partialorder %v1190, 0.0
        %vm1265 = vcmp.ge.f32.partialorder %v1192, 0.0
        %vm1266 = vcmp.ge.f32.partialorder %v1196, 0.0
        %vm1267 = vcmp.ge.f32.partialorder %v1198, 0.0
        %vm1268 = vcmp.ge.f32.partialorder %v1202, 0.0
        %vm1269 = vcmp.ge.f32.partialorder %v1204, 0.0
        %vm1270 = vcmp.ge.f32.partialorder %v1208, 0.0
        %vm1271 = vcmp.ge.f32.partialorder %v1210, 0.0
        %vm1272 = vcmp.ge.f32.partialorder %v1214, 0.0
        %vm1273 = vcmp.ge.f32.partialorder %v1216, 0.0
        %vm1274 = vcmp.ge.f32.partialorder %v1220, 0.0
        %vm1275 = vcmp.ge.f32.partialorder %v1222, 0.0
        %vm1276 = vcmp.ge.f32.partialorder %v1226, 0.0
        %vm1277 = vcmp.ge.f32.partialorder %v1228, 0.0
        %vm1278 = vcmp.ge.f32.partialorder %v1232, 0.0
        %vm1279 = vcmp.ge.f32.partialorder %v1234, 0.0
        %vm1280 = vcmp.ge.f32.partialorder %v1238, 0.0
        %vm1281 = vcmp.ge.f32.partialorder %v1240, 0.0
        %vm1282 = vcmp.ge.f32.partialorder %v1244, 0.0
        %vm1283 = vcmp.ge.f32.partialorder %v1246, 0.0
        %vm1284 = vcmp.ge.f32.partialorder %v1250, 0.0
        %vm1285 = vcmp.ge.f32.partialorder %v1252, 0.0
        %v1286 = vmul.f32 %v1160, 0.01
        %v1287 = vmul.f32 %v1162, 0.01
        %v1288 = vmul.f32 %v1166, 0.01
        %v1289 = vmul.f32 %v1168, 0.01
        %v1290 = vmul.f32 %v1172, 0.01
        %v1291 = vmul.f32 %v1174, 0.01
        %v1292 = vmul.f32 %v1178, 0.01
        %v1293 = vmul.f32 %v1180, 0.01
        %v1294 = vmul.f32 %v1184, 0.01
        %v1295 = vmul.f32 %v1186, 0.01
        %v1296 = vmul.f32 %v1190, 0.01
        %v1297 = vmul.f32 %v1192, 0.01
        %v1298 = vmul.f32 %v1196, 0.01
        %v1299 = vmul.f32 %v1198, 0.01
        %v1300 = vmul.f32 %v1202, 0.01
        %v1301 = vmul.f32 %v1204, 0.01
        %v1302 = vmul.f32 %v1208, 0.01
        %v1303 = vmul.f32 %v1210, 0.01
        %v1304 = vmul.f32 %v1214, 0.01
        %v1305 = vmul.f32 %v1216, 0.01
        %v1306 = vmul.f32 %v1220, 0.01
        %v1307 = vmul.f32 %v1222, 0.01
        %v1308 = vmul.f32 %v1226, 0.01
        %v1309 = vmul.f32 %v1228, 0.01
        %v1310 = vmul.f32 %v1232, 0.01
        %v1311 = vmul.f32 %v1234, 0.01
        %v1312 = vmul.f32 %v1238, 0.01
        %v1313 = vmul.f32 %v1240, 0.01
        %v1314 = vmul.f32 %v1244, 0.01
        %v1315 = vmul.f32 %v1246, 0.01
        %v1316 = vmul.f32 %v1250, 0.01
        %v1317 = vmul.f32 %v1252, 0.01
        %v1318 = vsel %vm1254, %v1160, %v1286
        %v1319 = vsel %vm1255, %v1162, %v1287
        %v1320 = vsel %vm1256, %v1166, %v1288
        %v1321 = vsel %vm1257, %v1168, %v1289
        %v1322 = vsel %vm1258, %v1172, %v1290
        %v1323 = vsel %vm1259, %v1174, %v1291
        %v1324 = vsel %vm1260, %v1178, %v1292
        %v1325 = vsel %vm1261, %v1180, %v1293
        %v1326 = vsel %vm1262, %v1184, %v1294
        %v1327 = vsel %vm1263, %v1186, %v1295
        %v1328 = vsel %vm1264, %v1190, %v1296
        %v1329 = vsel %vm1265, %v1192, %v1297
        %v1330 = vsel %vm1266, %v1196, %v1298
        %v1331 = vsel %vm1267, %v1198, %v1299
        %v1332 = vsel %vm1268, %v1202, %v1300
        %v1333 = vsel %vm1269, %v1204, %v1301
        %v1334 = vsel %vm1270, %v1208, %v1302
        %v1335 = vsel %vm1271, %v1210, %v1303
        %v1336 = vsel %vm1272, %v1214, %v1304
        %v1337 = vsel %vm1273, %v1216, %v1305
        %v1338 = vsel %vm1274, %v1220, %v1306
        %v1339 = vsel %vm1275, %v1222, %v1307
        %v1340 = vsel %vm1276, %v1226, %v1308
        %v1341 = vsel %vm1277, %v1228, %v1309
        %v1342 = vsel %vm1278, %v1232, %v1310
        %v1343 = vsel %vm1279, %v1234, %v1311
        %v1344 = vsel %vm1280, %v1238, %v1312
        %v1345 = vsel %vm1281, %v1240, %v1313
        %v1346 = vsel %vm1282, %v1244, %v1314
        %v1347 = vsel %vm1283, %v1246, %v1315
        %v1348 = vsel %vm1284, %v1250, %v1316
        %v1349 = vsel %vm1285, %v1252, %v1317
        %v1350 = vld [vmem:[%s4] sm:$0xff]
        %v1351 = vld [vmem:[%s4 + $0x8] sm:$0xff]
        %v1352 = vld [vmem:[%s4 + $0x10] sm:$0xff]
        %v1353 = vld [vmem:[%s4 + $0x18] sm:$0xff]
        %v1354 = vld [vmem:[%s4 + $0x20] sm:$0xff]
        %v1355 = vld [vmem:[%s4 + $0x28] sm:$0xff]
        %v1356 = vld [vmem:[%s4 + $0x30] sm:$0xff]
        %v1357 = vld [vmem:[%s4 + $0x38] sm:$0xff]
        %v1358 = vld [vmem:[%s4 + $0x40] sm:$0xff]
        %v1359 = vld [vmem:[%s4 + $0x48] sm:$0xff]
        %v1360 = vld [vmem:[%s4 + $0x50] sm:$0xff]
        %v1361 = vld [vmem:[%s4 + $0x58] sm:$0xff]
        %v1362 = vld [vmem:[%s4 + $0x60] sm:$0xff]
        %v1363 = vld [vmem:[%s4 + $0x68] sm:$0xff]
        %v1364 = vld [vmem:[%s4 + $0x70] sm:$0xff]
        %v1365 = vld [vmem:[%s4 + $0x78] sm:$0xff]
        %v1366 = vld [vmem:[%s4 + $0x80] sm:$0xff]
        %v1367 = vld [vmem:[%s4 + $0x88] sm:$0xff]
        %v1368 = vld [vmem:[%s4 + $0x90] sm:$0xff]
        %v1369 = vld [vmem:[%s4 + $0x98] sm:$0xff]
        %v1370 = vld [vmem:[%s4 + $0xa0] sm:$0xff]
        %v1371 = vld [vmem:[%s4 + $0xa8] sm:$0xff]
        %v1372 = vld [vmem:[%s4 + $0xb0] sm:$0xff]
        %v1373 = vld [vmem:[%s4 + $0xb8] sm:$0xff]
        %v1374 = vld [vmem:[%s4 + $0xc0] sm:$0xff]
        %v1375 = vld [vmem:[%s4 + $0xc8] sm:$0xff]
        %v1376 = vld [vmem:[%s4 + $0xd0] sm:$0xff]
        %v1377 = vld [vmem:[%s4 + $0xd8] sm:$0xff]
        %v1378 = vld [vmem:[%s4 + $0xe0] sm:$0xff]
        %v1379 = vld [vmem:[%s4 + $0xe8] sm:$0xff]
        %v1380 = vld [vmem:[%s4 + $0xf0] sm:$0xff]
        %v1381 = vld [vmem:[%s4 + $0xf8] sm:$0xff]
        %v1382 = vld [vmem:[#allocation6] sm:$0x1]
        %v1384 = vlaneseq
        %v1385 = vshrl.u32 %v1384, 7
        %v1386 = vsub.s32 0, %v1385
        %v1387 = vrot.slane %v1382, %v1386
        %1389 = vmatprep.subr.mxu0 0.0
        %1390 = vmatpush1.msra.mxu0 %v1350
        %1391 = vmatprep.subr.mxu0 0.0
        %1392 = vmatpush1.msra.mxu0 %v1351
        %1393 = vmatprep.subr.mxu0 0.0
        %1394 = vmatpush1.msra.mxu0 %v1352
        %1395 = vmatprep.subr.mxu0 0.0
        %1396 = vmatpush1.msra.mxu0 %v1353
        %1397 = vmatprep.subr.mxu0 0.0
        %1398 = vmatpush1.msra.mxu0 %v1354
        %1399 = vmatprep.subr.mxu0 0.0
        %1400 = vmatpush1.msra.mxu0 %v1355
        %1401 = vmatprep.subr.mxu0 0.0
        %1402 = vmatpush1.msra.mxu0 %v1356
        %1403 = vmatprep.subr.mxu0 0.0
        %1404 = vmatpush1.msra.mxu0 %v1357
        %1405 = vmatprep.subr.mxu0 0.0
        %1406 = vmatpush1.msra.mxu0 %v1358
        %1407 = vmatprep.subr.mxu0 0.0
        %1408 = vmatpush1.msra.mxu0 %v1359
        %1409 = vmatprep.subr.mxu0 0.0
        %1410 = vmatpush1.msra.mxu0 %v1360
        %1411 = vmatprep.subr.mxu0 0.0
        %1412 = vmatpush1.msra.mxu0 %v1361
        %1413 = vmatprep.subr.mxu0 0.0
        %1414 = vmatpush1.msra.mxu0 %v1362
        %1415 = vmatprep.subr.mxu0 0.0
        %1416 = vmatpush1.msra.mxu0 %v1363
        %1417 = vmatprep.subr.mxu0 0.0
        %1418 = vmatpush1.msra.mxu0 %v1364
        %1419 = vmatprep.subr.mxu0 0.0
        %1420 = vmatpush1.msra.mxu0 %v1365
        %1421 = vmatprep.subr.mxu0 0.0
        %1422 = vmatpush1.msra.mxu0 %v1366
        %1423 = vmatprep.subr.mxu0 0.0
        %1424 = vmatpush1.msra.mxu0 %v1367
        %1425 = vmatprep.subr.mxu0 0.0
        %1426 = vmatpush1.msra.mxu0 %v1368
        %1427 = vmatprep.subr.mxu0 0.0
        %1428 = vmatpush1.msra.mxu0 %v1369
        %1429 = vmatprep.subr.mxu0 0.0
        %1430 = vmatpush1.msra.mxu0 %v1370
        %1431 = vmatprep.subr.mxu0 0.0
        %1432 = vmatpush1.msra.mxu0 %v1371
        %1433 = vmatprep.subr.mxu0 0.0
        %1434 = vmatpush1.msra.mxu0 %v1372
        %1435 = vmatprep.subr.mxu0 0.0
        %1436 = vmatpush1.msra.mxu0 %v1373
        %1437 = vmatprep.subr.mxu0 0.0
        %1438 = vmatpush1.msra.mxu0 %v1374
        %1439 = vmatprep.subr.mxu0 0.0
        %1440 = vmatpush1.msra.mxu0 %v1375
        %1441 = vmatprep.subr.mxu0 0.0
        %1442 = vmatpush1.msra.mxu0 %v1376
        %1443 = vmatprep.subr.mxu0 0.0
        %1444 = vmatpush1.msra.mxu0 %v1377
        %1445 = vmatprep.subr.mxu0 0.0
        %1446 = vmatpush1.msra.mxu0 %v1378
        %1447 = vmatprep.subr.mxu0 0.0
        %1448 = vmatpush1.msra.mxu0 %v1379
        %1449 = vmatprep.subr.mxu0 0.0
        %1450 = vmatpush1.msra.mxu0 %v1380
        %1451 = vmatprep.subr.mxu0 0.0
        %1452 = vmatpush1.msra.mxu0 %v1381
        %1453 = vmatprep.mubr.f32.mxu0 %v1319
        %1454 = vmatmul.mubr.f32.gmra.mrb[0].mxu0 %v1318
        %v1455 = vpop.f32.mrb[0].mxu0
        %v1456 = vadd.f32 %v1387, %v1455
        %v1457 = vpop.f32.mrb[0].mxu0
        %1458 = vmatprep.mubr.f32.mxu0 %v1321
        %1459 = vmatmul.mubr.f32.gmra.mrb[0].mxu0 %v1320
        %v1460 = vpop.f32.mrb[0].mxu0
        %v1461 = vadd.f32 %v1387, %v1460
        %v1462 = vpop.f32.mrb[0].mxu0
        %1463 = vmatprep.mubr.f32.mxu0 %v1323
        %1464 = vmatmul.mubr.f32.gmra.mrb[0].mxu0 %v1322
        %v1465 = vpop.f32.mrb[0].mxu0
        %v1466 = vadd.f32 %v1387, %v1465
        %v1467 = vpop.f32.mrb[0].mxu0
        %1468 = vmatprep.mubr.f32.mxu0 %v1325
        %1469 = vmatmul.mubr.f32.gmra.mrb[0].mxu0 %v1324
        %v1470 = vpop.f32.mrb[0].mxu0
        %v1471 = vadd.f32 %v1387, %v1470
        %v1472 = vpop.f32.mrb[0].mxu0
        %1473 = vmatprep.mubr.f32.mxu0 %v1327
        %1474 = vmatmul.mubr.f32.gmra.mrb[0].mxu0 %v1326
        %v1475 = vpop.f32.mrb[0].mxu0
        %v1476 = vadd.f32 %v1387, %v1475
        %v1477 = vpop.f32.mrb[0].mxu0
        %1478 = vmatprep.mubr.f32.mxu0 %v1329
        %1479 = vmatmul.mubr.f32.gmra.mrb[0].mxu0 %v1328
        %v1480 = vpop.f32.mrb[0].mxu0
        %v1481 = vadd.f32 %v1387, %v1480
        %v1482 = vpop.f32.mrb[0].mxu0
        %1483 = vmatprep.mubr.f32.mxu0 %v1331
        %1484 = vmatmul.mubr.f32.gmra.mrb[0].mxu0 %v1330
        %v1485 = vpop.f32.mrb[0].mxu0
        %v1486 = vadd.f32 %v1387, %v1485
        %v1487 = vpop.f32.mrb[0].mxu0
        %1488 = vmatprep.mubr.f32.mxu0 %v1333
        %1489 = vmatmul.mubr.f32.gmra.mrb[0].mxu0 %v1332
        %v1490 = vpop.f32.mrb[0].mxu0
        %v1491 = vadd.f32 %v1387, %v1490
        %v1492 = vpop.f32.mrb[0].mxu0
        %1493 = vmatprep.mubr.f32.mxu0 %v1335
        %1494 = vmatmul.mubr.f32.gmra.mrb[0].mxu0 %v1334
        %v1495 = vpop.f32.mrb[0].mxu0
        %v1496 = vadd.f32 %v1387, %v1495
        %v1497 = vpop.f32.mrb[0].mxu0
        %1498 = vmatprep.mubr.f32.mxu0 %v1337
        %1499 = vmatmul.mubr.f32.gmra.mrb[0].mxu0 %v1336
        %v1500 = vpop.f32.mrb[0].mxu0
        %v1501 = vadd.f32 %v1387, %v1500
        %v1502 = vpop.f32.mrb[0].mxu0
        %1503 = vmatprep.mubr.f32.mxu0 %v1339
        %1504 = vmatmul.mubr.f32.gmra.mrb[0].mxu0 %v1338
        %v1505 = vpop.f32.mrb[0].mxu0
        %v1506 = vadd.f32 %v1387, %v1505
        %v1507 = vpop.f32.mrb[0].mxu0
        %1508 = vmatprep.mubr.f32.mxu0 %v1341
        %1509 = vmatmul.mubr.f32.gmra.mrb[0].mxu0 %v1340
        %v1510 = vpop.f32.mrb[0].mxu0
        %v1511 = vadd.f32 %v1387, %v1510
        %v1512 = vpop.f32.mrb[0].mxu0
        %1513 = vmatprep.mubr.f32.mxu0 %v1343
        %1514 = vmatmul.mubr.f32.gmra.mrb[0].mxu0 %v1342
        %v1515 = vpop.f32.mrb[0].mxu0
        %v1516 = vadd.f32 %v1387, %v1515
        %v1517 = vpop.f32.mrb[0].mxu0
        %1518 = vmatprep.mubr.f32.mxu0 %v1345
        %1519 = vmatmul.mubr.f32.gmra.mrb[0].mxu0 %v1344
        %v1520 = vpop.f32.mrb[0].mxu0
        %v1521 = vadd.f32 %v1387, %v1520
        %v1522 = vpop.f32.mrb[0].mxu0
        %1523 = vmatprep.mubr.f32.mxu0 %v1347
        %1524 = vmatmul.mubr.f32.gmra.mrb[0].mxu0 %v1346
        %v1525 = vpop.f32.mrb[0].mxu0
        %v1526 = vadd.f32 %v1387, %v1525
        %v1527 = vpop.f32.mrb[0].mxu0
        %1528 = vmatprep.mubr.f32.mxu0 %v1349
        %1529 = vmatmul.mubr.f32.gmra.mrb[0].mxu0 %v1348
        %v1530 = vpop.f32.mrb[0].mxu0
        %v1531 = vadd.f32 %v1387, %v1530
        %v1532 = vpop.f32.mrb[0].mxu0
        %1533 = vdwg.mxu0
        %vm1534 = vcmp.ge.f32.partialorder %v1456, 0.0
        %vm1535 = vcmp.ge.f32.partialorder %v1461, 0.0
        %vm1536 = vcmp.ge.f32.partialorder %v1466, 0.0
        %vm1537 = vcmp.ge.f32.partialorder %v1471, 0.0
        %vm1538 = vcmp.ge.f32.partialorder %v1476, 0.0
        %vm1539 = vcmp.ge.f32.partialorder %v1481, 0.0
        %vm1540 = vcmp.ge.f32.partialorder %v1486, 0.0
        %vm1541 = vcmp.ge.f32.partialorder %v1491, 0.0
        %vm1542 = vcmp.ge.f32.partialorder %v1496, 0.0
        %vm1543 = vcmp.ge.f32.partialorder %v1501, 0.0
        %vm1544 = vcmp.ge.f32.partialorder %v1506, 0.0
        %vm1545 = vcmp.ge.f32.partialorder %v1511, 0.0
        %vm1546 = vcmp.ge.f32.partialorder %v1516, 0.0
        %vm1547 = vcmp.ge.f32.partialorder %v1521, 0.0
        %vm1548 = vcmp.ge.f32.partialorder %v1526, 0.0
        %vm1549 = vcmp.ge.f32.partialorder %v1531, 0.0
        %v1550 = vmul.f32 %v1456, 0.01
        %v1551 = vmul.f32 %v1461, 0.01
        %v1552 = vmul.f32 %v1466, 0.01
        %v1553 = vmul.f32 %v1471, 0.01
        %v1554 = vmul.f32 %v1476, 0.01
        %v1555 = vmul.f32 %v1481, 0.01
        %v1556 = vmul.f32 %v1486, 0.01
        %v1557 = vmul.f32 %v1491, 0.01
        %v1558 = vmul.f32 %v1496, 0.01
        %v1559 = vmul.f32 %v1501, 0.01
        %v1560 = vmul.f32 %v1506, 0.01
        %v1561 = vmul.f32 %v1511, 0.01
        %v1562 = vmul.f32 %v1516, 0.01
        %v1563 = vmul.f32 %v1521, 0.01
        %v1564 = vmul.f32 %v1526, 0.01
        %v1565 = vmul.f32 %v1531, 0.01
        %v1566 = vsel %vm1534, %v1456, %v1550
        %v1567 = vsel %vm1535, %v1461, %v1551
        %v1568 = vsel %vm1536, %v1466, %v1552
        %v1569 = vsel %vm1537, %v1471, %v1553
        %v1570 = vsel %vm1538, %v1476, %v1554
        %v1571 = vsel %vm1539, %v1481, %v1555
        %v1572 = vsel %vm1540, %v1486, %v1556
        %v1573 = vsel %vm1541, %v1491, %v1557
        %v1574 = vsel %vm1542, %v1496, %v1558
        %v1575 = vsel %vm1543, %v1501, %v1559
        %v1576 = vsel %vm1544, %v1506, %v1560
        %v1577 = vsel %vm1545, %v1511, %v1561
        %v1578 = vsel %vm1546, %v1516, %v1562
        %v1579 = vsel %vm1547, %v1521, %v1563
        %v1580 = vsel %vm1548, %v1526, %v1564
        %v1581 = vsel %vm1549, %v1531, %v1565
        %1582 = vst.msk [vmem:[%s894] sm:$0xff] %vm928, %v1566
        %1583 = vst.msk [vmem:[%s894 + $0x8] sm:$0xff] %vm928, %v1567
        %1584 = vst.msk [vmem:[%s894 + $0x10] sm:$0xff] %vm928, %v1568
        %1585 = vst.msk [vmem:[%s894 + $0x18] sm:$0xff] %vm928, %v1569
        %1586 = vst.msk [vmem:[%s894 + $0x20] sm:$0xff] %vm928, %v1570
        %1587 = vst.msk [vmem:[%s894 + $0x28] sm:$0xff] %vm928, %v1571
        %1588 = vst.msk [vmem:[%s894 + $0x30] sm:$0xff] %vm928, %v1572
        %1589 = vst.msk [vmem:[%s894 + $0x38] sm:$0xff] %vm928, %v1573
        %1590 = vst.msk [vmem:[%s894 + $0x40] sm:$0xff] %vm928, %v1574
        %1591 = vst.msk [vmem:[%s894 + $0x48] sm:$0xff] %vm928, %v1575
        %1592 = vst.msk [vmem:[%s894 + $0x50] sm:$0xff] %vm928, %v1576
        %1593 = vst.msk [vmem:[%s894 + $0x58] sm:$0xff] %vm928, %v1577
        %1594 = vst.msk [vmem:[%s894 + $0x60] sm:$0xff] %vm928, %v1578
        %1595 = vst.msk [vmem:[%s894 + $0x68] sm:$0xff] %vm928, %v1579
        %1596 = vst.msk [vmem:[%s894 + $0x70] sm:$0xff] %vm928, %v1580
        %1597 = vst.msk [vmem:[%s894 + $0x78] sm:$0xff] %vm928, %v1581
        %v1598 = vld [vmem:[%s882] sm:$0xff]
        %v1599 = vld [vmem:[%s882 + $0x8] sm:$0xff]
        %v1600 = vld [vmem:[%s882 + $0x10] sm:$0xff]
        %v1601 = vld [vmem:[%s882 + $0x18] sm:$0xff]
        %v1602 = vld [vmem:[%s882 + $0x20] sm:$0xff]
        %v1603 = vld [vmem:[%s882 + $0x28] sm:$0xff]
        %v1604 = vld [vmem:[%s882 + $0x30] sm:$0xff]
        %v1605 = vld [vmem:[%s882 + $0x38] sm:$0xff]
        %v1606 = vld [vmem:[%s882 + $0x40] sm:$0xff]
        %v1607 = vld [vmem:[%s882 + $0x48] sm:$0xff]
        %v1608 = vld [vmem:[%s882 + $0x50] sm:$0xff]
        %v1609 = vld [vmem:[%s882 + $0x58] sm:$0xff]
        %v1610 = vld [vmem:[%s882 + $0x60] sm:$0xff]
        %v1611 = vld [vmem:[%s882 + $0x68] sm:$0xff]
        %v1612 = vld [vmem:[%s882 + $0x70] sm:$0xff]
        %v1613 = vld [vmem:[%s882 + $0x78] sm:$0xff]
        %v1614 = vmul.f32 %v1566, 0.5
        %v1615 = vmul.f32 %v1567, 0.5
        %v1616 = vmul.f32 %v1568, 0.5
        %v1617 = vmul.f32 %v1569, 0.5
        %v1618 = vmul.f32 %v1570, 0.5
        %v1619 = vmul.f32 %v1571, 0.5
        %v1620 = vmul.f32 %v1572, 0.5
        %v1621 = vmul.f32 %v1573, 0.5
        %v1622 = vmul.f32 %v1574, 0.5
        %v1623 = vmul.f32 %v1575, 0.5
        %v1624 = vmul.f32 %v1576, 0.5
        %v1625 = vmul.f32 %v1577, 0.5
        %v1626 = vmul.f32 %v1578, 0.5
        %v1627 = vmul.f32 %v1579, 0.5
        %v1628 = vmul.f32 %v1580, 0.5
        %v1629 = vmul.f32 %v1581, 0.5
        %v1630 = vmul.f32 %v1614, 1.442695
        %v1631 = vpow.pop %v1630
        %v1632 = vmul.f32 %v1615, 1.442695
        %v1633 = vpow.pop %v1632
        %v1634 = vmul.f32 %v1616, 1.442695
        %v1635 = vpow.pop %v1634
        %v1636 = vmul.f32 %v1617, 1.442695
        %v1637 = vpow.pop %v1636
        %v1638 = vmul.f32 %v1618, 1.442695
        %v1639 = vpow.pop %v1638
        %v1640 = vmul.f32 %v1619, 1.442695
        %v1641 = vpow.pop %v1640
        %v1642 = vmul.f32 %v1620, 1.442695
        %v1643 = vpow.pop %v1642
        %v1644 = vmul.f32 %v1621, 1.442695
        %v1645 = vpow.pop %v1644
        %v1646 = vmul.f32 %v1622, 1.442695
        %v1647 = vpow.pop %v1646
        %v1648 = vmul.f32 %v1623, 1.442695
        %v1649 = vpow.pop %v1648
        %v1650 = vmul.f32 %v1624, 1.442695
        %v1651 = vpow.pop %v1650
        %v1652 = vmul.f32 %v1625, 1.442695
        %v1653 = vpow.pop %v1652
        %v1654 = vmul.f32 %v1626, 1.442695
        %v1655 = vpow.pop %v1654
        %v1656 = vmul.f32 %v1627, 1.442695
        %v1657 = vpow.pop %v1656
        %v1658 = vmul.f32 %v1628, 1.442695
        %v1659 = vpow.pop %v1658
        %v1660 = vmul.f32 %v1629, 1.442695
        %v1661 = vpow.pop %v1660
        %1678 = vrot.lane.b32.xlu0 %v1631, 112
        %v1679 = vpop.permute.xlu0 %1678
        %1680 = vrot.lane.b32.xlu0 %v1633, 112
        %v1681 = vpop.permute.xlu0 %1680
        %1682 = vrot.lane.b32.xlu0 %v1635, 112
        %v1683 = vpop.permute.xlu0 %1682
        %1684 = vrot.lane.b32.xlu0 %v1637, 112
        %v1685 = vpop.permute.xlu0 %1684
        %1686 = vrot.lane.b32.xlu0 %v1639, 112
        %v1687 = vpop.permute.xlu0 %1686
        %1688 = vrot.lane.b32.xlu0 %v1641, 112
        %v1689 = vpop.permute.xlu0 %1688
        %1690 = vrot.lane.b32.xlu0 %v1643, 112
        %v1691 = vpop.permute.xlu0 %1690
        %1692 = vrot.lane.b32.xlu0 %v1645, 112
        %v1693 = vpop.permute.xlu0 %1692
        %1694 = vrot.lane.b32.xlu0 %v1647, 112
        %v1695 = vpop.permute.xlu0 %1694
        %1696 = vrot.lane.b32.xlu0 %v1649, 112
        %v1697 = vpop.permute.xlu0 %1696
        %1698 = vrot.lane.b32.xlu0 %v1651, 112
        %v1699 = vpop.permute.xlu0 %1698
        %1700 = vrot.lane.b32.xlu0 %v1653, 112
        %v1701 = vpop.permute.xlu0 %1700
        %1702 = vrot.lane.b32.xlu0 %v1655, 112
        %v1703 = vpop.permute.xlu0 %1702
        %1704 = vrot.lane.b32.xlu0 %v1657, 112
        %v1705 = vpop.permute.xlu0 %1704
        %1706 = vrot.lane.b32.xlu0 %v1659, 112
        %v1707 = vpop.permute.xlu0 %1706
        %1708 = vrot.lane.b32.xlu0 %v1661, 112
        %v1709 = vpop.permute.xlu0 %1708
        %v1726 = vmul.f32 %v1598, %v1679
        %v1727 = vmul.f32 %v1599, %v1681
        %v1728 = vmul.f32 %v1600, %v1683
        %v1729 = vmul.f32 %v1601, %v1685
        %v1730 = vmul.f32 %v1602, %v1687
        %v1731 = vmul.f32 %v1603, %v1689
        %v1732 = vmul.f32 %v1604, %v1691
        %v1733 = vmul.f32 %v1605, %v1693
        %v1734 = vmul.f32 %v1606, %v1695
        %v1735 = vmul.f32 %v1607, %v1697
        %v1736 = vmul.f32 %v1608, %v1699
        %v1737 = vmul.f32 %v1609, %v1701
        %v1738 = vmul.f32 %v1610, %v1703
        %v1739 = vmul.f32 %v1611, %v1705
        %v1740 = vmul.f32 %v1612, %v1707
        %v1741 = vmul.f32 %v1613, %v1709
        %v1742 = vadd.f32 %v1566, %v1726
        %v1743 = vadd.f32 %v1567, %v1727
        %v1744 = vadd.f32 %v1568, %v1728
        %v1745 = vadd.f32 %v1569, %v1729
        %v1746 = vadd.f32 %v1570, %v1730
        %v1747 = vadd.f32 %v1571, %v1731
        %v1748 = vadd.f32 %v1572, %v1732
        %v1749 = vadd.f32 %v1573, %v1733
        %v1750 = vadd.f32 %v1574, %v1734
        %v1751 = vadd.f32 %v1575, %v1735
        %v1752 = vadd.f32 %v1576, %v1736
        %v1753 = vadd.f32 %v1577, %v1737
        %v1754 = vadd.f32 %v1578, %v1738
        %v1755 = vadd.f32 %v1579, %v1739
        %v1756 = vadd.f32 %v1580, %v1740
        %v1757 = vadd.f32 %v1581, %v1741
        %v1758 = vld [vmem:[#allocation7] sm:$0xff]
        %v1759 = vld [vmem:[#allocation7 + $0x8] sm:$0xff]
        %v1760 = vld [vmem:[#allocation7 + $0x10] sm:$0xff]
        %v1761 = vld [vmem:[#allocation7 + $0x18] sm:$0xff]
        %v1762 = vld [vmem:[#allocation7 + $0x20] sm:$0xff]
        %v1763 = vld [vmem:[#allocation7 + $0x28] sm:$0xff]
        %v1764 = vld [vmem:[#allocation7 + $0x30] sm:$0xff]
        %v1765 = vld [vmem:[#allocation7 + $0x38] sm:$0xff]
        %v1766 = vld [vmem:[#allocation7 + $0x40] sm:$0xff]
        %v1767 = vld [vmem:[#allocation7 + $0x48] sm:$0xff]
        %v1768 = vld [vmem:[#allocation7 + $0x50] sm:$0xff]
        %v1769 = vld [vmem:[#allocation7 + $0x58] sm:$0xff]
        %v1770 = vld [vmem:[#allocation7 + $0x60] sm:$0xff]
        %v1771 = vld [vmem:[#allocation7 + $0x68] sm:$0xff]
        %v1772 = vld [vmem:[#allocation7 + $0x70] sm:$0xff]
        %v1773 = vld [vmem:[#allocation7 + $0x78] sm:$0xff]
        %v1774 = vld [vmem:[#allocation9] sm:$0xff]
        %v1776 = vlaneseq
        %v1777 = vshrl.u32 %v1776, 7
        %v1778 = vsub.s32 0, %v1777
        %v1779 = vrot.slane %v1774, %v1778
        %v1780 = vlaneseq
        %v1781 = vshrl.u32 %v1780, 7
        %v1782 = vsub.s32 1, %v1781
        %v1783 = vrot.slane %v1774, %v1782
        %v1784 = vlaneseq
        %v1785 = vshrl.u32 %v1784, 7
        %v1786 = vsub.s32 2, %v1785
        %v1787 = vrot.slane %v1774, %v1786
        %v1788 = vlaneseq
        %v1789 = vshrl.u32 %v1788, 7
        %v1790 = vsub.s32 3, %v1789
        %v1791 = vrot.slane %v1774, %v1790
        %v1792 = vlaneseq
        %v1793 = vshrl.u32 %v1792, 7
        %v1794 = vsub.s32 4, %v1793
        %v1795 = vrot.slane %v1774, %v1794
        %v1796 = vlaneseq
        %v1797 = vshrl.u32 %v1796, 7
        %v1798 = vsub.s32 5, %v1797
        %v1799 = vrot.slane %v1774, %v1798
        %v1800 = vlaneseq
        %v1801 = vshrl.u32 %v1800, 7
        %v1802 = vsub.s32 6, %v1801
        %v1803 = vrot.slane %v1774, %v1802
        %v1804 = vlaneseq
        %v1805 = vshrl.u32 %v1804, 7
        %v1806 = vsub.s32 7, %v1805
        %v1807 = vrot.slane %v1774, %v1806
        %vm1816 = vcmask 130048
        %v1818 = vsel %vm1816, %v1742, 0
        %v1821 = vsel %vm1816, %v1743, 0
        %v1824 = vsel %vm1816, %v1744, 0
        %v1827 = vsel %vm1816, %v1745, 0
        %v1830 = vsel %vm1816, %v1746, 0
        %v1833 = vsel %vm1816, %v1747, 0
        %v1836 = vsel %vm1816, %v1748, 0
        %v1839 = vsel %vm1816, %v1749, 0
        %v1842 = vsel %vm1816, %v1750, 0
        %v1845 = vsel %vm1816, %v1751, 0
        %v1848 = vsel %vm1816, %v1752, 0
        %v1851 = vsel %vm1816, %v1753, 0
        %v1854 = vsel %vm1816, %v1754, 0
        %v1857 = vsel %vm1816, %v1755, 0
        %v1860 = vsel %vm1816, %v1756, 0
        %v1863 = vsel %vm1816, %v1757, 0
        %1865 = vmatprep.subr.mxu0 %v1759
        %1866 = vmatpush1.msra.mxu0 %v1758
        %1867 = vmatprep.subr.mxu0 %v1767
        %1868 = vmatpush1.msra.mxu0 %v1766
        %1869 = vmatprep.subr.mxu0 0.0
        %1870 = vmatpush1.msra.mxu0 0.0
        %1871 = vmatprep.subr.mxu0 0.0
        %1872 = vmatpush1.msra.mxu0 0.0
        %1873 = vmatprep.subr.mxu0 0.0
        %1874 = vmatpush1.msra.mxu0 0.0
        %1875 = vmatprep.subr.mxu0 0.0
        %1876 = vmatpush1.msra.mxu0 0.0
        %1877 = vmatprep.subr.mxu0 0.0
        %1878 = vmatpush1.msra.mxu0 0.0
        %1879 = vmatprep.subr.mxu0 0.0
        %1880 = vmatpush1.msra.mxu0 0.0
        %1881 = vmatprep.subr.mxu0 0.0
        %1882 = vmatpush1.msra.mxu0 0.0
        %1883 = vmatprep.subr.mxu0 0.0
        %1884 = vmatpush1.msra.mxu0 0.0
        %1885 = vmatprep.subr.mxu0 0.0
        %1886 = vmatpush1.msra.mxu0 0.0
        %1887 = vmatprep.subr.mxu0 0.0
        %1888 = vmatpush1.msra.mxu0 0.0
        %1889 = vmatprep.subr.mxu0 0.0
        %1890 = vmatpush1.msra.mxu0 0.0
        %1891 = vmatprep.subr.mxu0 0.0
        %1892 = vmatpush1.msra.mxu0 0.0
        %1893 = vmatprep.subr.mxu0 0.0
        %1894 = vmatpush1.msra.mxu0 0.0
        %1895 = vmatprep.subr.mxu0 0.0
        %1896 = vmatpush1.msra.mxu0 0.0
        %1897 = vmatprep.subr.mxu0 0.0
        %1898 = vmatpush1.msra.mxu0 0.0
        %1899 = vmatprep.subr.mxu0 0.0
        %1900 = vmatpush1.msra.mxu0 0.0
        %1901 = vmatprep.subr.mxu0 0.0
        %1902 = vmatpush1.msra.mxu0 0.0
        %1903 = vmatprep.subr.mxu0 0.0
        %1904 = vmatpush1.msra.mxu0 0.0
        %1905 = vmatprep.subr.mxu0 0.0
        %1906 = vmatpush1.msra.mxu0 0.0
        %1907 = vmatprep.subr.mxu0 0.0
        %1908 = vmatpush1.msra.mxu0 0.0
        %1909 = vmatprep.subr.mxu0 0.0
        %1910 = vmatpush1.msra.mxu0 0.0
        %1911 = vmatprep.subr.mxu0 0.0
        %1912 = vmatpush1.msra.mxu0 0.0
        %1913 = vmatprep.subr.mxu0 0.0
        %1914 = vmatpush1.msra.mxu0 0.0
        %1915 = vmatprep.subr.mxu0 0.0
        %1916 = vmatpush1.msra.mxu0 0.0
        %1917 = vmatprep.subr.mxu0 0.0
        %1918 = vmatpush1.msra.mxu0 0.0
        %1919 = vmatprep.subr.mxu0 0.0
        %1920 = vmatpush1.msra.mxu0 0.0
        %1921 = vmatprep.subr.mxu0 0.0
        %1922 = vmatpush1.msra.mxu0 0.0
        %1923 = vmatprep.subr.mxu0 0.0
        %1924 = vmatpush1.msra.mxu0 0.0
        %1925 = vmatprep.subr.mxu0 0.0
        %1926 = vmatpush1.msra.mxu0 0.0
        %1927 = vmatprep.subr.mxu0 0.0
        %1928 = vmatpush1.msra.mxu0 0.0
        %1929 = vmatprep.mubr.f32.mxu0 0.0
        %1930 = vmatmul.mubr.f32.gmra.mrb[0].mxu0 %v1818
        %v1931 = vpop.f32.mrb[0].mxu0
        %v1932 = vadd.f32 %v1779, %v1931
        %v1933 = vpop.f32.mrb[0].mxu0
        %v1934 = vadd.f32 %v1783, %v1933
        %1935 = vmatprep.mubr.f32.mxu0 0.0
        %1936 = vmatmul.mubr.f32.gmra.mrb[0].mxu0 %v1821
        %v1937 = vpop.f32.mrb[0].mxu0
        %v1938 = vadd.f32 %v1779, %v1937
        %v1939 = vpop.f32.mrb[0].mxu0
        %v1940 = vadd.f32 %v1783, %v1939
        %1941 = vmatprep.mubr.f32.mxu0 0.0
        %1942 = vmatmul.mubr.f32.gmra.mrb[0].mxu0 %v1824
        %v1943 = vpop.f32.mrb[0].mxu0
        %v1944 = vadd.f32 %v1779, %v1943
        %v1945 = vpop.f32.mrb[0].mxu0
        %v1946 = vadd.f32 %v1783, %v1945
        %1947 = vmatprep.mubr.f32.mxu0 0.0
        %1948 = vmatmul.mubr.f32.gmra.mrb[0].mxu0 %v1827
        %v1949 = vpop.f32.mrb[0].mxu0
        %v1950 = vadd.f32 %v1779, %v1949
        %v1951 = vpop.f32.mrb[0].mxu0
        %v1952 = vadd.f32 %v1783, %v1951
        %1953 = vmatprep.mubr.f32.mxu0 0.0
        %1954 = vmatmul.mubr.f32.gmra.mrb[0].mxu0 %v1830
        %v1955 = vpop.f32.mrb[0].mxu0
        %v1956 = vadd.f32 %v1779, %v1955
        %v1957 = vpop.f32.mrb[0].mxu0
        %v1958 = vadd.f32 %v1783, %v1957
        %1959 = vmatprep.mubr.f32.mxu0 0.0
        %1960 = vmatmul.mubr.f32.gmra.mrb[0].mxu0 %v1833
        %v1961 = vpop.f32.mrb[0].mxu0
        %v1962 = vadd.f32 %v1779, %v1961
        %v1963 = vpop.f32.mrb[0].mxu0
        %v1964 = vadd.f32 %v1783, %v1963
        %1965 = vmatprep.mubr.f32.mxu0 0.0
        %1966 = vmatmul.mubr.f32.gmra.mrb[0].mxu0 %v1836
        %v1967 = vpop.f32.mrb[0].mxu0
        %v1968 = vadd.f32 %v1779, %v1967
        %v1969 = vpop.f32.mrb[0].mxu0
        %v1970 = vadd.f32 %v1783, %v1969
        %1971 = vmatprep.mubr.f32.mxu0 0.0
        %1972 = vmatmul.mubr.f32.gmra.mrb[0].mxu0 %v1839
        %v1973 = vpop.f32.mrb[0].mxu0
        %v1974 = vadd.f32 %v1779, %v1973
        %v1975 = vpop.f32.mrb[0].mxu0
        %v1976 = vadd.f32 %v1783, %v1975
        %1977 = vmatprep.mubr.f32.mxu0 0.0
        %1978 = vmatmul.mubr.f32.gmra.mrb[0].mxu0 %v1842
        %v1979 = vpop.f32.mrb[0].mxu0
        %v1980 = vadd.f32 %v1779, %v1979
        %v1981 = vpop.f32.mrb[0].mxu0
        %v1982 = vadd.f32 %v1783, %v1981
        %1983 = vmatprep.mubr.f32.mxu0 0.0
        %1984 = vmatmul.mubr.f32.gmra.mrb[0].mxu0 %v1845
        %v1985 = vpop.f32.mrb[0].mxu0
        %v1986 = vadd.f32 %v1779, %v1985
        %v1987 = vpop.f32.mrb[0].mxu0
        %v1988 = vadd.f32 %v1783, %v1987
        %1989 = vmatprep.mubr.f32.mxu0 0.0
        %1990 = vmatmul.mubr.f32.gmra.mrb[0].mxu0 %v1848
        %v1991 = vpop.f32.mrb[0].mxu0
        %v1992 = vadd.f32 %v1779, %v1991
        %v1993 = vpop.f32.mrb[0].mxu0
        %v1994 = vadd.f32 %v1783, %v1993
        %1995 = vmatprep.mubr.f32.mxu0 0.0
        %1996 = vmatmul.mubr.f32.gmra.mrb[0].mxu0 %v1851
        %v1997 = vpop.f32.mrb[0].mxu0
        %v1998 = vadd.f32 %v1779, %v1997
        %v1999 = vpop.f32.mrb[0].mxu0
        %v2000 = vadd.f32 %v1783, %v1999
        %2001 = vmatprep.mubr.f32.mxu0 0.0
        %2002 = vmatmul.mubr.f32.gmra.mrb[0].mxu0 %v1854
        %v2003 = vpop.f32.mrb[0].mxu0
        %v2004 = vadd.f32 %v1779, %v2003
        %v2005 = vpop.f32.mrb[0].mxu0
        %v2006 = vadd.f32 %v1783, %v2005
        %2007 = vmatprep.mubr.f32.mxu0 0.0
        %2008 = vmatmul.mubr.f32.gmra.mrb[0].mxu0 %v1857
        %v2009 = vpop.f32.mrb[0].mxu0
        %v2010 = vadd.f32 %v1779, %v2009
        %v2011 = vpop.f32.mrb[0].mxu0
        %v2012 = vadd.f32 %v1783, %v2011
        %2013 = vmatprep.mubr.f32.mxu0 0.0
        %2014 = vmatmul.mubr.f32.gmra.mrb[0].mxu0 %v1860
        %v2015 = vpop.f32.mrb[0].mxu0
        %v2016 = vadd.f32 %v1779, %v2015
        %v2017 = vpop.f32.mrb[0].mxu0
        %v2018 = vadd.f32 %v1783, %v2017
        %2019 = vmatprep.mubr.f32.mxu0 0.0
        %2020 = vmatmul.mubr.f32.gmra.mrb[0].mxu0 %v1863
        %v2021 = vpop.f32.mrb[0].mxu0
        %v2022 = vadd.f32 %v1779, %v2021
        %v2023 = vpop.f32.mrb[0].mxu0
        %v2024 = vadd.f32 %v1783, %v2023
        %2025 = vdwg.mxu0
        %2026 = vmatprep.subr.mxu0 %v1761
        %2027 = vmatpush1.msra.mxu0 %v1760
        %2028 = vmatprep.subr.mxu0 %v1769
        %2029 = vmatpush1.msra.mxu0 %v1768
        %2030 = vmatprep.subr.mxu0 0.0
        %2031 = vmatpush1.msra.mxu0 0.0
        %2032 = vmatprep.subr.mxu0 0.0
        %2033 = vmatpush1.msra.mxu0 0.0
        %2034 = vmatprep.subr.mxu0 0.0
        %2035 = vmatpush1.msra.mxu0 0.0
        %2036 = vmatprep.subr.mxu0 0.0
        %2037 = vmatpush1.msra.mxu0 0.0
        %2038 = vmatprep.subr.mxu0 0.0
        %2039 = vmatpush1.msra.mxu0 0.0
        %2040 = vmatprep.subr.mxu0 0.0
        %2041 = vmatpush1.msra.mxu0 0.0
        %2042 = vmatprep.subr.mxu0 0.0
        %2043 = vmatpush1.msra.mxu0 0.0
        %2044 = vmatprep.subr.mxu0 0.0
        %2045 = vmatpush1.msra.mxu0 0.0
        %2046 = vmatprep.subr.mxu0 0.0
        %2047 = vmatpush1.msra.mxu0 0.0
        %2048 = vmatprep.subr.mxu0 0.0
        %2049 = vmatpush1.msra.mxu0 0.0
        %2050 = vmatprep.subr.mxu0 0.0
        %2051 = vmatpush1.msra.mxu0 0.0
        %2052 = vmatprep.subr.mxu0 0.0
        %2053 = vmatpush1.msra.mxu0 0.0
        %2054 = vmatprep.subr.mxu0 0.0
        %2055 = vmatpush1.msra.mxu0 0.0
        %2056 = vmatprep.subr.mxu0 0.0
        %2057 = vmatpush1.msra.mxu0 0.0
        %2058 = vmatprep.subr.mxu0 0.0
        %2059 = vmatpush1.msra.mxu0 0.0
        %2060 = vmatprep.subr.mxu0 0.0
        %2061 = vmatpush1.msra.mxu0 0.0
        %2062 = vmatprep.subr.mxu0 0.0
        %2063 = vmatpush1.msra.mxu0 0.0
        %2064 = vmatprep.subr.mxu0 0.0
        %2065 = vmatpush1.msra.mxu0 0.0
        %2066 = vmatprep.subr.mxu0 0.0
        %2067 = vmatpush1.msra.mxu0 0.0
        %2068 = vmatprep.subr.mxu0 0.0
        %2069 = vmatpush1.msra.mxu0 0.0
        %2070 = vmatprep.subr.mxu0 0.0
        %2071 = vmatpush1.msra.mxu0 0.0
        %2072 = vmatprep.subr.mxu0 0.0
        %2073 = vmatpush1.msra.mxu0 0.0
        %2074 = vmatprep.subr.mxu0 0.0
        %2075 = vmatpush1.msra.mxu0 0.0
        %2076 = vmatprep.subr.mxu0 0.0
        %2077 = vmatpush1.msra.mxu0 0.0
        %2078 = vmatprep.subr.mxu0 0.0
        %2079 = vmatpush1.msra.mxu0 0.0
        %2080 = vmatprep.subr.mxu0 0.0
        %2081 = vmatpush1.msra.mxu0 0.0
        %2082 = vmatprep.subr.mxu0 0.0
        %2083 = vmatpush1.msra.mxu0 0.0
        %2084 = vmatprep.subr.mxu0 0.0
        %2085 = vmatpush1.msra.mxu0 0.0
        %2086 = vmatprep.subr.mxu0 0.0
        %2087 = vmatpush1.msra.mxu0 0.0
        %2088 = vmatprep.subr.mxu0 0.0
        %2089 = vmatpush1.msra.mxu0 0.0
        %2090 = vmatprep.mubr.f32.mxu0 0.0
        %2091 = vmatmul.mubr.f32.gmra.mrb[0].mxu0 %v1818
        %v2092 = vpop.f32.mrb[0].mxu0
        %v2093 = vadd.f32 %v1787, %v2092
        %v2094 = vpop.f32.mrb[0].mxu0
        %v2095 = vadd.f32 %v1791, %v2094
        %2096 = vmatprep.mubr.f32.mxu0 0.0
        %2097 = vmatmul.mubr.f32.gmra.mrb[0].mxu0 %v1821
        %v2098 = vpop.f32.mrb[0].mxu0
        %v2099 = vadd.f32 %v1787, %v2098
        %v2100 = vpop.f32.mrb[0].mxu0
        %v2101 = vadd.f32 %v1791, %v2100
        %2102 = vmatprep.mubr.f32.mxu0 0.0
        %2103 = vmatmul.mubr.f32.gmra.mrb[0].mxu0 %v1824
        %v2104 = vpop.f32.mrb[0].mxu0
        %v2105 = vadd.f32 %v1787, %v2104
        %v2106 = vpop.f32.mrb[0].mxu0
        %v2107 = vadd.f32 %v1791, %v2106
        %2108 = vmatprep.mubr.f32.mxu0 0.0
        %2109 = vmatmul.mubr.f32.gmra.mrb[0].mxu0 %v1827
        %v2110 = vpop.f32.mrb[0].mxu0
        %v2111 = vadd.f32 %v1787, %v2110
        %v2112 = vpop.f32.mrb[0].mxu0
        %v2113 = vadd.f32 %v1791, %v2112
        %2114 = vmatprep.mubr.f32.mxu0 0.0
        %2115 = vmatmul.mubr.f32.gmra.mrb[0].mxu0 %v1830
        %v2116 = vpop.f32.mrb[0].mxu0
        %v2117 = vadd.f32 %v1787, %v2116
        %v2118 = vpop.f32.mrb[0].mxu0
        %v2119 = vadd.f32 %v1791, %v2118
        %2120 = vmatprep.mubr.f32.mxu0 0.0
        %2121 = vmatmul.mubr.f32.gmra.mrb[0].mxu0 %v1833
        %v2122 = vpop.f32.mrb[0].mxu0
        %v2123 = vadd.f32 %v1787, %v2122
        %v2124 = vpop.f32.mrb[0].mxu0
        %v2125 = vadd.f32 %v1791, %v2124
        %2126 = vmatprep.mubr.f32.mxu0 0.0
        %2127 = vmatmul.mubr.f32.gmra.mrb[0].mxu0 %v1836
        %v2128 = vpop.f32.mrb[0].mxu0
        %v2129 = vadd.f32 %v1787, %v2128
        %v2130 = vpop.f32.mrb[0].mxu0
        %v2131 = vadd.f32 %v1791, %v2130
        %2132 = vmatprep.mubr.f32.mxu0 0.0
        %2133 = vmatmul.mubr.f32.gmra.mrb[0].mxu0 %v1839
        %v2134 = vpop.f32.mrb[0].mxu0
        %v2135 = vadd.f32 %v1787, %v2134
        %v2136 = vpop.f32.mrb[0].mxu0
        %v2137 = vadd.f32 %v1791, %v2136
        %2138 = vmatprep.mubr.f32.mxu0 0.0
        %2139 = vmatmul.mubr.f32.gmra.mrb[0].mxu0 %v1842
        %v2140 = vpop.f32.mrb[0].mxu0
        %v2141 = vadd.f32 %v1787, %v2140
        %v2142 = vpop.f32.mrb[0].mxu0
        %v2143 = vadd.f32 %v1791, %v2142
        %2144 = vmatprep.mubr.f32.mxu0 0.0
        %2145 = vmatmul.mubr.f32.gmra.mrb[0].mxu0 %v1845
        %v2146 = vpop.f32.mrb[0].mxu0
        %v2147 = vadd.f32 %v1787, %v2146
        %v2148 = vpop.f32.mrb[0].mxu0
        %v2149 = vadd.f32 %v1791, %v2148
        %2150 = vmatprep.mubr.f32.mxu0 0.0
        %2151 = vmatmul.mubr.f32.gmra.mrb[0].mxu0 %v1848
        %v2152 = vpop.f32.mrb[0].mxu0
        %v2153 = vadd.f32 %v1787, %v2152
        %v2154 = vpop.f32.mrb[0].mxu0
        %v2155 = vadd.f32 %v1791, %v2154
        %2156 = vmatprep.mubr.f32.mxu0 0.0
        %2157 = vmatmul.mubr.f32.gmra.mrb[0].mxu0 %v1851
        %v2158 = vpop.f32.mrb[0].mxu0
        %v2159 = vadd.f32 %v1787, %v2158
        %v2160 = vpop.f32.mrb[0].mxu0
        %v2161 = vadd.f32 %v1791, %v2160
        %2162 = vmatprep.mubr.f32.mxu0 0.0
        %2163 = vmatmul.mubr.f32.gmra.mrb[0].mxu0 %v1854
        %v2164 = vpop.f32.mrb[0].mxu0
        %v2165 = vadd.f32 %v1787, %v2164
        %v2166 = vpop.f32.mrb[0].mxu0
        %v2167 = vadd.f32 %v1791, %v2166
        %2168 = vmatprep.mubr.f32.mxu0 0.0
        %2169 = vmatmul.mubr.f32.gmra.mrb[0].mxu0 %v1857
        %v2170 = vpop.f32.mrb[0].mxu0
        %v2171 = vadd.f32 %v1787, %v2170
        %v2172 = vpop.f32.mrb[0].mxu0
        %v2173 = vadd.f32 %v1791, %v2172
        %2174 = vmatprep.mubr.f32.mxu0 0.0
        %2175 = vmatmul.mubr.f32.gmra.mrb[0].mxu0 %v1860
        %v2176 = vpop.f32.mrb[0].mxu0
        %v2177 = vadd.f32 %v1787, %v2176
        %v2178 = vpop.f32.mrb[0].mxu0
        %v2179 = vadd.f32 %v1791, %v2178
        %2180 = vmatprep.mubr.f32.mxu0 0.0
        %2181 = vmatmul.mubr.f32.gmra.mrb[0].mxu0 %v1863
        %v2182 = vpop.f32.mrb[0].mxu0
        %v2183 = vadd.f32 %v1787, %v2182
        %v2184 = vpop.f32.mrb[0].mxu0
        %v2185 = vadd.f32 %v1791, %v2184
        %2186 = vdwg.mxu0
        %2187 = vmatprep.subr.mxu0 %v1763
        %2188 = vmatpush1.msra.mxu0 %v1762
        %2189 = vmatprep.subr.mxu0 %v1771
        %2190 = vmatpush1.msra.mxu0 %v1770
        %2191 = vmatprep.subr.mxu0 0.0
        %2192 = vmatpush1.msra.mxu0 0.0
        %2193 = vmatprep.subr.mxu0 0.0
        %2194 = vmatpush1.msra.mxu0 0.0
        %2195 = vmatprep.subr.mxu0 0.0
        %2196 = vmatpush1.msra.mxu0 0.0
        %2197 = vmatprep.subr.mxu0 0.0
        %2198 = vmatpush1.msra.mxu0 0.0
        %2199 = vmatprep.subr.mxu0 0.0
        %2200 = vmatpush1.msra.mxu0 0.0
        %2201 = vmatprep.subr.mxu0 0.0
        %2202 = vmatpush1.msra.mxu0 0.0
        %2203 = vmatprep.subr.mxu0 0.0
        %2204 = vmatpush1.msra.mxu0 0.0
        %2205 = vmatprep.subr.mxu0 0.0
        %2206 = vmatpush1.msra.mxu0 0.0
        %2207 = vmatprep.subr.mxu0 0.0
        %2208 = vmatpush1.msra.mxu0 0.0
        %2209 = vmatprep.subr.mxu0 0.0
        %2210 = vmatpush1.msra.mxu0 0.0
        %2211 = vmatprep.subr.mxu0 0.0
        %2212 = vmatpush1.msra.mxu0 0.0
        %2213 = vmatprep.subr.mxu0 0.0
        %2214 = vmatpush1.msra.mxu0 0.0
        %2215 = vmatprep.subr.mxu0 0.0
        %2216 = vmatpush1.msra.mxu0 0.0
        %2217 = vmatprep.subr.mxu0 0.0
        %2218 = vmatpush1.msra.mxu0 0.0
        %2219 = vmatprep.subr.mxu0 0.0
        %2220 = vmatpush1.msra.mxu0 0.0
        %2221 = vmatprep.subr.mxu0 0.0
        %2222 = vmatpush1.msra.mxu0 0.0
        %2223 = vmatprep.subr.mxu0 0.0
        %2224 = vmatpush1.msra.mxu0 0.0
        %2225 = vmatprep.subr.mxu0 0.0
        %2226 = vmatpush1.msra.mxu0 0.0
        %2227 = vmatprep.subr.mxu0 0.0
        %2228 = vmatpush1.msra.mxu0 0.0
        %2229 = vmatprep.subr.mxu0 0.0
        %2230 = vmatpush1.msra.mxu0 0.0
        %2231 = vmatprep.subr.mxu0 0.0
        %2232 = vmatpush1.msra.mxu0 0.0
        %2233 = vmatprep.subr.mxu0 0.0
        %2234 = vmatpush1.msra.mxu0 0.0
        %2235 = vmatprep.subr.mxu0 0.0
        %2236 = vmatpush1.msra.mxu0 0.0
        %2237 = vmatprep.subr.mxu0 0.0
        %2238 = vmatpush1.msra.mxu0 0.0
        %2239 = vmatprep.subr.mxu0 0.0
        %2240 = vmatpush1.msra.mxu0 0.0
        %2241 = vmatprep.subr.mxu0 0.0
        %2242 = vmatpush1.msra.mxu0 0.0
        %2243 = vmatprep.subr.mxu0 0.0
        %2244 = vmatpush1.msra.mxu0 0.0
        %2245 = vmatprep.subr.mxu0 0.0
        %2246 = vmatpush1.msra.mxu0 0.0
        %2247 = vmatprep.subr.mxu0 0.0
        %2248 = vmatpush1.msra.mxu0 0.0
        %2249 = vmatprep.subr.mxu0 0.0
        %2250 = vmatpush1.msra.mxu0 0.0
        %2251 = vmatprep.mubr.f32.mxu0 0.0
        %2252 = vmatmul.mubr.f32.gmra.mrb[0].mxu0 %v1818
        %v2253 = vpop.f32.mrb[0].mxu0
        %v2254 = vadd.f32 %v1795, %v2253
        %v2255 = vpop.f32.mrb[0].mxu0
        %v2256 = vadd.f32 %v1799, %v2255
        %2257 = vmatprep.mubr.f32.mxu0 0.0
        %2258 = vmatmul.mubr.f32.gmra.mrb[0].mxu0 %v1821
        %v2259 = vpop.f32.mrb[0].mxu0
        %v2260 = vadd.f32 %v1795, %v2259
        %v2261 = vpop.f32.mrb[0].mxu0
        %v2262 = vadd.f32 %v1799, %v2261
        %2263 = vmatprep.mubr.f32.mxu0 0.0
        %2264 = vmatmul.mubr.f32.gmra.mrb[0].mxu0 %v1824
        %v2265 = vpop.f32.mrb[0].mxu0
        %v2266 = vadd.f32 %v1795, %v2265
        %v2267 = vpop.f32.mrb[0].mxu0
        %v2268 = vadd.f32 %v1799, %v2267
        %2269 = vmatprep.mubr.f32.mxu0 0.0
        %2270 = vmatmul.mubr.f32.gmra.mrb[0].mxu0 %v1827
        %v2271 = vpop.f32.mrb[0].mxu0
        %v2272 = vadd.f32 %v1795, %v2271
        %v2273 = vpop.f32.mrb[0].mxu0
        %v2274 = vadd.f32 %v1799, %v2273
        %2275 = vmatprep.mubr.f32.mxu0 0.0
        %2276 = vmatmul.mubr.f32.gmra.mrb[0].mxu0 %v1830
        %v2277 = vpop.f32.mrb[0].mxu0
        %v2278 = vadd.f32 %v1795, %v2277
        %v2279 = vpop.f32.mrb[0].mxu0
        %v2280 = vadd.f32 %v1799, %v2279
        %2281 = vmatprep.mubr.f32.mxu0 0.0
        %2282 = vmatmul.mubr.f32.gmra.mrb[0].mxu0 %v1833
        %v2283 = vpop.f32.mrb[0].mxu0
        %v2284 = vadd.f32 %v1795, %v2283
        %v2285 = vpop.f32.mrb[0].mxu0
        %v2286 = vadd.f32 %v1799, %v2285
        %2287 = vmatprep.mubr.f32.mxu0 0.0
        %2288 = vmatmul.mubr.f32.gmra.mrb[0].mxu0 %v1836
        %v2289 = vpop.f32.mrb[0].mxu0
        %v2290 = vadd.f32 %v1795, %v2289
        %v2291 = vpop.f32.mrb[0].mxu0
        %v2292 = vadd.f32 %v1799, %v2291
        %2293 = vmatprep.mubr.f32.mxu0 0.0
        %2294 = vmatmul.mubr.f32.gmra.mrb[0].mxu0 %v1839
        %v2295 = vpop.f32.mrb[0].mxu0
        %v2296 = vadd.f32 %v1795, %v2295
        %v2297 = vpop.f32.mrb[0].mxu0
        %v2298 = vadd.f32 %v1799, %v2297
        %2299 = vmatprep.mubr.f32.mxu0 0.0
        %2300 = vmatmul.mubr.f32.gmra.mrb[0].mxu0 %v1842
        %v2301 = vpop.f32.mrb[0].mxu0
        %v2302 = vadd.f32 %v1795, %v2301
        %v2303 = vpop.f32.mrb[0].mxu0
        %v2304 = vadd.f32 %v1799, %v2303
        %2305 = vmatprep.mubr.f32.mxu0 0.0
        %2306 = vmatmul.mubr.f32.gmra.mrb[0].mxu0 %v1845
        %v2307 = vpop.f32.mrb[0].mxu0
        %v2308 = vadd.f32 %v1795, %v2307
        %v2309 = vpop.f32.mrb[0].mxu0
        %v2310 = vadd.f32 %v1799, %v2309
        %2311 = vmatprep.mubr.f32.mxu0 0.0
        %2312 = vmatmul.mubr.f32.gmra.mrb[0].mxu0 %v1848
        %v2313 = vpop.f32.mrb[0].mxu0
        %v2314 = vadd.f32 %v1795, %v2313
        %v2315 = vpop.f32.mrb[0].mxu0
        %v2316 = vadd.f32 %v1799, %v2315
        %2317 = vmatprep.mubr.f32.mxu0 0.0
        %2318 = vmatmul.mubr.f32.gmra.mrb[0].mxu0 %v1851
        %v2319 = vpop.f32.mrb[0].mxu0
        %v2320 = vadd.f32 %v1795, %v2319
        %v2321 = vpop.f32.mrb[0].mxu0
        %v2322 = vadd.f32 %v1799, %v2321
        %2323 = vmatprep.mubr.f32.mxu0 0.0
        %2324 = vmatmul.mubr.f32.gmra.mrb[0].mxu0 %v1854
        %v2325 = vpop.f32.mrb[0].mxu0
        %v2326 = vadd.f32 %v1795, %v2325
        %v2327 = vpop.f32.mrb[0].mxu0
        %v2328 = vadd.f32 %v1799, %v2327
        %2329 = vmatprep.mubr.f32.mxu0 0.0
        %2330 = vmatmul.mubr.f32.gmra.mrb[0].mxu0 %v1857
        %v2331 = vpop.f32.mrb[0].mxu0
        %v2332 = vadd.f32 %v1795, %v2331
        %v2333 = vpop.f32.mrb[0].mxu0
        %v2334 = vadd.f32 %v1799, %v2333
        %2335 = vmatprep.mubr.f32.mxu0 0.0
        %2336 = vmatmul.mubr.f32.gmra.mrb[0].mxu0 %v1860
        %v2337 = vpop.f32.mrb[0].mxu0
        %v2338 = vadd.f32 %v1795, %v2337
        %v2339 = vpop.f32.mrb[0].mxu0
        %v2340 = vadd.f32 %v1799, %v2339
        %2341 = vmatprep.mubr.f32.mxu0 0.0
        %2342 = vmatmul.mubr.f32.gmra.mrb[0].mxu0 %v1863
        %v2343 = vpop.f32.mrb[0].mxu0
        %v2344 = vadd.f32 %v1795, %v2343
        %v2345 = vpop.f32.mrb[0].mxu0
        %v2346 = vadd.f32 %v1799, %v2345
        %2347 = vdwg.mxu0
        %2348 = vmatprep.subr.mxu0 %v1765
        %2349 = vmatpush1.msra.mxu0 %v1764
        %2350 = vmatprep.subr.mxu0 %v1773
        %2351 = vmatpush1.msra.mxu0 %v1772
        %2352 = vmatprep.subr.mxu0 0.0
        %2353 = vmatpush1.msra.mxu0 0.0
        %2354 = vmatprep.subr.mxu0 0.0
        %2355 = vmatpush1.msra.mxu0 0.0
        %2356 = vmatprep.subr.mxu0 0.0
        %2357 = vmatpush1.msra.mxu0 0.0
        %2358 = vmatprep.subr.mxu0 0.0
        %2359 = vmatpush1.msra.mxu0 0.0
        %2360 = vmatprep.subr.mxu0 0.0
        %2361 = vmatpush1.msra.mxu0 0.0
        %2362 = vmatprep.subr.mxu0 0.0
        %2363 = vmatpush1.msra.mxu0 0.0
        %2364 = vmatprep.subr.mxu0 0.0
        %2365 = vmatpush1.msra.mxu0 0.0
        %2366 = vmatprep.subr.mxu0 0.0
        %2367 = vmatpush1.msra.mxu0 0.0
        %2368 = vmatprep.subr.mxu0 0.0
        %2369 = vmatpush1.msra.mxu0 0.0
        %2370 = vmatprep.subr.mxu0 0.0
        %2371 = vmatpush1.msra.mxu0 0.0
        %2372 = vmatprep.subr.mxu0 0.0
        %2373 = vmatpush1.msra.mxu0 0.0
        %2374 = vmatprep.subr.mxu0 0.0
        %2375 = vmatpush1.msra.mxu0 0.0
        %2376 = vmatprep.subr.mxu0 0.0
        %2377 = vmatpush1.msra.mxu0 0.0
        %2378 = vmatprep.subr.mxu0 0.0
        %2379 = vmatpush1.msra.mxu0 0.0
        %2380 = vmatprep.subr.mxu0 0.0
        %2381 = vmatpush1.msra.mxu0 0.0
        %2382 = vmatprep.subr.mxu0 0.0
        %2383 = vmatpush1.msra.mxu0 0.0
        %2384 = vmatprep.subr.mxu0 0.0
        %2385 = vmatpush1.msra.mxu0 0.0
        %2386 = vmatprep.subr.mxu0 0.0
        %2387 = vmatpush1.msra.mxu0 0.0
        %2388 = vmatprep.subr.mxu0 0.0
        %2389 = vmatpush1.msra.mxu0 0.0
        %2390 = vmatprep.subr.mxu0 0.0
        %2391 = vmatpush1.msra.mxu0 0.0
        %2392 = vmatprep.subr.mxu0 0.0
        %2393 = vmatpush1.msra.mxu0 0.0
        %2394 = vmatprep.subr.mxu0 0.0
        %2395 = vmatpush1.msra.mxu0 0.0
        %2396 = vmatprep.subr.mxu0 0.0
        %2397 = vmatpush1.msra.mxu0 0.0
        %2398 = vmatprep.subr.mxu0 0.0
        %2399 = vmatpush1.msra.mxu0 0.0
        %2400 = vmatprep.subr.mxu0 0.0
        %2401 = vmatpush1.msra.mxu0 0.0
        %2402 = vmatprep.subr.mxu0 0.0
        %2403 = vmatpush1.msra.mxu0 0.0
        %2404 = vmatprep.subr.mxu0 0.0
        %2405 = vmatpush1.msra.mxu0 0.0
        %2406 = vmatprep.subr.mxu0 0.0
        %2407 = vmatpush1.msra.mxu0 0.0
        %2408 = vmatprep.subr.mxu0 0.0
        %2409 = vmatpush1.msra.mxu0 0.0
        %2410 = vmatprep.subr.mxu0 0.0
        %2411 = vmatpush1.msra.mxu0 0.0
        %2412 = vmatprep.mubr.f32.mxu0 0.0
        %2413 = vmatmul.mubr.f32.gmra.mrb[0].mxu0 %v1818
        %v2414 = vpop.f32.mrb[0].mxu0
        %v2415 = vadd.f32 %v1803, %v2414
        %v2416 = vpop.f32.mrb[0].mxu0
        %v2417 = vadd.f32 %v1807, %v2416
        %2418 = vmatprep.mubr.f32.mxu0 0.0
        %2419 = vmatmul.mubr.f32.gmra.mrb[0].mxu0 %v1821
        %v2420 = vpop.f32.mrb[0].mxu0
        %v2421 = vadd.f32 %v1803, %v2420
        %v2422 = vpop.f32.mrb[0].mxu0
        %v2423 = vadd.f32 %v1807, %v2422
        %2424 = vmatprep.mubr.f32.mxu0 0.0
        %2425 = vmatmul.mubr.f32.gmra.mrb[0].mxu0 %v1824
        %v2426 = vpop.f32.mrb[0].mxu0
        %v2427 = vadd.f32 %v1803, %v2426
        %v2428 = vpop.f32.mrb[0].mxu0
        %v2429 = vadd.f32 %v1807, %v2428
        %2430 = vmatprep.mubr.f32.mxu0 0.0
        %2431 = vmatmul.mubr.f32.gmra.mrb[0].mxu0 %v1827
        %v2432 = vpop.f32.mrb[0].mxu0
        %v2433 = vadd.f32 %v1803, %v2432
        %v2434 = vpop.f32.mrb[0].mxu0
        %v2435 = vadd.f32 %v1807, %v2434
        %2436 = vmatprep.mubr.f32.mxu0 0.0
        %2437 = vmatmul.mubr.f32.gmra.mrb[0].mxu0 %v1830
        %v2438 = vpop.f32.mrb[0].mxu0
        %v2439 = vadd.f32 %v1803, %v2438
        %v2440 = vpop.f32.mrb[0].mxu0
        %v2441 = vadd.f32 %v1807, %v2440
        %2442 = vmatprep.mubr.f32.mxu0 0.0
        %2443 = vmatmul.mubr.f32.gmra.mrb[0].mxu0 %v1833
        %v2444 = vpop.f32.mrb[0].mxu0
        %v2445 = vadd.f32 %v1803, %v2444
        %v2446 = vpop.f32.mrb[0].mxu0
        %v2447 = vadd.f32 %v1807, %v2446
        %2448 = vmatprep.mubr.f32.mxu0 0.0
        %2449 = vmatmul.mubr.f32.gmra.mrb[0].mxu0 %v1836
        %v2450 = vpop.f32.mrb[0].mxu0
        %v2451 = vadd.f32 %v1803, %v2450
        %v2452 = vpop.f32.mrb[0].mxu0
        %v2453 = vadd.f32 %v1807, %v2452
        %2454 = vmatprep.mubr.f32.mxu0 0.0
        %2455 = vmatmul.mubr.f32.gmra.mrb[0].mxu0 %v1839
        %v2456 = vpop.f32.mrb[0].mxu0
        %v2457 = vadd.f32 %v1803, %v2456
        %v2458 = vpop.f32.mrb[0].mxu0
        %v2459 = vadd.f32 %v1807, %v2458
        %2460 = vmatprep.mubr.f32.mxu0 0.0
        %2461 = vmatmul.mubr.f32.gmra.mrb[0].mxu0 %v1842
        %v2462 = vpop.f32.mrb[0].mxu0
        %v2463 = vadd.f32 %v1803, %v2462
        %v2464 = vpop.f32.mrb[0].mxu0
        %v2465 = vadd.f32 %v1807, %v2464
        %2466 = vmatprep.mubr.f32.mxu0 0.0
        %2467 = vmatmul.mubr.f32.gmra.mrb[0].mxu0 %v1845
        %v2468 = vpop.f32.mrb[0].mxu0
        %v2469 = vadd.f32 %v1803, %v2468
        %v2470 = vpop.f32.mrb[0].mxu0
        %v2471 = vadd.f32 %v1807, %v2470
        %2472 = vmatprep.mubr.f32.mxu0 0.0
        %2473 = vmatmul.mubr.f32.gmra.mrb[0].mxu0 %v1848
        %v2474 = vpop.f32.mrb[0].mxu0
        %v2475 = vadd.f32 %v1803, %v2474
        %v2476 = vpop.f32.mrb[0].mxu0
        %v2477 = vadd.f32 %v1807, %v2476
        %2478 = vmatprep.mubr.f32.mxu0 0.0
        %2479 = vmatmul.mubr.f32.gmra.mrb[0].mxu0 %v1851
        %v2480 = vpop.f32.mrb[0].mxu0
        %v2481 = vadd.f32 %v1803, %v2480
        %v2482 = vpop.f32.mrb[0].mxu0
        %v2483 = vadd.f32 %v1807, %v2482
        %2484 = vmatprep.mubr.f32.mxu0 0.0
        %2485 = vmatmul.mubr.f32.gmra.mrb[0].mxu0 %v1854
        %v2486 = vpop.f32.mrb[0].mxu0
        %v2487 = vadd.f32 %v1803, %v2486
        %v2488 = vpop.f32.mrb[0].mxu0
        %v2489 = vadd.f32 %v1807, %v2488
        %2490 = vmatprep.mubr.f32.mxu0 0.0
        %2491 = vmatmul.mubr.f32.gmra.mrb[0].mxu0 %v1857
        %v2492 = vpop.f32.mrb[0].mxu0
        %v2493 = vadd.f32 %v1803, %v2492
        %v2494 = vpop.f32.mrb[0].mxu0
        %v2495 = vadd.f32 %v1807, %v2494
        %2496 = vmatprep.mubr.f32.mxu0 0.0
        %2497 = vmatmul.mubr.f32.gmra.mrb[0].mxu0 %v1860
        %v2498 = vpop.f32.mrb[0].mxu0
        %v2499 = vadd.f32 %v1803, %v2498
        %v2500 = vpop.f32.mrb[0].mxu0
        %v2501 = vadd.f32 %v1807, %v2500
        %2502 = vmatprep.mubr.f32.mxu0 0.0
        %2503 = vmatmul.mubr.f32.gmra.mrb[0].mxu0 %v1863
        %v2504 = vpop.f32.mrb[0].mxu0
        %v2505 = vadd.f32 %v1803, %v2504
        %v2506 = vpop.f32.mrb[0].mxu0
        %v2507 = vadd.f32 %v1807, %v2506
        %2508 = vdwg.mxu0
        %vm2509 = vcmp.ge.f32.partialorder %v1932, 0.0
        %vm2510 = vcmp.ge.f32.partialorder %v1934, 0.0
        %vm2511 = vcmp.ge.f32.partialorder %v2093, 0.0
        %vm2512 = vcmp.ge.f32.partialorder %v2095, 0.0
        %vm2513 = vcmp.ge.f32.partialorder %v2254, 0.0
        %vm2514 = vcmp.ge.f32.partialorder %v2256, 0.0
        %vm2515 = vcmp.ge.f32.partialorder %v2415, 0.0
        %vm2516 = vcmp.ge.f32.partialorder %v2417, 0.0
        %vm2517 = vcmp.ge.f32.partialorder %v1938, 0.0
        %vm2518 = vcmp.ge.f32.partialorder %v1940, 0.0
        %vm2519 = vcmp.ge.f32.partialorder %v2099, 0.0
        %vm2520 = vcmp.ge.f32.partialorder %v2101, 0.0
        %vm2521 = vcmp.ge.f32.partialorder %v2260, 0.0
        %vm2522 = vcmp.ge.f32.partialorder %v2262, 0.0
        %vm2523 = vcmp.ge.f32.partialorder %v2421, 0.0
        %vm2524 = vcmp.ge.f32.partialorder %v2423, 0.0
        %vm2525 = vcmp.ge.f32.partialorder %v1944, 0.0
        %vm2526 = vcmp.ge.f32.partialorder %v1946, 0.0
        %vm2527 = vcmp.ge.f32.partialorder %v2105, 0.0
        %vm2528 = vcmp.ge.f32.partialorder %v2107, 0.0
        %vm2529 = vcmp.ge.f32.partialorder %v2266, 0.0
        %vm2530 = vcmp.ge.f32.partialorder %v2268, 0.0
        %vm2531 = vcmp.ge.f32.partialorder %v2427, 0.0
        %vm2532 = vcmp.ge.f32.partialorder %v2429, 0.0
        %vm2533 = vcmp.ge.f32.partialorder %v1950, 0.0
        %vm2534 = vcmp.ge.f32.partialorder %v1952, 0.0
        %vm2535 = vcmp.ge.f32.partialorder %v2111, 0.0
        %vm2536 = vcmp.ge.f32.partialorder %v2113, 0.0
        %vm2537 = vcmp.ge.f32.partialorder %v2272, 0.0
        %vm2538 = vcmp.ge.f32.partialorder %v2274, 0.0
        %vm2539 = vcmp.ge.f32.partialorder %v2433, 0.0
        %vm2540 = vcmp.ge.f32.partialorder %v2435, 0.0
        %vm2541 = vcmp.ge.f32.partialorder %v1956, 0.0
        %vm2542 = vcmp.ge.f32.partialorder %v1958, 0.0
        %vm2543 = vcmp.ge.f32.partialorder %v2117, 0.0
        %vm2544 = vcmp.ge.f32.partialorder %v2119, 0.0
        %vm2545 = vcmp.ge.f32.partialorder %v2278, 0.0
        %vm2546 = vcmp.ge.f32.partialorder %v2280, 0.0
        %vm2547 = vcmp.ge.f32.partialorder %v2439, 0.0
        %vm2548 = vcmp.ge.f32.partialorder %v2441, 0.0
        %vm2549 = vcmp.ge.f32.partialorder %v1962, 0.0
        %vm2550 = vcmp.ge.f32.partialorder %v1964, 0.0
        %vm2551 = vcmp.ge.f32.partialorder %v2123, 0.0
        %vm2552 = vcmp.ge.f32.partialorder %v2125, 0.0
        %vm2553 = vcmp.ge.f32.partialorder %v2284, 0.0
        %vm2554 = vcmp.ge.f32.partialorder %v2286, 0.0
        %vm2555 = vcmp.ge.f32.partialorder %v2445, 0.0
        %vm2556 = vcmp.ge.f32.partialorder %v2447, 0.0
        %vm2557 = vcmp.ge.f32.partialorder %v1968, 0.0
        %vm2558 = vcmp.ge.f32.partialorder %v1970, 0.0
        %vm2559 = vcmp.ge.f32.partialorder %v2129, 0.0
        %vm2560 = vcmp.ge.f32.partialorder %v2131, 0.0
        %vm2561 = vcmp.ge.f32.partialorder %v2290, 0.0
        %vm2562 = vcmp.ge.f32.partialorder %v2292, 0.0
        %vm2563 = vcmp.ge.f32.partialorder %v2451, 0.0
        %vm2564 = vcmp.ge.f32.partialorder %v2453, 0.0
        %vm2565 = vcmp.ge.f32.partialorder %v1974, 0.0
        %vm2566 = vcmp.ge.f32.partialorder %v1976, 0.0
        %vm2567 = vcmp.ge.f32.partialorder %v2135, 0.0
        %vm2568 = vcmp.ge.f32.partialorder %v2137, 0.0
        %vm2569 = vcmp.ge.f32.partialorder %v2296, 0.0
        %vm2570 = vcmp.ge.f32.partialorder %v2298, 0.0
        %vm2571 = vcmp.ge.f32.partialorder %v2457, 0.0
        %vm2572 = vcmp.ge.f32.partialorder %v2459, 0.0
        %vm2573 = vcmp.ge.f32.partialorder %v1980, 0.0
        %vm2574 = vcmp.ge.f32.partialorder %v1982, 0.0
        %vm2575 = vcmp.ge.f32.partialorder %v2141, 0.0
        %vm2576 = vcmp.ge.f32.partialorder %v2143, 0.0
        %vm2577 = vcmp.ge.f32.partialorder %v2302, 0.0
        %vm2578 = vcmp.ge.f32.partialorder %v2304, 0.0
        %vm2579 = vcmp.ge.f32.partialorder %v2463, 0.0
        %vm2580 = vcmp.ge.f32.partialorder %v2465, 0.0
        %vm2581 = vcmp.ge.f32.partialorder %v1986, 0.0
        %vm2582 = vcmp.ge.f32.partialorder %v1988, 0.0
        %vm2583 = vcmp.ge.f32.partialorder %v2147, 0.0
        %vm2584 = vcmp.ge.f32.partialorder %v2149, 0.0
        %vm2585 = vcmp.ge.f32.partialorder %v2308, 0.0
        %vm2586 = vcmp.ge.f32.partialorder %v2310, 0.0
        %vm2587 = vcmp.ge.f32.partialorder %v2469, 0.0
        %vm2588 = vcmp.ge.f32.partialorder %v2471, 0.0
        %vm2589 = vcmp.ge.f32.partialorder %v1992, 0.0
        %vm2590 = vcmp.ge.f32.partialorder %v1994, 0.0
        %vm2591 = vcmp.ge.f32.partialorder %v2153, 0.0
        %vm2592 = vcmp.ge.f32.partialorder %v2155, 0.0
        %vm2593 = vcmp.ge.f32.partialorder %v2314, 0.0
        %vm2594 = vcmp.ge.f32.partialorder %v2316, 0.0
        %vm2595 = vcmp.ge.f32.partialorder %v2475, 0.0
        %vm2596 = vcmp.ge.f32.partialorder %v2477, 0.0
        %vm2597 = vcmp.ge.f32.partialorder %v1998, 0.0
        %vm2598 = vcmp.ge.f32.partialorder %v2000, 0.0
        %vm2599 = vcmp.ge.f32.partialorder %v2159, 0.0
        %vm2600 = vcmp.ge.f32.partialorder %v2161, 0.0
        %vm2601 = vcmp.ge.f32.partialorder %v2320, 0.0
        %vm2602 = vcmp.ge.f32.partialorder %v2322, 0.0
        %vm2603 = vcmp.ge.f32.partialorder %v2481, 0.0
        %vm2604 = vcmp.ge.f32.partialorder %v2483, 0.0
        %vm2605 = vcmp.ge.f32.partialorder %v2004, 0.0
        %vm2606 = vcmp.ge.f32.partialorder %v2006, 0.0
        %vm2607 = vcmp.ge.f32.partialorder %v2165, 0.0
        %vm2608 = vcmp.ge.f32.partialorder %v2167, 0.0
        %vm2609 = vcmp.ge.f32.partialorder %v2326, 0.0
        %vm2610 = vcmp.ge.f32.partialorder %v2328, 0.0
        %vm2611 = vcmp.ge.f32.partialorder %v2487, 0.0
        %vm2612 = vcmp.ge.f32.partialorder %v2489, 0.0
        %vm2613 = vcmp.ge.f32.partialorder %v2010, 0.0
        %vm2614 = vcmp.ge.f32.partialorder %v2012, 0.0
        %vm2615 = vcmp.ge.f32.partialorder %v2171, 0.0
        %vm2616 = vcmp.ge.f32.partialorder %v2173, 0.0
        %vm2617 = vcmp.ge.f32.partialorder %v2332, 0.0
        %vm2618 = vcmp.ge.f32.partialorder %v2334, 0.0
        %vm2619 = vcmp.ge.f32.partialorder %v2493, 0.0
        %vm2620 = vcmp.ge.f32.partialorder %v2495, 0.0
        %vm2621 = vcmp.ge.f32.partialorder %v2016, 0.0
        %vm2622 = vcmp.ge.f32.partialorder %v2018, 0.0
        %vm2623 = vcmp.ge.f32.partialorder %v2177, 0.0
        %vm2624 = vcmp.ge.f32.partialorder %v2179, 0.0
        %vm2625 = vcmp.ge.f32.partialorder %v2338, 0.0
        %vm2626 = vcmp.ge.f32.partialorder %v2340, 0.0
        %vm2627 = vcmp.ge.f32.partialorder %v2499, 0.0
        %vm2628 = vcmp.ge.f32.partialorder %v2501, 0.0
        %vm2629 = vcmp.ge.f32.partialorder %v2022, 0.0
        %vm2630 = vcmp.ge.f32.partialorder %v2024, 0.0
        %vm2631 = vcmp.ge.f32.partialorder %v2183, 0.0
        %vm2632 = vcmp.ge.f32.partialorder %v2185, 0.0
        %vm2633 = vcmp.ge.f32.partialorder %v2344, 0.0
        %vm2634 = vcmp.ge.f32.partialorder %v2346, 0.0
        %vm2635 = vcmp.ge.f32.partialorder %v2505, 0.0
        %vm2636 = vcmp.ge.f32.partialorder %v2507, 0.0
        %v2637 = vmul.f32 %v1932, 0.01
        %v2638 = vmul.f32 %v1934, 0.01
        %v2639 = vmul.f32 %v2093, 0.01
        %v2640 = vmul.f32 %v2095, 0.01
        %v2641 = vmul.f32 %v2254, 0.01
        %v2642 = vmul.f32 %v2256, 0.01
        %v2643 = vmul.f32 %v2415, 0.01
        %v2644 = vmul.f32 %v2417, 0.01
        %v2645 = vmul.f32 %v1938, 0.01
        %v2646 = vmul.f32 %v1940, 0.01
        %v2647 = vmul.f32 %v2099, 0.01
        %v2648 = vmul.f32 %v2101, 0.01
        %v2649 = vmul.f32 %v2260, 0.01
        %v2650 = vmul.f32 %v2262, 0.01
        %v2651 = vmul.f32 %v2421, 0.01
        %v2652 = vmul.f32 %v2423, 0.01
        %v2653 = vmul.f32 %v1944, 0.01
        %v2654 = vmul.f32 %v1946, 0.01
        %v2655 = vmul.f32 %v2105, 0.01
        %v2656 = vmul.f32 %v2107, 0.01
        %v2657 = vmul.f32 %v2266, 0.01
        %v2658 = vmul.f32 %v2268, 0.01
        %v2659 = vmul.f32 %v2427, 0.01
        %v2660 = vmul.f32 %v2429, 0.01
        %v2661 = vmul.f32 %v1950, 0.01
        %v2662 = vmul.f32 %v1952, 0.01
        %v2663 = vmul.f32 %v2111, 0.01
        %v2664 = vmul.f32 %v2113, 0.01
        %v2665 = vmul.f32 %v2272, 0.01
        %v2666 = vmul.f32 %v2274, 0.01
        %v2667 = vmul.f32 %v2433, 0.01
        %v2668 = vmul.f32 %v2435, 0.01
        %v2669 = vmul.f32 %v1956, 0.01
        %v2670 = vmul.f32 %v1958, 0.01
        %v2671 = vmul.f32 %v2117, 0.01
        %v2672 = vmul.f32 %v2119, 0.01
        %v2673 = vmul.f32 %v2278, 0.01
        %v2674 = vmul.f32 %v2280, 0.01
        %v2675 = vmul.f32 %v2439, 0.01
        %v2676 = vmul.f32 %v2441, 0.01
        %v2677 = vmul.f32 %v1962, 0.01
        %v2678 = vmul.f32 %v1964, 0.01
        %v2679 = vmul.f32 %v2123, 0.01
        %v2680 = vmul.f32 %v2125, 0.01
        %v2681 = vmul.f32 %v2284, 0.01
        %v2682 = vmul.f32 %v2286, 0.01
        %v2683 = vmul.f32 %v2445, 0.01
        %v2684 = vmul.f32 %v2447, 0.01
        %v2685 = vmul.f32 %v1968, 0.01
        %v2686 = vmul.f32 %v1970, 0.01
        %v2687 = vmul.f32 %v2129, 0.01
        %v2688 = vmul.f32 %v2131, 0.01
        %v2689 = vmul.f32 %v2290, 0.01
        %v2690 = vmul.f32 %v2292, 0.01
        %v2691 = vmul.f32 %v2451, 0.01
        %v2692 = vmul.f32 %v2453, 0.01
        %v2693 = vmul.f32 %v1974, 0.01
        %v2694 = vmul.f32 %v1976, 0.01
        %v2695 = vmul.f32 %v2135, 0.01
        %v2696 = vmul.f32 %v2137, 0.01
        %v2697 = vmul.f32 %v2296, 0.01
        %v2698 = vmul.f32 %v2298, 0.01
        %v2699 = vmul.f32 %v2457, 0.01
        %v2700 = vmul.f32 %v2459, 0.01
        %v2701 = vmul.f32 %v1980, 0.01
        %v2702 = vmul.f32 %v1982, 0.01
        %v2703 = vmul.f32 %v2141, 0.01
        %v2704 = vmul.f32 %v2143, 0.01
        %v2705 = vmul.f32 %v2302, 0.01
        %v2706 = vmul.f32 %v2304, 0.01
        %v2707 = vmul.f32 %v2463, 0.01
        %v2708 = vmul.f32 %v2465, 0.01
        %v2709 = vmul.f32 %v1986, 0.01
        %v2710 = vmul.f32 %v1988, 0.01
        %v2711 = vmul.f32 %v2147, 0.01
        %v2712 = vmul.f32 %v2149, 0.01
        %v2713 = vmul.f32 %v2308, 0.01
        %v2714 = vmul.f32 %v2310, 0.01
        %v2715 = vmul.f32 %v2469, 0.01
        %v2716 = vmul.f32 %v2471, 0.01
        %v2717 = vmul.f32 %v1992, 0.01
        %v2718 = vmul.f32 %v1994, 0.01
        %v2719 = vmul.f32 %v2153, 0.01
        %v2720 = vmul.f32 %v2155, 0.01
        %v2721 = vmul.f32 %v2314, 0.01
        %v2722 = vmul.f32 %v2316, 0.01
        %v2723 = vmul.f32 %v2475, 0.01
        %v2724 = vmul.f32 %v2477, 0.01
        %v2725 = vmul.f32 %v1998, 0.01
        %v2726 = vmul.f32 %v2000, 0.01
        %v2727 = vmul.f32 %v2159, 0.01
        %v2728 = vmul.f32 %v2161, 0.01
        %v2729 = vmul.f32 %v2320, 0.01
        %v2730 = vmul.f32 %v2322, 0.01
        %v2731 = vmul.f32 %v2481, 0.01
        %v2732 = vmul.f32 %v2483, 0.01
        %v2733 = vmul.f32 %v2004, 0.01
        %v2734 = vmul.f32 %v2006, 0.01
        %v2735 = vmul.f32 %v2165, 0.01
        %v2736 = vmul.f32 %v2167, 0.01
        %v2737 = vmul.f32 %v2326, 0.01
        %v2738 = vmul.f32 %v2328, 0.01
        %v2739 = vmul.f32 %v2487, 0.01
        %v2740 = vmul.f32 %v2489, 0.01
        %v2741 = vmul.f32 %v2010, 0.01
        %v2742 = vmul.f32 %v2012, 0.01
        %v2743 = vmul.f32 %v2171, 0.01
        %v2744 = vmul.f32 %v2173, 0.01
        %v2745 = vmul.f32 %v2332, 0.01
        %v2746 = vmul.f32 %v2334, 0.01
        %v2747 = vmul.f32 %v2493, 0.01
        %v2748 = vmul.f32 %v2495, 0.01
        %v2749 = vmul.f32 %v2016, 0.01
        %v2750 = vmul.f32 %v2018, 0.01
        %v2751 = vmul.f32 %v2177, 0.01
        %v2752 = vmul.f32 %v2179, 0.01
        %v2753 = vmul.f32 %v2338, 0.01
        %v2754 = vmul.f32 %v2340, 0.01
        %v2755 = vmul.f32 %v2499, 0.01
        %v2756 = vmul.f32 %v2501, 0.01
        %v2757 = vmul.f32 %v2022, 0.01
        %v2758 = vmul.f32 %v2024, 0.01
        %v2759 = vmul.f32 %v2183, 0.01
        %v2760 = vmul.f32 %v2185, 0.01
        %v2761 = vmul.f32 %v2344, 0.01
        %v2762 = vmul.f32 %v2346, 0.01
        %v2763 = vmul.f32 %v2505, 0.01
        %v2764 = vmul.f32 %v2507, 0.01
        %v2765 = vsel %vm2509, %v1932, %v2637
        %v2766 = vsel %vm2510, %v1934, %v2638
        %v2767 = vsel %vm2511, %v2093, %v2639
        %v2768 = vsel %vm2512, %v2095, %v2640
        %v2769 = vsel %vm2513, %v2254, %v2641
        %v2770 = vsel %vm2514, %v2256, %v2642
        %v2771 = vsel %vm2515, %v2415, %v2643
        %v2772 = vsel %vm2516, %v2417, %v2644
        %v2773 = vsel %vm2517, %v1938, %v2645
        %v2774 = vsel %vm2518, %v1940, %v2646
        %v2775 = vsel %vm2519, %v2099, %v2647
        %v2776 = vsel %vm2520, %v2101, %v2648
        %v2777 = vsel %vm2521, %v2260, %v2649
        %v2778 = vsel %vm2522, %v2262, %v2650
        %v2779 = vsel %vm2523, %v2421, %v2651
        %v2780 = vsel %vm2524, %v2423, %v2652
        %v2781 = vsel %vm2525, %v1944, %v2653
        %v2782 = vsel %vm2526, %v1946, %v2654
        %v2783 = vsel %vm2527, %v2105, %v2655
        %v2784 = vsel %vm2528, %v2107, %v2656
        %v2785 = vsel %vm2529, %v2266, %v2657
        %v2786 = vsel %vm2530, %v2268, %v2658
        %v2787 = vsel %vm2531, %v2427, %v2659
        %v2788 = vsel %vm2532, %v2429, %v2660
        %v2789 = vsel %vm2533, %v1950, %v2661
        %v2790 = vsel %vm2534, %v1952, %v2662
        %v2791 = vsel %vm2535, %v2111, %v2663
        %v2792 = vsel %vm2536, %v2113, %v2664
        %v2793 = vsel %vm2537, %v2272, %v2665
        %v2794 = vsel %vm2538, %v2274, %v2666
        %v2795 = vsel %vm2539, %v2433, %v2667
        %v2796 = vsel %vm2540, %v2435, %v2668
        %v2797 = vsel %vm2541, %v1956, %v2669
        %v2798 = vsel %vm2542, %v1958, %v2670
        %v2799 = vsel %vm2543, %v2117, %v2671
        %v2800 = vsel %vm2544, %v2119, %v2672
        %v2801 = vsel %vm2545, %v2278, %v2673
        %v2802 = vsel %vm2546, %v2280, %v2674
        %v2803 = vsel %vm2547, %v2439, %v2675
        %v2804 = vsel %vm2548, %v2441, %v2676
        %v2805 = vsel %vm2549, %v1962, %v2677
        %v2806 = vsel %vm2550, %v1964, %v2678
        %v2807 = vsel %vm2551, %v2123, %v2679
        %v2808 = vsel %vm2552, %v2125, %v2680
        %v2809 = vsel %vm2553, %v2284, %v2681
        %v2810 = vsel %vm2554, %v2286, %v2682
        %v2811 = vsel %vm2555, %v2445, %v2683
        %v2812 = vsel %vm2556, %v2447, %v2684
        %v2813 = vsel %vm2557, %v1968, %v2685
        %v2814 = vsel %vm2558, %v1970, %v2686
        %v2815 = vsel %vm2559, %v2129, %v2687
        %v2816 = vsel %vm2560, %v2131, %v2688
        %v2817 = vsel %vm2561, %v2290, %v2689
        %v2818 = vsel %vm2562, %v2292, %v2690
        %v2819 = vsel %vm2563, %v2451, %v2691
        %v2820 = vsel %vm2564, %v2453, %v2692
        %v2821 = vsel %vm2565, %v1974, %v2693
        %v2822 = vsel %vm2566, %v1976, %v2694
        %v2823 = vsel %vm2567, %v2135, %v2695
        %v2824 = vsel %vm2568, %v2137, %v2696
        %v2825 = vsel %vm2569, %v2296, %v2697
        %v2826 = vsel %vm2570, %v2298, %v2698
        %v2827 = vsel %vm2571, %v2457, %v2699
        %v2828 = vsel %vm2572, %v2459, %v2700
        %v2829 = vsel %vm2573, %v1980, %v2701
        %v2830 = vsel %vm2574, %v1982, %v2702
        %v2831 = vsel %vm2575, %v2141, %v2703
        %v2832 = vsel %vm2576, %v2143, %v2704
        %v2833 = vsel %vm2577, %v2302, %v2705
        %v2834 = vsel %vm2578, %v2304, %v2706
        %v2835 = vsel %vm2579, %v2463, %v2707
        %v2836 = vsel %vm2580, %v2465, %v2708
        %v2837 = vsel %vm2581, %v1986, %v2709
        %v2838 = vsel %vm2582, %v1988, %v2710
        %v2839 = vsel %vm2583, %v2147, %v2711
        %v2840 = vsel %vm2584, %v2149, %v2712
        %v2841 = vsel %vm2585, %v2308, %v2713
        %v2842 = vsel %vm2586, %v2310, %v2714
        %v2843 = vsel %vm2587, %v2469, %v2715
        %v2844 = vsel %vm2588, %v2471, %v2716
        %v2845 = vsel %vm2589, %v1992, %v2717
        %v2846 = vsel %vm2590, %v1994, %v2718
        %v2847 = vsel %vm2591, %v2153, %v2719
        %v2848 = vsel %vm2592, %v2155, %v2720
        %v2849 = vsel %vm2593, %v2314, %v2721
        %v2850 = vsel %vm2594, %v2316, %v2722
        %v2851 = vsel %vm2595, %v2475, %v2723
        %v2852 = vsel %vm2596, %v2477, %v2724
        %v2853 = vsel %vm2597, %v1998, %v2725
        %v2854 = vsel %vm2598, %v2000, %v2726
        %v2855 = vsel %vm2599, %v2159, %v2727
        %v2856 = vsel %vm2600, %v2161, %v2728
        %v2857 = vsel %vm2601, %v2320, %v2729
        %v2858 = vsel %vm2602, %v2322, %v2730
        %v2859 = vsel %vm2603, %v2481, %v2731
        %v2860 = vsel %vm2604, %v2483, %v2732
        %v2861 = vsel %vm2605, %v2004, %v2733
        %v2862 = vsel %vm2606, %v2006, %v2734
        %v2863 = vsel %vm2607, %v2165, %v2735
        %v2864 = vsel %vm2608, %v2167, %v2736
        %v2865 = vsel %vm2609, %v2326, %v2737
        %v2866 = vsel %vm2610, %v2328, %v2738
        %v2867 = vsel %vm2611, %v2487, %v2739
        %v2868 = vsel %vm2612, %v2489, %v2740
        %v2869 = vsel %vm2613, %v2010, %v2741
        %v2870 = vsel %vm2614, %v2012, %v2742
        %v2871 = vsel %vm2615, %v2171, %v2743
        %v2872 = vsel %vm2616, %v2173, %v2744
        %v2873 = vsel %vm2617, %v2332, %v2745
        %v2874 = vsel %vm2618, %v2334, %v2746
        %v2875 = vsel %vm2619, %v2493, %v2747
        %v2876 = vsel %vm2620, %v2495, %v2748
        %v2877 = vsel %vm2621, %v2016, %v2749
        %v2878 = vsel %vm2622, %v2018, %v2750
        %v2879 = vsel %vm2623, %v2177, %v2751
        %v2880 = vsel %vm2624, %v2179, %v2752
        %v2881 = vsel %vm2625, %v2338, %v2753
        %v2882 = vsel %vm2626, %v2340, %v2754
        %v2883 = vsel %vm2627, %v2499, %v2755
        %v2884 = vsel %vm2628, %v2501, %v2756
        %v2885 = vsel %vm2629, %v2022, %v2757
        %v2886 = vsel %vm2630, %v2024, %v2758
        %v2887 = vsel %vm2631, %v2183, %v2759
        %v2888 = vsel %vm2632, %v2185, %v2760
        %v2889 = vsel %vm2633, %v2344, %v2761
        %v2890 = vsel %vm2634, %v2346, %v2762
        %v2891 = vsel %vm2635, %v2505, %v2763
        %v2892 = vsel %vm2636, %v2507, %v2764
        %v2893 = vld [vmem:[#allocation10] sm:$0xff]
        %v2894 = vld [vmem:[#allocation10 + $0x8] sm:$0xff]
        %v2895 = vld [vmem:[#allocation10 + $0x10] sm:$0xff]
        %v2896 = vld [vmem:[#allocation10 + $0x18] sm:$0xff]
        %v2897 = vld [vmem:[#allocation10 + $0x20] sm:$0xff]
        %v2898 = vld [vmem:[#allocation10 + $0x28] sm:$0xff]
        %v2899 = vld [vmem:[#allocation10 + $0x30] sm:$0xff]
        %v2900 = vld [vmem:[#allocation10 + $0x38] sm:$0xff]
        %v2901 = vld [vmem:[#allocation10 + $0x40] sm:$0xff]
        %v2902 = vld [vmem:[#allocation10 + $0x48] sm:$0xff]
        %v2903 = vld [vmem:[#allocation10 + $0x50] sm:$0xff]
        %v2904 = vld [vmem:[#allocation10 + $0x58] sm:$0xff]
        %v2905 = vld [vmem:[#allocation10 + $0x60] sm:$0xff]
        %v2906 = vld [vmem:[#allocation10 + $0x68] sm:$0xff]
        %v2907 = vld [vmem:[#allocation10 + $0x70] sm:$0xff]
        %v2908 = vld [vmem:[#allocation10 + $0x78] sm:$0xff]
        %v2909 = vld [vmem:[#allocation10 + $0x80] sm:$0xff]
        %v2910 = vld [vmem:[#allocation10 + $0x88] sm:$0xff]
        %v2911 = vld [vmem:[#allocation10 + $0x90] sm:$0xff]
        %v2912 = vld [vmem:[#allocation10 + $0x98] sm:$0xff]
        %v2913 = vld [vmem:[#allocation10 + $0xa0] sm:$0xff]
        %v2914 = vld [vmem:[#allocation10 + $0xa8] sm:$0xff]
        %v2915 = vld [vmem:[#allocation10 + $0xb0] sm:$0xff]
        %v2916 = vld [vmem:[#allocation10 + $0xb8] sm:$0xff]
        %v2917 = vld [vmem:[#allocation10 + $0xc0] sm:$0xff]
        %v2918 = vld [vmem:[#allocation10 + $0xc8] sm:$0xff]
        %v2919 = vld [vmem:[#allocation10 + $0xd0] sm:$0xff]
        %v2920 = vld [vmem:[#allocation10 + $0xd8] sm:$0xff]
        %v2921 = vld [vmem:[#allocation10 + $0xe0] sm:$0xff]
        %v2922 = vld [vmem:[#allocation10 + $0xe8] sm:$0xff]
        %v2923 = vld [vmem:[#allocation10 + $0xf0] sm:$0xff]
        %v2924 = vld [vmem:[#allocation10 + $0xf8] sm:$0xff]
        %v2925 = vld [vmem:[#allocation10 + $0x100] sm:$0xff]
        %v2926 = vld [vmem:[#allocation10 + $0x108] sm:$0xff]
        %v2927 = vld [vmem:[#allocation10 + $0x110] sm:$0xff]
        %v2928 = vld [vmem:[#allocation10 + $0x118] sm:$0xff]
        %v2929 = vld [vmem:[#allocation10 + $0x120] sm:$0xff]
        %v2930 = vld [vmem:[#allocation10 + $0x128] sm:$0xff]
        %v2931 = vld [vmem:[#allocation10 + $0x130] sm:$0xff]
        %v2932 = vld [vmem:[#allocation10 + $0x138] sm:$0xff]
        %v2933 = vld [vmem:[#allocation10 + $0x140] sm:$0xff]
        %v2934 = vld [vmem:[#allocation10 + $0x148] sm:$0xff]
        %v2935 = vld [vmem:[#allocation10 + $0x150] sm:$0xff]
        %v2936 = vld [vmem:[#allocation10 + $0x158] sm:$0xff]
        %v2937 = vld [vmem:[#allocation10 + $0x160] sm:$0xff]
        %v2938 = vld [vmem:[#allocation10 + $0x168] sm:$0xff]
        %v2939 = vld [vmem:[#allocation10 + $0x170] sm:$0xff]
        %v2940 = vld [vmem:[#allocation10 + $0x178] sm:$0xff]
        %v2941 = vld [vmem:[#allocation10 + $0x180] sm:$0xff]
        %v2942 = vld [vmem:[#allocation10 + $0x188] sm:$0xff]
        %v2943 = vld [vmem:[#allocation10 + $0x190] sm:$0xff]
        %v2944 = vld [vmem:[#allocation10 + $0x198] sm:$0xff]
        %v2945 = vld [vmem:[#allocation10 + $0x1a0] sm:$0xff]
        %v2946 = vld [vmem:[#allocation10 + $0x1a8] sm:$0xff]
        %v2947 = vld [vmem:[#allocation10 + $0x1b0] sm:$0xff]
        %v2948 = vld [vmem:[#allocation10 + $0x1b8] sm:$0xff]
        %v2949 = vld [vmem:[#allocation10 + $0x1c0] sm:$0xff]
        %v2950 = vld [vmem:[#allocation10 + $0x1c8] sm:$0xff]
        %v2951 = vld [vmem:[#allocation10 + $0x1d0] sm:$0xff]
        %v2952 = vld [vmem:[#allocation10 + $0x1d8] sm:$0xff]
        %v2953 = vld [vmem:[#allocation10 + $0x1e0] sm:$0xff]
        %v2954 = vld [vmem:[#allocation10 + $0x1e8] sm:$0xff]
        %v2955 = vld [vmem:[#allocation10 + $0x1f0] sm:$0xff]
        %v2956 = vld [vmem:[#allocation10 + $0x1f8] sm:$0xff]
        %v2957 = vld [vmem:[#allocation10 + $0x200] sm:$0xff]
        %v2958 = vld [vmem:[#allocation10 + $0x208] sm:$0xff]
        %v2959 = vld [vmem:[#allocation10 + $0x210] sm:$0xff]
        %v2960 = vld [vmem:[#allocation10 + $0x218] sm:$0xff]
        %v2961 = vld [vmem:[#allocation10 + $0x220] sm:$0xff]
        %v2962 = vld [vmem:[#allocation10 + $0x228] sm:$0xff]
        %v2963 = vld [vmem:[#allocation10 + $0x230] sm:$0xff]
        %v2964 = vld [vmem:[#allocation10 + $0x238] sm:$0xff]
        %v2965 = vld [vmem:[#allocation10 + $0x240] sm:$0xff]
        %v2966 = vld [vmem:[#allocation10 + $0x248] sm:$0xff]
        %v2967 = vld [vmem:[#allocation10 + $0x250] sm:$0xff]
        %v2968 = vld [vmem:[#allocation10 + $0x258] sm:$0xff]
        %v2969 = vld [vmem:[#allocation10 + $0x260] sm:$0xff]
        %v2970 = vld [vmem:[#allocation10 + $0x268] sm:$0xff]
        %v2971 = vld [vmem:[#allocation10 + $0x270] sm:$0xff]
        %v2972 = vld [vmem:[#allocation10 + $0x278] sm:$0xff]
        %v2973 = vld [vmem:[#allocation10 + $0x280] sm:$0xff]
        %v2974 = vld [vmem:[#allocation10 + $0x288] sm:$0xff]
        %v2975 = vld [vmem:[#allocation10 + $0x290] sm:$0xff]
        %v2976 = vld [vmem:[#allocation10 + $0x298] sm:$0xff]
        %v2977 = vld [vmem:[#allocation10 + $0x2a0] sm:$0xff]
        %v2978 = vld [vmem:[#allocation10 + $0x2a8] sm:$0xff]
        %v2979 = vld [vmem:[#allocation10 + $0x2b0] sm:$0xff]
        %v2980 = vld [vmem:[#allocation10 + $0x2b8] sm:$0xff]
        %v2981 = vld [vmem:[#allocation10 + $0x2c0] sm:$0xff]
        %v2982 = vld [vmem:[#allocation10 + $0x2c8] sm:$0xff]
        %v2983 = vld [vmem:[#allocation10 + $0x2d0] sm:$0xff]
        %v2984 = vld [vmem:[#allocation10 + $0x2d8] sm:$0xff]
        %v2985 = vld [vmem:[#allocation10 + $0x2e0] sm:$0xff]
        %v2986 = vld [vmem:[#allocation10 + $0x2e8] sm:$0xff]
        %v2987 = vld [vmem:[#allocation10 + $0x2f0] sm:$0xff]
        %v2988 = vld [vmem:[#allocation10 + $0x2f8] sm:$0xff]
        %v2989 = vld [vmem:[#allocation10 + $0x300] sm:$0xff]
        %v2990 = vld [vmem:[#allocation10 + $0x308] sm:$0xff]
        %v2991 = vld [vmem:[#allocation10 + $0x310] sm:$0xff]
        %v2992 = vld [vmem:[#allocation10 + $0x318] sm:$0xff]
        %v2993 = vld [vmem:[#allocation10 + $0x320] sm:$0xff]
        %v2994 = vld [vmem:[#allocation10 + $0x328] sm:$0xff]
        %v2995 = vld [vmem:[#allocation10 + $0x330] sm:$0xff]
        %v2996 = vld [vmem:[#allocation10 + $0x338] sm:$0xff]
        %v2997 = vld [vmem:[#allocation10 + $0x340] sm:$0xff]
        %v2998 = vld [vmem:[#allocation10 + $0x348] sm:$0xff]
        %v2999 = vld [vmem:[#allocation10 + $0x350] sm:$0xff]
        %v3000 = vld [vmem:[#allocation10 + $0x358] sm:$0xff]
        %v3001 = vld [vmem:[#allocation10 + $0x360] sm:$0xff]
        %v3002 = vld [vmem:[#allocation10 + $0x368] sm:$0xff]
        %v3003 = vld [vmem:[#allocation10 + $0x370] sm:$0xff]
        %v3004 = vld [vmem:[#allocation10 + $0x378] sm:$0xff]
        %v3005 = vld [vmem:[#allocation10 + $0x380] sm:$0xff]
        %v3006 = vld [vmem:[#allocation10 + $0x388] sm:$0xff]
        %v3007 = vld [vmem:[#allocation10 + $0x390] sm:$0xff]
        %v3008 = vld [vmem:[#allocation10 + $0x398] sm:$0xff]
        %v3009 = vld [vmem:[#allocation10 + $0x3a0] sm:$0xff]
        %v3010 = vld [vmem:[#allocation10 + $0x3a8] sm:$0xff]
        %v3011 = vld [vmem:[#allocation10 + $0x3b0] sm:$0xff]
        %v3012 = vld [vmem:[#allocation10 + $0x3b8] sm:$0xff]
        %v3013 = vld [vmem:[#allocation10 + $0x3c0] sm:$0xff]
        %v3014 = vld [vmem:[#allocation10 + $0x3c8] sm:$0xff]
        %v3015 = vld [vmem:[#allocation10 + $0x3d0] sm:$0xff]
        %v3016 = vld [vmem:[#allocation10 + $0x3d8] sm:$0xff]
        %v3017 = vld [vmem:[#allocation10 + $0x3e0] sm:$0xff]
        %v3018 = vld [vmem:[#allocation10 + $0x3e8] sm:$0xff]
        %v3019 = vld [vmem:[#allocation10 + $0x3f0] sm:$0xff]
        %v3020 = vld [vmem:[#allocation10 + $0x3f8] sm:$0xff]
        %v3021 = vld [vmem:[#allocation10 + $0x400] sm:$0xff]
        %v3022 = vld [vmem:[#allocation10 + $0x408] sm:$0xff]
        %v3023 = vld [vmem:[#allocation10 + $0x410] sm:$0xff]
        %v3024 = vld [vmem:[#allocation10 + $0x418] sm:$0xff]
        %v3025 = vld [vmem:[#allocation10 + $0x420] sm:$0xff]
        %v3026 = vld [vmem:[#allocation10 + $0x428] sm:$0xff]
        %v3027 = vld [vmem:[#allocation10 + $0x430] sm:$0xff]
        %v3028 = vld [vmem:[#allocation10 + $0x438] sm:$0xff]
        %v3029 = vld [vmem:[#allocation10 + $0x440] sm:$0xff]
        %v3030 = vld [vmem:[#allocation10 + $0x448] sm:$0xff]
        %v3031 = vld [vmem:[#allocation10 + $0x450] sm:$0xff]
        %v3032 = vld [vmem:[#allocation10 + $0x458] sm:$0xff]
        %v3033 = vld [vmem:[#allocation10 + $0x460] sm:$0xff]
        %v3034 = vld [vmem:[#allocation10 + $0x468] sm:$0xff]
        %v3035 = vld [vmem:[#allocation10 + $0x470] sm:$0xff]
        %v3036 = vld [vmem:[#allocation10 + $0x478] sm:$0xff]
        %v3037 = vld [vmem:[#allocation10 + $0x480] sm:$0xff]
        %v3038 = vld [vmem:[#allocation10 + $0x488] sm:$0xff]
        %v3039 = vld [vmem:[#allocation10 + $0x490] sm:$0xff]
        %v3040 = vld [vmem:[#allocation10 + $0x498] sm:$0xff]
        %v3041 = vld [vmem:[#allocation10 + $0x4a0] sm:$0xff]
        %v3042 = vld [vmem:[#allocation10 + $0x4a8] sm:$0xff]
        %v3043 = vld [vmem:[#allocation10 + $0x4b0] sm:$0xff]
        %v3044 = vld [vmem:[#allocation10 + $0x4b8] sm:$0xff]
        %v3045 = vld [vmem:[#allocation10 + $0x4c0] sm:$0xff]
        %v3046 = vld [vmem:[#allocation10 + $0x4c8] sm:$0xff]
        %v3047 = vld [vmem:[#allocation10 + $0x4d0] sm:$0xff]
        %v3048 = vld [vmem:[#allocation10 + $0x4d8] sm:$0xff]
        %v3049 = vld [vmem:[#allocation10 + $0x4e0] sm:$0xff]
        %v3050 = vld [vmem:[#allocation10 + $0x4e8] sm:$0xff]
        %v3051 = vld [vmem:[#allocation10 + $0x4f0] sm:$0xff]
        %v3052 = vld [vmem:[#allocation10 + $0x4f8] sm:$0xff]
        %v3053 = vld [vmem:[#allocation10 + $0x500] sm:$0xff]
        %v3054 = vld [vmem:[#allocation10 + $0x508] sm:$0xff]
        %v3055 = vld [vmem:[#allocation10 + $0x510] sm:$0xff]
        %v3056 = vld [vmem:[#allocation10 + $0x518] sm:$0xff]
        %v3057 = vld [vmem:[#allocation10 + $0x520] sm:$0xff]
        %v3058 = vld [vmem:[#allocation10 + $0x528] sm:$0xff]
        %v3059 = vld [vmem:[#allocation10 + $0x530] sm:$0xff]
        %v3060 = vld [vmem:[#allocation10 + $0x538] sm:$0xff]
        %v3061 = vld [vmem:[#allocation10 + $0x540] sm:$0xff]
        %v3062 = vld [vmem:[#allocation10 + $0x548] sm:$0xff]
        %v3063 = vld [vmem:[#allocation10 + $0x550] sm:$0xff]
        %v3064 = vld [vmem:[#allocation10 + $0x558] sm:$0xff]
        %v3065 = vld [vmem:[#allocation10 + $0x560] sm:$0xff]
        %v3066 = vld [vmem:[#allocation10 + $0x568] sm:$0xff]
        %v3067 = vld [vmem:[#allocation10 + $0x570] sm:$0xff]
        %v3068 = vld [vmem:[#allocation10 + $0x578] sm:$0xff]
        %v3069 = vld [vmem:[#allocation10 + $0x580] sm:$0xff]
        %v3070 = vld [vmem:[#allocation10 + $0x588] sm:$0xff]
        %v3071 = vld [vmem:[#allocation10 + $0x590] sm:$0xff]
        %v3072 = vld [vmem:[#allocation10 + $0x598] sm:$0xff]
        %v3073 = vld [vmem:[#allocation10 + $0x5a0] sm:$0xff]
        %v3074 = vld [vmem:[#allocation10 + $0x5a8] sm:$0xff]
        %v3075 = vld [vmem:[#allocation10 + $0x5b0] sm:$0xff]
        %v3076 = vld [vmem:[#allocation10 + $0x5b8] sm:$0xff]
        %v3077 = vld [vmem:[#allocation10 + $0x5c0] sm:$0xff]
        %v3078 = vld [vmem:[#allocation10 + $0x5c8] sm:$0xff]
        %v3079 = vld [vmem:[#allocation10 + $0x5d0] sm:$0xff]
        %v3080 = vld [vmem:[#allocation10 + $0x5d8] sm:$0xff]
        %v3081 = vld [vmem:[#allocation10 + $0x5e0] sm:$0xff]
        %v3082 = vld [vmem:[#allocation10 + $0x5e8] sm:$0xff]
        %v3083 = vld [vmem:[#allocation10 + $0x5f0] sm:$0xff]
        %v3084 = vld [vmem:[#allocation10 + $0x5f8] sm:$0xff]
        %v3085 = vld [vmem:[#allocation10 + $0x600] sm:$0xff]
        %v3086 = vld [vmem:[#allocation10 + $0x608] sm:$0xff]
        %v3087 = vld [vmem:[#allocation10 + $0x610] sm:$0xff]
        %v3088 = vld [vmem:[#allocation10 + $0x618] sm:$0xff]
        %v3089 = vld [vmem:[#allocation10 + $0x620] sm:$0xff]
        %v3090 = vld [vmem:[#allocation10 + $0x628] sm:$0xff]
        %v3091 = vld [vmem:[#allocation10 + $0x630] sm:$0xff]
        %v3092 = vld [vmem:[#allocation10 + $0x638] sm:$0xff]
        %v3093 = vld [vmem:[#allocation10 + $0x640] sm:$0xff]
        %v3094 = vld [vmem:[#allocation10 + $0x648] sm:$0xff]
        %v3095 = vld [vmem:[#allocation10 + $0x650] sm:$0xff]
        %v3096 = vld [vmem:[#allocation10 + $0x658] sm:$0xff]
        %v3097 = vld [vmem:[#allocation10 + $0x660] sm:$0xff]
        %v3098 = vld [vmem:[#allocation10 + $0x668] sm:$0xff]
        %v3099 = vld [vmem:[#allocation10 + $0x670] sm:$0xff]
        %v3100 = vld [vmem:[#allocation10 + $0x678] sm:$0xff]
        %v3101 = vld [vmem:[#allocation10 + $0x680] sm:$0xff]
        %v3102 = vld [vmem:[#allocation10 + $0x688] sm:$0xff]
        %v3103 = vld [vmem:[#allocation10 + $0x690] sm:$0xff]
        %v3104 = vld [vmem:[#allocation10 + $0x698] sm:$0xff]
        %v3105 = vld [vmem:[#allocation10 + $0x6a0] sm:$0xff]
        %v3106 = vld [vmem:[#allocation10 + $0x6a8] sm:$0xff]
        %v3107 = vld [vmem:[#allocation10 + $0x6b0] sm:$0xff]
        %v3108 = vld [vmem:[#allocation10 + $0x6b8] sm:$0xff]
        %v3109 = vld [vmem:[#allocation10 + $0x6c0] sm:$0xff]
        %v3110 = vld [vmem:[#allocation10 + $0x6c8] sm:$0xff]
        %v3111 = vld [vmem:[#allocation10 + $0x6d0] sm:$0xff]
        %v3112 = vld [vmem:[#allocation10 + $0x6d8] sm:$0xff]
        %v3113 = vld [vmem:[#allocation10 + $0x6e0] sm:$0xff]
        %v3114 = vld [vmem:[#allocation10 + $0x6e8] sm:$0xff]
        %v3115 = vld [vmem:[#allocation10 + $0x6f0] sm:$0xff]
        %v3116 = vld [vmem:[#allocation10 + $0x6f8] sm:$0xff]
        %v3117 = vld [vmem:[#allocation10 + $0x700] sm:$0xff]
        %v3118 = vld [vmem:[#allocation10 + $0x708] sm:$0xff]
        %v3119 = vld [vmem:[#allocation10 + $0x710] sm:$0xff]
        %v3120 = vld [vmem:[#allocation10 + $0x718] sm:$0xff]
        %v3121 = vld [vmem:[#allocation10 + $0x720] sm:$0xff]
        %v3122 = vld [vmem:[#allocation10 + $0x728] sm:$0xff]
        %v3123 = vld [vmem:[#allocation10 + $0x730] sm:$0xff]
        %v3124 = vld [vmem:[#allocation10 + $0x738] sm:$0xff]
        %v3125 = vld [vmem:[#allocation10 + $0x740] sm:$0xff]
        %v3126 = vld [vmem:[#allocation10 + $0x748] sm:$0xff]
        %v3127 = vld [vmem:[#allocation10 + $0x750] sm:$0xff]
        %v3128 = vld [vmem:[#allocation10 + $0x758] sm:$0xff]
        %v3129 = vld [vmem:[#allocation10 + $0x760] sm:$0xff]
        %v3130 = vld [vmem:[#allocation10 + $0x768] sm:$0xff]
        %v3131 = vld [vmem:[#allocation10 + $0x770] sm:$0xff]
        %v3132 = vld [vmem:[#allocation10 + $0x778] sm:$0xff]
        %v3133 = vld [vmem:[#allocation10 + $0x780] sm:$0xff]
        %v3134 = vld [vmem:[#allocation10 + $0x788] sm:$0xff]
        %v3135 = vld [vmem:[#allocation10 + $0x790] sm:$0xff]
        %v3136 = vld [vmem:[#allocation10 + $0x798] sm:$0xff]
        %v3137 = vld [vmem:[#allocation10 + $0x7a0] sm:$0xff]
        %v3138 = vld [vmem:[#allocation10 + $0x7a8] sm:$0xff]
        %v3139 = vld [vmem:[#allocation10 + $0x7b0] sm:$0xff]
        %v3140 = vld [vmem:[#allocation10 + $0x7b8] sm:$0xff]
        %v3141 = vld [vmem:[#allocation10 + $0x7c0] sm:$0xff]
        %v3142 = vld [vmem:[#allocation10 + $0x7c8] sm:$0xff]
        %v3143 = vld [vmem:[#allocation10 + $0x7d0] sm:$0xff]
        %v3144 = vld [vmem:[#allocation10 + $0x7d8] sm:$0xff]
        %v3145 = vld [vmem:[#allocation10 + $0x7e0] sm:$0xff]
        %v3146 = vld [vmem:[#allocation10 + $0x7e8] sm:$0xff]
        %v3147 = vld [vmem:[#allocation10 + $0x7f0] sm:$0xff]
        %v3148 = vld [vmem:[#allocation10 + $0x7f8] sm:$0xff]
        %v3149 = vld [vmem:[#allocation10 + $0x800] sm:$0xff]
        %v3150 = vld [vmem:[#allocation10 + $0x808] sm:$0xff]
        %v3151 = vld [vmem:[#allocation10 + $0x810] sm:$0xff]
        %v3152 = vld [vmem:[#allocation10 + $0x818] sm:$0xff]
        %v3153 = vld [vmem:[#allocation10 + $0x820] sm:$0xff]
        %v3154 = vld [vmem:[#allocation10 + $0x828] sm:$0xff]
        %v3155 = vld [vmem:[#allocation10 + $0x830] sm:$0xff]
        %v3156 = vld [vmem:[#allocation10 + $0x838] sm:$0xff]
        %v3157 = vld [vmem:[#allocation10 + $0x840] sm:$0xff]
        %v3158 = vld [vmem:[#allocation10 + $0x848] sm:$0xff]
        %v3159 = vld [vmem:[#allocation10 + $0x850] sm:$0xff]
        %v3160 = vld [vmem:[#allocation10 + $0x858] sm:$0xff]
        %v3161 = vld [vmem:[#allocation10 + $0x860] sm:$0xff]
        %v3162 = vld [vmem:[#allocation10 + $0x868] sm:$0xff]
        %v3163 = vld [vmem:[#allocation10 + $0x870] sm:$0xff]
        %v3164 = vld [vmem:[#allocation10 + $0x878] sm:$0xff]
        %v3165 = vld [vmem:[#allocation10 + $0x880] sm:$0xff]
        %v3166 = vld [vmem:[#allocation10 + $0x888] sm:$0xff]
        %v3167 = vld [vmem:[#allocation10 + $0x890] sm:$0xff]
        %v3168 = vld [vmem:[#allocation10 + $0x898] sm:$0xff]
        %v3169 = vld [vmem:[#allocation10 + $0x8a0] sm:$0xff]
        %v3170 = vld [vmem:[#allocation10 + $0x8a8] sm:$0xff]
        %v3171 = vld [vmem:[#allocation10 + $0x8b0] sm:$0xff]
        %v3172 = vld [vmem:[#allocation10 + $0x8b8] sm:$0xff]
        %v3173 = vld [vmem:[#allocation10 + $0x8c0] sm:$0xff]
        %v3174 = vld [vmem:[#allocation10 + $0x8c8] sm:$0xff]
        %v3175 = vld [vmem:[#allocation10 + $0x8d0] sm:$0xff]
        %v3176 = vld [vmem:[#allocation10 + $0x8d8] sm:$0xff]
        %v3177 = vld [vmem:[#allocation10 + $0x8e0] sm:$0xff]
        %v3178 = vld [vmem:[#allocation10 + $0x8e8] sm:$0xff]
        %v3179 = vld [vmem:[#allocation10 + $0x8f0] sm:$0xff]
        %v3180 = vld [vmem:[#allocation10 + $0x8f8] sm:$0xff]
        %v3181 = vld [vmem:[#allocation10 + $0x900] sm:$0xff]
        %v3182 = vld [vmem:[#allocation10 + $0x908] sm:$0xff]
        %v3183 = vld [vmem:[#allocation10 + $0x910] sm:$0xff]
        %v3184 = vld [vmem:[#allocation10 + $0x918] sm:$0xff]
        %v3185 = vld [vmem:[#allocation10 + $0x920] sm:$0xff]
        %v3186 = vld [vmem:[#allocation10 + $0x928] sm:$0xff]
        %v3187 = vld [vmem:[#allocation10 + $0x930] sm:$0xff]
        %v3188 = vld [vmem:[#allocation10 + $0x938] sm:$0xff]
        %v3189 = vld [vmem:[#allocation10 + $0x940] sm:$0xff]
        %v3190 = vld [vmem:[#allocation10 + $0x948] sm:$0xff]
        %v3191 = vld [vmem:[#allocation10 + $0x950] sm:$0xff]
        %v3192 = vld [vmem:[#allocation10 + $0x958] sm:$0xff]
        %v3193 = vld [vmem:[#allocation10 + $0x960] sm:$0xff]
        %v3194 = vld [vmem:[#allocation10 + $0x968] sm:$0xff]
        %v3195 = vld [vmem:[#allocation10 + $0x970] sm:$0xff]
        %v3196 = vld [vmem:[#allocation10 + $0x978] sm:$0xff]
        %v3197 = vld [vmem:[#allocation10 + $0x980] sm:$0xff]
        %v3198 = vld [vmem:[#allocation10 + $0x988] sm:$0xff]
        %v3199 = vld [vmem:[#allocation10 + $0x990] sm:$0xff]
        %v3200 = vld [vmem:[#allocation10 + $0x998] sm:$0xff]
        %v3201 = vld [vmem:[#allocation10 + $0x9a0] sm:$0xff]
        %v3202 = vld [vmem:[#allocation10 + $0x9a8] sm:$0xff]
        %v3203 = vld [vmem:[#allocation10 + $0x9b0] sm:$0xff]
        %v3204 = vld [vmem:[#allocation10 + $0x9b8] sm:$0xff]
        %v3205 = vld [vmem:[#allocation10 + $0x9c0] sm:$0xff]
        %v3206 = vld [vmem:[#allocation10 + $0x9c8] sm:$0xff]
        %v3207 = vld [vmem:[#allocation10 + $0x9d0] sm:$0xff]
        %v3208 = vld [vmem:[#allocation10 + $0x9d8] sm:$0xff]
        %v3209 = vld [vmem:[#allocation10 + $0x9e0] sm:$0xff]
        %v3210 = vld [vmem:[#allocation10 + $0x9e8] sm:$0xff]
        %v3211 = vld [vmem:[#allocation10 + $0x9f0] sm:$0xff]
        %v3212 = vld [vmem:[#allocation10 + $0x9f8] sm:$0xff]
        %v3213 = vld [vmem:[#allocation10 + $0xa00] sm:$0xff]
        %v3214 = vld [vmem:[#allocation10 + $0xa08] sm:$0xff]
        %v3215 = vld [vmem:[#allocation10 + $0xa10] sm:$0xff]
        %v3216 = vld [vmem:[#allocation10 + $0xa18] sm:$0xff]
        %v3217 = vld [vmem:[#allocation10 + $0xa20] sm:$0xff]
        %v3218 = vld [vmem:[#allocation10 + $0xa28] sm:$0xff]
        %v3219 = vld [vmem:[#allocation10 + $0xa30] sm:$0xff]
        %v3220 = vld [vmem:[#allocation10 + $0xa38] sm:$0xff]
        %v3221 = vld [vmem:[#allocation10 + $0xa40] sm:$0xff]
        %v3222 = vld [vmem:[#allocation10 + $0xa48] sm:$0xff]
        %v3223 = vld [vmem:[#allocation10 + $0xa50] sm:$0xff]
        %v3224 = vld [vmem:[#allocation10 + $0xa58] sm:$0xff]
        %v3225 = vld [vmem:[#allocation10 + $0xa60] sm:$0xff]
        %v3226 = vld [vmem:[#allocation10 + $0xa68] sm:$0xff]
        %v3227 = vld [vmem:[#allocation10 + $0xa70] sm:$0xff]
        %v3228 = vld [vmem:[#allocation10 + $0xa78] sm:$0xff]
        %v3229 = vld [vmem:[#allocation10 + $0xa80] sm:$0xff]
        %v3230 = vld [vmem:[#allocation10 + $0xa88] sm:$0xff]
        %v3231 = vld [vmem:[#allocation10 + $0xa90] sm:$0xff]
        %v3232 = vld [vmem:[#allocation10 + $0xa98] sm:$0xff]
        %v3233 = vld [vmem:[#allocation10 + $0xaa0] sm:$0xff]
        %v3234 = vld [vmem:[#allocation10 + $0xaa8] sm:$0xff]
        %v3235 = vld [vmem:[#allocation10 + $0xab0] sm:$0xff]
        %v3236 = vld [vmem:[#allocation10 + $0xab8] sm:$0xff]
        %v3237 = vld [vmem:[#allocation10 + $0xac0] sm:$0xff]
        %v3238 = vld [vmem:[#allocation10 + $0xac8] sm:$0xff]
        %v3239 = vld [vmem:[#allocation10 + $0xad0] sm:$0xff]
        %v3240 = vld [vmem:[#allocation10 + $0xad8] sm:$0xff]
        %v3241 = vld [vmem:[#allocation10 + $0xae0] sm:$0xff]
        %v3242 = vld [vmem:[#allocation10 + $0xae8] sm:$0xff]
        %v3243 = vld [vmem:[#allocation10 + $0xaf0] sm:$0xff]
        %v3244 = vld [vmem:[#allocation10 + $0xaf8] sm:$0xff]
        %v3245 = vld [vmem:[#allocation10 + $0xb00] sm:$0xff]
        %v3246 = vld [vmem:[#allocation10 + $0xb08] sm:$0xff]
        %v3247 = vld [vmem:[#allocation10 + $0xb10] sm:$0xff]
        %v3248 = vld [vmem:[#allocation10 + $0xb18] sm:$0xff]
        %v3249 = vld [vmem:[#allocation10 + $0xb20] sm:$0xff]
        %v3250 = vld [vmem:[#allocation10 + $0xb28] sm:$0xff]
        %v3251 = vld [vmem:[#allocation10 + $0xb30] sm:$0xff]
        %v3252 = vld [vmem:[#allocation10 + $0xb38] sm:$0xff]
        %v3253 = vld [vmem:[#allocation10 + $0xb40] sm:$0xff]
        %v3254 = vld [vmem:[#allocation10 + $0xb48] sm:$0xff]
        %v3255 = vld [vmem:[#allocation10 + $0xb50] sm:$0xff]
        %v3256 = vld [vmem:[#allocation10 + $0xb58] sm:$0xff]
        %v3257 = vld [vmem:[#allocation10 + $0xb60] sm:$0xff]
        %v3258 = vld [vmem:[#allocation10 + $0xb68] sm:$0xff]
        %v3259 = vld [vmem:[#allocation10 + $0xb70] sm:$0xff]
        %v3260 = vld [vmem:[#allocation10 + $0xb78] sm:$0xff]
        %v3261 = vld [vmem:[#allocation10 + $0xb80] sm:$0xff]
        %v3262 = vld [vmem:[#allocation10 + $0xb88] sm:$0xff]
        %v3263 = vld [vmem:[#allocation10 + $0xb90] sm:$0xff]
        %v3264 = vld [vmem:[#allocation10 + $0xb98] sm:$0xff]
        %v3265 = vld [vmem:[#allocation10 + $0xba0] sm:$0xff]
        %v3266 = vld [vmem:[#allocation10 + $0xba8] sm:$0xff]
        %v3267 = vld [vmem:[#allocation10 + $0xbb0] sm:$0xff]
        %v3268 = vld [vmem:[#allocation10 + $0xbb8] sm:$0xff]
        %v3269 = vld [vmem:[#allocation10 + $0xbc0] sm:$0xff]
        %v3270 = vld [vmem:[#allocation10 + $0xbc8] sm:$0xff]
        %v3271 = vld [vmem:[#allocation10 + $0xbd0] sm:$0xff]
        %v3272 = vld [vmem:[#allocation10 + $0xbd8] sm:$0xff]
        %v3273 = vld [vmem:[#allocation10 + $0xbe0] sm:$0xff]
        %v3274 = vld [vmem:[#allocation10 + $0xbe8] sm:$0xff]
        %v3275 = vld [vmem:[#allocation10 + $0xbf0] sm:$0xff]
        %v3276 = vld [vmem:[#allocation10 + $0xbf8] sm:$0xff]
        %v3277 = vld [vmem:[#allocation10 + $0xc00] sm:$0xff]
        %v3278 = vld [vmem:[#allocation10 + $0xc08] sm:$0xff]
        %v3279 = vld [vmem:[#allocation10 + $0xc10] sm:$0xff]
        %v3280 = vld [vmem:[#allocation10 + $0xc18] sm:$0xff]
        %v3281 = vld [vmem:[#allocation10 + $0xc20] sm:$0xff]
        %v3282 = vld [vmem:[#allocation10 + $0xc28] sm:$0xff]
        %v3283 = vld [vmem:[#allocation10 + $0xc30] sm:$0xff]
        %v3284 = vld [vmem:[#allocation10 + $0xc38] sm:$0xff]
        %v3285 = vld [vmem:[#allocation10 + $0xc40] sm:$0xff]
        %v3286 = vld [vmem:[#allocation10 + $0xc48] sm:$0xff]
        %v3287 = vld [vmem:[#allocation10 + $0xc50] sm:$0xff]
        %v3288 = vld [vmem:[#allocation10 + $0xc58] sm:$0xff]
        %v3289 = vld [vmem:[#allocation10 + $0xc60] sm:$0xff]
        %v3290 = vld [vmem:[#allocation10 + $0xc68] sm:$0xff]
        %v3291 = vld [vmem:[#allocation10 + $0xc70] sm:$0xff]
        %v3292 = vld [vmem:[#allocation10 + $0xc78] sm:$0xff]
        %v3293 = vld [vmem:[#allocation10 + $0xc80] sm:$0xff]
        %v3294 = vld [vmem:[#allocation10 + $0xc88] sm:$0xff]
        %v3295 = vld [vmem:[#allocation10 + $0xc90] sm:$0xff]
        %v3296 = vld [vmem:[#allocation10 + $0xc98] sm:$0xff]
        %v3297 = vld [vmem:[#allocation10 + $0xca0] sm:$0xff]
        %v3298 = vld [vmem:[#allocation10 + $0xca8] sm:$0xff]
        %v3299 = vld [vmem:[#allocation10 + $0xcb0] sm:$0xff]
        %v3300 = vld [vmem:[#allocation10 + $0xcb8] sm:$0xff]
        %v3301 = vld [vmem:[#allocation10 + $0xcc0] sm:$0xff]
        %v3302 = vld [vmem:[#allocation10 + $0xcc8] sm:$0xff]
        %v3303 = vld [vmem:[#allocation10 + $0xcd0] sm:$0xff]
        %v3304 = vld [vmem:[#allocation10 + $0xcd8] sm:$0xff]
        %v3305 = vld [vmem:[#allocation10 + $0xce0] sm:$0xff]
        %v3306 = vld [vmem:[#allocation10 + $0xce8] sm:$0xff]
        %v3307 = vld [vmem:[#allocation10 + $0xcf0] sm:$0xff]
        %v3308 = vld [vmem:[#allocation10 + $0xcf8] sm:$0xff]
        %v3309 = vld [vmem:[#allocation10 + $0xd00] sm:$0xff]
        %v3310 = vld [vmem:[#allocation10 + $0xd08] sm:$0xff]
        %v3311 = vld [vmem:[#allocation10 + $0xd10] sm:$0xff]
        %v3312 = vld [vmem:[#allocation10 + $0xd18] sm:$0xff]
        %v3313 = vld [vmem:[#allocation10 + $0xd20] sm:$0xff]
        %v3314 = vld [vmem:[#allocation10 + $0xd28] sm:$0xff]
        %v3315 = vld [vmem:[#allocation10 + $0xd30] sm:$0xff]
        %v3316 = vld [vmem:[#allocation10 + $0xd38] sm:$0xff]
        %v3317 = vld [vmem:[#allocation10 + $0xd40] sm:$0xff]
        %v3318 = vld [vmem:[#allocation10 + $0xd48] sm:$0xff]
        %v3319 = vld [vmem:[#allocation10 + $0xd50] sm:$0xff]
        %v3320 = vld [vmem:[#allocation10 + $0xd58] sm:$0xff]
        %v3321 = vld [vmem:[#allocation10 + $0xd60] sm:$0xff]
        %v3322 = vld [vmem:[#allocation10 + $0xd68] sm:$0xff]
        %v3323 = vld [vmem:[#allocation10 + $0xd70] sm:$0xff]
        %v3324 = vld [vmem:[#allocation10 + $0xd78] sm:$0xff]
        %v3325 = vld [vmem:[#allocation10 + $0xd80] sm:$0xff]
        %v3326 = vld [vmem:[#allocation10 + $0xd88] sm:$0xff]
        %v3327 = vld [vmem:[#allocation10 + $0xd90] sm:$0xff]
        %v3328 = vld [vmem:[#allocation10 + $0xd98] sm:$0xff]
        %v3329 = vld [vmem:[#allocation10 + $0xda0] sm:$0xff]
        %v3330 = vld [vmem:[#allocation10 + $0xda8] sm:$0xff]
        %v3331 = vld [vmem:[#allocation10 + $0xdb0] sm:$0xff]
        %v3332 = vld [vmem:[#allocation10 + $0xdb8] sm:$0xff]
        %v3333 = vld [vmem:[#allocation10 + $0xdc0] sm:$0xff]
        %v3334 = vld [vmem:[#allocation10 + $0xdc8] sm:$0xff]
        %v3335 = vld [vmem:[#allocation10 + $0xdd0] sm:$0xff]
        %v3336 = vld [vmem:[#allocation10 + $0xdd8] sm:$0xff]
        %v3337 = vld [vmem:[#allocation10 + $0xde0] sm:$0xff]
        %v3338 = vld [vmem:[#allocation10 + $0xde8] sm:$0xff]
        %v3339 = vld [vmem:[#allocation10 + $0xdf0] sm:$0xff]
        %v3340 = vld [vmem:[#allocation10 + $0xdf8] sm:$0xff]
        %v3341 = vld [vmem:[#allocation10 + $0xe00] sm:$0xff]
        %v3342 = vld [vmem:[#allocation10 + $0xe08] sm:$0xff]
        %v3343 = vld [vmem:[#allocation10 + $0xe10] sm:$0xff]
        %v3344 = vld [vmem:[#allocation10 + $0xe18] sm:$0xff]
        %v3345 = vld [vmem:[#allocation10 + $0xe20] sm:$0xff]
        %v3346 = vld [vmem:[#allocation10 + $0xe28] sm:$0xff]
        %v3347 = vld [vmem:[#allocation10 + $0xe30] sm:$0xff]
        %v3348 = vld [vmem:[#allocation10 + $0xe38] sm:$0xff]
        %v3349 = vld [vmem:[#allocation10 + $0xe40] sm:$0xff]
        %v3350 = vld [vmem:[#allocation10 + $0xe48] sm:$0xff]
        %v3351 = vld [vmem:[#allocation10 + $0xe50] sm:$0xff]
        %v3352 = vld [vmem:[#allocation10 + $0xe58] sm:$0xff]
        %v3353 = vld [vmem:[#allocation10 + $0xe60] sm:$0xff]
        %v3354 = vld [vmem:[#allocation10 + $0xe68] sm:$0xff]
        %v3355 = vld [vmem:[#allocation10 + $0xe70] sm:$0xff]
        %v3356 = vld [vmem:[#allocation10 + $0xe78] sm:$0xff]
        %v3357 = vld [vmem:[#allocation10 + $0xe80] sm:$0xff]
        %v3358 = vld [vmem:[#allocation10 + $0xe88] sm:$0xff]
        %v3359 = vld [vmem:[#allocation10 + $0xe90] sm:$0xff]
        %v3360 = vld [vmem:[#allocation10 + $0xe98] sm:$0xff]
        %v3361 = vld [vmem:[#allocation10 + $0xea0] sm:$0xff]
        %v3362 = vld [vmem:[#allocation10 + $0xea8] sm:$0xff]
        %v3363 = vld [vmem:[#allocation10 + $0xeb0] sm:$0xff]
        %v3364 = vld [vmem:[#allocation10 + $0xeb8] sm:$0xff]
        %v3365 = vld [vmem:[#allocation10 + $0xec0] sm:$0xff]
        %v3366 = vld [vmem:[#allocation10 + $0xec8] sm:$0xff]
        %v3367 = vld [vmem:[#allocation10 + $0xed0] sm:$0xff]
        %v3368 = vld [vmem:[#allocation10 + $0xed8] sm:$0xff]
        %v3369 = vld [vmem:[#allocation10 + $0xee0] sm:$0xff]
        %v3370 = vld [vmem:[#allocation10 + $0xee8] sm:$0xff]
        %v3371 = vld [vmem:[#allocation10 + $0xef0] sm:$0xff]
        %v3372 = vld [vmem:[#allocation10 + $0xef8] sm:$0xff]
        %v3373 = vld [vmem:[#allocation10 + $0xf00] sm:$0xff]
        %v3374 = vld [vmem:[#allocation10 + $0xf08] sm:$0xff]
        %v3375 = vld [vmem:[#allocation10 + $0xf10] sm:$0xff]
        %v3376 = vld [vmem:[#allocation10 + $0xf18] sm:$0xff]
        %v3377 = vld [vmem:[#allocation10 + $0xf20] sm:$0xff]
        %v3378 = vld [vmem:[#allocation10 + $0xf28] sm:$0xff]
        %v3379 = vld [vmem:[#allocation10 + $0xf30] sm:$0xff]
        %v3380 = vld [vmem:[#allocation10 + $0xf38] sm:$0xff]
        %v3381 = vld [vmem:[#allocation10 + $0xf40] sm:$0xff]
        %v3382 = vld [vmem:[#allocation10 + $0xf48] sm:$0xff]
        %v3383 = vld [vmem:[#allocation10 + $0xf50] sm:$0xff]
        %v3384 = vld [vmem:[#allocation10 + $0xf58] sm:$0xff]
        %v3385 = vld [vmem:[#allocation10 + $0xf60] sm:$0xff]
        %v3386 = vld [vmem:[#allocation10 + $0xf68] sm:$0xff]
        %v3387 = vld [vmem:[#allocation10 + $0xf70] sm:$0xff]
        %v3388 = vld [vmem:[#allocation10 + $0xf78] sm:$0xff]
        %v3389 = vld [vmem:[#allocation10 + $0xf80] sm:$0xff]
        %v3390 = vld [vmem:[#allocation10 + $0xf88] sm:$0xff]
        %v3391 = vld [vmem:[#allocation10 + $0xf90] sm:$0xff]
        %v3392 = vld [vmem:[#allocation10 + $0xf98] sm:$0xff]
        %v3393 = vld [vmem:[#allocation10 + $0xfa0] sm:$0xff]
        %v3394 = vld [vmem:[#allocation10 + $0xfa8] sm:$0xff]
        %v3395 = vld [vmem:[#allocation10 + $0xfb0] sm:$0xff]
        %v3396 = vld [vmem:[#allocation10 + $0xfb8] sm:$0xff]
        %v3397 = vld [vmem:[#allocation10 + $0xfc0] sm:$0xff]
        %v3398 = vld [vmem:[#allocation10 + $0xfc8] sm:$0xff]
        %v3399 = vld [vmem:[#allocation10 + $0xfd0] sm:$0xff]
        %v3400 = vld [vmem:[#allocation10 + $0xfd8] sm:$0xff]
        %v3401 = vld [vmem:[#allocation10 + $0xfe0] sm:$0xff]
        %v3402 = vld [vmem:[#allocation10 + $0xfe8] sm:$0xff]
        %v3403 = vld [vmem:[#allocation10 + $0xff0] sm:$0xff]
        %v3404 = vld [vmem:[#allocation10 + $0xff8] sm:$0xff]
        %v3405 = vld [vmem:[#allocation12] sm:$0xf]
        %v3407 = vlaneseq
        %v3408 = vshrl.u32 %v3407, 7
        %v3409 = vsub.s32 0, %v3408
        %v3410 = vrot.slane %v3405, %v3409
        %v3411 = vlaneseq
        %v3412 = vshrl.u32 %v3411, 7
        %v3413 = vsub.s32 1, %v3412
        %v3414 = vrot.slane %v3405, %v3413
        %v3415 = vlaneseq
        %v3416 = vshrl.u32 %v3415, 7
        %v3417 = vsub.s32 2, %v3416
        %v3418 = vrot.slane %v3405, %v3417
        %v3419 = vlaneseq
        %v3420 = vshrl.u32 %v3419, 7
        %v3421 = vsub.s32 3, %v3420
        %v3422 = vrot.slane %v3405, %v3421
        %3427 = vmatprep.subr.mxu0 %v2894
        %3428 = vmatpush1.msra.mxu0 %v2893
        %3429 = vmatprep.subr.mxu0 %v2898
        %3430 = vmatpush1.msra.mxu0 %v2897
        %3431 = vmatprep.subr.mxu0 %v2902
        %3432 = vmatpush1.msra.mxu0 %v2901
        %3433 = vmatprep.subr.mxu0 %v2906
        %3434 = vmatpush1.msra.mxu0 %v2905
        %3435 = vmatprep.subr.mxu0 %v2910
        %3436 = vmatpush1.msra.mxu0 %v2909
        %3437 = vmatprep.subr.mxu0 %v2914
        %3438 = vmatpush1.msra.mxu0 %v2913
        %3439 = vmatprep.subr.mxu0 %v2918
        %3440 = vmatpush1.msra.mxu0 %v2917
        %3441 = vmatprep.subr.mxu0 %v2922
        %3442 = vmatpush1.msra.mxu0 %v2921
        %3443 = vmatprep.subr.mxu0 %v2926
        %3444 = vmatpush1.msra.mxu0 %v2925
        %3445 = vmatprep.subr.mxu0 %v2930
        %3446 = vmatpush1.msra.mxu0 %v2929
        %3447 = vmatprep.subr.mxu0 %v2934
        %3448 = vmatpush1.msra.mxu0 %v2933
        %3449 = vmatprep.subr.mxu0 %v2938
        %3450 = vmatpush1.msra.mxu0 %v2937
        %3451 = vmatprep.subr.mxu0 %v2942
        %3452 = vmatpush1.msra.mxu0 %v2941
        %3453 = vmatprep.subr.mxu0 %v2946
        %3454 = vmatpush1.msra.mxu0 %v2945
        %3455 = vmatprep.subr.mxu0 %v2950
        %3456 = vmatpush1.msra.mxu0 %v2949
        %3457 = vmatprep.subr.mxu0 %v2954
        %3458 = vmatpush1.msra.mxu0 %v2953
        %3459 = vmatprep.subr.mxu0 %v2958
        %3460 = vmatpush1.msra.mxu0 %v2957
        %3461 = vmatprep.subr.mxu0 %v2962
        %3462 = vmatpush1.msra.mxu0 %v2961
        %3463 = vmatprep.subr.mxu0 %v2966
        %3464 = vmatpush1.msra.mxu0 %v2965
        %3465 = vmatprep.subr.mxu0 %v2970
        %3466 = vmatpush1.msra.mxu0 %v2969
        %3467 = vmatprep.subr.mxu0 %v2974
        %3468 = vmatpush1.msra.mxu0 %v2973
        %3469 = vmatprep.subr.mxu0 %v2978
        %3470 = vmatpush1.msra.mxu0 %v2977
        %3471 = vmatprep.subr.mxu0 %v2982
        %3472 = vmatpush1.msra.mxu0 %v2981
        %3473 = vmatprep.subr.mxu0 %v2986
        %3474 = vmatpush1.msra.mxu0 %v2985
        %3475 = vmatprep.subr.mxu0 %v2990
        %3476 = vmatpush1.msra.mxu0 %v2989
        %3477 = vmatprep.subr.mxu0 %v2994
        %3478 = vmatpush1.msra.mxu0 %v2993
        %3479 = vmatprep.subr.mxu0 %v2998
        %3480 = vmatpush1.msra.mxu0 %v2997
        %3481 = vmatprep.subr.mxu0 %v3002
        %3482 = vmatpush1.msra.mxu0 %v3001
        %3483 = vmatprep.subr.mxu0 %v3006
        %3484 = vmatpush1.msra.mxu0 %v3005
        %3485 = vmatprep.subr.mxu0 %v3010
        %3486 = vmatpush1.msra.mxu0 %v3009
        %3487 = vmatprep.subr.mxu0 %v3014
        %3488 = vmatpush1.msra.mxu0 %v3013
        %3489 = vmatprep.subr.mxu0 %v3018
        %3490 = vmatpush1.msra.mxu0 %v3017
        %3491 = vmatprep.mubr.f32.mxu0 %v2766
        %3492 = vmatmul.mubr.f32.gmra.mrb[0].mxu0 %v2765
        %v3493 = vpop.f32.mrb[0].mxu0
        %v3494 = vadd.f32 %v3410, %v3493
        %v3495 = vpop.f32.mrb[0].mxu0
        %v3496 = vadd.f32 %v3414, %v3495
        %3497 = vmatprep.mubr.f32.mxu0 %v2774
        %3498 = vmatmul.mubr.f32.gmra.mrb[0].mxu0 %v2773
        %v3499 = vpop.f32.mrb[0].mxu0
        %v3500 = vadd.f32 %v3410, %v3499
        %v3501 = vpop.f32.mrb[0].mxu0
        %v3502 = vadd.f32 %v3414, %v3501
        %3503 = vmatprep.mubr.f32.mxu0 %v2782
        %3504 = vmatmul.mubr.f32.gmra.mrb[0].mxu0 %v2781
        %v3505 = vpop.f32.mrb[0].mxu0
        %v3506 = vadd.f32 %v3410, %v3505
        %v3507 = vpop.f32.mrb[0].mxu0
        %v3508 = vadd.f32 %v3414, %v3507
        %3509 = vmatprep.mubr.f32.mxu0 %v2790
        %3510 = vmatmul.mubr.f32.gmra.mrb[0].mxu0 %v2789
        %v3511 = vpop.f32.mrb[0].mxu0
        %v3512 = vadd.f32 %v3410, %v3511
        %v3513 = vpop.f32.mrb[0].mxu0
        %v3514 = vadd.f32 %v3414, %v3513
        %3515 = vmatprep.mubr.f32.mxu0 %v2798
        %3516 = vmatmul.mubr.f32.gmra.mrb[0].mxu0 %v2797
        %v3517 = vpop.f32.mrb[0].mxu0
        %v3518 = vadd.f32 %v3410, %v3517
        %v3519 = vpop.f32.mrb[0].mxu0
        %v3520 = vadd.f32 %v3414, %v3519
        %3521 = vmatprep.mubr.f32.mxu0 %v2806
        %3522 = vmatmul.mubr.f32.gmra.mrb[0].mxu0 %v2805
        %v3523 = vpop.f32.mrb[0].mxu0
        %v3524 = vadd.f32 %v3410, %v3523
        %v3525 = vpop.f32.mrb[0].mxu0
        %v3526 = vadd.f32 %v3414, %v3525
        %3527 = vmatprep.mubr.f32.mxu0 %v2814
        %3528 = vmatmul.mubr.f32.gmra.mrb[0].mxu0 %v2813
        %v3529 = vpop.f32.mrb[0].mxu0
        %v3530 = vadd.f32 %v3410, %v3529
        %v3531 = vpop.f32.mrb[0].mxu0
        %v3532 = vadd.f32 %v3414, %v3531
        %3533 = vmatprep.mubr.f32.mxu0 %v2822
        %3534 = vmatmul.mubr.f32.gmra.mrb[0].mxu0 %v2821
        %v3535 = vpop.f32.mrb[0].mxu0
        %v3536 = vadd.f32 %v3410, %v3535
        %v3537 = vpop.f32.mrb[0].mxu0
        %v3538 = vadd.f32 %v3414, %v3537
        %3539 = vmatprep.mubr.f32.mxu0 %v2830
        %3540 = vmatmul.mubr.f32.gmra.mrb[0].mxu0 %v2829
        %v3541 = vpop.f32.mrb[0].mxu0
        %v3542 = vadd.f32 %v3410, %v3541
        %v3543 = vpop.f32.mrb[0].mxu0
        %v3544 = vadd.f32 %v3414, %v3543
        %3545 = vmatprep.mubr.f32.mxu0 %v2838
        %3546 = vmatmul.mubr.f32.gmra.mrb[0].mxu0 %v2837
        %v3547 = vpop.f32.mrb[0].mxu0
        %v3548 = vadd.f32 %v3410, %v3547
        %v3549 = vpop.f32.mrb[0].mxu0
        %v3550 = vadd.f32 %v3414, %v3549
        %3551 = vmatprep.mubr.f32.mxu0 %v2846
        %3552 = vmatmul.mubr.f32.gmra.mrb[0].mxu0 %v2845
        %v3553 = vpop.f32.mrb[0].mxu0
        %v3554 = vadd.f32 %v3410, %v3553
        %v3555 = vpop.f32.mrb[0].mxu0
        %v3556 = vadd.f32 %v3414, %v3555
        %3557 = vmatprep.mubr.f32.mxu0 %v2854
        %3558 = vmatmul.mubr.f32.gmra.mrb[0].mxu0 %v2853
        %v3559 = vpop.f32.mrb[0].mxu0
        %v3560 = vadd.f32 %v3410, %v3559
        %v3561 = vpop.f32.mrb[0].mxu0
        %v3562 = vadd.f32 %v3414, %v3561
        %3563 = vmatprep.mubr.f32.mxu0 %v2862
        %3564 = vmatmul.mubr.f32.gmra.mrb[0].mxu0 %v2861
        %v3565 = vpop.f32.mrb[0].mxu0
        %v3566 = vadd.f32 %v3410, %v3565
        %v3567 = vpop.f32.mrb[0].mxu0
        %v3568 = vadd.f32 %v3414, %v3567
        %3569 = vmatprep.mubr.f32.mxu0 %v2870
        %3570 = vmatmul.mubr.f32.gmra.mrb[0].mxu0 %v2869
        %v3571 = vpop.f32.mrb[0].mxu0
        %v3572 = vadd.f32 %v3410, %v3571
        %v3573 = vpop.f32.mrb[0].mxu0
        %v3574 = vadd.f32 %v3414, %v3573
        %3575 = vmatprep.mubr.f32.mxu0 %v2878
        %3576 = vmatmul.mubr.f32.gmra.mrb[0].mxu0 %v2877
        %v3577 = vpop.f32.mrb[0].mxu0
        %v3578 = vadd.f32 %v3410, %v3577
        %v3579 = vpop.f32.mrb[0].mxu0
        %v3580 = vadd.f32 %v3414, %v3579
        %3581 = vmatprep.mubr.f32.mxu0 %v2886
        %3582 = vmatmul.mubr.f32.gmra.mrb[0].mxu0 %v2885
        %v3583 = vpop.f32.mrb[0].mxu0
        %v3584 = vadd.f32 %v3410, %v3583
        %v3585 = vpop.f32.mrb[0].mxu0
        %v3586 = vadd.f32 %v3414, %v3585
        %3587 = vdwg.mxu0
        %3588 = vmatprep.subr.mxu0 %v3022
        %3589 = vmatpush1.msra.mxu0 %v3021
        %3590 = vmatprep.subr.mxu0 %v3026
        %3591 = vmatpush1.msra.mxu0 %v3025
        %3592 = vmatprep.subr.mxu0 %v3030
        %3593 = vmatpush1.msra.mxu0 %v3029
        %3594 = vmatprep.subr.mxu0 %v3034
        %3595 = vmatpush1.msra.mxu0 %v3033
        %3596 = vmatprep.subr.mxu0 %v3038
        %3597 = vmatpush1.msra.mxu0 %v3037
        %3598 = vmatprep.subr.mxu0 %v3042
        %3599 = vmatpush1.msra.mxu0 %v3041
        %3600 = vmatprep.subr.mxu0 %v3046
        %3601 = vmatpush1.msra.mxu0 %v3045
        %3602 = vmatprep.subr.mxu0 %v3050
        %3603 = vmatpush1.msra.mxu0 %v3049
        %3604 = vmatprep.subr.mxu0 %v3054
        %3605 = vmatpush1.msra.mxu0 %v3053
        %3606 = vmatprep.subr.mxu0 %v3058
        %3607 = vmatpush1.msra.mxu0 %v3057
        %3608 = vmatprep.subr.mxu0 %v3062
        %3609 = vmatpush1.msra.mxu0 %v3061
        %3610 = vmatprep.subr.mxu0 %v3066
        %3611 = vmatpush1.msra.mxu0 %v3065
        %3612 = vmatprep.subr.mxu0 %v3070
        %3613 = vmatpush1.msra.mxu0 %v3069
        %3614 = vmatprep.subr.mxu0 %v3074
        %3615 = vmatpush1.msra.mxu0 %v3073
        %3616 = vmatprep.subr.mxu0 %v3078
        %3617 = vmatpush1.msra.mxu0 %v3077
        %3618 = vmatprep.subr.mxu0 %v3082
        %3619 = vmatpush1.msra.mxu0 %v3081
        %3620 = vmatprep.subr.mxu0 %v3086
        %3621 = vmatpush1.msra.mxu0 %v3085
        %3622 = vmatprep.subr.mxu0 %v3090
        %3623 = vmatpush1.msra.mxu0 %v3089
        %3624 = vmatprep.subr.mxu0 %v3094
        %3625 = vmatpush1.msra.mxu0 %v3093
        %3626 = vmatprep.subr.mxu0 %v3098
        %3627 = vmatpush1.msra.mxu0 %v3097
        %3628 = vmatprep.subr.mxu0 %v3102
        %3629 = vmatpush1.msra.mxu0 %v3101
        %3630 = vmatprep.subr.mxu0 %v3106
        %3631 = vmatpush1.msra.mxu0 %v3105
        %3632 = vmatprep.subr.mxu0 %v3110
        %3633 = vmatpush1.msra.mxu0 %v3109
        %3634 = vmatprep.subr.mxu0 %v3114
        %3635 = vmatpush1.msra.mxu0 %v3113
        %3636 = vmatprep.subr.mxu0 %v3118
        %3637 = vmatpush1.msra.mxu0 %v3117
        %3638 = vmatprep.subr.mxu0 %v3122
        %3639 = vmatpush1.msra.mxu0 %v3121
        %3640 = vmatprep.subr.mxu0 %v3126
        %3641 = vmatpush1.msra.mxu0 %v3125
        %3642 = vmatprep.subr.mxu0 %v3130
        %3643 = vmatpush1.msra.mxu0 %v3129
        %3644 = vmatprep.subr.mxu0 %v3134
        %3645 = vmatpush1.msra.mxu0 %v3133
        %3646 = vmatprep.subr.mxu0 %v3138
        %3647 = vmatpush1.msra.mxu0 %v3137
        %3648 = vmatprep.subr.mxu0 %v3142
        %3649 = vmatpush1.msra.mxu0 %v3141
        %3650 = vmatprep.subr.mxu0 %v3146
        %3651 = vmatpush1.msra.mxu0 %v3145
        %3652 = vmatprep.mubr.f32.mxu0 %v2768
        %3653 = vmatmul.mubr.f32.gmra.mrb[0].mxu0 %v2767
        %v3654 = vpop.f32.mrb[0].mxu0
        %v3655 = vadd.f32 %v3494, %v3654
        %v3656 = vpop.f32.mrb[0].mxu0
        %v3657 = vadd.f32 %v3496, %v3656
        %3658 = vmatprep.mubr.f32.mxu0 %v2776
        %3659 = vmatmul.mubr.f32.gmra.mrb[0].mxu0 %v2775
        %v3660 = vpop.f32.mrb[0].mxu0
        %v3661 = vadd.f32 %v3500, %v3660
        %v3662 = vpop.f32.mrb[0].mxu0
        %v3663 = vadd.f32 %v3502, %v3662
        %3664 = vmatprep.mubr.f32.mxu0 %v2784
        %3665 = vmatmul.mubr.f32.gmra.mrb[0].mxu0 %v2783
        %v3666 = vpop.f32.mrb[0].mxu0
        %v3667 = vadd.f32 %v3506, %v3666
        %v3668 = vpop.f32.mrb[0].mxu0
        %v3669 = vadd.f32 %v3508, %v3668
        %3670 = vmatprep.mubr.f32.mxu0 %v2792
        %3671 = vmatmul.mubr.f32.gmra.mrb[0].mxu0 %v2791
        %v3672 = vpop.f32.mrb[0].mxu0
        %v3673 = vadd.f32 %v3512, %v3672
        %v3674 = vpop.f32.mrb[0].mxu0
        %v3675 = vadd.f32 %v3514, %v3674
        %3676 = vmatprep.mubr.f32.mxu0 %v2800
        %3677 = vmatmul.mubr.f32.gmra.mrb[0].mxu0 %v2799
        %v3678 = vpop.f32.mrb[0].mxu0
        %v3679 = vadd.f32 %v3518, %v3678
        %v3680 = vpop.f32.mrb[0].mxu0
        %v3681 = vadd.f32 %v3520, %v3680
        %3682 = vmatprep.mubr.f32.mxu0 %v2808
        %3683 = vmatmul.mubr.f32.gmra.mrb[0].mxu0 %v2807
        %v3684 = vpop.f32.mrb[0].mxu0
        %v3685 = vadd.f32 %v3524, %v3684
        %v3686 = vpop.f32.mrb[0].mxu0
        %v3687 = vadd.f32 %v3526, %v3686
        %3688 = vmatprep.mubr.f32.mxu0 %v2816
        %3689 = vmatmul.mubr.f32.gmra.mrb[0].mxu0 %v2815
        %v3690 = vpop.f32.mrb[0].mxu0
        %v3691 = vadd.f32 %v3530, %v3690
        %v3692 = vpop.f32.mrb[0].mxu0
        %v3693 = vadd.f32 %v3532, %v3692
        %3694 = vmatprep.mubr.f32.mxu0 %v2824
        %3695 = vmatmul.mubr.f32.gmra.mrb[0].mxu0 %v2823
        %v3696 = vpop.f32.mrb[0].mxu0
        %v3697 = vadd.f32 %v3536, %v3696
        %v3698 = vpop.f32.mrb[0].mxu0
        %v3699 = vadd.f32 %v3538, %v3698
        %3700 = vmatprep.mubr.f32.mxu0 %v2832
        %3701 = vmatmul.mubr.f32.gmra.mrb[0].mxu0 %v2831
        %v3702 = vpop.f32.mrb[0].mxu0
        %v3703 = vadd.f32 %v3542, %v3702
        %v3704 = vpop.f32.mrb[0].mxu0
        %v3705 = vadd.f32 %v3544, %v3704
        %3706 = vmatprep.mubr.f32.mxu0 %v2840
        %3707 = vmatmul.mubr.f32.gmra.mrb[0].mxu0 %v2839
        %v3708 = vpop.f32.mrb[0].mxu0
        %v3709 = vadd.f32 %v3548, %v3708
        %v3710 = vpop.f32.mrb[0].mxu0
        %v3711 = vadd.f32 %v3550, %v3710
        %3712 = vmatprep.mubr.f32.mxu0 %v2848
        %3713 = vmatmul.mubr.f32.gmra.mrb[0].mxu0 %v2847
        %v3714 = vpop.f32.mrb[0].mxu0
        %v3715 = vadd.f32 %v3554, %v3714
        %v3716 = vpop.f32.mrb[0].mxu0
        %v3717 = vadd.f32 %v3556, %v3716
        %3718 = vmatprep.mubr.f32.mxu0 %v2856
        %3719 = vmatmul.mubr.f32.gmra.mrb[0].mxu0 %v2855
        %v3720 = vpop.f32.mrb[0].mxu0
        %v3721 = vadd.f32 %v3560, %v3720
        %v3722 = vpop.f32.mrb[0].mxu0
        %v3723 = vadd.f32 %v3562, %v3722
        %3724 = vmatprep.mubr.f32.mxu0 %v2864
        %3725 = vmatmul.mubr.f32.gmra.mrb[0].mxu0 %v2863
        %v3726 = vpop.f32.mrb[0].mxu0
        %v3727 = vadd.f32 %v3566, %v3726
        %v3728 = vpop.f32.mrb[0].mxu0
        %v3729 = vadd.f32 %v3568, %v3728
        %3730 = vmatprep.mubr.f32.mxu0 %v2872
        %3731 = vmatmul.mubr.f32.gmra.mrb[0].mxu0 %v2871
        %v3732 = vpop.f32.mrb[0].mxu0
        %v3733 = vadd.f32 %v3572, %v3732
        %v3734 = vpop.f32.mrb[0].mxu0
        %v3735 = vadd.f32 %v3574, %v3734
        %3736 = vmatprep.mubr.f32.mxu0 %v2880
        %3737 = vmatmul.mubr.f32.gmra.mrb[0].mxu0 %v2879
        %v3738 = vpop.f32.mrb[0].mxu0
        %v3739 = vadd.f32 %v3578, %v3738
        %v3740 = vpop.f32.mrb[0].mxu0
        %v3741 = vadd.f32 %v3580, %v3740
        %3742 = vmatprep.mubr.f32.mxu0 %v2888
        %3743 = vmatmul.mubr.f32.gmra.mrb[0].mxu0 %v2887
        %v3744 = vpop.f32.mrb[0].mxu0
        %v3745 = vadd.f32 %v3584, %v3744
        %v3746 = vpop.f32.mrb[0].mxu0
        %v3747 = vadd.f32 %v3586, %v3746
        %3748 = vdwg.mxu0
        %3749 = vmatprep.subr.mxu0 %v3150
        %3750 = vmatpush1.msra.mxu0 %v3149
        %3751 = vmatprep.subr.mxu0 %v3154
        %3752 = vmatpush1.msra.mxu0 %v3153
        %3753 = vmatprep.subr.mxu0 %v3158
        %3754 = vmatpush1.msra.mxu0 %v3157
        %3755 = vmatprep.subr.mxu0 %v3162
        %3756 = vmatpush1.msra.mxu0 %v3161
        %3757 = vmatprep.subr.mxu0 %v3166
        %3758 = vmatpush1.msra.mxu0 %v3165
        %3759 = vmatprep.subr.mxu0 %v3170
        %3760 = vmatpush1.msra.mxu0 %v3169
        %3761 = vmatprep.subr.mxu0 %v3174
        %3762 = vmatpush1.msra.mxu0 %v3173
        %3763 = vmatprep.subr.mxu0 %v3178
        %3764 = vmatpush1.msra.mxu0 %v3177
        %3765 = vmatprep.subr.mxu0 %v3182
        %3766 = vmatpush1.msra.mxu0 %v3181
        %3767 = vmatprep.subr.mxu0 %v3186
        %3768 = vmatpush1.msra.mxu0 %v3185
        %3769 = vmatprep.subr.mxu0 %v3190
        %3770 = vmatpush1.msra.mxu0 %v3189
        %3771 = vmatprep.subr.mxu0 %v3194
        %3772 = vmatpush1.msra.mxu0 %v3193
        %3773 = vmatprep.subr.mxu0 %v3198
        %3774 = vmatpush1.msra.mxu0 %v3197
        %3775 = vmatprep.subr.mxu0 %v3202
        %3776 = vmatpush1.msra.mxu0 %v3201
        %3777 = vmatprep.subr.mxu0 %v3206
        %3778 = vmatpush1.msra.mxu0 %v3205
        %3779 = vmatprep.subr.mxu0 %v3210
        %3780 = vmatpush1.msra.mxu0 %v3209
        %3781 = vmatprep.subr.mxu0 %v3214
        %3782 = vmatpush1.msra.mxu0 %v3213
        %3783 = vmatprep.subr.mxu0 %v3218
        %3784 = vmatpush1.msra.mxu0 %v3217
        %3785 = vmatprep.subr.mxu0 %v3222
        %3786 = vmatpush1.msra.mxu0 %v3221
        %3787 = vmatprep.subr.mxu0 %v3226
        %3788 = vmatpush1.msra.mxu0 %v3225
        %3789 = vmatprep.subr.mxu0 %v3230
        %3790 = vmatpush1.msra.mxu0 %v3229
        %3791 = vmatprep.subr.mxu0 %v3234
        %3792 = vmatpush1.msra.mxu0 %v3233
        %3793 = vmatprep.subr.mxu0 %v3238
        %3794 = vmatpush1.msra.mxu0 %v3237
        %3795 = vmatprep.subr.mxu0 %v3242
        %3796 = vmatpush1.msra.mxu0 %v3241
        %3797 = vmatprep.subr.mxu0 %v3246
        %3798 = vmatpush1.msra.mxu0 %v3245
        %3799 = vmatprep.subr.mxu0 %v3250
        %3800 = vmatpush1.msra.mxu0 %v3249
        %3801 = vmatprep.subr.mxu0 %v3254
        %3802 = vmatpush1.msra.mxu0 %v3253
        %3803 = vmatprep.subr.mxu0 %v3258
        %3804 = vmatpush1.msra.mxu0 %v3257
        %3805 = vmatprep.subr.mxu0 %v3262
        %3806 = vmatpush1.msra.mxu0 %v3261
        %3807 = vmatprep.subr.mxu0 %v3266
        %3808 = vmatpush1.msra.mxu0 %v3265
        %3809 = vmatprep.subr.mxu0 %v3270
        %3810 = vmatpush1.msra.mxu0 %v3269
        %3811 = vmatprep.subr.mxu0 %v3274
        %3812 = vmatpush1.msra.mxu0 %v3273
        %3813 = vmatprep.mubr.f32.mxu0 %v2770
        %3814 = vmatmul.mubr.f32.gmra.mrb[0].mxu0 %v2769
        %v3815 = vpop.f32.mrb[0].mxu0
        %v3816 = vadd.f32 %v3655, %v3815
        %v3817 = vpop.f32.mrb[0].mxu0
        %v3818 = vadd.f32 %v3657, %v3817
        %3819 = vmatprep.mubr.f32.mxu0 %v2778
        %3820 = vmatmul.mubr.f32.gmra.mrb[0].mxu0 %v2777
        %v3821 = vpop.f32.mrb[0].mxu0
        %v3822 = vadd.f32 %v3661, %v3821
        %v3823 = vpop.f32.mrb[0].mxu0
        %v3824 = vadd.f32 %v3663, %v3823
        %3825 = vmatprep.mubr.f32.mxu0 %v2786
        %3826 = vmatmul.mubr.f32.gmra.mrb[0].mxu0 %v2785
        %v3827 = vpop.f32.mrb[0].mxu0
        %v3828 = vadd.f32 %v3667, %v3827
        %v3829 = vpop.f32.mrb[0].mxu0
        %v3830 = vadd.f32 %v3669, %v3829
        %3831 = vmatprep.mubr.f32.mxu0 %v2794
        %3832 = vmatmul.mubr.f32.gmra.mrb[0].mxu0 %v2793
        %v3833 = vpop.f32.mrb[0].mxu0
        %v3834 = vadd.f32 %v3673, %v3833
        %v3835 = vpop.f32.mrb[0].mxu0
        %v3836 = vadd.f32 %v3675, %v3835
        %3837 = vmatprep.mubr.f32.mxu0 %v2802
        %3838 = vmatmul.mubr.f32.gmra.mrb[0].mxu0 %v2801
        %v3839 = vpop.f32.mrb[0].mxu0
        %v3840 = vadd.f32 %v3679, %v3839
        %v3841 = vpop.f32.mrb[0].mxu0
        %v3842 = vadd.f32 %v3681, %v3841
        %3843 = vmatprep.mubr.f32.mxu0 %v2810
        %3844 = vmatmul.mubr.f32.gmra.mrb[0].mxu0 %v2809
        %v3845 = vpop.f32.mrb[0].mxu0
        %v3846 = vadd.f32 %v3685, %v3845
        %v3847 = vpop.f32.mrb[0].mxu0
        %v3848 = vadd.f32 %v3687, %v3847
        %3849 = vmatprep.mubr.f32.mxu0 %v2818
        %3850 = vmatmul.mubr.f32.gmra.mrb[0].mxu0 %v2817
        %v3851 = vpop.f32.mrb[0].mxu0
        %v3852 = vadd.f32 %v3691, %v3851
        %v3853 = vpop.f32.mrb[0].mxu0
        %v3854 = vadd.f32 %v3693, %v3853
        %3855 = vmatprep.mubr.f32.mxu0 %v2826
        %3856 = vmatmul.mubr.f32.gmra.mrb[0].mxu0 %v2825
        %v3857 = vpop.f32.mrb[0].mxu0
        %v3858 = vadd.f32 %v3697, %v3857
        %v3859 = vpop.f32.mrb[0].mxu0
        %v3860 = vadd.f32 %v3699, %v3859
        %3861 = vmatprep.mubr.f32.mxu0 %v2834
        %3862 = vmatmul.mubr.f32.gmra.mrb[0].mxu0 %v2833
        %v3863 = vpop.f32.mrb[0].mxu0
        %v3864 = vadd.f32 %v3703, %v3863
        %v3865 = vpop.f32.mrb[0].mxu0
        %v3866 = vadd.f32 %v3705, %v3865
        %3867 = vmatprep.mubr.f32.mxu0 %v2842
        %3868 = vmatmul.mubr.f32.gmra.mrb[0].mxu0 %v2841
        %v3869 = vpop.f32.mrb[0].mxu0
        %v3870 = vadd.f32 %v3709, %v3869
        %v3871 = vpop.f32.mrb[0].mxu0
        %v3872 = vadd.f32 %v3711, %v3871
        %3873 = vmatprep.mubr.f32.mxu0 %v2850
        %3874 = vmatmul.mubr.f32.gmra.mrb[0].mxu0 %v2849
        %v3875 = vpop.f32.mrb[0].mxu0
        %v3876 = vadd.f32 %v3715, %v3875
        %v3877 = vpop.f32.mrb[0].mxu0
        %v3878 = vadd.f32 %v3717, %v3877
        %3879 = vmatprep.mubr.f32.mxu0 %v2858
        %3880 = vmatmul.mubr.f32.gmra.mrb[0].mxu0 %v2857
        %v3881 = vpop.f32.mrb[0].mxu0
        %v3882 = vadd.f32 %v3721, %v3881
        %v3883 = vpop.f32.mrb[0].mxu0
        %v3884 = vadd.f32 %v3723, %v3883
        %3885 = vmatprep.mubr.f32.mxu0 %v2866
        %3886 = vmatmul.mubr.f32.gmra.mrb[0].mxu0 %v2865
        %v3887 = vpop.f32.mrb[0].mxu0
        %v3888 = vadd.f32 %v3727, %v3887
        %v3889 = vpop.f32.mrb[0].mxu0
        %v3890 = vadd.f32 %v3729, %v3889
        %3891 = vmatprep.mubr.f32.mxu0 %v2874
        %3892 = vmatmul.mubr.f32.gmra.mrb[0].mxu0 %v2873
        %v3893 = vpop.f32.mrb[0].mxu0
        %v3894 = vadd.f32 %v3733, %v3893
        %v3895 = vpop.f32.mrb[0].mxu0
        %v3896 = vadd.f32 %v3735, %v3895
        %3897 = vmatprep.mubr.f32.mxu0 %v2882
        %3898 = vmatmul.mubr.f32.gmra.mrb[0].mxu0 %v2881
        %v3899 = vpop.f32.mrb[0].mxu0
        %v3900 = vadd.f32 %v3739, %v3899
        %v3901 = vpop.f32.mrb[0].mxu0
        %v3902 = vadd.f32 %v3741, %v3901
        %3903 = vmatprep.mubr.f32.mxu0 %v2890
        %3904 = vmatmul.mubr.f32.gmra.mrb[0].mxu0 %v2889
        %v3905 = vpop.f32.mrb[0].mxu0
        %v3906 = vadd.f32 %v3745, %v3905
        %v3907 = vpop.f32.mrb[0].mxu0
        %v3908 = vadd.f32 %v3747, %v3907
        %3909 = vdwg.mxu0
        %3910 = vmatprep.subr.mxu0 %v3278
        %3911 = vmatpush1.msra.mxu0 %v3277
        %3912 = vmatprep.subr.mxu0 %v3282
        %3913 = vmatpush1.msra.mxu0 %v3281
        %3914 = vmatprep.subr.mxu0 %v3286
        %3915 = vmatpush1.msra.mxu0 %v3285
        %3916 = vmatprep.subr.mxu0 %v3290
        %3917 = vmatpush1.msra.mxu0 %v3289
        %3918 = vmatprep.subr.mxu0 %v3294
        %3919 = vmatpush1.msra.mxu0 %v3293
        %3920 = vmatprep.subr.mxu0 %v3298
        %3921 = vmatpush1.msra.mxu0 %v3297
        %3922 = vmatprep.subr.mxu0 %v3302
        %3923 = vmatpush1.msra.mxu0 %v3301
        %3924 = vmatprep.subr.mxu0 %v3306
        %3925 = vmatpush1.msra.mxu0 %v3305
        %3926 = vmatprep.subr.mxu0 %v3310
        %3927 = vmatpush1.msra.mxu0 %v3309
        %3928 = vmatprep.subr.mxu0 %v3314
        %3929 = vmatpush1.msra.mxu0 %v3313
        %3930 = vmatprep.subr.mxu0 %v3318
        %3931 = vmatpush1.msra.mxu0 %v3317
        %3932 = vmatprep.subr.mxu0 %v3322
        %3933 = vmatpush1.msra.mxu0 %v3321
        %3934 = vmatprep.subr.mxu0 %v3326
        %3935 = vmatpush1.msra.mxu0 %v3325
        %3936 = vmatprep.subr.mxu0 %v3330
        %3937 = vmatpush1.msra.mxu0 %v3329
        %3938 = vmatprep.subr.mxu0 %v3334
        %3939 = vmatpush1.msra.mxu0 %v3333
        %3940 = vmatprep.subr.mxu0 %v3338
        %3941 = vmatpush1.msra.mxu0 %v3337
        %3942 = vmatprep.subr.mxu0 %v3342
        %3943 = vmatpush1.msra.mxu0 %v3341
        %3944 = vmatprep.subr.mxu0 %v3346
        %3945 = vmatpush1.msra.mxu0 %v3345
        %3946 = vmatprep.subr.mxu0 %v3350
        %3947 = vmatpush1.msra.mxu0 %v3349
        %3948 = vmatprep.subr.mxu0 %v3354
        %3949 = vmatpush1.msra.mxu0 %v3353
        %3950 = vmatprep.subr.mxu0 %v3358
        %3951 = vmatpush1.msra.mxu0 %v3357
        %3952 = vmatprep.subr.mxu0 %v3362
        %3953 = vmatpush1.msra.mxu0 %v3361
        %3954 = vmatprep.subr.mxu0 %v3366
        %3955 = vmatpush1.msra.mxu0 %v3365
        %3956 = vmatprep.subr.mxu0 %v3370
        %3957 = vmatpush1.msra.mxu0 %v3369
        %3958 = vmatprep.subr.mxu0 %v3374
        %3959 = vmatpush1.msra.mxu0 %v3373
        %3960 = vmatprep.subr.mxu0 %v3378
        %3961 = vmatpush1.msra.mxu0 %v3377
        %3962 = vmatprep.subr.mxu0 %v3382
        %3963 = vmatpush1.msra.mxu0 %v3381
        %3964 = vmatprep.subr.mxu0 %v3386
        %3965 = vmatpush1.msra.mxu0 %v3385
        %3966 = vmatprep.subr.mxu0 %v3390
        %3967 = vmatpush1.msra.mxu0 %v3389
        %3968 = vmatprep.subr.mxu0 %v3394
        %3969 = vmatpush1.msra.mxu0 %v3393
        %3970 = vmatprep.subr.mxu0 %v3398
        %3971 = vmatpush1.msra.mxu0 %v3397
        %3972 = vmatprep.subr.mxu0 %v3402
        %3973 = vmatpush1.msra.mxu0 %v3401
        %3974 = vmatprep.mubr.f32.mxu0 %v2772
        %3975 = vmatmul.mubr.f32.gmra.mrb[0].mxu0 %v2771
        %v3976 = vpop.f32.mrb[0].mxu0
        %v3977 = vadd.f32 %v3816, %v3976
        %v3978 = vpop.f32.mrb[0].mxu0
        %v3979 = vadd.f32 %v3818, %v3978
        %3980 = vmatprep.mubr.f32.mxu0 %v2780
        %3981 = vmatmul.mubr.f32.gmra.mrb[0].mxu0 %v2779
        %v3982 = vpop.f32.mrb[0].mxu0
        %v3983 = vadd.f32 %v3822, %v3982
        %v3984 = vpop.f32.mrb[0].mxu0
        %v3985 = vadd.f32 %v3824, %v3984
        %3986 = vmatprep.mubr.f32.mxu0 %v2788
        %3987 = vmatmul.mubr.f32.gmra.mrb[0].mxu0 %v2787
        %v3988 = vpop.f32.mrb[0].mxu0
        %v3989 = vadd.f32 %v3828, %v3988
        %v3990 = vpop.f32.mrb[0].mxu0
        %v3991 = vadd.f32 %v3830, %v3990
        %3992 = vmatprep.mubr.f32.mxu0 %v2796
        %3993 = vmatmul.mubr.f32.gmra.mrb[0].mxu0 %v2795
        %v3994 = vpop.f32.mrb[0].mxu0
        %v3995 = vadd.f32 %v3834, %v3994
        %v3996 = vpop.f32.mrb[0].mxu0
        %v3997 = vadd.f32 %v3836, %v3996
        %3998 = vmatprep.mubr.f32.mxu0 %v2804
        %3999 = vmatmul.mubr.f32.gmra.mrb[0].mxu0 %v2803
        %v4000 = vpop.f32.mrb[0].mxu0
        %v4001 = vadd.f32 %v3840, %v4000
        %v4002 = vpop.f32.mrb[0].mxu0
        %v4003 = vadd.f32 %v3842, %v4002
        %4004 = vmatprep.mubr.f32.mxu0 %v2812
        %4005 = vmatmul.mubr.f32.gmra.mrb[0].mxu0 %v2811
        %v4006 = vpop.f32.mrb[0].mxu0
        %v4007 = vadd.f32 %v3846, %v4006
        %v4008 = vpop.f32.mrb[0].mxu0
        %v4009 = vadd.f32 %v3848, %v4008
        %4010 = vmatprep.mubr.f32.mxu0 %v2820
        %4011 = vmatmul.mubr.f32.gmra.mrb[0].mxu0 %v2819
        %v4012 = vpop.f32.mrb[0].mxu0
        %v4013 = vadd.f32 %v3852, %v4012
        %v4014 = vpop.f32.mrb[0].mxu0
        %v4015 = vadd.f32 %v3854, %v4014
        %4016 = vmatprep.mubr.f32.mxu0 %v2828
        %4017 = vmatmul.mubr.f32.gmra.mrb[0].mxu0 %v2827
        %v4018 = vpop.f32.mrb[0].mxu0
        %v4019 = vadd.f32 %v3858, %v4018
        %v4020 = vpop.f32.mrb[0].mxu0
        %v4021 = vadd.f32 %v3860, %v4020
        %4022 = vmatprep.mubr.f32.mxu0 %v2836
        %4023 = vmatmul.mubr.f32.gmra.mrb[0].mxu0 %v2835
        %v4024 = vpop.f32.mrb[0].mxu0
        %v4025 = vadd.f32 %v3864, %v4024
        %v4026 = vpop.f32.mrb[0].mxu0
        %v4027 = vadd.f32 %v3866, %v4026
        %4028 = vmatprep.mubr.f32.mxu0 %v2844
        %4029 = vmatmul.mubr.f32.gmra.mrb[0].mxu0 %v2843
        %v4030 = vpop.f32.mrb[0].mxu0
        %v4031 = vadd.f32 %v3870, %v4030
        %v4032 = vpop.f32.mrb[0].mxu0
        %v4033 = vadd.f32 %v3872, %v4032
        %4034 = vmatprep.mubr.f32.mxu0 %v2852
        %4035 = vmatmul.mubr.f32.gmra.mrb[0].mxu0 %v2851
        %v4036 = vpop.f32.mrb[0].mxu0
        %v4037 = vadd.f32 %v3876, %v4036
        %v4038 = vpop.f32.mrb[0].mxu0
        %v4039 = vadd.f32 %v3878, %v4038
        %4040 = vmatprep.mubr.f32.mxu0 %v2860
        %4041 = vmatmul.mubr.f32.gmra.mrb[0].mxu0 %v2859
        %v4042 = vpop.f32.mrb[0].mxu0
        %v4043 = vadd.f32 %v3882, %v4042
        %v4044 = vpop.f32.mrb[0].mxu0
        %v4045 = vadd.f32 %v3884, %v4044
        %4046 = vmatprep.mubr.f32.mxu0 %v2868
        %4047 = vmatmul.mubr.f32.gmra.mrb[0].mxu0 %v2867
        %v4048 = vpop.f32.mrb[0].mxu0
        %v4049 = vadd.f32 %v3888, %v4048
        %v4050 = vpop.f32.mrb[0].mxu0
        %v4051 = vadd.f32 %v3890, %v4050
        %4052 = vmatprep.mubr.f32.mxu0 %v2876
        %4053 = vmatmul.mubr.f32.gmra.mrb[0].mxu0 %v2875
        %v4054 = vpop.f32.mrb[0].mxu0
        %v4055 = vadd.f32 %v3894, %v4054
        %v4056 = vpop.f32.mrb[0].mxu0
        %v4057 = vadd.f32 %v3896, %v4056
        %4058 = vmatprep.mubr.f32.mxu0 %v2884
        %4059 = vmatmul.mubr.f32.gmra.mrb[0].mxu0 %v2883
        %v4060 = vpop.f32.mrb[0].mxu0
        %v4061 = vadd.f32 %v3900, %v4060
        %v4062 = vpop.f32.mrb[0].mxu0
        %v4063 = vadd.f32 %v3902, %v4062
        %4064 = vmatprep.mubr.f32.mxu0 %v2892
        %4065 = vmatmul.mubr.f32.gmra.mrb[0].mxu0 %v2891
        %v4066 = vpop.f32.mrb[0].mxu0
        %v4067 = vadd.f32 %v3906, %v4066
        %v4068 = vpop.f32.mrb[0].mxu0
        %v4069 = vadd.f32 %v3908, %v4068
        %4070 = vdwg.mxu0
        %4071 = vmatprep.subr.mxu0 %v2896
        %4072 = vmatpush1.msra.mxu0 %v2895
        %4073 = vmatprep.subr.mxu0 %v2900
        %4074 = vmatpush1.msra.mxu0 %v2899
        %4075 = vmatprep.subr.mxu0 %v2904
        %4076 = vmatpush1.msra.mxu0 %v2903
        %4077 = vmatprep.subr.mxu0 %v2908
        %4078 = vmatpush1.msra.mxu0 %v2907
        %4079 = vmatprep.subr.mxu0 %v2912
        %4080 = vmatpush1.msra.mxu0 %v2911
        %4081 = vmatprep.subr.mxu0 %v2916
        %4082 = vmatpush1.msra.mxu0 %v2915
        %4083 = vmatprep.subr.mxu0 %v2920
        %4084 = vmatpush1.msra.mxu0 %v2919
        %4085 = vmatprep.subr.mxu0 %v2924
        %4086 = vmatpush1.msra.mxu0 %v2923
        %4087 = vmatprep.subr.mxu0 %v2928
        %4088 = vmatpush1.msra.mxu0 %v2927
        %4089 = vmatprep.subr.mxu0 %v2932
        %4090 = vmatpush1.msra.mxu0 %v2931
        %4091 = vmatprep.subr.mxu0 %v2936
        %4092 = vmatpush1.msra.mxu0 %v2935
        %4093 = vmatprep.subr.mxu0 %v2940
        %4094 = vmatpush1.msra.mxu0 %v2939
        %4095 = vmatprep.subr.mxu0 %v2944
        %4096 = vmatpush1.msra.mxu0 %v2943
        %4097 = vmatprep.subr.mxu0 %v2948
        %4098 = vmatpush1.msra.mxu0 %v2947
        %4099 = vmatprep.subr.mxu0 %v2952
        %4100 = vmatpush1.msra.mxu0 %v2951
        %4101 = vmatprep.subr.mxu0 %v2956
        %4102 = vmatpush1.msra.mxu0 %v2955
        %4103 = vmatprep.subr.mxu0 %v2960
        %4104 = vmatpush1.msra.mxu0 %v2959
        %4105 = vmatprep.subr.mxu0 %v2964
        %4106 = vmatpush1.msra.mxu0 %v2963
        %4107 = vmatprep.subr.mxu0 %v2968
        %4108 = vmatpush1.msra.mxu0 %v2967
        %4109 = vmatprep.subr.mxu0 %v2972
        %4110 = vmatpush1.msra.mxu0 %v2971
        %4111 = vmatprep.subr.mxu0 %v2976
        %4112 = vmatpush1.msra.mxu0 %v2975
        %4113 = vmatprep.subr.mxu0 %v2980
        %4114 = vmatpush1.msra.mxu0 %v2979
        %4115 = vmatprep.subr.mxu0 %v2984
        %4116 = vmatpush1.msra.mxu0 %v2983
        %4117 = vmatprep.subr.mxu0 %v2988
        %4118 = vmatpush1.msra.mxu0 %v2987
        %4119 = vmatprep.subr.mxu0 %v2992
        %4120 = vmatpush1.msra.mxu0 %v2991
        %4121 = vmatprep.subr.mxu0 %v2996
        %4122 = vmatpush1.msra.mxu0 %v2995
        %4123 = vmatprep.subr.mxu0 %v3000
        %4124 = vmatpush1.msra.mxu0 %v2999
        %4125 = vmatprep.subr.mxu0 %v3004
        %4126 = vmatpush1.msra.mxu0 %v3003
        %4127 = vmatprep.subr.mxu0 %v3008
        %4128 = vmatpush1.msra.mxu0 %v3007
        %4129 = vmatprep.subr.mxu0 %v3012
        %4130 = vmatpush1.msra.mxu0 %v3011
        %4131 = vmatprep.subr.mxu0 %v3016
        %4132 = vmatpush1.msra.mxu0 %v3015
        %4133 = vmatprep.subr.mxu0 %v3020
        %4134 = vmatpush1.msra.mxu0 %v3019
        %4135 = vmatprep.mubr.f32.mxu0 %v2766
        %4136 = vmatmul.mubr.f32.gmra.mrb[0].mxu0 %v2765
        %v4137 = vpop.f32.mrb[0].mxu0
        %v4138 = vadd.f32 %v3418, %v4137
        %v4139 = vpop.f32.mrb[0].mxu0
        %v4140 = vadd.f32 %v3422, %v4139
        %4141 = vmatprep.mubr.f32.mxu0 %v2774
        %4142 = vmatmul.mubr.f32.gmra.mrb[0].mxu0 %v2773
        %v4143 = vpop.f32.mrb[0].mxu0
        %v4144 = vadd.f32 %v3418, %v4143
        %v4145 = vpop.f32.mrb[0].mxu0
        %v4146 = vadd.f32 %v3422, %v4145
        %4147 = vmatprep.mubr.f32.mxu0 %v2782
        %4148 = vmatmul.mubr.f32.gmra.mrb[0].mxu0 %v2781
        %v4149 = vpop.f32.mrb[0].mxu0
        %v4150 = vadd.f32 %v3418, %v4149
        %v4151 = vpop.f32.mrb[0].mxu0
        %v4152 = vadd.f32 %v3422, %v4151
        %4153 = vmatprep.mubr.f32.mxu0 %v2790
        %4154 = vmatmul.mubr.f32.gmra.mrb[0].mxu0 %v2789
        %v4155 = vpop.f32.mrb[0].mxu0
        %v4156 = vadd.f32 %v3418, %v4155
        %v4157 = vpop.f32.mrb[0].mxu0
        %v4158 = vadd.f32 %v3422, %v4157
        %4159 = vmatprep.mubr.f32.mxu0 %v2798
        %4160 = vmatmul.mubr.f32.gmra.mrb[0].mxu0 %v2797
        %v4161 = vpop.f32.mrb[0].mxu0
        %v4162 = vadd.f32 %v3418, %v4161
        %v4163 = vpop.f32.mrb[0].mxu0
        %v4164 = vadd.f32 %v3422, %v4163
        %4165 = vmatprep.mubr.f32.mxu0 %v2806
        %4166 = vmatmul.mubr.f32.gmra.mrb[0].mxu0 %v2805
        %v4167 = vpop.f32.mrb[0].mxu0
        %v4168 = vadd.f32 %v3418, %v4167
        %v4169 = vpop.f32.mrb[0].mxu0
        %v4170 = vadd.f32 %v3422, %v4169
        %4171 = vmatprep.mubr.f32.mxu0 %v2814
        %4172 = vmatmul.mubr.f32.gmra.mrb[0].mxu0 %v2813
        %v4173 = vpop.f32.mrb[0].mxu0
        %v4174 = vadd.f32 %v3418, %v4173
        %v4175 = vpop.f32.mrb[0].mxu0
        %v4176 = vadd.f32 %v3422, %v4175
        %4177 = vmatprep.mubr.f32.mxu0 %v2822
        %4178 = vmatmul.mubr.f32.gmra.mrb[0].mxu0 %v2821
        %v4179 = vpop.f32.mrb[0].mxu0
        %v4180 = vadd.f32 %v3418, %v4179
        %v4181 = vpop.f32.mrb[0].mxu0
        %v4182 = vadd.f32 %v3422, %v4181
        %4183 = vmatprep.mubr.f32.mxu0 %v2830
        %4184 = vmatmul.mubr.f32.gmra.mrb[0].mxu0 %v2829
        %v4185 = vpop.f32.mrb[0].mxu0
        %v4186 = vadd.f32 %v3418, %v4185
        %v4187 = vpop.f32.mrb[0].mxu0
        %v4188 = vadd.f32 %v3422, %v4187
        %4189 = vmatprep.mubr.f32.mxu0 %v2838
        %4190 = vmatmul.mubr.f32.gmra.mrb[0].mxu0 %v2837
        %v4191 = vpop.f32.mrb[0].mxu0
        %v4192 = vadd.f32 %v3418, %v4191
        %v4193 = vpop.f32.mrb[0].mxu0
        %v4194 = vadd.f32 %v3422, %v4193
        %4195 = vmatprep.mubr.f32.mxu0 %v2846
        %4196 = vmatmul.mubr.f32.gmra.mrb[0].mxu0 %v2845
        %v4197 = vpop.f32.mrb[0].mxu0
        %v4198 = vadd.f32 %v3418, %v4197
        %v4199 = vpop.f32.mrb[0].mxu0
        %v4200 = vadd.f32 %v3422, %v4199
        %4201 = vmatprep.mubr.f32.mxu0 %v2854
        %4202 = vmatmul.mubr.f32.gmra.mrb[0].mxu0 %v2853
        %v4203 = vpop.f32.mrb[0].mxu0
        %v4204 = vadd.f32 %v3418, %v4203
        %v4205 = vpop.f32.mrb[0].mxu0
        %v4206 = vadd.f32 %v3422, %v4205
        %4207 = vmatprep.mubr.f32.mxu0 %v2862
        %4208 = vmatmul.mubr.f32.gmra.mrb[0].mxu0 %v2861
        %v4209 = vpop.f32.mrb[0].mxu0
        %v4210 = vadd.f32 %v3418, %v4209
        %v4211 = vpop.f32.mrb[0].mxu0
        %v4212 = vadd.f32 %v3422, %v4211
        %4213 = vmatprep.mubr.f32.mxu0 %v2870
        %4214 = vmatmul.mubr.f32.gmra.mrb[0].mxu0 %v2869
        %v4215 = vpop.f32.mrb[0].mxu0
        %v4216 = vadd.f32 %v3418, %v4215
        %v4217 = vpop.f32.mrb[0].mxu0
        %v4218 = vadd.f32 %v3422, %v4217
        %4219 = vmatprep.mubr.f32.mxu0 %v2878
        %4220 = vmatmul.mubr.f32.gmra.mrb[0].mxu0 %v2877
        %v4221 = vpop.f32.mrb[0].mxu0
        %v4222 = vadd.f32 %v3418, %v4221
        %v4223 = vpop.f32.mrb[0].mxu0
        %v4224 = vadd.f32 %v3422, %v4223
        %4225 = vmatprep.mubr.f32.mxu0 %v2886
        %4226 = vmatmul.mubr.f32.gmra.mrb[0].mxu0 %v2885
        %v4227 = vpop.f32.mrb[0].mxu0
        %v4228 = vadd.f32 %v3418, %v4227
        %v4229 = vpop.f32.mrb[0].mxu0
        %v4230 = vadd.f32 %v3422, %v4229
        %4231 = vdwg.mxu0
        %4232 = vmatprep.subr.mxu0 %v3024
        %4233 = vmatpush1.msra.mxu0 %v3023
        %4234 = vmatprep.subr.mxu0 %v3028
        %4235 = vmatpush1.msra.mxu0 %v3027
        %4236 = vmatprep.subr.mxu0 %v3032
        %4237 = vmatpush1.msra.mxu0 %v3031
        %4238 = vmatprep.subr.mxu0 %v3036
        %4239 = vmatpush1.msra.mxu0 %v3035
        %4240 = vmatprep.subr.mxu0 %v3040
        %4241 = vmatpush1.msra.mxu0 %v3039
        %4242 = vmatprep.subr.mxu0 %v3044
        %4243 = vmatpush1.msra.mxu0 %v3043
        %4244 = vmatprep.subr.mxu0 %v3048
        %4245 = vmatpush1.msra.mxu0 %v3047
        %4246 = vmatprep.subr.mxu0 %v3052
        %4247 = vmatpush1.msra.mxu0 %v3051
        %4248 = vmatprep.subr.mxu0 %v3056
        %4249 = vmatpush1.msra.mxu0 %v3055
        %4250 = vmatprep.subr.mxu0 %v3060
        %4251 = vmatpush1.msra.mxu0 %v3059
        %4252 = vmatprep.subr.mxu0 %v3064
        %4253 = vmatpush1.msra.mxu0 %v3063
        %4254 = vmatprep.subr.mxu0 %v3068
        %4255 = vmatpush1.msra.mxu0 %v3067
        %4256 = vmatprep.subr.mxu0 %v3072
        %4257 = vmatpush1.msra.mxu0 %v3071
        %4258 = vmatprep.subr.mxu0 %v3076
        %4259 = vmatpush1.msra.mxu0 %v3075
        %4260 = vmatprep.subr.mxu0 %v3080
        %4261 = vmatpush1.msra.mxu0 %v3079
        %4262 = vmatprep.subr.mxu0 %v3084
        %4263 = vmatpush1.msra.mxu0 %v3083
        %4264 = vmatprep.subr.mxu0 %v3088
        %4265 = vmatpush1.msra.mxu0 %v3087
        %4266 = vmatprep.subr.mxu0 %v3092
        %4267 = vmatpush1.msra.mxu0 %v3091
        %4268 = vmatprep.subr.mxu0 %v3096
        %4269 = vmatpush1.msra.mxu0 %v3095
        %4270 = vmatprep.subr.mxu0 %v3100
        %4271 = vmatpush1.msra.mxu0 %v3099
        %4272 = vmatprep.subr.mxu0 %v3104
        %4273 = vmatpush1.msra.mxu0 %v3103
        %4274 = vmatprep.subr.mxu0 %v3108
        %4275 = vmatpush1.msra.mxu0 %v3107
        %4276 = vmatprep.subr.mxu0 %v3112
        %4277 = vmatpush1.msra.mxu0 %v3111
        %4278 = vmatprep.subr.mxu0 %v3116
        %4279 = vmatpush1.msra.mxu0 %v3115
        %4280 = vmatprep.subr.mxu0 %v3120
        %4281 = vmatpush1.msra.mxu0 %v3119
        %4282 = vmatprep.subr.mxu0 %v3124
        %4283 = vmatpush1.msra.mxu0 %v3123
        %4284 = vmatprep.subr.mxu0 %v3128
        %4285 = vmatpush1.msra.mxu0 %v3127
        %4286 = vmatprep.subr.mxu0 %v3132
        %4287 = vmatpush1.msra.mxu0 %v3131
        %4288 = vmatprep.subr.mxu0 %v3136
        %4289 = vmatpush1.msra.mxu0 %v3135
        %4290 = vmatprep.subr.mxu0 %v3140
        %4291 = vmatpush1.msra.mxu0 %v3139
        %4292 = vmatprep.subr.mxu0 %v3144
        %4293 = vmatpush1.msra.mxu0 %v3143
        %4294 = vmatprep.subr.mxu0 %v3148
        %4295 = vmatpush1.msra.mxu0 %v3147
        %4296 = vmatprep.mubr.f32.mxu0 %v2768
        %4297 = vmatmul.mubr.f32.gmra.mrb[0].mxu0 %v2767
        %v4298 = vpop.f32.mrb[0].mxu0
        %v4299 = vadd.f32 %v4138, %v4298
        %v4300 = vpop.f32.mrb[0].mxu0
        %v4301 = vadd.f32 %v4140, %v4300
        %4302 = vmatprep.mubr.f32.mxu0 %v2776
        %4303 = vmatmul.mubr.f32.gmra.mrb[0].mxu0 %v2775
        %v4304 = vpop.f32.mrb[0].mxu0
        %v4305 = vadd.f32 %v4144, %v4304
        %v4306 = vpop.f32.mrb[0].mxu0
        %v4307 = vadd.f32 %v4146, %v4306
        %4308 = vmatprep.mubr.f32.mxu0 %v2784
        %4309 = vmatmul.mubr.f32.gmra.mrb[0].mxu0 %v2783
        %v4310 = vpop.f32.mrb[0].mxu0
        %v4311 = vadd.f32 %v4150, %v4310
        %v4312 = vpop.f32.mrb[0].mxu0
        %v4313 = vadd.f32 %v4152, %v4312
        %4314 = vmatprep.mubr.f32.mxu0 %v2792
        %4315 = vmatmul.mubr.f32.gmra.mrb[0].mxu0 %v2791
        %v4316 = vpop.f32.mrb[0].mxu0
        %v4317 = vadd.f32 %v4156, %v4316
        %v4318 = vpop.f32.mrb[0].mxu0
        %v4319 = vadd.f32 %v4158, %v4318
        %4320 = vmatprep.mubr.f32.mxu0 %v2800
        %4321 = vmatmul.mubr.f32.gmra.mrb[0].mxu0 %v2799
        %v4322 = vpop.f32.mrb[0].mxu0
        %v4323 = vadd.f32 %v4162, %v4322
        %v4324 = vpop.f32.mrb[0].mxu0
        %v4325 = vadd.f32 %v4164, %v4324
        %4326 = vmatprep.mubr.f32.mxu0 %v2808
        %4327 = vmatmul.mubr.f32.gmra.mrb[0].mxu0 %v2807
        %v4328 = vpop.f32.mrb[0].mxu0
        %v4329 = vadd.f32 %v4168, %v4328
        %v4330 = vpop.f32.mrb[0].mxu0
        %v4331 = vadd.f32 %v4170, %v4330
        %4332 = vmatprep.mubr.f32.mxu0 %v2816
        %4333 = vmatmul.mubr.f32.gmra.mrb[0].mxu0 %v2815
        %v4334 = vpop.f32.mrb[0].mxu0
        %v4335 = vadd.f32 %v4174, %v4334
        %v4336 = vpop.f32.mrb[0].mxu0
        %v4337 = vadd.f32 %v4176, %v4336
        %4338 = vmatprep.mubr.f32.mxu0 %v2824
        %4339 = vmatmul.mubr.f32.gmra.mrb[0].mxu0 %v2823
        %v4340 = vpop.f32.mrb[0].mxu0
        %v4341 = vadd.f32 %v4180, %v4340
        %v4342 = vpop.f32.mrb[0].mxu0
        %v4343 = vadd.f32 %v4182, %v4342
        %4344 = vmatprep.mubr.f32.mxu0 %v2832
        %4345 = vmatmul.mubr.f32.gmra.mrb[0].mxu0 %v2831
        %v4346 = vpop.f32.mrb[0].mxu0
        %v4347 = vadd.f32 %v4186, %v4346
        %v4348 = vpop.f32.mrb[0].mxu0
        %v4349 = vadd.f32 %v4188, %v4348
        %4350 = vmatprep.mubr.f32.mxu0 %v2840
        %4351 = vmatmul.mubr.f32.gmra.mrb[0].mxu0 %v2839
        %v4352 = vpop.f32.mrb[0].mxu0
        %v4353 = vadd.f32 %v4192, %v4352
        %v4354 = vpop.f32.mrb[0].mxu0
        %v4355 = vadd.f32 %v4194, %v4354
        %4356 = vmatprep.mubr.f32.mxu0 %v2848
        %4357 = vmatmul.mubr.f32.gmra.mrb[0].mxu0 %v2847
        %v4358 = vpop.f32.mrb[0].mxu0
        %v4359 = vadd.f32 %v4198, %v4358
        %v4360 = vpop.f32.mrb[0].mxu0
        %v4361 = vadd.f32 %v4200, %v4360
        %4362 = vmatprep.mubr.f32.mxu0 %v2856
        %4363 = vmatmul.mubr.f32.gmra.mrb[0].mxu0 %v2855
        %v4364 = vpop.f32.mrb[0].mxu0
        %v4365 = vadd.f32 %v4204, %v4364
        %v4366 = vpop.f32.mrb[0].mxu0
        %v4367 = vadd.f32 %v4206, %v4366
        %4368 = vmatprep.mubr.f32.mxu0 %v2864
        %4369 = vmatmul.mubr.f32.gmra.mrb[0].mxu0 %v2863
        %v4370 = vpop.f32.mrb[0].mxu0
        %v4371 = vadd.f32 %v4210, %v4370
        %v4372 = vpop.f32.mrb[0].mxu0
        %v4373 = vadd.f32 %v4212, %v4372
        %4374 = vmatprep.mubr.f32.mxu0 %v2872
        %4375 = vmatmul.mubr.f32.gmra.mrb[0].mxu0 %v2871
        %v4376 = vpop.f32.mrb[0].mxu0
        %v4377 = vadd.f32 %v4216, %v4376
        %v4378 = vpop.f32.mrb[0].mxu0
        %v4379 = vadd.f32 %v4218, %v4378
        %4380 = vmatprep.mubr.f32.mxu0 %v2880
        %4381 = vmatmul.mubr.f32.gmra.mrb[0].mxu0 %v2879
        %v4382 = vpop.f32.mrb[0].mxu0
        %v4383 = vadd.f32 %v4222, %v4382
        %v4384 = vpop.f32.mrb[0].mxu0
        %v4385 = vadd.f32 %v4224, %v4384
        %4386 = vmatprep.mubr.f32.mxu0 %v2888
        %4387 = vmatmul.mubr.f32.gmra.mrb[0].mxu0 %v2887
        %v4388 = vpop.f32.mrb[0].mxu0
        %v4389 = vadd.f32 %v4228, %v4388
        %v4390 = vpop.f32.mrb[0].mxu0
        %v4391 = vadd.f32 %v4230, %v4390
        %4392 = vdwg.mxu0
        %4393 = vmatprep.subr.mxu0 %v3152
        %4394 = vmatpush1.msra.mxu0 %v3151
        %4395 = vmatprep.subr.mxu0 %v3156
        %4396 = vmatpush1.msra.mxu0 %v3155
        %4397 = vmatprep.subr.mxu0 %v3160
        %4398 = vmatpush1.msra.mxu0 %v3159
        %4399 = vmatprep.subr.mxu0 %v3164
        %4400 = vmatpush1.msra.mxu0 %v3163
        %4401 = vmatprep.subr.mxu0 %v3168
        %4402 = vmatpush1.msra.mxu0 %v3167
        %4403 = vmatprep.subr.mxu0 %v3172
        %4404 = vmatpush1.msra.mxu0 %v3171
        %4405 = vmatprep.subr.mxu0 %v3176
        %4406 = vmatpush1.msra.mxu0 %v3175
        %4407 = vmatprep.subr.mxu0 %v3180
        %4408 = vmatpush1.msra.mxu0 %v3179
        %4409 = vmatprep.subr.mxu0 %v3184
        %4410 = vmatpush1.msra.mxu0 %v3183
        %4411 = vmatprep.subr.mxu0 %v3188
        %4412 = vmatpush1.msra.mxu0 %v3187
        %4413 = vmatprep.subr.mxu0 %v3192
        %4414 = vmatpush1.msra.mxu0 %v3191
        %4415 = vmatprep.subr.mxu0 %v3196
        %4416 = vmatpush1.msra.mxu0 %v3195
        %4417 = vmatprep.subr.mxu0 %v3200
        %4418 = vmatpush1.msra.mxu0 %v3199
        %4419 = vmatprep.subr.mxu0 %v3204
        %4420 = vmatpush1.msra.mxu0 %v3203
        %4421 = vmatprep.subr.mxu0 %v3208
        %4422 = vmatpush1.msra.mxu0 %v3207
        %4423 = vmatprep.subr.mxu0 %v3212
        %4424 = vmatpush1.msra.mxu0 %v3211
        %4425 = vmatprep.subr.mxu0 %v3216
        %4426 = vmatpush1.msra.mxu0 %v3215
        %4427 = vmatprep.subr.mxu0 %v3220
        %4428 = vmatpush1.msra.mxu0 %v3219
        %4429 = vmatprep.subr.mxu0 %v3224
        %4430 = vmatpush1.msra.mxu0 %v3223
        %4431 = vmatprep.subr.mxu0 %v3228
        %4432 = vmatpush1.msra.mxu0 %v3227
        %4433 = vmatprep.subr.mxu0 %v3232
        %4434 = vmatpush1.msra.mxu0 %v3231
        %4435 = vmatprep.subr.mxu0 %v3236
        %4436 = vmatpush1.msra.mxu0 %v3235
        %4437 = vmatprep.subr.mxu0 %v3240
        %4438 = vmatpush1.msra.mxu0 %v3239
        %4439 = vmatprep.subr.mxu0 %v3244
        %4440 = vmatpush1.msra.mxu0 %v3243
        %4441 = vmatprep.subr.mxu0 %v3248
        %4442 = vmatpush1.msra.mxu0 %v3247
        %4443 = vmatprep.subr.mxu0 %v3252
        %4444 = vmatpush1.msra.mxu0 %v3251
        %4445 = vmatprep.subr.mxu0 %v3256
        %4446 = vmatpush1.msra.mxu0 %v3255
        %4447 = vmatprep.subr.mxu0 %v3260
        %4448 = vmatpush1.msra.mxu0 %v3259
        %4449 = vmatprep.subr.mxu0 %v3264
        %4450 = vmatpush1.msra.mxu0 %v3263
        %4451 = vmatprep.subr.mxu0 %v3268
        %4452 = vmatpush1.msra.mxu0 %v3267
        %4453 = vmatprep.subr.mxu0 %v3272
        %4454 = vmatpush1.msra.mxu0 %v3271
        %4455 = vmatprep.subr.mxu0 %v3276
        %4456 = vmatpush1.msra.mxu0 %v3275
        %4457 = vmatprep.mubr.f32.mxu0 %v2770
        %4458 = vmatmul.mubr.f32.gmra.mrb[0].mxu0 %v2769
        %v4459 = vpop.f32.mrb[0].mxu0
        %v4460 = vadd.f32 %v4299, %v4459
        %v4461 = vpop.f32.mrb[0].mxu0
        %v4462 = vadd.f32 %v4301, %v4461
        %4463 = vmatprep.mubr.f32.mxu0 %v2778
        %4464 = vmatmul.mubr.f32.gmra.mrb[0].mxu0 %v2777
        %v4465 = vpop.f32.mrb[0].mxu0
        %v4466 = vadd.f32 %v4305, %v4465
        %v4467 = vpop.f32.mrb[0].mxu0
        %v4468 = vadd.f32 %v4307, %v4467
        %4469 = vmatprep.mubr.f32.mxu0 %v2786
        %4470 = vmatmul.mubr.f32.gmra.mrb[0].mxu0 %v2785
        %v4471 = vpop.f32.mrb[0].mxu0
        %v4472 = vadd.f32 %v4311, %v4471
        %v4473 = vpop.f32.mrb[0].mxu0
        %v4474 = vadd.f32 %v4313, %v4473
        %4475 = vmatprep.mubr.f32.mxu0 %v2794
        %4476 = vmatmul.mubr.f32.gmra.mrb[0].mxu0 %v2793
        %v4477 = vpop.f32.mrb[0].mxu0
        %v4478 = vadd.f32 %v4317, %v4477
        %v4479 = vpop.f32.mrb[0].mxu0
        %v4480 = vadd.f32 %v4319, %v4479
        %4481 = vmatprep.mubr.f32.mxu0 %v2802
        %4482 = vmatmul.mubr.f32.gmra.mrb[0].mxu0 %v2801
        %v4483 = vpop.f32.mrb[0].mxu0
        %v4484 = vadd.f32 %v4323, %v4483
        %v4485 = vpop.f32.mrb[0].mxu0
        %v4486 = vadd.f32 %v4325, %v4485
        %4487 = vmatprep.mubr.f32.mxu0 %v2810
        %4488 = vmatmul.mubr.f32.gmra.mrb[0].mxu0 %v2809
        %v4489 = vpop.f32.mrb[0].mxu0
        %v4490 = vadd.f32 %v4329, %v4489
        %v4491 = vpop.f32.mrb[0].mxu0
        %v4492 = vadd.f32 %v4331, %v4491
        %4493 = vmatprep.mubr.f32.mxu0 %v2818
        %4494 = vmatmul.mubr.f32.gmra.mrb[0].mxu0 %v2817
        %v4495 = vpop.f32.mrb[0].mxu0
        %v4496 = vadd.f32 %v4335, %v4495
        %v4497 = vpop.f32.mrb[0].mxu0
        %v4498 = vadd.f32 %v4337, %v4497
        %4499 = vmatprep.mubr.f32.mxu0 %v2826
        %4500 = vmatmul.mubr.f32.gmra.mrb[0].mxu0 %v2825
        %v4501 = vpop.f32.mrb[0].mxu0
        %v4502 = vadd.f32 %v4341, %v4501
        %v4503 = vpop.f32.mrb[0].mxu0
        %v4504 = vadd.f32 %v4343, %v4503
        %4505 = vmatprep.mubr.f32.mxu0 %v2834
        %4506 = vmatmul.mubr.f32.gmra.mrb[0].mxu0 %v2833
        %v4507 = vpop.f32.mrb[0].mxu0
        %v4508 = vadd.f32 %v4347, %v4507
        %v4509 = vpop.f32.mrb[0].mxu0
        %v4510 = vadd.f32 %v4349, %v4509
        %4511 = vmatprep.mubr.f32.mxu0 %v2842
        %4512 = vmatmul.mubr.f32.gmra.mrb[0].mxu0 %v2841
        %v4513 = vpop.f32.mrb[0].mxu0
        %v4514 = vadd.f32 %v4353, %v4513
        %v4515 = vpop.f32.mrb[0].mxu0
        %v4516 = vadd.f32 %v4355, %v4515
        %4517 = vmatprep.mubr.f32.mxu0 %v2850
        %4518 = vmatmul.mubr.f32.gmra.mrb[0].mxu0 %v2849
        %v4519 = vpop.f32.mrb[0].mxu0
        %v4520 = vadd.f32 %v4359, %v4519
        %v4521 = vpop.f32.mrb[0].mxu0
        %v4522 = vadd.f32 %v4361, %v4521
        %4523 = vmatprep.mubr.f32.mxu0 %v2858
        %4524 = vmatmul.mubr.f32.gmra.mrb[0].mxu0 %v2857
        %v4525 = vpop.f32.mrb[0].mxu0
        %v4526 = vadd.f32 %v4365, %v4525
        %v4527 = vpop.f32.mrb[0].mxu0
        %v4528 = vadd.f32 %v4367, %v4527
        %4529 = vmatprep.mubr.f32.mxu0 %v2866
        %4530 = vmatmul.mubr.f32.gmra.mrb[0].mxu0 %v2865
        %v4531 = vpop.f32.mrb[0].mxu0
        %v4532 = vadd.f32 %v4371, %v4531
        %v4533 = vpop.f32.mrb[0].mxu0
        %v4534 = vadd.f32 %v4373, %v4533
        %4535 = vmatprep.mubr.f32.mxu0 %v2874
        %4536 = vmatmul.mubr.f32.gmra.mrb[0].mxu0 %v2873
        %v4537 = vpop.f32.mrb[0].mxu0
        %v4538 = vadd.f32 %v4377, %v4537
        %v4539 = vpop.f32.mrb[0].mxu0
        %v4540 = vadd.f32 %v4379, %v4539
        %4541 = vmatprep.mubr.f32.mxu0 %v2882
        %4542 = vmatmul.mubr.f32.gmra.mrb[0].mxu0 %v2881
        %v4543 = vpop.f32.mrb[0].mxu0
        %v4544 = vadd.f32 %v4383, %v4543
        %v4545 = vpop.f32.mrb[0].mxu0
        %v4546 = vadd.f32 %v4385, %v4545
        %4547 = vmatprep.mubr.f32.mxu0 %v2890
        %4548 = vmatmul.mubr.f32.gmra.mrb[0].mxu0 %v2889
        %v4549 = vpop.f32.mrb[0].mxu0
        %v4550 = vadd.f32 %v4389, %v4549
        %v4551 = vpop.f32.mrb[0].mxu0
        %v4552 = vadd.f32 %v4391, %v4551
        %4553 = vdwg.mxu0
        %4554 = vmatprep.subr.mxu0 %v3280
        %4555 = vmatpush1.msra.mxu0 %v3279
        %4556 = vmatprep.subr.mxu0 %v3284
        %4557 = vmatpush1.msra.mxu0 %v3283
        %4558 = vmatprep.subr.mxu0 %v3288
        %4559 = vmatpush1.msra.mxu0 %v3287
        %4560 = vmatprep.subr.mxu0 %v3292
        %4561 = vmatpush1.msra.mxu0 %v3291
        %4562 = vmatprep.subr.mxu0 %v3296
        %4563 = vmatpush1.msra.mxu0 %v3295
        %4564 = vmatprep.subr.mxu0 %v3300
        %4565 = vmatpush1.msra.mxu0 %v3299
        %4566 = vmatprep.subr.mxu0 %v3304
        %4567 = vmatpush1.msra.mxu0 %v3303
        %4568 = vmatprep.subr.mxu0 %v3308
        %4569 = vmatpush1.msra.mxu0 %v3307
        %4570 = vmatprep.subr.mxu0 %v3312
        %4571 = vmatpush1.msra.mxu0 %v3311
        %4572 = vmatprep.subr.mxu0 %v3316
        %4573 = vmatpush1.msra.mxu0 %v3315
        %4574 = vmatprep.subr.mxu0 %v3320
        %4575 = vmatpush1.msra.mxu0 %v3319
        %4576 = vmatprep.subr.mxu0 %v3324
        %4577 = vmatpush1.msra.mxu0 %v3323
        %4578 = vmatprep.subr.mxu0 %v3328
        %4579 = vmatpush1.msra.mxu0 %v3327
        %4580 = vmatprep.subr.mxu0 %v3332
        %4581 = vmatpush1.msra.mxu0 %v3331
        %4582 = vmatprep.subr.mxu0 %v3336
        %4583 = vmatpush1.msra.mxu0 %v3335
        %4584 = vmatprep.subr.mxu0 %v3340
        %4585 = vmatpush1.msra.mxu0 %v3339
        %4586 = vmatprep.subr.mxu0 %v3344
        %4587 = vmatpush1.msra.mxu0 %v3343
        %4588 = vmatprep.subr.mxu0 %v3348
        %4589 = vmatpush1.msra.mxu0 %v3347
        %4590 = vmatprep.subr.mxu0 %v3352
        %4591 = vmatpush1.msra.mxu0 %v3351
        %4592 = vmatprep.subr.mxu0 %v3356
        %4593 = vmatpush1.msra.mxu0 %v3355
        %4594 = vmatprep.subr.mxu0 %v3360
        %4595 = vmatpush1.msra.mxu0 %v3359
        %4596 = vmatprep.subr.mxu0 %v3364
        %4597 = vmatpush1.msra.mxu0 %v3363
        %4598 = vmatprep.subr.mxu0 %v3368
        %4599 = vmatpush1.msra.mxu0 %v3367
        %4600 = vmatprep.subr.mxu0 %v3372
        %4601 = vmatpush1.msra.mxu0 %v3371
        %4602 = vmatprep.subr.mxu0 %v3376
        %4603 = vmatpush1.msra.mxu0 %v3375
        %4604 = vmatprep.subr.mxu0 %v3380
        %4605 = vmatpush1.msra.mxu0 %v3379
        %4606 = vmatprep.subr.mxu0 %v3384
        %4607 = vmatpush1.msra.mxu0 %v3383
        %4608 = vmatprep.subr.mxu0 %v3388
        %4609 = vmatpush1.msra.mxu0 %v3387
        %4610 = vmatprep.subr.mxu0 %v3392
        %4611 = vmatpush1.msra.mxu0 %v3391
        %4612 = vmatprep.subr.mxu0 %v3396
        %4613 = vmatpush1.msra.mxu0 %v3395
        %4614 = vmatprep.subr.mxu0 %v3400
        %4615 = vmatpush1.msra.mxu0 %v3399
        %4616 = vmatprep.subr.mxu0 %v3404
        %4617 = vmatpush1.msra.mxu0 %v3403
        %4618 = vmatprep.mubr.f32.mxu0 %v2772
        %4619 = vmatmul.mubr.f32.gmra.mrb[0].mxu0 %v2771
        %v4620 = vpop.f32.mrb[0].mxu0
        %v4621 = vadd.f32 %v4460, %v4620
        %v4622 = vpop.f32.mrb[0].mxu0
        %v4623 = vadd.f32 %v4462, %v4622
        %4624 = vmatprep.mubr.f32.mxu0 %v2780
        %4625 = vmatmul.mubr.f32.gmra.mrb[0].mxu0 %v2779
        %v4626 = vpop.f32.mrb[0].mxu0
        %v4627 = vadd.f32 %v4466, %v4626
        %v4628 = vpop.f32.mrb[0].mxu0
        %v4629 = vadd.f32 %v4468, %v4628
        %4630 = vmatprep.mubr.f32.mxu0 %v2788
        %4631 = vmatmul.mubr.f32.gmra.mrb[0].mxu0 %v2787
        %v4632 = vpop.f32.mrb[0].mxu0
        %v4633 = vadd.f32 %v4472, %v4632
        %v4634 = vpop.f32.mrb[0].mxu0
        %v4635 = vadd.f32 %v4474, %v4634
        %4636 = vmatprep.mubr.f32.mxu0 %v2796
        %4637 = vmatmul.mubr.f32.gmra.mrb[0].mxu0 %v2795
        %v4638 = vpop.f32.mrb[0].mxu0
        %v4639 = vadd.f32 %v4478, %v4638
        %v4640 = vpop.f32.mrb[0].mxu0
        %v4641 = vadd.f32 %v4480, %v4640
        %4642 = vmatprep.mubr.f32.mxu0 %v2804
        %4643 = vmatmul.mubr.f32.gmra.mrb[0].mxu0 %v2803
        %v4644 = vpop.f32.mrb[0].mxu0
        %v4645 = vadd.f32 %v4484, %v4644
        %v4646 = vpop.f32.mrb[0].mxu0
        %v4647 = vadd.f32 %v4486, %v4646
        %4648 = vmatprep.mubr.f32.mxu0 %v2812
        %4649 = vmatmul.mubr.f32.gmra.mrb[0].mxu0 %v2811
        %v4650 = vpop.f32.mrb[0].mxu0
        %v4651 = vadd.f32 %v4490, %v4650
        %v4652 = vpop.f32.mrb[0].mxu0
        %v4653 = vadd.f32 %v4492, %v4652
        %4654 = vmatprep.mubr.f32.mxu0 %v2820
        %4655 = vmatmul.mubr.f32.gmra.mrb[0].mxu0 %v2819
        %v4656 = vpop.f32.mrb[0].mxu0
        %v4657 = vadd.f32 %v4496, %v4656
        %v4658 = vpop.f32.mrb[0].mxu0
        %v4659 = vadd.f32 %v4498, %v4658
        %4660 = vmatprep.mubr.f32.mxu0 %v2828
        %4661 = vmatmul.mubr.f32.gmra.mrb[0].mxu0 %v2827
        %v4662 = vpop.f32.mrb[0].mxu0
        %v4663 = vadd.f32 %v4502, %v4662
        %v4664 = vpop.f32.mrb[0].mxu0
        %v4665 = vadd.f32 %v4504, %v4664
        %4666 = vmatprep.mubr.f32.mxu0 %v2836
        %4667 = vmatmul.mubr.f32.gmra.mrb[0].mxu0 %v2835
        %v4668 = vpop.f32.mrb[0].mxu0
        %v4669 = vadd.f32 %v4508, %v4668
        %v4670 = vpop.f32.mrb[0].mxu0
        %v4671 = vadd.f32 %v4510, %v4670
        %4672 = vmatprep.mubr.f32.mxu0 %v2844
        %4673 = vmatmul.mubr.f32.gmra.mrb[0].mxu0 %v2843
        %v4674 = vpop.f32.mrb[0].mxu0
        %v4675 = vadd.f32 %v4514, %v4674
        %v4676 = vpop.f32.mrb[0].mxu0
        %v4677 = vadd.f32 %v4516, %v4676
        %4678 = vmatprep.mubr.f32.mxu0 %v2852
        %4679 = vmatmul.mubr.f32.gmra.mrb[0].mxu0 %v2851
        %v4680 = vpop.f32.mrb[0].mxu0
        %v4681 = vadd.f32 %v4520, %v4680
        %v4682 = vpop.f32.mrb[0].mxu0
        %v4683 = vadd.f32 %v4522, %v4682
        %4684 = vmatprep.mubr.f32.mxu0 %v2860
        %4685 = vmatmul.mubr.f32.gmra.mrb[0].mxu0 %v2859
        %v4686 = vpop.f32.mrb[0].mxu0
        %v4687 = vadd.f32 %v4526, %v4686
        %v4688 = vpop.f32.mrb[0].mxu0
        %v4689 = vadd.f32 %v4528, %v4688
        %4690 = vmatprep.mubr.f32.mxu0 %v2868
        %4691 = vmatmul.mubr.f32.gmra.mrb[0].mxu0 %v2867
        %v4692 = vpop.f32.mrb[0].mxu0
        %v4693 = vadd.f32 %v4532, %v4692
        %v4694 = vpop.f32.mrb[0].mxu0
        %v4695 = vadd.f32 %v4534, %v4694
        %4696 = vmatprep.mubr.f32.mxu0 %v2876
        %4697 = vmatmul.mubr.f32.gmra.mrb[0].mxu0 %v2875
        %v4698 = vpop.f32.mrb[0].mxu0
        %v4699 = vadd.f32 %v4538, %v4698
        %v4700 = vpop.f32.mrb[0].mxu0
        %v4701 = vadd.f32 %v4540, %v4700
        %4702 = vmatprep.mubr.f32.mxu0 %v2884
        %4703 = vmatmul.mubr.f32.gmra.mrb[0].mxu0 %v2883
        %v4704 = vpop.f32.mrb[0].mxu0
        %v4705 = vadd.f32 %v4544, %v4704
        %v4706 = vpop.f32.mrb[0].mxu0
        %v4707 = vadd.f32 %v4546, %v4706
        %4708 = vmatprep.mubr.f32.mxu0 %v2892
        %4709 = vmatmul.mubr.f32.gmra.mrb[0].mxu0 %v2891
        %v4710 = vpop.f32.mrb[0].mxu0
        %v4711 = vadd.f32 %v4550, %v4710
        %v4712 = vpop.f32.mrb[0].mxu0
        %v4713 = vadd.f32 %v4552, %v4712
        %4714 = vdwg.mxu0
        %vm4715 = vcmp.ge.f32.partialorder %v3977, 0.0
        %vm4716 = vcmp.ge.f32.partialorder %v3979, 0.0
        %vm4717 = vcmp.ge.f32.partialorder %v4621, 0.0
        %vm4718 = vcmp.ge.f32.partialorder %v4623, 0.0
        %vm4719 = vcmp.ge.f32.partialorder %v3983, 0.0
        %vm4720 = vcmp.ge.f32.partialorder %v3985, 0.0
        %vm4721 = vcmp.ge.f32.partialorder %v4627, 0.0
        %vm4722 = vcmp.ge.f32.partialorder %v4629, 0.0
        %vm4723 = vcmp.ge.f32.partialorder %v3989, 0.0
        %vm4724 = vcmp.ge.f32.partialorder %v3991, 0.0
        %vm4725 = vcmp.ge.f32.partialorder %v4633, 0.0
        %vm4726 = vcmp.ge.f32.partialorder %v4635, 0.0
        %vm4727 = vcmp.ge.f32.partialorder %v3995, 0.0
        %vm4728 = vcmp.ge.f32.partialorder %v3997, 0.0
        %vm4729 = vcmp.ge.f32.partialorder %v4639, 0.0
        %vm4730 = vcmp.ge.f32.partialorder %v4641, 0.0
        %vm4731 = vcmp.ge.f32.partialorder %v4001, 0.0
        %vm4732 = vcmp.ge.f32.partialorder %v4003, 0.0
        %vm4733 = vcmp.ge.f32.partialorder %v4645, 0.0
        %vm4734 = vcmp.ge.f32.partialorder %v4647, 0.0
        %vm4735 = vcmp.ge.f32.partialorder %v4007, 0.0
        %vm4736 = vcmp.ge.f32.partialorder %v4009, 0.0
        %vm4737 = vcmp.ge.f32.partialorder %v4651, 0.0
        %vm4738 = vcmp.ge.f32.partialorder %v4653, 0.0
        %vm4739 = vcmp.ge.f32.partialorder %v4013, 0.0
        %vm4740 = vcmp.ge.f32.partialorder %v4015, 0.0
        %vm4741 = vcmp.ge.f32.partialorder %v4657, 0.0
        %vm4742 = vcmp.ge.f32.partialorder %v4659, 0.0
        %vm4743 = vcmp.ge.f32.partialorder %v4019, 0.0
        %vm4744 = vcmp.ge.f32.partialorder %v4021, 0.0
        %vm4745 = vcmp.ge.f32.partialorder %v4663, 0.0
        %vm4746 = vcmp.ge.f32.partialorder %v4665, 0.0
        %vm4747 = vcmp.ge.f32.partialorder %v4025, 0.0
        %vm4748 = vcmp.ge.f32.partialorder %v4027, 0.0
        %vm4749 = vcmp.ge.f32.partialorder %v4669, 0.0
        %vm4750 = vcmp.ge.f32.partialorder %v4671, 0.0
        %vm4751 = vcmp.ge.f32.partialorder %v4031, 0.0
        %vm4752 = vcmp.ge.f32.partialorder %v4033, 0.0
        %vm4753 = vcmp.ge.f32.partialorder %v4675, 0.0
        %vm4754 = vcmp.ge.f32.partialorder %v4677, 0.0
        %vm4755 = vcmp.ge.f32.partialorder %v4037, 0.0
        %vm4756 = vcmp.ge.f32.partialorder %v4039, 0.0
        %vm4757 = vcmp.ge.f32.partialorder %v4681, 0.0
        %vm4758 = vcmp.ge.f32.partialorder %v4683, 0.0
        %vm4759 = vcmp.ge.f32.partialorder %v4043, 0.0
        %vm4760 = vcmp.ge.f32.partialorder %v4045, 0.0
        %vm4761 = vcmp.ge.f32.partialorder %v4687, 0.0
        %vm4762 = vcmp.ge.f32.partialorder %v4689, 0.0
        %vm4763 = vcmp.ge.f32.partialorder %v4049, 0.0
        %vm4764 = vcmp.ge.f32.partialorder %v4051, 0.0
        %vm4765 = vcmp.ge.f32.partialorder %v4693, 0.0
        %vm4766 = vcmp.ge.f32.partialorder %v4695, 0.0
        %vm4767 = vcmp.ge.f32.partialorder %v4055, 0.0
        %vm4768 = vcmp.ge.f32.partialorder %v4057, 0.0
        %vm4769 = vcmp.ge.f32.partialorder %v4699, 0.0
        %vm4770 = vcmp.ge.f32.partialorder %v4701, 0.0
        %vm4771 = vcmp.ge.f32.partialorder %v4061, 0.0
        %vm4772 = vcmp.ge.f32.partialorder %v4063, 0.0
        %vm4773 = vcmp.ge.f32.partialorder %v4705, 0.0
        %vm4774 = vcmp.ge.f32.partialorder %v4707, 0.0
        %vm4775 = vcmp.ge.f32.partialorder %v4067, 0.0
        %vm4776 = vcmp.ge.f32.partialorder %v4069, 0.0
        %vm4777 = vcmp.ge.f32.partialorder %v4711, 0.0
        %vm4778 = vcmp.ge.f32.partialorder %v4713, 0.0
        %v4779 = vmul.f32 %v3977, 0.01
        %v4780 = vmul.f32 %v3979, 0.01
        %v4781 = vmul.f32 %v4621, 0.01
        %v4782 = vmul.f32 %v4623, 0.01
        %v4783 = vmul.f32 %v3983, 0.01
        %v4784 = vmul.f32 %v3985, 0.01
        %v4785 = vmul.f32 %v4627, 0.01
        %v4786 = vmul.f32 %v4629, 0.01
        %v4787 = vmul.f32 %v3989, 0.01
        %v4788 = vmul.f32 %v3991, 0.01
        %v4789 = vmul.f32 %v4633, 0.01
        %v4790 = vmul.f32 %v4635, 0.01
        %v4791 = vmul.f32 %v3995, 0.01
        %v4792 = vmul.f32 %v3997, 0.01
        %v4793 = vmul.f32 %v4639, 0.01
        %v4794 = vmul.f32 %v4641, 0.01
        %v4795 = vmul.f32 %v4001, 0.01
        %v4796 = vmul.f32 %v4003, 0.01
        %v4797 = vmul.f32 %v4645, 0.01
        %v4798 = vmul.f32 %v4647, 0.01
        %v4799 = vmul.f32 %v4007, 0.01
        %v4800 = vmul.f32 %v4009, 0.01
        %v4801 = vmul.f32 %v4651, 0.01
        %v4802 = vmul.f32 %v4653, 0.01
        %v4803 = vmul.f32 %v4013, 0.01
        %v4804 = vmul.f32 %v4015, 0.01
        %v4805 = vmul.f32 %v4657, 0.01
        %v4806 = vmul.f32 %v4659, 0.01
        %v4807 = vmul.f32 %v4019, 0.01
        %v4808 = vmul.f32 %v4021, 0.01
        %v4809 = vmul.f32 %v4663, 0.01
        %v4810 = vmul.f32 %v4665, 0.01
        %v4811 = vmul.f32 %v4025, 0.01
        %v4812 = vmul.f32 %v4027, 0.01
        %v4813 = vmul.f32 %v4669, 0.01
        %v4814 = vmul.f32 %v4671, 0.01
        %v4815 = vmul.f32 %v4031, 0.01
        %v4816 = vmul.f32 %v4033, 0.01
        %v4817 = vmul.f32 %v4675, 0.01
        %v4818 = vmul.f32 %v4677, 0.01
        %v4819 = vmul.f32 %v4037, 0.01
        %v4820 = vmul.f32 %v4039, 0.01
        %v4821 = vmul.f32 %v4681, 0.01
        %v4822 = vmul.f32 %v4683, 0.01
        %v4823 = vmul.f32 %v4043, 0.01
        %v4824 = vmul.f32 %v4045, 0.01
        %v4825 = vmul.f32 %v4687, 0.01
        %v4826 = vmul.f32 %v4689, 0.01
        %v4827 = vmul.f32 %v4049, 0.01
        %v4828 = vmul.f32 %v4051, 0.01
        %v4829 = vmul.f32 %v4693, 0.01
        %v4830 = vmul.f32 %v4695, 0.01
        %v4831 = vmul.f32 %v4055, 0.01
        %v4832 = vmul.f32 %v4057, 0.01
        %v4833 = vmul.f32 %v4699, 0.01
        %v4834 = vmul.f32 %v4701, 0.01
        %v4835 = vmul.f32 %v4061, 0.01
        %v4836 = vmul.f32 %v4063, 0.01
        %v4837 = vmul.f32 %v4705, 0.01
        %v4838 = vmul.f32 %v4707, 0.01
        %v4839 = vmul.f32 %v4067, 0.01
        %v4840 = vmul.f32 %v4069, 0.01
        %v4841 = vmul.f32 %v4711, 0.01
        %v4842 = vmul.f32 %v4713, 0.01
        %v4843 = vsel %vm4715, %v3977, %v4779
        %v4844 = vsel %vm4716, %v3979, %v4780
        %v4845 = vsel %vm4717, %v4621, %v4781
        %v4846 = vsel %vm4718, %v4623, %v4782
        %v4847 = vsel %vm4719, %v3983, %v4783
        %v4848 = vsel %vm4720, %v3985, %v4784
        %v4849 = vsel %vm4721, %v4627, %v4785
        %v4850 = vsel %vm4722, %v4629, %v4786
        %v4851 = vsel %vm4723, %v3989, %v4787
        %v4852 = vsel %vm4724, %v3991, %v4788
        %v4853 = vsel %vm4725, %v4633, %v4789
        %v4854 = vsel %vm4726, %v4635, %v4790
        %v4855 = vsel %vm4727, %v3995, %v4791
        %v4856 = vsel %vm4728, %v3997, %v4792
        %v4857 = vsel %vm4729, %v4639, %v4793
        %v4858 = vsel %vm4730, %v4641, %v4794
        %v4859 = vsel %vm4731, %v4001, %v4795
        %v4860 = vsel %vm4732, %v4003, %v4796
        %v4861 = vsel %vm4733, %v4645, %v4797
        %v4862 = vsel %vm4734, %v4647, %v4798
        %v4863 = vsel %vm4735, %v4007, %v4799
        %v4864 = vsel %vm4736, %v4009, %v4800
        %v4865 = vsel %vm4737, %v4651, %v4801
        %v4866 = vsel %vm4738, %v4653, %v4802
        %v4867 = vsel %vm4739, %v4013, %v4803
        %v4868 = vsel %vm4740, %v4015, %v4804
        %v4869 = vsel %vm4741, %v4657, %v4805
        %v4870 = vsel %vm4742, %v4659, %v4806
        %v4871 = vsel %vm4743, %v4019, %v4807
        %v4872 = vsel %vm4744, %v4021, %v4808
        %v4873 = vsel %vm4745, %v4663, %v4809
        %v4874 = vsel %vm4746, %v4665, %v4810
        %v4875 = vsel %vm4747, %v4025, %v4811
        %v4876 = vsel %vm4748, %v4027, %v4812
        %v4877 = vsel %vm4749, %v4669, %v4813
        %v4878 = vsel %vm4750, %v4671, %v4814
        %v4879 = vsel %vm4751, %v4031, %v4815
        %v4880 = vsel %vm4752, %v4033, %v4816
        %v4881 = vsel %vm4753, %v4675, %v4817
        %v4882 = vsel %vm4754, %v4677, %v4818
        %v4883 = vsel %vm4755, %v4037, %v4819
        %v4884 = vsel %vm4756, %v4039, %v4820
        %v4885 = vsel %vm4757, %v4681, %v4821
        %v4886 = vsel %vm4758, %v4683, %v4822
        %v4887 = vsel %vm4759, %v4043, %v4823
        %v4888 = vsel %vm4760, %v4045, %v4824
        %v4889 = vsel %vm4761, %v4687, %v4825
        %v4890 = vsel %vm4762, %v4689, %v4826
        %v4891 = vsel %vm4763, %v4049, %v4827
        %v4892 = vsel %vm4764, %v4051, %v4828
        %v4893 = vsel %vm4765, %v4693, %v4829
        %v4894 = vsel %vm4766, %v4695, %v4830
        %v4895 = vsel %vm4767, %v4055, %v4831
        %v4896 = vsel %vm4768, %v4057, %v4832
        %v4897 = vsel %vm4769, %v4699, %v4833
        %v4898 = vsel %vm4770, %v4701, %v4834
        %v4899 = vsel %vm4771, %v4061, %v4835
        %v4900 = vsel %vm4772, %v4063, %v4836
        %v4901 = vsel %vm4773, %v4705, %v4837
        %v4902 = vsel %vm4774, %v4707, %v4838
        %v4903 = vsel %vm4775, %v4067, %v4839
        %v4904 = vsel %vm4776, %v4069, %v4840
        %v4905 = vsel %vm4777, %v4711, %v4841
        %v4906 = vsel %vm4778, %v4713, %v4842
        %v4907 = vld [vmem:[#allocation13] sm:$0xff]
        %v4908 = vld [vmem:[#allocation13 + $0x8] sm:$0xff]
        %v4909 = vld [vmem:[#allocation13 + $0x10] sm:$0xff]
        %v4910 = vld [vmem:[#allocation13 + $0x18] sm:$0xff]
        %v4911 = vld [vmem:[#allocation13 + $0x20] sm:$0xff]
        %v4912 = vld [vmem:[#allocation13 + $0x28] sm:$0xff]
        %v4913 = vld [vmem:[#allocation13 + $0x30] sm:$0xff]
        %v4914 = vld [vmem:[#allocation13 + $0x38] sm:$0xff]
        %v4915 = vld [vmem:[#allocation13 + $0x40] sm:$0xff]
        %v4916 = vld [vmem:[#allocation13 + $0x48] sm:$0xff]
        %v4917 = vld [vmem:[#allocation13 + $0x50] sm:$0xff]
        %v4918 = vld [vmem:[#allocation13 + $0x58] sm:$0xff]
        %v4919 = vld [vmem:[#allocation13 + $0x60] sm:$0xff]
        %v4920 = vld [vmem:[#allocation13 + $0x68] sm:$0xff]
        %v4921 = vld [vmem:[#allocation13 + $0x70] sm:$0xff]
        %v4922 = vld [vmem:[#allocation13 + $0x78] sm:$0xff]
        %v4923 = vld [vmem:[#allocation13 + $0x80] sm:$0xff]
        %v4924 = vld [vmem:[#allocation13 + $0x88] sm:$0xff]
        %v4925 = vld [vmem:[#allocation13 + $0x90] sm:$0xff]
        %v4926 = vld [vmem:[#allocation13 + $0x98] sm:$0xff]
        %v4927 = vld [vmem:[#allocation13 + $0xa0] sm:$0xff]
        %v4928 = vld [vmem:[#allocation13 + $0xa8] sm:$0xff]
        %v4929 = vld [vmem:[#allocation13 + $0xb0] sm:$0xff]
        %v4930 = vld [vmem:[#allocation13 + $0xb8] sm:$0xff]
        %v4931 = vld [vmem:[#allocation13 + $0xc0] sm:$0xff]
        %v4932 = vld [vmem:[#allocation13 + $0xc8] sm:$0xff]
        %v4933 = vld [vmem:[#allocation13 + $0xd0] sm:$0xff]
        %v4934 = vld [vmem:[#allocation13 + $0xd8] sm:$0xff]
        %v4935 = vld [vmem:[#allocation13 + $0xe0] sm:$0xff]
        %v4936 = vld [vmem:[#allocation13 + $0xe8] sm:$0xff]
        %v4937 = vld [vmem:[#allocation13 + $0xf0] sm:$0xff]
        %v4938 = vld [vmem:[#allocation13 + $0xf8] sm:$0xff]
        %v4939 = vld [vmem:[#allocation13 + $0x100] sm:$0xff]
        %v4940 = vld [vmem:[#allocation13 + $0x108] sm:$0xff]
        %v4941 = vld [vmem:[#allocation13 + $0x110] sm:$0xff]
        %v4942 = vld [vmem:[#allocation13 + $0x118] sm:$0xff]
        %v4943 = vld [vmem:[#allocation13 + $0x120] sm:$0xff]
        %v4944 = vld [vmem:[#allocation13 + $0x128] sm:$0xff]
        %v4945 = vld [vmem:[#allocation13 + $0x130] sm:$0xff]
        %v4946 = vld [vmem:[#allocation13 + $0x138] sm:$0xff]
        %v4947 = vld [vmem:[#allocation13 + $0x140] sm:$0xff]
        %v4948 = vld [vmem:[#allocation13 + $0x148] sm:$0xff]
        %v4949 = vld [vmem:[#allocation13 + $0x150] sm:$0xff]
        %v4950 = vld [vmem:[#allocation13 + $0x158] sm:$0xff]
        %v4951 = vld [vmem:[#allocation13 + $0x160] sm:$0xff]
        %v4952 = vld [vmem:[#allocation13 + $0x168] sm:$0xff]
        %v4953 = vld [vmem:[#allocation13 + $0x170] sm:$0xff]
        %v4954 = vld [vmem:[#allocation13 + $0x178] sm:$0xff]
        %v4955 = vld [vmem:[#allocation13 + $0x180] sm:$0xff]
        %v4956 = vld [vmem:[#allocation13 + $0x188] sm:$0xff]
        %v4957 = vld [vmem:[#allocation13 + $0x190] sm:$0xff]
        %v4958 = vld [vmem:[#allocation13 + $0x198] sm:$0xff]
        %v4959 = vld [vmem:[#allocation13 + $0x1a0] sm:$0xff]
        %v4960 = vld [vmem:[#allocation13 + $0x1a8] sm:$0xff]
        %v4961 = vld [vmem:[#allocation13 + $0x1b0] sm:$0xff]
        %v4962 = vld [vmem:[#allocation13 + $0x1b8] sm:$0xff]
        %v4963 = vld [vmem:[#allocation13 + $0x1c0] sm:$0xff]
        %v4964 = vld [vmem:[#allocation13 + $0x1c8] sm:$0xff]
        %v4965 = vld [vmem:[#allocation13 + $0x1d0] sm:$0xff]
        %v4966 = vld [vmem:[#allocation13 + $0x1d8] sm:$0xff]
        %v4967 = vld [vmem:[#allocation13 + $0x1e0] sm:$0xff]
        %v4968 = vld [vmem:[#allocation13 + $0x1e8] sm:$0xff]
        %v4969 = vld [vmem:[#allocation13 + $0x1f0] sm:$0xff]
        %v4970 = vld [vmem:[#allocation13 + $0x1f8] sm:$0xff]
        %v4971 = vld [vmem:[#allocation13 + $0x200] sm:$0xff]
        %v4972 = vld [vmem:[#allocation13 + $0x208] sm:$0xff]
        %v4973 = vld [vmem:[#allocation13 + $0x210] sm:$0xff]
        %v4974 = vld [vmem:[#allocation13 + $0x218] sm:$0xff]
        %v4975 = vld [vmem:[#allocation13 + $0x220] sm:$0xff]
        %v4976 = vld [vmem:[#allocation13 + $0x228] sm:$0xff]
        %v4977 = vld [vmem:[#allocation13 + $0x230] sm:$0xff]
        %v4978 = vld [vmem:[#allocation13 + $0x238] sm:$0xff]
        %v4979 = vld [vmem:[#allocation13 + $0x240] sm:$0xff]
        %v4980 = vld [vmem:[#allocation13 + $0x248] sm:$0xff]
        %v4981 = vld [vmem:[#allocation13 + $0x250] sm:$0xff]
        %v4982 = vld [vmem:[#allocation13 + $0x258] sm:$0xff]
        %v4983 = vld [vmem:[#allocation13 + $0x260] sm:$0xff]
        %v4984 = vld [vmem:[#allocation13 + $0x268] sm:$0xff]
        %v4985 = vld [vmem:[#allocation13 + $0x270] sm:$0xff]
        %v4986 = vld [vmem:[#allocation13 + $0x278] sm:$0xff]
        %v4987 = vld [vmem:[#allocation13 + $0x280] sm:$0xff]
        %v4988 = vld [vmem:[#allocation13 + $0x288] sm:$0xff]
        %v4989 = vld [vmem:[#allocation13 + $0x290] sm:$0xff]
        %v4990 = vld [vmem:[#allocation13 + $0x298] sm:$0xff]
        %v4991 = vld [vmem:[#allocation13 + $0x2a0] sm:$0xff]
        %v4992 = vld [vmem:[#allocation13 + $0x2a8] sm:$0xff]
        %v4993 = vld [vmem:[#allocation13 + $0x2b0] sm:$0xff]
        %v4994 = vld [vmem:[#allocation13 + $0x2b8] sm:$0xff]
        %v4995 = vld [vmem:[#allocation13 + $0x2c0] sm:$0xff]
        %v4996 = vld [vmem:[#allocation13 + $0x2c8] sm:$0xff]
        %v4997 = vld [vmem:[#allocation13 + $0x2d0] sm:$0xff]
        %v4998 = vld [vmem:[#allocation13 + $0x2d8] sm:$0xff]
        %v4999 = vld [vmem:[#allocation13 + $0x2e0] sm:$0xff]
        %v5000 = vld [vmem:[#allocation13 + $0x2e8] sm:$0xff]
        %v5001 = vld [vmem:[#allocation13 + $0x2f0] sm:$0xff]
        %v5002 = vld [vmem:[#allocation13 + $0x2f8] sm:$0xff]
        %v5003 = vld [vmem:[#allocation13 + $0x300] sm:$0xff]
        %v5004 = vld [vmem:[#allocation13 + $0x308] sm:$0xff]
        %v5005 = vld [vmem:[#allocation13 + $0x310] sm:$0xff]
        %v5006 = vld [vmem:[#allocation13 + $0x318] sm:$0xff]
        %v5007 = vld [vmem:[#allocation13 + $0x320] sm:$0xff]
        %v5008 = vld [vmem:[#allocation13 + $0x328] sm:$0xff]
        %v5009 = vld [vmem:[#allocation13 + $0x330] sm:$0xff]
        %v5010 = vld [vmem:[#allocation13 + $0x338] sm:$0xff]
        %v5011 = vld [vmem:[#allocation13 + $0x340] sm:$0xff]
        %v5012 = vld [vmem:[#allocation13 + $0x348] sm:$0xff]
        %v5013 = vld [vmem:[#allocation13 + $0x350] sm:$0xff]
        %v5014 = vld [vmem:[#allocation13 + $0x358] sm:$0xff]
        %v5015 = vld [vmem:[#allocation13 + $0x360] sm:$0xff]
        %v5016 = vld [vmem:[#allocation13 + $0x368] sm:$0xff]
        %v5017 = vld [vmem:[#allocation13 + $0x370] sm:$0xff]
        %v5018 = vld [vmem:[#allocation13 + $0x378] sm:$0xff]
        %v5019 = vld [vmem:[#allocation13 + $0x380] sm:$0xff]
        %v5020 = vld [vmem:[#allocation13 + $0x388] sm:$0xff]
        %v5021 = vld [vmem:[#allocation13 + $0x390] sm:$0xff]
        %v5022 = vld [vmem:[#allocation13 + $0x398] sm:$0xff]
        %v5023 = vld [vmem:[#allocation13 + $0x3a0] sm:$0xff]
        %v5024 = vld [vmem:[#allocation13 + $0x3a8] sm:$0xff]
        %v5025 = vld [vmem:[#allocation13 + $0x3b0] sm:$0xff]
        %v5026 = vld [vmem:[#allocation13 + $0x3b8] sm:$0xff]
        %v5027 = vld [vmem:[#allocation13 + $0x3c0] sm:$0xff]
        %v5028 = vld [vmem:[#allocation13 + $0x3c8] sm:$0xff]
        %v5029 = vld [vmem:[#allocation13 + $0x3d0] sm:$0xff]
        %v5030 = vld [vmem:[#allocation13 + $0x3d8] sm:$0xff]
        %v5031 = vld [vmem:[#allocation13 + $0x3e0] sm:$0xff]
        %v5032 = vld [vmem:[#allocation13 + $0x3e8] sm:$0xff]
        %v5033 = vld [vmem:[#allocation13 + $0x3f0] sm:$0xff]
        %v5034 = vld [vmem:[#allocation13 + $0x3f8] sm:$0xff]
        %v5035 = vld [vmem:[#allocation15] sm:$0x3]
        %v5037 = vlaneseq
        %v5038 = vshrl.u32 %v5037, 7
        %v5039 = vsub.s32 0, %v5038
        %v5040 = vrot.slane %v5035, %v5039
        %v5041 = vlaneseq
        %v5042 = vshrl.u32 %v5041, 7
        %v5043 = vsub.s32 1, %v5042
        %v5044 = vrot.slane %v5035, %v5043
        %5047 = vmatprep.subr.mxu0 %v4908
        %5048 = vmatpush1.msra.mxu0 %v4907
        %5049 = vmatprep.subr.mxu0 %v4910
        %5050 = vmatpush1.msra.mxu0 %v4909
        %5051 = vmatprep.subr.mxu0 %v4912
        %5052 = vmatpush1.msra.mxu0 %v4911
        %5053 = vmatprep.subr.mxu0 %v4914
        %5054 = vmatpush1.msra.mxu0 %v4913
        %5055 = vmatprep.subr.mxu0 %v4916
        %5056 = vmatpush1.msra.mxu0 %v4915
        %5057 = vmatprep.subr.mxu0 %v4918
        %5058 = vmatpush1.msra.mxu0 %v4917
        %5059 = vmatprep.subr.mxu0 %v4920
        %5060 = vmatpush1.msra.mxu0 %v4919
        %5061 = vmatprep.subr.mxu0 %v4922
        %5062 = vmatpush1.msra.mxu0 %v4921
        %5063 = vmatprep.subr.mxu0 %v4924
        %5064 = vmatpush1.msra.mxu0 %v4923
        %5065 = vmatprep.subr.mxu0 %v4926
        %5066 = vmatpush1.msra.mxu0 %v4925
        %5067 = vmatprep.subr.mxu0 %v4928
        %5068 = vmatpush1.msra.mxu0 %v4927
        %5069 = vmatprep.subr.mxu0 %v4930
        %5070 = vmatpush1.msra.mxu0 %v4929
        %5071 = vmatprep.subr.mxu0 %v4932
        %5072 = vmatpush1.msra.mxu0 %v4931
        %5073 = vmatprep.subr.mxu0 %v4934
        %5074 = vmatpush1.msra.mxu0 %v4933
        %5075 = vmatprep.subr.mxu0 %v4936
        %5076 = vmatpush1.msra.mxu0 %v4935
        %5077 = vmatprep.subr.mxu0 %v4938
        %5078 = vmatpush1.msra.mxu0 %v4937
        %5079 = vmatprep.subr.mxu0 %v4940
        %5080 = vmatpush1.msra.mxu0 %v4939
        %5081 = vmatprep.subr.mxu0 %v4942
        %5082 = vmatpush1.msra.mxu0 %v4941
        %5083 = vmatprep.subr.mxu0 %v4944
        %5084 = vmatpush1.msra.mxu0 %v4943
        %5085 = vmatprep.subr.mxu0 %v4946
        %5086 = vmatpush1.msra.mxu0 %v4945
        %5087 = vmatprep.subr.mxu0 %v4948
        %5088 = vmatpush1.msra.mxu0 %v4947
        %5089 = vmatprep.subr.mxu0 %v4950
        %5090 = vmatpush1.msra.mxu0 %v4949
        %5091 = vmatprep.subr.mxu0 %v4952
        %5092 = vmatpush1.msra.mxu0 %v4951
        %5093 = vmatprep.subr.mxu0 %v4954
        %5094 = vmatpush1.msra.mxu0 %v4953
        %5095 = vmatprep.subr.mxu0 %v4956
        %5096 = vmatpush1.msra.mxu0 %v4955
        %5097 = vmatprep.subr.mxu0 %v4958
        %5098 = vmatpush1.msra.mxu0 %v4957
        %5099 = vmatprep.subr.mxu0 %v4960
        %5100 = vmatpush1.msra.mxu0 %v4959
        %5101 = vmatprep.subr.mxu0 %v4962
        %5102 = vmatpush1.msra.mxu0 %v4961
        %5103 = vmatprep.subr.mxu0 %v4964
        %5104 = vmatpush1.msra.mxu0 %v4963
        %5105 = vmatprep.subr.mxu0 %v4966
        %5106 = vmatpush1.msra.mxu0 %v4965
        %5107 = vmatprep.subr.mxu0 %v4968
        %5108 = vmatpush1.msra.mxu0 %v4967
        %5109 = vmatprep.subr.mxu0 %v4970
        %5110 = vmatpush1.msra.mxu0 %v4969
        %5111 = vmatprep.mubr.f32.mxu0 %v4844
        %5112 = vmatmul.mubr.f32.gmra.mrb[0].mxu0 %v4843
        %v5113 = vpop.f32.mrb[0].mxu0
        %v5114 = vadd.f32 %v5040, %v5113
        %v5115 = vpop.f32.mrb[0].mxu0
        %v5116 = vadd.f32 %v5044, %v5115
        %5117 = vmatprep.mubr.f32.mxu0 %v4848
        %5118 = vmatmul.mubr.f32.gmra.mrb[0].mxu0 %v4847
        %v5119 = vpop.f32.mrb[0].mxu0
        %v5120 = vadd.f32 %v5040, %v5119
        %v5121 = vpop.f32.mrb[0].mxu0
        %v5122 = vadd.f32 %v5044, %v5121
        %5123 = vmatprep.mubr.f32.mxu0 %v4852
        %5124 = vmatmul.mubr.f32.gmra.mrb[0].mxu0 %v4851
        %v5125 = vpop.f32.mrb[0].mxu0
        %v5126 = vadd.f32 %v5040, %v5125
        %v5127 = vpop.f32.mrb[0].mxu0
        %v5128 = vadd.f32 %v5044, %v5127
        %5129 = vmatprep.mubr.f32.mxu0 %v4856
        %5130 = vmatmul.mubr.f32.gmra.mrb[0].mxu0 %v4855
        %v5131 = vpop.f32.mrb[0].mxu0
        %v5132 = vadd.f32 %v5040, %v5131
        %v5133 = vpop.f32.mrb[0].mxu0
        %v5134 = vadd.f32 %v5044, %v5133
        %5135 = vmatprep.mubr.f32.mxu0 %v4860
        %5136 = vmatmul.mubr.f32.gmra.mrb[0].mxu0 %v4859
        %v5137 = vpop.f32.mrb[0].mxu0
        %v5138 = vadd.f32 %v5040, %v5137
        %v5139 = vpop.f32.mrb[0].mxu0
        %v5140 = vadd.f32 %v5044, %v5139
        %5141 = vmatprep.mubr.f32.mxu0 %v4864
        %5142 = vmatmul.mubr.f32.gmra.mrb[0].mxu0 %v4863
        %v5143 = vpop.f32.mrb[0].mxu0
        %v5144 = vadd.f32 %v5040, %v5143
        %v5145 = vpop.f32.mrb[0].mxu0
        %v5146 = vadd.f32 %v5044, %v5145
        %5147 = vmatprep.mubr.f32.mxu0 %v4868
        %5148 = vmatmul.mubr.f32.gmra.mrb[0].mxu0 %v4867
        %v5149 = vpop.f32.mrb[0].mxu0
        %v5150 = vadd.f32 %v5040, %v5149
        %v5151 = vpop.f32.mrb[0].mxu0
        %v5152 = vadd.f32 %v5044, %v5151
        %5153 = vmatprep.mubr.f32.mxu0 %v4872
        %5154 = vmatmul.mubr.f32.gmra.mrb[0].mxu0 %v4871
        %v5155 = vpop.f32.mrb[0].mxu0
        %v5156 = vadd.f32 %v5040, %v5155
        %v5157 = vpop.f32.mrb[0].mxu0
        %v5158 = vadd.f32 %v5044, %v5157
        %5159 = vmatprep.mubr.f32.mxu0 %v4876
        %5160 = vmatmul.mubr.f32.gmra.mrb[0].mxu0 %v4875
        %v5161 = vpop.f32.mrb[0].mxu0
        %v5162 = vadd.f32 %v5040, %v5161
        %v5163 = vpop.f32.mrb[0].mxu0
        %v5164 = vadd.f32 %v5044, %v5163
        %5165 = vmatprep.mubr.f32.mxu0 %v4880
        %5166 = vmatmul.mubr.f32.gmra.mrb[0].mxu0 %v4879
        %v5167 = vpop.f32.mrb[0].mxu0
        %v5168 = vadd.f32 %v5040, %v5167
        %v5169 = vpop.f32.mrb[0].mxu0
        %v5170 = vadd.f32 %v5044, %v5169
        %5171 = vmatprep.mubr.f32.mxu0 %v4884
        %5172 = vmatmul.mubr.f32.gmra.mrb[0].mxu0 %v4883
        %v5173 = vpop.f32.mrb[0].mxu0
        %v5174 = vadd.f32 %v5040, %v5173
        %v5175 = vpop.f32.mrb[0].mxu0
        %v5176 = vadd.f32 %v5044, %v5175
        %5177 = vmatprep.mubr.f32.mxu0 %v4888
        %5178 = vmatmul.mubr.f32.gmra.mrb[0].mxu0 %v4887
        %v5179 = vpop.f32.mrb[0].mxu0
        %v5180 = vadd.f32 %v5040, %v5179
        %v5181 = vpop.f32.mrb[0].mxu0
        %v5182 = vadd.f32 %v5044, %v5181
        %5183 = vmatprep.mubr.f32.mxu0 %v4892
        %5184 = vmatmul.mubr.f32.gmra.mrb[0].mxu0 %v4891
        %v5185 = vpop.f32.mrb[0].mxu0
        %v5186 = vadd.f32 %v5040, %v5185
        %v5187 = vpop.f32.mrb[0].mxu0
        %v5188 = vadd.f32 %v5044, %v5187
        %5189 = vmatprep.mubr.f32.mxu0 %v4896
        %5190 = vmatmul.mubr.f32.gmra.mrb[0].mxu0 %v4895
        %v5191 = vpop.f32.mrb[0].mxu0
        %v5192 = vadd.f32 %v5040, %v5191
        %v5193 = vpop.f32.mrb[0].mxu0
        %v5194 = vadd.f32 %v5044, %v5193
        %5195 = vmatprep.mubr.f32.mxu0 %v4900
        %5196 = vmatmul.mubr.f32.gmra.mrb[0].mxu0 %v4899
        %v5197 = vpop.f32.mrb[0].mxu0
        %v5198 = vadd.f32 %v5040, %v5197
        %v5199 = vpop.f32.mrb[0].mxu0
        %v5200 = vadd.f32 %v5044, %v5199
        %5201 = vmatprep.mubr.f32.mxu0 %v4904
        %5202 = vmatmul.mubr.f32.gmra.mrb[0].mxu0 %v4903
        %v5203 = vpop.f32.mrb[0].mxu0
        %v5204 = vadd.f32 %v5040, %v5203
        %v5205 = vpop.f32.mrb[0].mxu0
        %v5206 = vadd.f32 %v5044, %v5205
        %5207 = vdwg.mxu0
        %5208 = vmatprep.subr.mxu0 %v4972
        %5209 = vmatpush1.msra.mxu0 %v4971
        %5210 = vmatprep.subr.mxu0 %v4974
        %5211 = vmatpush1.msra.mxu0 %v4973
        %5212 = vmatprep.subr.mxu0 %v4976
        %5213 = vmatpush1.msra.mxu0 %v4975
        %5214 = vmatprep.subr.mxu0 %v4978
        %5215 = vmatpush1.msra.mxu0 %v4977
        %5216 = vmatprep.subr.mxu0 %v4980
        %5217 = vmatpush1.msra.mxu0 %v4979
        %5218 = vmatprep.subr.mxu0 %v4982
        %5219 = vmatpush1.msra.mxu0 %v4981
        %5220 = vmatprep.subr.mxu0 %v4984
        %5221 = vmatpush1.msra.mxu0 %v4983
        %5222 = vmatprep.subr.mxu0 %v4986
        %5223 = vmatpush1.msra.mxu0 %v4985
        %5224 = vmatprep.subr.mxu0 %v4988
        %5225 = vmatpush1.msra.mxu0 %v4987
        %5226 = vmatprep.subr.mxu0 %v4990
        %5227 = vmatpush1.msra.mxu0 %v4989
        %5228 = vmatprep.subr.mxu0 %v4992
        %5229 = vmatpush1.msra.mxu0 %v4991
        %5230 = vmatprep.subr.mxu0 %v4994
        %5231 = vmatpush1.msra.mxu0 %v4993
        %5232 = vmatprep.subr.mxu0 %v4996
        %5233 = vmatpush1.msra.mxu0 %v4995
        %5234 = vmatprep.subr.mxu0 %v4998
        %5235 = vmatpush1.msra.mxu0 %v4997
        %5236 = vmatprep.subr.mxu0 %v5000
        %5237 = vmatpush1.msra.mxu0 %v4999
        %5238 = vmatprep.subr.mxu0 %v5002
        %5239 = vmatpush1.msra.mxu0 %v5001
        %5240 = vmatprep.subr.mxu0 %v5004
        %5241 = vmatpush1.msra.mxu0 %v5003
        %5242 = vmatprep.subr.mxu0 %v5006
        %5243 = vmatpush1.msra.mxu0 %v5005
        %5244 = vmatprep.subr.mxu0 %v5008
        %5245 = vmatpush1.msra.mxu0 %v5007
        %5246 = vmatprep.subr.mxu0 %v5010
        %5247 = vmatpush1.msra.mxu0 %v5009
        %5248 = vmatprep.subr.mxu0 %v5012
        %5249 = vmatpush1.msra.mxu0 %v5011
        %5250 = vmatprep.subr.mxu0 %v5014
        %5251 = vmatpush1.msra.mxu0 %v5013
        %5252 = vmatprep.subr.mxu0 %v5016
        %5253 = vmatpush1.msra.mxu0 %v5015
        %5254 = vmatprep.subr.mxu0 %v5018
        %5255 = vmatpush1.msra.mxu0 %v5017
        %5256 = vmatprep.subr.mxu0 %v5020
        %5257 = vmatpush1.msra.mxu0 %v5019
        %5258 = vmatprep.subr.mxu0 %v5022
        %5259 = vmatpush1.msra.mxu0 %v5021
        %5260 = vmatprep.subr.mxu0 %v5024
        %5261 = vmatpush1.msra.mxu0 %v5023
        %5262 = vmatprep.subr.mxu0 %v5026
        %5263 = vmatpush1.msra.mxu0 %v5025
        %5264 = vmatprep.subr.mxu0 %v5028
        %5265 = vmatpush1.msra.mxu0 %v5027
        %5266 = vmatprep.subr.mxu0 %v5030
        %5267 = vmatpush1.msra.mxu0 %v5029
        %5268 = vmatprep.subr.mxu0 %v5032
        %5269 = vmatpush1.msra.mxu0 %v5031
        %5270 = vmatprep.subr.mxu0 %v5034
        %5271 = vmatpush1.msra.mxu0 %v5033
        %5272 = vmatprep.mubr.f32.mxu0 %v4846
        %5273 = vmatmul.mubr.f32.gmra.mrb[0].mxu0 %v4845
        %v5274 = vpop.f32.mrb[0].mxu0
        %v5275 = vadd.f32 %v5114, %v5274
        %v5276 = vpop.f32.mrb[0].mxu0
        %v5277 = vadd.f32 %v5116, %v5276
        %5278 = vmatprep.mubr.f32.mxu0 %v4850
        %5279 = vmatmul.mubr.f32.gmra.mrb[0].mxu0 %v4849
        %v5280 = vpop.f32.mrb[0].mxu0
        %v5281 = vadd.f32 %v5120, %v5280
        %v5282 = vpop.f32.mrb[0].mxu0
        %v5283 = vadd.f32 %v5122, %v5282
        %5284 = vmatprep.mubr.f32.mxu0 %v4854
        %5285 = vmatmul.mubr.f32.gmra.mrb[0].mxu0 %v4853
        %v5286 = vpop.f32.mrb[0].mxu0
        %v5287 = vadd.f32 %v5126, %v5286
        %v5288 = vpop.f32.mrb[0].mxu0
        %v5289 = vadd.f32 %v5128, %v5288
        %5290 = vmatprep.mubr.f32.mxu0 %v4858
        %5291 = vmatmul.mubr.f32.gmra.mrb[0].mxu0 %v4857
        %v5292 = vpop.f32.mrb[0].mxu0
        %v5293 = vadd.f32 %v5132, %v5292
        %v5294 = vpop.f32.mrb[0].mxu0
        %v5295 = vadd.f32 %v5134, %v5294
        %5296 = vmatprep.mubr.f32.mxu0 %v4862
        %5297 = vmatmul.mubr.f32.gmra.mrb[0].mxu0 %v4861
        %v5298 = vpop.f32.mrb[0].mxu0
        %v5299 = vadd.f32 %v5138, %v5298
        %v5300 = vpop.f32.mrb[0].mxu0
        %v5301 = vadd.f32 %v5140, %v5300
        %5302 = vmatprep.mubr.f32.mxu0 %v4866
        %5303 = vmatmul.mubr.f32.gmra.mrb[0].mxu0 %v4865
        %v5304 = vpop.f32.mrb[0].mxu0
        %v5305 = vadd.f32 %v5144, %v5304
        %v5306 = vpop.f32.mrb[0].mxu0
        %v5307 = vadd.f32 %v5146, %v5306
        %5308 = vmatprep.mubr.f32.mxu0 %v4870
        %5309 = vmatmul.mubr.f32.gmra.mrb[0].mxu0 %v4869
        %v5310 = vpop.f32.mrb[0].mxu0
        %v5311 = vadd.f32 %v5150, %v5310
        %v5312 = vpop.f32.mrb[0].mxu0
        %v5313 = vadd.f32 %v5152, %v5312
        %5314 = vmatprep.mubr.f32.mxu0 %v4874
        %5315 = vmatmul.mubr.f32.gmra.mrb[0].mxu0 %v4873
        %v5316 = vpop.f32.mrb[0].mxu0
        %v5317 = vadd.f32 %v5156, %v5316
        %v5318 = vpop.f32.mrb[0].mxu0
        %v5319 = vadd.f32 %v5158, %v5318
        %5320 = vmatprep.mubr.f32.mxu0 %v4878
        %5321 = vmatmul.mubr.f32.gmra.mrb[0].mxu0 %v4877
        %v5322 = vpop.f32.mrb[0].mxu0
        %v5323 = vadd.f32 %v5162, %v5322
        %v5324 = vpop.f32.mrb[0].mxu0
        %v5325 = vadd.f32 %v5164, %v5324
        %5326 = vmatprep.mubr.f32.mxu0 %v4882
        %5327 = vmatmul.mubr.f32.gmra.mrb[0].mxu0 %v4881
        %v5328 = vpop.f32.mrb[0].mxu0
        %v5329 = vadd.f32 %v5168, %v5328
        %v5330 = vpop.f32.mrb[0].mxu0
        %v5331 = vadd.f32 %v5170, %v5330
        %5332 = vmatprep.mubr.f32.mxu0 %v4886
        %5333 = vmatmul.mubr.f32.gmra.mrb[0].mxu0 %v4885
        %v5334 = vpop.f32.mrb[0].mxu0
        %v5335 = vadd.f32 %v5174, %v5334
        %v5336 = vpop.f32.mrb[0].mxu0
        %v5337 = vadd.f32 %v5176, %v5336
        %5338 = vmatprep.mubr.f32.mxu0 %v4890
        %5339 = vmatmul.mubr.f32.gmra.mrb[0].mxu0 %v4889
        %v5340 = vpop.f32.mrb[0].mxu0
        %v5341 = vadd.f32 %v5180, %v5340
        %v5342 = vpop.f32.mrb[0].mxu0
        %v5343 = vadd.f32 %v5182, %v5342
        %5344 = vmatprep.mubr.f32.mxu0 %v4894
        %5345 = vmatmul.mubr.f32.gmra.mrb[0].mxu0 %v4893
        %v5346 = vpop.f32.mrb[0].mxu0
        %v5347 = vadd.f32 %v5186, %v5346
        %v5348 = vpop.f32.mrb[0].mxu0
        %v5349 = vadd.f32 %v5188, %v5348
        %5350 = vmatprep.mubr.f32.mxu0 %v4898
        %5351 = vmatmul.mubr.f32.gmra.mrb[0].mxu0 %v4897
        %v5352 = vpop.f32.mrb[0].mxu0
        %v5353 = vadd.f32 %v5192, %v5352
        %v5354 = vpop.f32.mrb[0].mxu0
        %v5355 = vadd.f32 %v5194, %v5354
        %5356 = vmatprep.mubr.f32.mxu0 %v4902
        %5357 = vmatmul.mubr.f32.gmra.mrb[0].mxu0 %v4901
        %v5358 = vpop.f32.mrb[0].mxu0
        %v5359 = vadd.f32 %v5198, %v5358
        %v5360 = vpop.f32.mrb[0].mxu0
        %v5361 = vadd.f32 %v5200, %v5360
        %5362 = vmatprep.mubr.f32.mxu0 %v4906
        %5363 = vmatmul.mubr.f32.gmra.mrb[0].mxu0 %v4905
        %v5364 = vpop.f32.mrb[0].mxu0
        %v5365 = vadd.f32 %v5204, %v5364
        %v5366 = vpop.f32.mrb[0].mxu0
        %v5367 = vadd.f32 %v5206, %v5366
        %5368 = vdwg.mxu0
        %v5369 = vld [vmem:[#allocation16] sm:$0xff]
        %v5370 = vld [vmem:[#allocation16 + $0x8] sm:$0xff]
        %v5371 = vld [vmem:[#allocation16 + $0x10] sm:$0xff]
        %v5372 = vld [vmem:[#allocation16 + $0x18] sm:$0xff]
        %v5373 = vld [vmem:[#allocation18] sm:$0x3]
        %v5375 = vlaneseq
        %v5376 = vshrl.u32 %v5375, 7
        %v5377 = vsub.s32 0, %v5376
        %v5378 = vrot.slane %v5373, %v5377
        %v5379 = vlaneseq
        %v5380 = vshrl.u32 %v5379, 7
        %v5381 = vsub.s32 1, %v5380
        %v5382 = vrot.slane %v5373, %v5381
        %5385 = vmatprep.subr.mxu0 %v5370
        %5386 = vmatpush1.msra.mxu0 %v5369
        %5387 = vmatprep.subr.mxu0 %v5372
        %5388 = vmatpush1.msra.mxu0 %v5371
        %5389 = vmatprep.subr.mxu0 0.0
        %5390 = vmatpush1.msra.mxu0 0.0
        %5391 = vmatprep.subr.mxu0 0.0
        %5392 = vmatpush1.msra.mxu0 0.0
        %5393 = vmatprep.subr.mxu0 0.0
        %5394 = vmatpush1.msra.mxu0 0.0
        %5395 = vmatprep.subr.mxu0 0.0
        %5396 = vmatpush1.msra.mxu0 0.0
        %5397 = vmatprep.subr.mxu0 0.0
        %5398 = vmatpush1.msra.mxu0 0.0
        %5399 = vmatprep.subr.mxu0 0.0
        %5400 = vmatpush1.msra.mxu0 0.0
        %5401 = vmatprep.subr.mxu0 0.0
        %5402 = vmatpush1.msra.mxu0 0.0
        %5403 = vmatprep.subr.mxu0 0.0
        %5404 = vmatpush1.msra.mxu0 0.0
        %5405 = vmatprep.subr.mxu0 0.0
        %5406 = vmatpush1.msra.mxu0 0.0
        %5407 = vmatprep.subr.mxu0 0.0
        %5408 = vmatpush1.msra.mxu0 0.0
        %5409 = vmatprep.subr.mxu0 0.0
        %5410 = vmatpush1.msra.mxu0 0.0
        %5411 = vmatprep.subr.mxu0 0.0
        %5412 = vmatpush1.msra.mxu0 0.0
        %5413 = vmatprep.subr.mxu0 0.0
        %5414 = vmatpush1.msra.mxu0 0.0
        %5415 = vmatprep.subr.mxu0 0.0
        %5416 = vmatpush1.msra.mxu0 0.0
        %5417 = vmatprep.subr.mxu0 0.0
        %5418 = vmatpush1.msra.mxu0 0.0
        %5419 = vmatprep.subr.mxu0 0.0
        %5420 = vmatpush1.msra.mxu0 0.0
        %5421 = vmatprep.subr.mxu0 0.0
        %5422 = vmatpush1.msra.mxu0 0.0
        %5423 = vmatprep.subr.mxu0 0.0
        %5424 = vmatpush1.msra.mxu0 0.0
        %5425 = vmatprep.subr.mxu0 0.0
        %5426 = vmatpush1.msra.mxu0 0.0
        %5427 = vmatprep.subr.mxu0 0.0
        %5428 = vmatpush1.msra.mxu0 0.0
        %5429 = vmatprep.subr.mxu0 0.0
        %5430 = vmatpush1.msra.mxu0 0.0
        %5431 = vmatprep.subr.mxu0 0.0
        %5432 = vmatpush1.msra.mxu0 0.0
        %5433 = vmatprep.subr.mxu0 0.0
        %5434 = vmatpush1.msra.mxu0 0.0
        %5435 = vmatprep.subr.mxu0 0.0
        %5436 = vmatpush1.msra.mxu0 0.0
        %5437 = vmatprep.subr.mxu0 0.0
        %5438 = vmatpush1.msra.mxu0 0.0
        %5439 = vmatprep.subr.mxu0 0.0
        %5440 = vmatpush1.msra.mxu0 0.0
        %5441 = vmatprep.subr.mxu0 0.0
        %5442 = vmatpush1.msra.mxu0 0.0
        %5443 = vmatprep.subr.mxu0 0.0
        %5444 = vmatpush1.msra.mxu0 0.0
        %5445 = vmatprep.subr.mxu0 0.0
        %5446 = vmatpush1.msra.mxu0 0.0
        %5447 = vmatprep.subr.mxu0 0.0
        %5448 = vmatpush1.msra.mxu0 0.0
        %5449 = vmatprep.mubr.f32.mxu0 0.0
        %5450 = vmatmul.mubr.f32.gmra.mrb[0].mxu0 %v1818
        %v5451 = vpop.f32.mrb[0].mxu0
        %v5452 = vadd.f32 %v5378, %v5451
        %v5453 = vpop.f32.mrb[0].mxu0
        %v5454 = vadd.f32 %v5382, %v5453
        %5455 = vmatprep.mubr.f32.mxu0 0.0
        %5456 = vmatmul.mubr.f32.gmra.mrb[0].mxu0 %v1821
        %v5457 = vpop.f32.mrb[0].mxu0
        %v5458 = vadd.f32 %v5378, %v5457
        %v5459 = vpop.f32.mrb[0].mxu0
        %v5460 = vadd.f32 %v5382, %v5459
        %5461 = vmatprep.mubr.f32.mxu0 0.0
        %5462 = vmatmul.mubr.f32.gmra.mrb[0].mxu0 %v1824
        %v5463 = vpop.f32.mrb[0].mxu0
        %v5464 = vadd.f32 %v5378, %v5463
        %v5465 = vpop.f32.mrb[0].mxu0
        %v5466 = vadd.f32 %v5382, %v5465
        %5467 = vmatprep.mubr.f32.mxu0 0.0
        %5468 = vmatmul.mubr.f32.gmra.mrb[0].mxu0 %v1827
        %v5469 = vpop.f32.mrb[0].mxu0
        %v5470 = vadd.f32 %v5378, %v5469
        %v5471 = vpop.f32.mrb[0].mxu0
        %v5472 = vadd.f32 %v5382, %v5471
        %5473 = vmatprep.mubr.f32.mxu0 0.0
        %5474 = vmatmul.mubr.f32.gmra.mrb[0].mxu0 %v1830
        %v5475 = vpop.f32.mrb[0].mxu0
        %v5476 = vadd.f32 %v5378, %v5475
        %v5477 = vpop.f32.mrb[0].mxu0
        %v5478 = vadd.f32 %v5382, %v5477
        %5479 = vmatprep.mubr.f32.mxu0 0.0
        %5480 = vmatmul.mubr.f32.gmra.mrb[0].mxu0 %v1833
        %v5481 = vpop.f32.mrb[0].mxu0
        %v5482 = vadd.f32 %v5378, %v5481
        %v5483 = vpop.f32.mrb[0].mxu0
        %v5484 = vadd.f32 %v5382, %v5483
        %5485 = vmatprep.mubr.f32.mxu0 0.0
        %5486 = vmatmul.mubr.f32.gmra.mrb[0].mxu0 %v1836
        %v5487 = vpop.f32.mrb[0].mxu0
        %v5488 = vadd.f32 %v5378, %v5487
        %v5489 = vpop.f32.mrb[0].mxu0
        %v5490 = vadd.f32 %v5382, %v5489
        %5491 = vmatprep.mubr.f32.mxu0 0.0
        %5492 = vmatmul.mubr.f32.gmra.mrb[0].mxu0 %v1839
        %v5493 = vpop.f32.mrb[0].mxu0
        %v5494 = vadd.f32 %v5378, %v5493
        %v5495 = vpop.f32.mrb[0].mxu0
        %v5496 = vadd.f32 %v5382, %v5495
        %5497 = vmatprep.mubr.f32.mxu0 0.0
        %5498 = vmatmul.mubr.f32.gmra.mrb[0].mxu0 %v1842
        %v5499 = vpop.f32.mrb[0].mxu0
        %v5500 = vadd.f32 %v5378, %v5499
        %v5501 = vpop.f32.mrb[0].mxu0
        %v5502 = vadd.f32 %v5382, %v5501
        %5503 = vmatprep.mubr.f32.mxu0 0.0
        %5504 = vmatmul.mubr.f32.gmra.mrb[0].mxu0 %v1845
        %v5505 = vpop.f32.mrb[0].mxu0
        %v5506 = vadd.f32 %v5378, %v5505
        %v5507 = vpop.f32.mrb[0].mxu0
        %v5508 = vadd.f32 %v5382, %v5507
        %5509 = vmatprep.mubr.f32.mxu0 0.0
        %5510 = vmatmul.mubr.f32.gmra.mrb[0].mxu0 %v1848
        %v5511 = vpop.f32.mrb[0].mxu0
        %v5512 = vadd.f32 %v5378, %v5511
        %v5513 = vpop.f32.mrb[0].mxu0
        %v5514 = vadd.f32 %v5382, %v5513
        %5515 = vmatprep.mubr.f32.mxu0 0.0
        %5516 = vmatmul.mubr.f32.gmra.mrb[0].mxu0 %v1851
        %v5517 = vpop.f32.mrb[0].mxu0
        %v5518 = vadd.f32 %v5378, %v5517
        %v5519 = vpop.f32.mrb[0].mxu0
        %v5520 = vadd.f32 %v5382, %v5519
        %5521 = vmatprep.mubr.f32.mxu0 0.0
        %5522 = vmatmul.mubr.f32.gmra.mrb[0].mxu0 %v1854
        %v5523 = vpop.f32.mrb[0].mxu0
        %v5524 = vadd.f32 %v5378, %v5523
        %v5525 = vpop.f32.mrb[0].mxu0
        %v5526 = vadd.f32 %v5382, %v5525
        %5527 = vmatprep.mubr.f32.mxu0 0.0
        %5528 = vmatmul.mubr.f32.gmra.mrb[0].mxu0 %v1857
        %v5529 = vpop.f32.mrb[0].mxu0
        %v5530 = vadd.f32 %v5378, %v5529
        %v5531 = vpop.f32.mrb[0].mxu0
        %v5532 = vadd.f32 %v5382, %v5531
        %5533 = vmatprep.mubr.f32.mxu0 0.0
        %5534 = vmatmul.mubr.f32.gmra.mrb[0].mxu0 %v1860
        %v5535 = vpop.f32.mrb[0].mxu0
        %v5536 = vadd.f32 %v5378, %v5535
        %v5537 = vpop.f32.mrb[0].mxu0
        %v5538 = vadd.f32 %v5382, %v5537
        %5539 = vmatprep.mubr.f32.mxu0 0.0
        %5540 = vmatmul.mubr.f32.gmra.mrb[0].mxu0 %v1863
        %v5541 = vpop.f32.mrb[0].mxu0
        %v5542 = vadd.f32 %v5378, %v5541
        %v5543 = vpop.f32.mrb[0].mxu0
        %v5544 = vadd.f32 %v5382, %v5543
        %5545 = vdwg.mxu0
        %5562 = vrot.lane.b32.xlu0 %v5452, 96
        %v5563 = vpop.permute.xlu0 %5562
        %5564 = vrot.lane.b32.xlu0 %v5458, 96
        %v5565 = vpop.permute.xlu0 %5564
        %5566 = vrot.lane.b32.xlu0 %v5464, 96
        %v5567 = vpop.permute.xlu0 %5566
        %5568 = vrot.lane.b32.xlu0 %v5470, 96
        %v5569 = vpop.permute.xlu0 %5568
        %5570 = vrot.lane.b32.xlu0 %v5476, 96
        %v5571 = vpop.permute.xlu0 %5570
        %5572 = vrot.lane.b32.xlu0 %v5482, 96
        %v5573 = vpop.permute.xlu0 %5572
        %5574 = vrot.lane.b32.xlu0 %v5488, 96
        %v5575 = vpop.permute.xlu0 %5574
        %5576 = vrot.lane.b32.xlu0 %v5494, 96
        %v5577 = vpop.permute.xlu0 %5576
        %5578 = vrot.lane.b32.xlu0 %v5500, 96
        %v5579 = vpop.permute.xlu0 %5578
        %5580 = vrot.lane.b32.xlu0 %v5506, 96
        %v5581 = vpop.permute.xlu0 %5580
        %5582 = vrot.lane.b32.xlu0 %v5512, 96
        %v5583 = vpop.permute.xlu0 %5582
        %5584 = vrot.lane.b32.xlu0 %v5518, 96
        %v5585 = vpop.permute.xlu0 %5584
        %5586 = vrot.lane.b32.xlu0 %v5524, 96
        %v5587 = vpop.permute.xlu0 %5586
        %5588 = vrot.lane.b32.xlu0 %v5530, 96
        %v5589 = vpop.permute.xlu0 %5588
        %5590 = vrot.lane.b32.xlu0 %v5536, 96
        %v5591 = vpop.permute.xlu0 %5590
        %5592 = vrot.lane.b32.xlu0 %v5542, 96
        %v5593 = vpop.permute.xlu0 %5592
        %v5610 = vmax.f32 %v5452, %v5563
        %v5611 = vmax.f32 %v5458, %v5565
        %v5612 = vmax.f32 %v5464, %v5567
        %v5613 = vmax.f32 %v5470, %v5569
        %v5614 = vmax.f32 %v5476, %v5571
        %v5615 = vmax.f32 %v5482, %v5573
        %v5616 = vmax.f32 %v5488, %v5575
        %v5617 = vmax.f32 %v5494, %v5577
        %v5618 = vmax.f32 %v5500, %v5579
        %v5619 = vmax.f32 %v5506, %v5581
        %v5620 = vmax.f32 %v5512, %v5583
        %v5621 = vmax.f32 %v5518, %v5585
        %v5622 = vmax.f32 %v5524, %v5587
        %v5623 = vmax.f32 %v5530, %v5589
        %v5624 = vmax.f32 %v5536, %v5591
        %v5625 = vmax.f32 %v5542, %v5593
        %5626 = vrot.lane.b32.xlu0 %v5452, 64
        %v5627 = vpop.permute.xlu0 %5626
        %5628 = vrot.lane.b32.xlu0 %v5458, 64
        %v5629 = vpop.permute.xlu0 %5628
        %5630 = vrot.lane.b32.xlu0 %v5464, 64
        %v5631 = vpop.permute.xlu0 %5630
        %5632 = vrot.lane.b32.xlu0 %v5470, 64
        %v5633 = vpop.permute.xlu0 %5632
        %5634 = vrot.lane.b32.xlu0 %v5476, 64
        %v5635 = vpop.permute.xlu0 %5634
        %5636 = vrot.lane.b32.xlu0 %v5482, 64
        %v5637 = vpop.permute.xlu0 %5636
        %5638 = vrot.lane.b32.xlu0 %v5488, 64
        %v5639 = vpop.permute.xlu0 %5638
        %5640 = vrot.lane.b32.xlu0 %v5494, 64
        %v5641 = vpop.permute.xlu0 %5640
        %5642 = vrot.lane.b32.xlu0 %v5500, 64
        %v5643 = vpop.permute.xlu0 %5642
        %5644 = vrot.lane.b32.xlu0 %v5506, 64
        %v5645 = vpop.permute.xlu0 %5644
        %5646 = vrot.lane.b32.xlu0 %v5512, 64
        %v5647 = vpop.permute.xlu0 %5646
        %5648 = vrot.lane.b32.xlu0 %v5518, 64
        %v5649 = vpop.permute.xlu0 %5648
        %5650 = vrot.lane.b32.xlu0 %v5524, 64
        %v5651 = vpop.permute.xlu0 %5650
        %5652 = vrot.lane.b32.xlu0 %v5530, 64
        %v5653 = vpop.permute.xlu0 %5652
        %5654 = vrot.lane.b32.xlu0 %v5536, 64
        %v5655 = vpop.permute.xlu0 %5654
        %5656 = vrot.lane.b32.xlu0 %v5542, 64
        %v5657 = vpop.permute.xlu0 %5656
        %v5674 = vmax.f32 %v5610, %v5627
        %v5675 = vmax.f32 %v5611, %v5629
        %v5676 = vmax.f32 %v5612, %v5631
        %v5677 = vmax.f32 %v5613, %v5633
        %v5678 = vmax.f32 %v5614, %v5635
        %v5679 = vmax.f32 %v5615, %v5637
        %v5680 = vmax.f32 %v5616, %v5639
        %v5681 = vmax.f32 %v5617, %v5641
        %v5682 = vmax.f32 %v5618, %v5643
        %v5683 = vmax.f32 %v5619, %v5645
        %v5684 = vmax.f32 %v5620, %v5647
        %v5685 = vmax.f32 %v5621, %v5649
        %v5686 = vmax.f32 %v5622, %v5651
        %v5687 = vmax.f32 %v5623, %v5653
        %v5688 = vmax.f32 %v5624, %v5655
        %v5689 = vmax.f32 %v5625, %v5657
        %5690 = vrot.lane.b32.xlu0 %v5452, 32
        %v5691 = vpop.permute.xlu0 %5690
        %5692 = vrot.lane.b32.xlu0 %v5458, 32
        %v5693 = vpop.permute.xlu0 %5692
        %5694 = vrot.lane.b32.xlu0 %v5464, 32
        %v5695 = vpop.permute.xlu0 %5694
        %5696 = vrot.lane.b32.xlu0 %v5470, 32
        %v5697 = vpop.permute.xlu0 %5696
        %5698 = vrot.lane.b32.xlu0 %v5476, 32
        %v5699 = vpop.permute.xlu0 %5698
        %5700 = vrot.lane.b32.xlu0 %v5482, 32
        %v5701 = vpop.permute.xlu0 %5700
        %5702 = vrot.lane.b32.xlu0 %v5488, 32
        %v5703 = vpop.permute.xlu0 %5702
        %5704 = vrot.lane.b32.xlu0 %v5494, 32
        %v5705 = vpop.permute.xlu0 %5704
        %5706 = vrot.lane.b32.xlu0 %v5500, 32
        %v5707 = vpop.permute.xlu0 %5706
        %5708 = vrot.lane.b32.xlu0 %v5506, 32
        %v5709 = vpop.permute.xlu0 %5708
        %5710 = vrot.lane.b32.xlu0 %v5512, 32
        %v5711 = vpop.permute.xlu0 %5710
        %5712 = vrot.lane.b32.xlu0 %v5518, 32
        %v5713 = vpop.permute.xlu0 %5712
        %5714 = vrot.lane.b32.xlu0 %v5524, 32
        %v5715 = vpop.permute.xlu0 %5714
        %5716 = vrot.lane.b32.xlu0 %v5530, 32
        %v5717 = vpop.permute.xlu0 %5716
        %5718 = vrot.lane.b32.xlu0 %v5536, 32
        %v5719 = vpop.permute.xlu0 %5718
        %5720 = vrot.lane.b32.xlu0 %v5542, 32
        %v5721 = vpop.permute.xlu0 %5720
        %v5738 = vmax.f32 %v5674, %v5691
        %v5739 = vmax.f32 %v5675, %v5693
        %v5740 = vmax.f32 %v5676, %v5695
        %v5741 = vmax.f32 %v5677, %v5697
        %v5742 = vmax.f32 %v5678, %v5699
        %v5743 = vmax.f32 %v5679, %v5701
        %v5744 = vmax.f32 %v5680, %v5703
        %v5745 = vmax.f32 %v5681, %v5705
        %v5746 = vmax.f32 %v5682, %v5707
        %v5747 = vmax.f32 %v5683, %v5709
        %v5748 = vmax.f32 %v5684, %v5711
        %v5749 = vmax.f32 %v5685, %v5713
        %v5750 = vmax.f32 %v5686, %v5715
        %v5751 = vmax.f32 %v5687, %v5717
        %v5752 = vmax.f32 %v5688, %v5719
        %v5753 = vmax.f32 %v5689, %v5721
        %v5754 = vmax.f32 %v5738, %v5454
        %v5755 = vmax.f32 %v5739, %v5460
        %v5756 = vmax.f32 %v5740, %v5466
        %v5757 = vmax.f32 %v5741, %v5472
        %v5758 = vmax.f32 %v5742, %v5478
        %v5759 = vmax.f32 %v5743, %v5484
        %v5760 = vmax.f32 %v5744, %v5490
        %v5761 = vmax.f32 %v5745, %v5496
        %v5762 = vmax.f32 %v5746, %v5502
        %v5763 = vmax.f32 %v5747, %v5508
        %v5764 = vmax.f32 %v5748, %v5514
        %v5765 = vmax.f32 %v5749, %v5520
        %v5766 = vmax.f32 %v5750, %v5526
        %v5767 = vmax.f32 %v5751, %v5532
        %v5768 = vmax.f32 %v5752, %v5538
        %v5769 = vmax.f32 %v5753, %v5544
        %5786 = vrot.lane.b32.xlu0 %v5454, 96
        %v5787 = vpop.permute.xlu0 %5786
        %5788 = vrot.lane.b32.xlu0 %v5460, 96
        %v5789 = vpop.permute.xlu0 %5788
        %5790 = vrot.lane.b32.xlu0 %v5466, 96
        %v5791 = vpop.permute.xlu0 %5790
        %5792 = vrot.lane.b32.xlu0 %v5472, 96
        %v5793 = vpop.permute.xlu0 %5792
        %5794 = vrot.lane.b32.xlu0 %v5478, 96
        %v5795 = vpop.permute.xlu0 %5794
        %5796 = vrot.lane.b32.xlu0 %v5484, 96
        %v5797 = vpop.permute.xlu0 %5796
        %5798 = vrot.lane.b32.xlu0 %v5490, 96
        %v5799 = vpop.permute.xlu0 %5798
        %5800 = vrot.lane.b32.xlu0 %v5496, 96
        %v5801 = vpop.permute.xlu0 %5800
        %5802 = vrot.lane.b32.xlu0 %v5502, 96
        %v5803 = vpop.permute.xlu0 %5802
        %5804 = vrot.lane.b32.xlu0 %v5508, 96
        %v5805 = vpop.permute.xlu0 %5804
        %5806 = vrot.lane.b32.xlu0 %v5514, 96
        %v5807 = vpop.permute.xlu0 %5806
        %5808 = vrot.lane.b32.xlu0 %v5520, 96
        %v5809 = vpop.permute.xlu0 %5808
        %5810 = vrot.lane.b32.xlu0 %v5526, 96
        %v5811 = vpop.permute.xlu0 %5810
        %5812 = vrot.lane.b32.xlu0 %v5532, 96
        %v5813 = vpop.permute.xlu0 %5812
        %5814 = vrot.lane.b32.xlu0 %v5538, 96
        %v5815 = vpop.permute.xlu0 %5814
        %5816 = vrot.lane.b32.xlu0 %v5544, 96
        %v5817 = vpop.permute.xlu0 %5816
        %v5834 = vmax.f32 %v5754, %v5787
        %v5835 = vmax.f32 %v5755, %v5789
        %v5836 = vmax.f32 %v5756, %v5791
        %v5837 = vmax.f32 %v5757, %v5793
        %v5838 = vmax.f32 %v5758, %v5795
        %v5839 = vmax.f32 %v5759, %v5797
        %v5840 = vmax.f32 %v5760, %v5799
        %v5841 = vmax.f32 %v5761, %v5801
        %v5842 = vmax.f32 %v5762, %v5803
        %v5843 = vmax.f32 %v5763, %v5805
        %v5844 = vmax.f32 %v5764, %v5807
        %v5845 = vmax.f32 %v5765, %v5809
        %v5846 = vmax.f32 %v5766, %v5811
        %v5847 = vmax.f32 %v5767, %v5813
        %v5848 = vmax.f32 %v5768, %v5815
        %v5849 = vmax.f32 %v5769, %v5817
        %5850 = vrot.lane.b32.xlu0 %v5454, 64
        %v5851 = vpop.permute.xlu0 %5850
        %5852 = vrot.lane.b32.xlu0 %v5460, 64
        %v5853 = vpop.permute.xlu0 %5852
        %5854 = vrot.lane.b32.xlu0 %v5466, 64
        %v5855 = vpop.permute.xlu0 %5854
        %5856 = vrot.lane.b32.xlu0 %v5472, 64
        %v5857 = vpop.permute.xlu0 %5856
        %5858 = vrot.lane.b32.xlu0 %v5478, 64
        %v5859 = vpop.permute.xlu0 %5858
        %5860 = vrot.lane.b32.xlu0 %v5484, 64
        %v5861 = vpop.permute.xlu0 %5860
        %5862 = vrot.lane.b32.xlu0 %v5490, 64
        %v5863 = vpop.permute.xlu0 %5862
        %5864 = vrot.lane.b32.xlu0 %v5496, 64
        %v5865 = vpop.permute.xlu0 %5864
        %5866 = vrot.lane.b32.xlu0 %v5502, 64
        %v5867 = vpop.permute.xlu0 %5866
        %5868 = vrot.lane.b32.xlu0 %v5508, 64
        %v5869 = vpop.permute.xlu0 %5868
        %5870 = vrot.lane.b32.xlu0 %v5514, 64
        %v5871 = vpop.permute.xlu0 %5870
        %5872 = vrot.lane.b32.xlu0 %v5520, 64
        %v5873 = vpop.permute.xlu0 %5872
        %5874 = vrot.lane.b32.xlu0 %v5526, 64
        %v5875 = vpop.permute.xlu0 %5874
        %5876 = vrot.lane.b32.xlu0 %v5532, 64
        %v5877 = vpop.permute.xlu0 %5876
        %5878 = vrot.lane.b32.xlu0 %v5538, 64
        %v5879 = vpop.permute.xlu0 %5878
        %5880 = vrot.lane.b32.xlu0 %v5544, 64
        %v5881 = vpop.permute.xlu0 %5880
        %v5898 = vmax.f32 %v5834, %v5851
        %v5899 = vmax.f32 %v5835, %v5853
        %v5900 = vmax.f32 %v5836, %v5855
        %v5901 = vmax.f32 %v5837, %v5857
        %v5902 = vmax.f32 %v5838, %v5859
        %v5903 = vmax.f32 %v5839, %v5861
        %v5904 = vmax.f32 %v5840, %v5863
        %v5905 = vmax.f32 %v5841, %v5865
        %v5906 = vmax.f32 %v5842, %v5867
        %v5907 = vmax.f32 %v5843, %v5869
        %v5908 = vmax.f32 %v5844, %v5871
        %v5909 = vmax.f32 %v5845, %v5873
        %v5910 = vmax.f32 %v5846, %v5875
        %v5911 = vmax.f32 %v5847, %v5877
        %v5912 = vmax.f32 %v5848, %v5879
        %v5913 = vmax.f32 %v5849, %v5881
        %5914 = vrot.lane.b32.xlu0 %v5454, 32
        %v5915 = vpop.permute.xlu0 %5914
        %5916 = vrot.lane.b32.xlu0 %v5460, 32
        %v5917 = vpop.permute.xlu0 %5916
        %5918 = vrot.lane.b32.xlu0 %v5466, 32
        %v5919 = vpop.permute.xlu0 %5918
        %5920 = vrot.lane.b32.xlu0 %v5472, 32
        %v5921 = vpop.permute.xlu0 %5920
        %5922 = vrot.lane.b32.xlu0 %v5478, 32
        %v5923 = vpop.permute.xlu0 %5922
        %5924 = vrot.lane.b32.xlu0 %v5484, 32
        %v5925 = vpop.permute.xlu0 %5924
        %5926 = vrot.lane.b32.xlu0 %v5490, 32
        %v5927 = vpop.permute.xlu0 %5926
        %5928 = vrot.lane.b32.xlu0 %v5496, 32
        %v5929 = vpop.permute.xlu0 %5928
        %5930 = vrot.lane.b32.xlu0 %v5502, 32
        %v5931 = vpop.permute.xlu0 %5930
        %5932 = vrot.lane.b32.xlu0 %v5508, 32
        %v5933 = vpop.permute.xlu0 %5932
        %5934 = vrot.lane.b32.xlu0 %v5514, 32
        %v5935 = vpop.permute.xlu0 %5934
        %5936 = vrot.lane.b32.xlu0 %v5520, 32
        %v5937 = vpop.permute.xlu0 %5936
        %5938 = vrot.lane.b32.xlu0 %v5526, 32
        %v5939 = vpop.permute.xlu0 %5938
        %5940 = vrot.lane.b32.xlu0 %v5532, 32
        %v5941 = vpop.permute.xlu0 %5940
        %5942 = vrot.lane.b32.xlu0 %v5538, 32
        %v5943 = vpop.permute.xlu0 %5942
        %5944 = vrot.lane.b32.xlu0 %v5544, 32
        %v5945 = vpop.permute.xlu0 %5944
        %v5962 = vmax.f32 %v5898, %v5915
        %v5963 = vmax.f32 %v5899, %v5917
        %v5964 = vmax.f32 %v5900, %v5919
        %v5965 = vmax.f32 %v5901, %v5921
        %v5966 = vmax.f32 %v5902, %v5923
        %v5967 = vmax.f32 %v5903, %v5925
        %v5968 = vmax.f32 %v5904, %v5927
        %v5969 = vmax.f32 %v5905, %v5929
        %v5970 = vmax.f32 %v5906, %v5931
        %v5971 = vmax.f32 %v5907, %v5933
        %v5972 = vmax.f32 %v5908, %v5935
        %v5973 = vmax.f32 %v5909, %v5937
        %v5974 = vmax.f32 %v5910, %v5939
        %v5975 = vmax.f32 %v5911, %v5941
        %v5976 = vmax.f32 %v5912, %v5943
        %v5977 = vmax.f32 %v5913, %v5945
        %v5978 = vsub.f32 %v5452, %v5962
        %v5979 = vsub.f32 %v5458, %v5963
        %v5980 = vsub.f32 %v5464, %v5964
        %v5981 = vsub.f32 %v5470, %v5965
        %v5982 = vsub.f32 %v5476, %v5966
        %v5983 = vsub.f32 %v5482, %v5967
        %v5984 = vsub.f32 %v5488, %v5968
        %v5985 = vsub.f32 %v5494, %v5969
        %v5986 = vsub.f32 %v5500, %v5970
        %v5987 = vsub.f32 %v5506, %v5971
        %v5988 = vsub.f32 %v5512, %v5972
        %v5989 = vsub.f32 %v5518, %v5973
        %v5990 = vsub.f32 %v5524, %v5974
        %v5991 = vsub.f32 %v5530, %v5975
        %v5992 = vsub.f32 %v5536, %v5976
        %v5993 = vsub.f32 %v5542, %v5977
        %v5994 = vmul.f32 %v5978, 1.442695
        %v5995 = vpow.pop %v5994
        %v5996 = vmul.f32 %v5979, 1.442695
        %v5997 = vpow.pop %v5996
        %v5998 = vmul.f32 %v5980, 1.442695
        %v5999 = vpow.pop %v5998
        %v6000 = vmul.f32 %v5981, 1.442695
        %v6001 = vpow.pop %v6000
        %v6002 = vmul.f32 %v5982, 1.442695
        %v6003 = vpow.pop %v6002
        %v6004 = vmul.f32 %v5983, 1.442695
        %v6005 = vpow.pop %v6004
        %v6006 = vmul.f32 %v5984, 1.442695
        %v6007 = vpow.pop %v6006
        %v6008 = vmul.f32 %v5985, 1.442695
        %v6009 = vpow.pop %v6008
        %v6010 = vmul.f32 %v5986, 1.442695
        %v6011 = vpow.pop %v6010
        %v6012 = vmul.f32 %v5987, 1.442695
        %v6013 = vpow.pop %v6012
        %v6014 = vmul.f32 %v5988, 1.442695
        %v6015 = vpow.pop %v6014
        %v6016 = vmul.f32 %v5989, 1.442695
        %v6017 = vpow.pop %v6016
        %v6018 = vmul.f32 %v5990, 1.442695
        %v6019 = vpow.pop %v6018
        %v6020 = vmul.f32 %v5991, 1.442695
        %v6021 = vpow.pop %v6020
        %v6022 = vmul.f32 %v5992, 1.442695
        %v6023 = vpow.pop %v6022
        %v6024 = vmul.f32 %v5993, 1.442695
        %v6025 = vpow.pop %v6024
        %v6026 = vadd.f32 %v5995, 0.0
        %v6027 = vadd.f32 %v5997, 0.0
        %v6028 = vadd.f32 %v5999, 0.0
        %v6029 = vadd.f32 %v6001, 0.0
        %v6030 = vadd.f32 %v6003, 0.0
        %v6031 = vadd.f32 %v6005, 0.0
        %v6032 = vadd.f32 %v6007, 0.0
        %v6033 = vadd.f32 %v6009, 0.0
        %v6034 = vadd.f32 %v6011, 0.0
        %v6035 = vadd.f32 %v6013, 0.0
        %v6036 = vadd.f32 %v6015, 0.0
        %v6037 = vadd.f32 %v6017, 0.0
        %v6038 = vadd.f32 %v6019, 0.0
        %v6039 = vadd.f32 %v6021, 0.0
        %v6040 = vadd.f32 %v6023, 0.0
        %v6041 = vadd.f32 %v6025, 0.0
        %v6042 = vmul.f32 %v5995, %v5275
        %v6043 = vmul.f32 %v5997, %v5281
        %v6044 = vmul.f32 %v5999, %v5287
        %v6045 = vmul.f32 %v6001, %v5293
        %v6046 = vmul.f32 %v6003, %v5299
        %v6047 = vmul.f32 %v6005, %v5305
        %v6048 = vmul.f32 %v6007, %v5311
        %v6049 = vmul.f32 %v6009, %v5317
        %v6050 = vmul.f32 %v6011, %v5323
        %v6051 = vmul.f32 %v6013, %v5329
        %v6052 = vmul.f32 %v6015, %v5335
        %v6053 = vmul.f32 %v6017, %v5341
        %v6054 = vmul.f32 %v6019, %v5347
        %v6055 = vmul.f32 %v6021, %v5353
        %v6056 = vmul.f32 %v6023, %v5359
        %v6057 = vmul.f32 %v6025, %v5365
        %v6058 = vadd.f32 %v6042, 0.0
        %v6059 = vadd.f32 %v6043, 0.0
        %v6060 = vadd.f32 %v6044, 0.0
        %v6061 = vadd.f32 %v6045, 0.0
        %v6062 = vadd.f32 %v6046, 0.0
        %v6063 = vadd.f32 %v6047, 0.0
        %v6064 = vadd.f32 %v6048, 0.0
        %v6065 = vadd.f32 %v6049, 0.0
        %v6066 = vadd.f32 %v6050, 0.0
        %v6067 = vadd.f32 %v6051, 0.0
        %v6068 = vadd.f32 %v6052, 0.0
        %v6069 = vadd.f32 %v6053, 0.0
        %v6070 = vadd.f32 %v6054, 0.0
        %v6071 = vadd.f32 %v6055, 0.0
        %v6072 = vadd.f32 %v6056, 0.0
        %v6073 = vadd.f32 %v6057, 0.0
        %6090 = vrot.lane.b32.xlu0 %v5962, 32
        %v6091 = vpop.permute.xlu0 %6090
        %6092 = vrot.lane.b32.xlu0 %v5963, 32
        %v6093 = vpop.permute.xlu0 %6092
        %6094 = vrot.lane.b32.xlu0 %v5964, 32
        %v6095 = vpop.permute.xlu0 %6094
        %6096 = vrot.lane.b32.xlu0 %v5965, 32
        %v6097 = vpop.permute.xlu0 %6096
        %6098 = vrot.lane.b32.xlu0 %v5966, 32
        %v6099 = vpop.permute.xlu0 %6098
        %6100 = vrot.lane.b32.xlu0 %v5967, 32
        %v6101 = vpop.permute.xlu0 %6100
        %6102 = vrot.lane.b32.xlu0 %v5968, 32
        %v6103 = vpop.permute.xlu0 %6102
        %6104 = vrot.lane.b32.xlu0 %v5969, 32
        %v6105 = vpop.permute.xlu0 %6104
        %6106 = vrot.lane.b32.xlu0 %v5970, 32
        %v6107 = vpop.permute.xlu0 %6106
        %6108 = vrot.lane.b32.xlu0 %v5971, 32
        %v6109 = vpop.permute.xlu0 %6108
        %6110 = vrot.lane.b32.xlu0 %v5972, 32
        %v6111 = vpop.permute.xlu0 %6110
        %6112 = vrot.lane.b32.xlu0 %v5973, 32
        %v6113 = vpop.permute.xlu0 %6112
        %6114 = vrot.lane.b32.xlu0 %v5974, 32
        %v6115 = vpop.permute.xlu0 %6114
        %6116 = vrot.lane.b32.xlu0 %v5975, 32
        %v6117 = vpop.permute.xlu0 %6116
        %6118 = vrot.lane.b32.xlu0 %v5976, 32
        %v6119 = vpop.permute.xlu0 %6118
        %6120 = vrot.lane.b32.xlu0 %v5977, 32
        %v6121 = vpop.permute.xlu0 %6120
        %v6138 = vsub.f32 %v5452, %v6091
        %v6139 = vsub.f32 %v5458, %v6093
        %v6140 = vsub.f32 %v5464, %v6095
        %v6141 = vsub.f32 %v5470, %v6097
        %v6142 = vsub.f32 %v5476, %v6099
        %v6143 = vsub.f32 %v5482, %v6101
        %v6144 = vsub.f32 %v5488, %v6103
        %v6145 = vsub.f32 %v5494, %v6105
        %v6146 = vsub.f32 %v5500, %v6107
        %v6147 = vsub.f32 %v5506, %v6109
        %v6148 = vsub.f32 %v5512, %v6111
        %v6149 = vsub.f32 %v5518, %v6113
        %v6150 = vsub.f32 %v5524, %v6115
        %v6151 = vsub.f32 %v5530, %v6117
        %v6152 = vsub.f32 %v5536, %v6119
        %v6153 = vsub.f32 %v5542, %v6121
        %v6154 = vmul.f32 %v6138, 1.442695
        %v6155 = vpow.pop %v6154
        %v6156 = vmul.f32 %v6139, 1.442695
        %v6157 = vpow.pop %v6156
        %v6158 = vmul.f32 %v6140, 1.442695
        %v6159 = vpow.pop %v6158
        %v6160 = vmul.f32 %v6141, 1.442695
        %v6161 = vpow.pop %v6160
        %v6162 = vmul.f32 %v6142, 1.442695
        %v6163 = vpow.pop %v6162
        %v6164 = vmul.f32 %v6143, 1.442695
        %v6165 = vpow.pop %v6164
        %v6166 = vmul.f32 %v6144, 1.442695
        %v6167 = vpow.pop %v6166
        %v6168 = vmul.f32 %v6145, 1.442695
        %v6169 = vpow.pop %v6168
        %v6170 = vmul.f32 %v6146, 1.442695
        %v6171 = vpow.pop %v6170
        %v6172 = vmul.f32 %v6147, 1.442695
        %v6173 = vpow.pop %v6172
        %v6174 = vmul.f32 %v6148, 1.442695
        %v6175 = vpow.pop %v6174
        %v6176 = vmul.f32 %v6149, 1.442695
        %v6177 = vpow.pop %v6176
        %v6178 = vmul.f32 %v6150, 1.442695
        %v6179 = vpow.pop %v6178
        %v6180 = vmul.f32 %v6151, 1.442695
        %v6181 = vpow.pop %v6180
        %v6182 = vmul.f32 %v6152, 1.442695
        %v6183 = vpow.pop %v6182
        %v6184 = vmul.f32 %v6153, 1.442695
        %v6185 = vpow.pop %v6184
        %6202 = vrot.lane.b32.xlu0 %v6155, 96
        %v6203 = vpop.permute.xlu0 %6202
        %6204 = vrot.lane.b32.xlu0 %v6157, 96
        %v6205 = vpop.permute.xlu0 %6204
        %6206 = vrot.lane.b32.xlu0 %v6159, 96
        %v6207 = vpop.permute.xlu0 %6206
        %6208 = vrot.lane.b32.xlu0 %v6161, 96
        %v6209 = vpop.permute.xlu0 %6208
        %6210 = vrot.lane.b32.xlu0 %v6163, 96
        %v6211 = vpop.permute.xlu0 %6210
        %6212 = vrot.lane.b32.xlu0 %v6165, 96
        %v6213 = vpop.permute.xlu0 %6212
        %6214 = vrot.lane.b32.xlu0 %v6167, 96
        %v6215 = vpop.permute.xlu0 %6214
        %6216 = vrot.lane.b32.xlu0 %v6169, 96
        %v6217 = vpop.permute.xlu0 %6216
        %6218 = vrot.lane.b32.xlu0 %v6171, 96
        %v6219 = vpop.permute.xlu0 %6218
        %6220 = vrot.lane.b32.xlu0 %v6173, 96
        %v6221 = vpop.permute.xlu0 %6220
        %6222 = vrot.lane.b32.xlu0 %v6175, 96
        %v6223 = vpop.permute.xlu0 %6222
        %6224 = vrot.lane.b32.xlu0 %v6177, 96
        %v6225 = vpop.permute.xlu0 %6224
        %6226 = vrot.lane.b32.xlu0 %v6179, 96
        %v6227 = vpop.permute.xlu0 %6226
        %6228 = vrot.lane.b32.xlu0 %v6181, 96
        %v6229 = vpop.permute.xlu0 %6228
        %6230 = vrot.lane.b32.xlu0 %v6183, 96
        %v6231 = vpop.permute.xlu0 %6230
        %6232 = vrot.lane.b32.xlu0 %v6185, 96
        %v6233 = vpop.permute.xlu0 %6232
        %v6250 = vadd.f32 %v6026, %v6203
        %v6251 = vadd.f32 %v6027, %v6205
        %v6252 = vadd.f32 %v6028, %v6207
        %v6253 = vadd.f32 %v6029, %v6209
        %v6254 = vadd.f32 %v6030, %v6211
        %v6255 = vadd.f32 %v6031, %v6213
        %v6256 = vadd.f32 %v6032, %v6215
        %v6257 = vadd.f32 %v6033, %v6217
        %v6258 = vadd.f32 %v6034, %v6219
        %v6259 = vadd.f32 %v6035, %v6221
        %v6260 = vadd.f32 %v6036, %v6223
        %v6261 = vadd.f32 %v6037, %v6225
        %v6262 = vadd.f32 %v6038, %v6227
        %v6263 = vadd.f32 %v6039, %v6229
        %v6264 = vadd.f32 %v6040, %v6231
        %v6265 = vadd.f32 %v6041, %v6233
        %v6266 = vmul.f32 %v6155, %v5275
        %v6267 = vmul.f32 %v6157, %v5281
        %v6268 = vmul.f32 %v6159, %v5287
        %v6269 = vmul.f32 %v6161, %v5293
        %v6270 = vmul.f32 %v6163, %v5299
        %v6271 = vmul.f32 %v6165, %v5305
        %v6272 = vmul.f32 %v6167, %v5311
        %v6273 = vmul.f32 %v6169, %v5317
        %v6274 = vmul.f32 %v6171, %v5323
        %v6275 = vmul.f32 %v6173, %v5329
        %v6276 = vmul.f32 %v6175, %v5335
        %v6277 = vmul.f32 %v6177, %v5341
        %v6278 = vmul.f32 %v6179, %v5347
        %v6279 = vmul.f32 %v6181, %v5353
        %v6280 = vmul.f32 %v6183, %v5359
        %v6281 = vmul.f32 %v6185, %v5365
        %6298 = vrot.lane.b32.xlu0 %v6266, 96
        %v6299 = vpop.permute.xlu0 %6298
        %6300 = vrot.lane.b32.xlu0 %v6267, 96
        %v6301 = vpop.permute.xlu0 %6300
        %6302 = vrot.lane.b32.xlu0 %v6268, 96
        %v6303 = vpop.permute.xlu0 %6302
        %6304 = vrot.lane.b32.xlu0 %v6269, 96
        %v6305 = vpop.permute.xlu0 %6304
        %6306 = vrot.lane.b32.xlu0 %v6270, 96
        %v6307 = vpop.permute.xlu0 %6306
        %6308 = vrot.lane.b32.xlu0 %v6271, 96
        %v6309 = vpop.permute.xlu0 %6308
        %6310 = vrot.lane.b32.xlu0 %v6272, 96
        %v6311 = vpop.permute.xlu0 %6310
        %6312 = vrot.lane.b32.xlu0 %v6273, 96
        %v6313 = vpop.permute.xlu0 %6312
        %6314 = vrot.lane.b32.xlu0 %v6274, 96
        %v6315 = vpop.permute.xlu0 %6314
        %6316 = vrot.lane.b32.xlu0 %v6275, 96
        %v6317 = vpop.permute.xlu0 %6316
        %6318 = vrot.lane.b32.xlu0 %v6276, 96
        %v6319 = vpop.permute.xlu0 %6318
        %6320 = vrot.lane.b32.xlu0 %v6277, 96
        %v6321 = vpop.permute.xlu0 %6320
        %6322 = vrot.lane.b32.xlu0 %v6278, 96
        %v6323 = vpop.permute.xlu0 %6322
        %6324 = vrot.lane.b32.xlu0 %v6279, 96
        %v6325 = vpop.permute.xlu0 %6324
        %6326 = vrot.lane.b32.xlu0 %v6280, 96
        %v6327 = vpop.permute.xlu0 %6326
        %6328 = vrot.lane.b32.xlu0 %v6281, 96
        %v6329 = vpop.permute.xlu0 %6328
        %v6346 = vadd.f32 %v6058, %v6299
        %v6347 = vadd.f32 %v6059, %v6301
        %v6348 = vadd.f32 %v6060, %v6303
        %v6349 = vadd.f32 %v6061, %v6305
        %v6350 = vadd.f32 %v6062, %v6307
        %v6351 = vadd.f32 %v6063, %v6309
        %v6352 = vadd.f32 %v6064, %v6311
        %v6353 = vadd.f32 %v6065, %v6313
        %v6354 = vadd.f32 %v6066, %v6315
        %v6355 = vadd.f32 %v6067, %v6317
        %v6356 = vadd.f32 %v6068, %v6319
        %v6357 = vadd.f32 %v6069, %v6321
        %v6358 = vadd.f32 %v6070, %v6323
        %v6359 = vadd.f32 %v6071, %v6325
        %v6360 = vadd.f32 %v6072, %v6327
        %v6361 = vadd.f32 %v6073, %v6329
        %6362 = vrot.lane.b32.xlu0 %v5962, 64
        %v6363 = vpop.permute.xlu0 %6362
        %6364 = vrot.lane.b32.xlu0 %v5963, 64
        %v6365 = vpop.permute.xlu0 %6364
        %6366 = vrot.lane.b32.xlu0 %v5964, 64
        %v6367 = vpop.permute.xlu0 %6366
        %6368 = vrot.lane.b32.xlu0 %v5965, 64
        %v6369 = vpop.permute.xlu0 %6368
        %6370 = vrot.lane.b32.xlu0 %v5966, 64
        %v6371 = vpop.permute.xlu0 %6370
        %6372 = vrot.lane.b32.xlu0 %v5967, 64
        %v6373 = vpop.permute.xlu0 %6372
        %6374 = vrot.lane.b32.xlu0 %v5968, 64
        %v6375 = vpop.permute.xlu0 %6374
        %6376 = vrot.lane.b32.xlu0 %v5969, 64
        %v6377 = vpop.permute.xlu0 %6376
        %6378 = vrot.lane.b32.xlu0 %v5970, 64
        %v6379 = vpop.permute.xlu0 %6378
        %6380 = vrot.lane.b32.xlu0 %v5971, 64
        %v6381 = vpop.permute.xlu0 %6380
        %6382 = vrot.lane.b32.xlu0 %v5972, 64
        %v6383 = vpop.permute.xlu0 %6382
        %6384 = vrot.lane.b32.xlu0 %v5973, 64
        %v6385 = vpop.permute.xlu0 %6384
        %6386 = vrot.lane.b32.xlu0 %v5974, 64
        %v6387 = vpop.permute.xlu0 %6386
        %6388 = vrot.lane.b32.xlu0 %v5975, 64
        %v6389 = vpop.permute.xlu0 %6388
        %6390 = vrot.lane.b32.xlu0 %v5976, 64
        %v6391 = vpop.permute.xlu0 %6390
        %6392 = vrot.lane.b32.xlu0 %v5977, 64
        %v6393 = vpop.permute.xlu0 %6392
        %v6410 = vsub.f32 %v5452, %v6363
        %v6411 = vsub.f32 %v5458, %v6365
        %v6412 = vsub.f32 %v5464, %v6367
        %v6413 = vsub.f32 %v5470, %v6369
        %v6414 = vsub.f32 %v5476, %v6371
        %v6415 = vsub.f32 %v5482, %v6373
        %v6416 = vsub.f32 %v5488, %v6375
        %v6417 = vsub.f32 %v5494, %v6377
        %v6418 = vsub.f32 %v5500, %v6379
        %v6419 = vsub.f32 %v5506, %v6381
        %v6420 = vsub.f32 %v5512, %v6383
        %v6421 = vsub.f32 %v5518, %v6385
        %v6422 = vsub.f32 %v5524, %v6387
        %v6423 = vsub.f32 %v5530, %v6389
        %v6424 = vsub.f32 %v5536, %v6391
        %v6425 = vsub.f32 %v5542, %v6393
        %v6426 = vmul.f32 %v6410, 1.442695
        %v6427 = vpow.pop %v6426
        %v6428 = vmul.f32 %v6411, 1.442695
        %v6429 = vpow.pop %v6428
        %v6430 = vmul.f32 %v6412, 1.442695
        %v6431 = vpow.pop %v6430
        %v6432 = vmul.f32 %v6413, 1.442695
        %v6433 = vpow.pop %v6432
        %v6434 = vmul.f32 %v6414, 1.442695
        %v6435 = vpow.pop %v6434
        %v6436 = vmul.f32 %v6415, 1.442695
        %v6437 = vpow.pop %v6436
        %v6438 = vmul.f32 %v6416, 1.442695
        %v6439 = vpow.pop %v6438
        %v6440 = vmul.f32 %v6417, 1.442695
        %v6441 = vpow.pop %v6440
        %v6442 = vmul.f32 %v6418, 1.442695
        %v6443 = vpow.pop %v6442
        %v6444 = vmul.f32 %v6419, 1.442695
        %v6445 = vpow.pop %v6444
        %v6446 = vmul.f32 %v6420, 1.442695
        %v6447 = vpow.pop %v6446
        %v6448 = vmul.f32 %v6421, 1.442695
        %v6449 = vpow.pop %v6448
        %v6450 = vmul.f32 %v6422, 1.442695
        %v6451 = vpow.pop %v6450
        %v6452 = vmul.f32 %v6423, 1.442695
        %v6453 = vpow.pop %v6452
        %v6454 = vmul.f32 %v6424, 1.442695
        %v6455 = vpow.pop %v6454
        %v6456 = vmul.f32 %v6425, 1.442695
        %v6457 = vpow.pop %v6456
        %6474 = vrot.lane.b32.xlu0 %v6427, 64
        %v6475 = vpop.permute.xlu0 %6474
        %6476 = vrot.lane.b32.xlu0 %v6429, 64
        %v6477 = vpop.permute.xlu0 %6476
        %6478 = vrot.lane.b32.xlu0 %v6431, 64
        %v6479 = vpop.permute.xlu0 %6478
        %6480 = vrot.lane.b32.xlu0 %v6433, 64
        %v6481 = vpop.permute.xlu0 %6480
        %6482 = vrot.lane.b32.xlu0 %v6435, 64
        %v6483 = vpop.permute.xlu0 %6482
        %6484 = vrot.lane.b32.xlu0 %v6437, 64
        %v6485 = vpop.permute.xlu0 %6484
        %6486 = vrot.lane.b32.xlu0 %v6439, 64
        %v6487 = vpop.permute.xlu0 %6486
        %6488 = vrot.lane.b32.xlu0 %v6441, 64
        %v6489 = vpop.permute.xlu0 %6488
        %6490 = vrot.lane.b32.xlu0 %v6443, 64
        %v6491 = vpop.permute.xlu0 %6490
        %6492 = vrot.lane.b32.xlu0 %v6445, 64
        %v6493 = vpop.permute.xlu0 %6492
        %6494 = vrot.lane.b32.xlu0 %v6447, 64
        %v6495 = vpop.permute.xlu0 %6494
        %6496 = vrot.lane.b32.xlu0 %v6449, 64
        %v6497 = vpop.permute.xlu0 %6496
        %6498 = vrot.lane.b32.xlu0 %v6451, 64
        %v6499 = vpop.permute.xlu0 %6498
        %6500 = vrot.lane.b32.xlu0 %v6453, 64
        %v6501 = vpop.permute.xlu0 %6500
        %6502 = vrot.lane.b32.xlu0 %v6455, 64
        %v6503 = vpop.permute.xlu0 %6502
        %6504 = vrot.lane.b32.xlu0 %v6457, 64
        %v6505 = vpop.permute.xlu0 %6504
        %v6522 = vadd.f32 %v6250, %v6475
        %v6523 = vadd.f32 %v6251, %v6477
        %v6524 = vadd.f32 %v6252, %v6479
        %v6525 = vadd.f32 %v6253, %v6481
        %v6526 = vadd.f32 %v6254, %v6483
        %v6527 = vadd.f32 %v6255, %v6485
        %v6528 = vadd.f32 %v6256, %v6487
        %v6529 = vadd.f32 %v6257, %v6489
        %v6530 = vadd.f32 %v6258, %v6491
        %v6531 = vadd.f32 %v6259, %v6493
        %v6532 = vadd.f32 %v6260, %v6495
        %v6533 = vadd.f32 %v6261, %v6497
        %v6534 = vadd.f32 %v6262, %v6499
        %v6535 = vadd.f32 %v6263, %v6501
        %v6536 = vadd.f32 %v6264, %v6503
        %v6537 = vadd.f32 %v6265, %v6505
        %v6538 = vmul.f32 %v6427, %v5275
        %v6539 = vmul.f32 %v6429, %v5281
        %v6540 = vmul.f32 %v6431, %v5287
        %v6541 = vmul.f32 %v6433, %v5293
        %v6542 = vmul.f32 %v6435, %v5299
        %v6543 = vmul.f32 %v6437, %v5305
        %v6544 = vmul.f32 %v6439, %v5311
        %v6545 = vmul.f32 %v6441, %v5317
        %v6546 = vmul.f32 %v6443, %v5323
        %v6547 = vmul.f32 %v6445, %v5329
        %v6548 = vmul.f32 %v6447, %v5335
        %v6549 = vmul.f32 %v6449, %v5341
        %v6550 = vmul.f32 %v6451, %v5347
        %v6551 = vmul.f32 %v6453, %v5353
        %v6552 = vmul.f32 %v6455, %v5359
        %v6553 = vmul.f32 %v6457, %v5365
        %6570 = vrot.lane.b32.xlu0 %v6538, 64
        %v6571 = vpop.permute.xlu0 %6570
        %6572 = vrot.lane.b32.xlu0 %v6539, 64
        %v6573 = vpop.permute.xlu0 %6572
        %6574 = vrot.lane.b32.xlu0 %v6540, 64
        %v6575 = vpop.permute.xlu0 %6574
        %6576 = vrot.lane.b32.xlu0 %v6541, 64
        %v6577 = vpop.permute.xlu0 %6576
        %6578 = vrot.lane.b32.xlu0 %v6542, 64
        %v6579 = vpop.permute.xlu0 %6578
        %6580 = vrot.lane.b32.xlu0 %v6543, 64
        %v6581 = vpop.permute.xlu0 %6580
        %6582 = vrot.lane.b32.xlu0 %v6544, 64
        %v6583 = vpop.permute.xlu0 %6582
        %6584 = vrot.lane.b32.xlu0 %v6545, 64
        %v6585 = vpop.permute.xlu0 %6584
        %6586 = vrot.lane.b32.xlu0 %v6546, 64
        %v6587 = vpop.permute.xlu0 %6586
        %6588 = vrot.lane.b32.xlu0 %v6547, 64
        %v6589 = vpop.permute.xlu0 %6588
        %6590 = vrot.lane.b32.xlu0 %v6548, 64
        %v6591 = vpop.permute.xlu0 %6590
        %6592 = vrot.lane.b32.xlu0 %v6549, 64
        %v6593 = vpop.permute.xlu0 %6592
        %6594 = vrot.lane.b32.xlu0 %v6550, 64
        %v6595 = vpop.permute.xlu0 %6594
        %6596 = vrot.lane.b32.xlu0 %v6551, 64
        %v6597 = vpop.permute.xlu0 %6596
        %6598 = vrot.lane.b32.xlu0 %v6552, 64
        %v6599 = vpop.permute.xlu0 %6598
        %6600 = vrot.lane.b32.xlu0 %v6553, 64
        %v6601 = vpop.permute.xlu0 %6600
        %v6618 = vadd.f32 %v6346, %v6571
        %v6619 = vadd.f32 %v6347, %v6573
        %v6620 = vadd.f32 %v6348, %v6575
        %v6621 = vadd.f32 %v6349, %v6577
        %v6622 = vadd.f32 %v6350, %v6579
        %v6623 = vadd.f32 %v6351, %v6581
        %v6624 = vadd.f32 %v6352, %v6583
        %v6625 = vadd.f32 %v6353, %v6585
        %v6626 = vadd.f32 %v6354, %v6587
        %v6627 = vadd.f32 %v6355, %v6589
        %v6628 = vadd.f32 %v6356, %v6591
        %v6629 = vadd.f32 %v6357, %v6593
        %v6630 = vadd.f32 %v6358, %v6595
        %v6631 = vadd.f32 %v6359, %v6597
        %v6632 = vadd.f32 %v6360, %v6599
        %v6633 = vadd.f32 %v6361, %v6601
        %6634 = vrot.lane.b32.xlu0 %v5962, 96
        %v6635 = vpop.permute.xlu0 %6634
        %6636 = vrot.lane.b32.xlu0 %v5963, 96
        %v6637 = vpop.permute.xlu0 %6636
        %6638 = vrot.lane.b32.xlu0 %v5964, 96
        %v6639 = vpop.permute.xlu0 %6638
        %6640 = vrot.lane.b32.xlu0 %v5965, 96
        %v6641 = vpop.permute.xlu0 %6640
        %6642 = vrot.lane.b32.xlu0 %v5966, 96
        %v6643 = vpop.permute.xlu0 %6642
        %6644 = vrot.lane.b32.xlu0 %v5967, 96
        %v6645 = vpop.permute.xlu0 %6644
        %6646 = vrot.lane.b32.xlu0 %v5968, 96
        %v6647 = vpop.permute.xlu0 %6646
        %6648 = vrot.lane.b32.xlu0 %v5969, 96
        %v6649 = vpop.permute.xlu0 %6648
        %6650 = vrot.lane.b32.xlu0 %v5970, 96
        %v6651 = vpop.permute.xlu0 %6650
        %6652 = vrot.lane.b32.xlu0 %v5971, 96
        %v6653 = vpop.permute.xlu0 %6652
        %6654 = vrot.lane.b32.xlu0 %v5972, 96
        %v6655 = vpop.permute.xlu0 %6654
        %6656 = vrot.lane.b32.xlu0 %v5973, 96
        %v6657 = vpop.permute.xlu0 %6656
        %6658 = vrot.lane.b32.xlu0 %v5974, 96
        %v6659 = vpop.permute.xlu0 %6658
        %6660 = vrot.lane.b32.xlu0 %v5975, 96
        %v6661 = vpop.permute.xlu0 %6660
        %6662 = vrot.lane.b32.xlu0 %v5976, 96
        %v6663 = vpop.permute.xlu0 %6662
        %6664 = vrot.lane.b32.xlu0 %v5977, 96
        %v6665 = vpop.permute.xlu0 %6664
        %v6682 = vsub.f32 %v5452, %v6635
        %v6683 = vsub.f32 %v5458, %v6637
        %v6684 = vsub.f32 %v5464, %v6639
        %v6685 = vsub.f32 %v5470, %v6641
        %v6686 = vsub.f32 %v5476, %v6643
        %v6687 = vsub.f32 %v5482, %v6645
        %v6688 = vsub.f32 %v5488, %v6647
        %v6689 = vsub.f32 %v5494, %v6649
        %v6690 = vsub.f32 %v5500, %v6651
        %v6691 = vsub.f32 %v5506, %v6653
        %v6692 = vsub.f32 %v5512, %v6655
        %v6693 = vsub.f32 %v5518, %v6657
        %v6694 = vsub.f32 %v5524, %v6659
        %v6695 = vsub.f32 %v5530, %v6661
        %v6696 = vsub.f32 %v5536, %v6663
        %v6697 = vsub.f32 %v5542, %v6665
        %v6698 = vmul.f32 %v6682, 1.442695
        %v6699 = vpow.pop %v6698
        %v6700 = vmul.f32 %v6683, 1.442695
        %v6701 = vpow.pop %v6700
        %v6702 = vmul.f32 %v6684, 1.442695
        %v6703 = vpow.pop %v6702
        %v6704 = vmul.f32 %v6685, 1.442695
        %v6705 = vpow.pop %v6704
        %v6706 = vmul.f32 %v6686, 1.442695
        %v6707 = vpow.pop %v6706
        %v6708 = vmul.f32 %v6687, 1.442695
        %v6709 = vpow.pop %v6708
        %v6710 = vmul.f32 %v6688, 1.442695
        %v6711 = vpow.pop %v6710
        %v6712 = vmul.f32 %v6689, 1.442695
        %v6713 = vpow.pop %v6712
        %v6714 = vmul.f32 %v6690, 1.442695
        %v6715 = vpow.pop %v6714
        %v6716 = vmul.f32 %v6691, 1.442695
        %v6717 = vpow.pop %v6716
        %v6718 = vmul.f32 %v6692, 1.442695
        %v6719 = vpow.pop %v6718
        %v6720 = vmul.f32 %v6693, 1.442695
        %v6721 = vpow.pop %v6720
        %v6722 = vmul.f32 %v6694, 1.442695
        %v6723 = vpow.pop %v6722
        %v6724 = vmul.f32 %v6695, 1.442695
        %v6725 = vpow.pop %v6724
        %v6726 = vmul.f32 %v6696, 1.442695
        %v6727 = vpow.pop %v6726
        %v6728 = vmul.f32 %v6697, 1.442695
        %v6729 = vpow.pop %v6728
        %6746 = vrot.lane.b32.xlu0 %v6699, 32
        %v6747 = vpop.permute.xlu0 %6746
        %6748 = vrot.lane.b32.xlu0 %v6701, 32
        %v6749 = vpop.permute.xlu0 %6748
        %6750 = vrot.lane.b32.xlu0 %v6703, 32
        %v6751 = vpop.permute.xlu0 %6750
        %6752 = vrot.lane.b32.xlu0 %v6705, 32
        %v6753 = vpop.permute.xlu0 %6752
        %6754 = vrot.lane.b32.xlu0 %v6707, 32
        %v6755 = vpop.permute.xlu0 %6754
        %6756 = vrot.lane.b32.xlu0 %v6709, 32
        %v6757 = vpop.permute.xlu0 %6756
        %6758 = vrot.lane.b32.xlu0 %v6711, 32
        %v6759 = vpop.permute.xlu0 %6758
        %6760 = vrot.lane.b32.xlu0 %v6713, 32
        %v6761 = vpop.permute.xlu0 %6760
        %6762 = vrot.lane.b32.xlu0 %v6715, 32
        %v6763 = vpop.permute.xlu0 %6762
        %6764 = vrot.lane.b32.xlu0 %v6717, 32
        %v6765 = vpop.permute.xlu0 %6764
        %6766 = vrot.lane.b32.xlu0 %v6719, 32
        %v6767 = vpop.permute.xlu0 %6766
        %6768 = vrot.lane.b32.xlu0 %v6721, 32
        %v6769 = vpop.permute.xlu0 %6768
        %6770 = vrot.lane.b32.xlu0 %v6723, 32
        %v6771 = vpop.permute.xlu0 %6770
        %6772 = vrot.lane.b32.xlu0 %v6725, 32
        %v6773 = vpop.permute.xlu0 %6772
        %6774 = vrot.lane.b32.xlu0 %v6727, 32
        %v6775 = vpop.permute.xlu0 %6774
        %6776 = vrot.lane.b32.xlu0 %v6729, 32
        %v6777 = vpop.permute.xlu0 %6776
        %v6794 = vadd.f32 %v6522, %v6747
        %v6795 = vadd.f32 %v6523, %v6749
        %v6796 = vadd.f32 %v6524, %v6751
        %v6797 = vadd.f32 %v6525, %v6753
        %v6798 = vadd.f32 %v6526, %v6755
        %v6799 = vadd.f32 %v6527, %v6757
        %v6800 = vadd.f32 %v6528, %v6759
        %v6801 = vadd.f32 %v6529, %v6761
        %v6802 = vadd.f32 %v6530, %v6763
        %v6803 = vadd.f32 %v6531, %v6765
        %v6804 = vadd.f32 %v6532, %v6767
        %v6805 = vadd.f32 %v6533, %v6769
        %v6806 = vadd.f32 %v6534, %v6771
        %v6807 = vadd.f32 %v6535, %v6773
        %v6808 = vadd.f32 %v6536, %v6775
        %v6809 = vadd.f32 %v6537, %v6777
        %v6810 = vmul.f32 %v6699, %v5275
        %v6811 = vmul.f32 %v6701, %v5281
        %v6812 = vmul.f32 %v6703, %v5287
        %v6813 = vmul.f32 %v6705, %v5293
        %v6814 = vmul.f32 %v6707, %v5299
        %v6815 = vmul.f32 %v6709, %v5305
        %v6816 = vmul.f32 %v6711, %v5311
        %v6817 = vmul.f32 %v6713, %v5317
        %v6818 = vmul.f32 %v6715, %v5323
        %v6819 = vmul.f32 %v6717, %v5329
        %v6820 = vmul.f32 %v6719, %v5335
        %v6821 = vmul.f32 %v6721, %v5341
        %v6822 = vmul.f32 %v6723, %v5347
        %v6823 = vmul.f32 %v6725, %v5353
        %v6824 = vmul.f32 %v6727, %v5359
        %v6825 = vmul.f32 %v6729, %v5365
        %6842 = vrot.lane.b32.xlu0 %v6810, 32
        %v6843 = vpop.permute.xlu0 %6842
        %6844 = vrot.lane.b32.xlu0 %v6811, 32
        %v6845 = vpop.permute.xlu0 %6844
        %6846 = vrot.lane.b32.xlu0 %v6812, 32
        %v6847 = vpop.permute.xlu0 %6846
        %6848 = vrot.lane.b32.xlu0 %v6813, 32
        %v6849 = vpop.permute.xlu0 %6848
        %6850 = vrot.lane.b32.xlu0 %v6814, 32
        %v6851 = vpop.permute.xlu0 %6850
        %6852 = vrot.lane.b32.xlu0 %v6815, 32
        %v6853 = vpop.permute.xlu0 %6852
        %6854 = vrot.lane.b32.xlu0 %v6816, 32
        %v6855 = vpop.permute.xlu0 %6854
        %6856 = vrot.lane.b32.xlu0 %v6817, 32
        %v6857 = vpop.permute.xlu0 %6856
        %6858 = vrot.lane.b32.xlu0 %v6818, 32
        %v6859 = vpop.permute.xlu0 %6858
        %6860 = vrot.lane.b32.xlu0 %v6819, 32
        %v6861 = vpop.permute.xlu0 %6860
        %6862 = vrot.lane.b32.xlu0 %v6820, 32
        %v6863 = vpop.permute.xlu0 %6862
        %6864 = vrot.lane.b32.xlu0 %v6821, 32
        %v6865 = vpop.permute.xlu0 %6864
        %6866 = vrot.lane.b32.xlu0 %v6822, 32
        %v6867 = vpop.permute.xlu0 %6866
        %6868 = vrot.lane.b32.xlu0 %v6823, 32
        %v6869 = vpop.permute.xlu0 %6868
        %6870 = vrot.lane.b32.xlu0 %v6824, 32
        %v6871 = vpop.permute.xlu0 %6870
        %6872 = vrot.lane.b32.xlu0 %v6825, 32
        %v6873 = vpop.permute.xlu0 %6872
        %v6890 = vadd.f32 %v6618, %v6843
        %v6891 = vadd.f32 %v6619, %v6845
        %v6892 = vadd.f32 %v6620, %v6847
        %v6893 = vadd.f32 %v6621, %v6849
        %v6894 = vadd.f32 %v6622, %v6851
        %v6895 = vadd.f32 %v6623, %v6853
        %v6896 = vadd.f32 %v6624, %v6855
        %v6897 = vadd.f32 %v6625, %v6857
        %v6898 = vadd.f32 %v6626, %v6859
        %v6899 = vadd.f32 %v6627, %v6861
        %v6900 = vadd.f32 %v6628, %v6863
        %v6901 = vadd.f32 %v6629, %v6865
        %v6902 = vadd.f32 %v6630, %v6867
        %v6903 = vadd.f32 %v6631, %v6869
        %v6904 = vadd.f32 %v6632, %v6871
        %v6905 = vadd.f32 %v6633, %v6873
        %v6906 = vsub.f32 %v5454, %v5962
        %v6907 = vsub.f32 %v5460, %v5963
        %v6908 = vsub.f32 %v5466, %v5964
        %v6909 = vsub.f32 %v5472, %v5965
        %v6910 = vsub.f32 %v5478, %v5966
        %v6911 = vsub.f32 %v5484, %v5967
        %v6912 = vsub.f32 %v5490, %v5968
        %v6913 = vsub.f32 %v5496, %v5969
        %v6914 = vsub.f32 %v5502, %v5970
        %v6915 = vsub.f32 %v5508, %v5971
        %v6916 = vsub.f32 %v5514, %v5972
        %v6917 = vsub.f32 %v5520, %v5973
        %v6918 = vsub.f32 %v5526, %v5974
        %v6919 = vsub.f32 %v5532, %v5975
        %v6920 = vsub.f32 %v5538, %v5976
        %v6921 = vsub.f32 %v5544, %v5977
        %v6922 = vmul.f32 %v6906, 1.442695
        %v6923 = vpow.pop %v6922
        %v6924 = vmul.f32 %v6907, 1.442695
        %v6925 = vpow.pop %v6924
        %v6926 = vmul.f32 %v6908, 1.442695
        %v6927 = vpow.pop %v6926
        %v6928 = vmul.f32 %v6909, 1.442695
        %v6929 = vpow.pop %v6928
        %v6930 = vmul.f32 %v6910, 1.442695
        %v6931 = vpow.pop %v6930
        %v6932 = vmul.f32 %v6911, 1.442695
        %v6933 = vpow.pop %v6932
        %v6934 = vmul.f32 %v6912, 1.442695
        %v6935 = vpow.pop %v6934
        %v6936 = vmul.f32 %v6913, 1.442695
        %v6937 = vpow.pop %v6936
        %v6938 = vmul.f32 %v6914, 1.442695
        %v6939 = vpow.pop %v6938
        %v6940 = vmul.f32 %v6915, 1.442695
        %v6941 = vpow.pop %v6940
        %v6942 = vmul.f32 %v6916, 1.442695
        %v6943 = vpow.pop %v6942
        %v6944 = vmul.f32 %v6917, 1.442695
        %v6945 = vpow.pop %v6944
        %v6946 = vmul.f32 %v6918, 1.442695
        %v6947 = vpow.pop %v6946
        %v6948 = vmul.f32 %v6919, 1.442695
        %v6949 = vpow.pop %v6948
        %v6950 = vmul.f32 %v6920, 1.442695
        %v6951 = vpow.pop %v6950
        %v6952 = vmul.f32 %v6921, 1.442695
        %v6953 = vpow.pop %v6952
        %v6954 = vadd.f32 %v6794, %v6923
        %v6955 = vadd.f32 %v6795, %v6925
        %v6956 = vadd.f32 %v6796, %v6927
        %v6957 = vadd.f32 %v6797, %v6929
        %v6958 = vadd.f32 %v6798, %v6931
        %v6959 = vadd.f32 %v6799, %v6933
        %v6960 = vadd.f32 %v6800, %v6935
        %v6961 = vadd.f32 %v6801, %v6937
        %v6962 = vadd.f32 %v6802, %v6939
        %v6963 = vadd.f32 %v6803, %v6941
        %v6964 = vadd.f32 %v6804, %v6943
        %v6965 = vadd.f32 %v6805, %v6945
        %v6966 = vadd.f32 %v6806, %v6947
        %v6967 = vadd.f32 %v6807, %v6949
        %v6968 = vadd.f32 %v6808, %v6951
        %v6969 = vadd.f32 %v6809, %v6953
        %v6970 = vmul.f32 %v6923, %v5277
        %v6971 = vmul.f32 %v6925, %v5283
        %v6972 = vmul.f32 %v6927, %v5289
        %v6973 = vmul.f32 %v6929, %v5295
        %v6974 = vmul.f32 %v6931, %v5301
        %v6975 = vmul.f32 %v6933, %v5307
        %v6976 = vmul.f32 %v6935, %v5313
        %v6977 = vmul.f32 %v6937, %v5319
        %v6978 = vmul.f32 %v6939, %v5325
        %v6979 = vmul.f32 %v6941, %v5331
        %v6980 = vmul.f32 %v6943, %v5337
        %v6981 = vmul.f32 %v6945, %v5343
        %v6982 = vmul.f32 %v6947, %v5349
        %v6983 = vmul.f32 %v6949, %v5355
        %v6984 = vmul.f32 %v6951, %v5361
        %v6985 = vmul.f32 %v6953, %v5367
        %v6986 = vadd.f32 %v6890, %v6970
        %v6987 = vadd.f32 %v6891, %v6971
        %v6988 = vadd.f32 %v6892, %v6972
        %v6989 = vadd.f32 %v6893, %v6973
        %v6990 = vadd.f32 %v6894, %v6974
        %v6991 = vadd.f32 %v6895, %v6975
        %v6992 = vadd.f32 %v6896, %v6976
        %v6993 = vadd.f32 %v6897, %v6977
        %v6994 = vadd.f32 %v6898, %v6978
        %v6995 = vadd.f32 %v6899, %v6979
        %v6996 = vadd.f32 %v6900, %v6980
        %v6997 = vadd.f32 %v6901, %v6981
        %v6998 = vadd.f32 %v6902, %v6982
        %v6999 = vadd.f32 %v6903, %v6983
        %v7000 = vadd.f32 %v6904, %v6984
        %v7001 = vadd.f32 %v6905, %v6985
        %v7002 = vsub.f32 %v5454, %v6091
        %v7003 = vsub.f32 %v5460, %v6093
        %v7004 = vsub.f32 %v5466, %v6095
        %v7005 = vsub.f32 %v5472, %v6097
        %v7006 = vsub.f32 %v5478, %v6099
        %v7007 = vsub.f32 %v5484, %v6101
        %v7008 = vsub.f32 %v5490, %v6103
        %v7009 = vsub.f32 %v5496, %v6105
        %v7010 = vsub.f32 %v5502, %v6107
        %v7011 = vsub.f32 %v5508, %v6109
        %v7012 = vsub.f32 %v5514, %v6111
        %v7013 = vsub.f32 %v5520, %v6113
        %v7014 = vsub.f32 %v5526, %v6115
        %v7015 = vsub.f32 %v5532, %v6117
        %v7016 = vsub.f32 %v5538, %v6119
        %v7017 = vsub.f32 %v5544, %v6121
        %v7018 = vmul.f32 %v7002, 1.442695
        %v7019 = vpow.pop %v7018
        %v7020 = vmul.f32 %v7003, 1.442695
        %v7021 = vpow.pop %v7020
        %v7022 = vmul.f32 %v7004, 1.442695
        %v7023 = vpow.pop %v7022
        %v7024 = vmul.f32 %v7005, 1.442695
        %v7025 = vpow.pop %v7024
        %v7026 = vmul.f32 %v7006, 1.442695
        %v7027 = vpow.pop %v7026
        %v7028 = vmul.f32 %v7007, 1.442695
        %v7029 = vpow.pop %v7028
        %v7030 = vmul.f32 %v7008, 1.442695
        %v7031 = vpow.pop %v7030
        %v7032 = vmul.f32 %v7009, 1.442695
        %v7033 = vpow.pop %v7032
        %v7034 = vmul.f32 %v7010, 1.442695
        %v7035 = vpow.pop %v7034
        %v7036 = vmul.f32 %v7011, 1.442695
        %v7037 = vpow.pop %v7036
        %v7038 = vmul.f32 %v7012, 1.442695
        %v7039 = vpow.pop %v7038
        %v7040 = vmul.f32 %v7013, 1.442695
        %v7041 = vpow.pop %v7040
        %v7042 = vmul.f32 %v7014, 1.442695
        %v7043 = vpow.pop %v7042
        %v7044 = vmul.f32 %v7015, 1.442695
        %v7045 = vpow.pop %v7044
        %v7046 = vmul.f32 %v7016, 1.442695
        %v7047 = vpow.pop %v7046
        %v7048 = vmul.f32 %v7017, 1.442695
        %v7049 = vpow.pop %v7048
        %7066 = vrot.lane.b32.xlu0 %v7019, 96
        %v7067 = vpop.permute.xlu0 %7066
        %7068 = vrot.lane.b32.xlu0 %v7021, 96
        %v7069 = vpop.permute.xlu0 %7068
        %7070 = vrot.lane.b32.xlu0 %v7023, 96
        %v7071 = vpop.permute.xlu0 %7070
        %7072 = vrot.lane.b32.xlu0 %v7025, 96
        %v7073 = vpop.permute.xlu0 %7072
        %7074 = vrot.lane.b32.xlu0 %v7027, 96
        %v7075 = vpop.permute.xlu0 %7074
        %7076 = vrot.lane.b32.xlu0 %v7029, 96
        %v7077 = vpop.permute.xlu0 %7076
        %7078 = vrot.lane.b32.xlu0 %v7031, 96
        %v7079 = vpop.permute.xlu0 %7078
        %7080 = vrot.lane.b32.xlu0 %v7033, 96
        %v7081 = vpop.permute.xlu0 %7080
        %7082 = vrot.lane.b32.xlu0 %v7035, 96
        %v7083 = vpop.permute.xlu0 %7082
        %7084 = vrot.lane.b32.xlu0 %v7037, 96
        %v7085 = vpop.permute.xlu0 %7084
        %7086 = vrot.lane.b32.xlu0 %v7039, 96
        %v7087 = vpop.permute.xlu0 %7086
        %7088 = vrot.lane.b32.xlu0 %v7041, 96
        %v7089 = vpop.permute.xlu0 %7088
        %7090 = vrot.lane.b32.xlu0 %v7043, 96
        %v7091 = vpop.permute.xlu0 %7090
        %7092 = vrot.lane.b32.xlu0 %v7045, 96
        %v7093 = vpop.permute.xlu0 %7092
        %7094 = vrot.lane.b32.xlu0 %v7047, 96
        %v7095 = vpop.permute.xlu0 %7094
        %7096 = vrot.lane.b32.xlu0 %v7049, 96
        %v7097 = vpop.permute.xlu0 %7096
        %v7114 = vadd.f32 %v6954, %v7067
        %v7115 = vadd.f32 %v6955, %v7069
        %v7116 = vadd.f32 %v6956, %v7071
        %v7117 = vadd.f32 %v6957, %v7073
        %v7118 = vadd.f32 %v6958, %v7075
        %v7119 = vadd.f32 %v6959, %v7077
        %v7120 = vadd.f32 %v6960, %v7079
        %v7121 = vadd.f32 %v6961, %v7081
        %v7122 = vadd.f32 %v6962, %v7083
        %v7123 = vadd.f32 %v6963, %v7085
        %v7124 = vadd.f32 %v6964, %v7087
        %v7125 = vadd.f32 %v6965, %v7089
        %v7126 = vadd.f32 %v6966, %v7091
        %v7127 = vadd.f32 %v6967, %v7093
        %v7128 = vadd.f32 %v6968, %v7095
        %v7129 = vadd.f32 %v6969, %v7097
        %v7130 = vmul.f32 %v7019, %v5277
        %v7131 = vmul.f32 %v7021, %v5283
        %v7132 = vmul.f32 %v7023, %v5289
        %v7133 = vmul.f32 %v7025, %v5295
        %v7134 = vmul.f32 %v7027, %v5301
        %v7135 = vmul.f32 %v7029, %v5307
        %v7136 = vmul.f32 %v7031, %v5313
        %v7137 = vmul.f32 %v7033, %v5319
        %v7138 = vmul.f32 %v7035, %v5325
        %v7139 = vmul.f32 %v7037, %v5331
        %v7140 = vmul.f32 %v7039, %v5337
        %v7141 = vmul.f32 %v7041, %v5343
        %v7142 = vmul.f32 %v7043, %v5349
        %v7143 = vmul.f32 %v7045, %v5355
        %v7144 = vmul.f32 %v7047, %v5361
        %v7145 = vmul.f32 %v7049, %v5367
        %7162 = vrot.lane.b32.xlu0 %v7130, 96
        %v7163 = vpop.permute.xlu0 %7162
        %7164 = vrot.lane.b32.xlu0 %v7131, 96
        %v7165 = vpop.permute.xlu0 %7164
        %7166 = vrot.lane.b32.xlu0 %v7132, 96
        %v7167 = vpop.permute.xlu0 %7166
        %7168 = vrot.lane.b32.xlu0 %v7133, 96
        %v7169 = vpop.permute.xlu0 %7168
        %7170 = vrot.lane.b32.xlu0 %v7134, 96
        %v7171 = vpop.permute.xlu0 %7170
        %7172 = vrot.lane.b32.xlu0 %v7135, 96
        %v7173 = vpop.permute.xlu0 %7172
        %7174 = vrot.lane.b32.xlu0 %v7136, 96
        %v7175 = vpop.permute.xlu0 %7174
        %7176 = vrot.lane.b32.xlu0 %v7137, 96
        %v7177 = vpop.permute.xlu0 %7176
        %7178 = vrot.lane.b32.xlu0 %v7138, 96
        %v7179 = vpop.permute.xlu0 %7178
        %7180 = vrot.lane.b32.xlu0 %v7139, 96
        %v7181 = vpop.permute.xlu0 %7180
        %7182 = vrot.lane.b32.xlu0 %v7140, 96
        %v7183 = vpop.permute.xlu0 %7182
        %7184 = vrot.lane.b32.xlu0 %v7141, 96
        %v7185 = vpop.permute.xlu0 %7184
        %7186 = vrot.lane.b32.xlu0 %v7142, 96
        %v7187 = vpop.permute.xlu0 %7186
        %7188 = vrot.lane.b32.xlu0 %v7143, 96
        %v7189 = vpop.permute.xlu0 %7188
        %7190 = vrot.lane.b32.xlu0 %v7144, 96
        %v7191 = vpop.permute.xlu0 %7190
        %7192 = vrot.lane.b32.xlu0 %v7145, 96
        %v7193 = vpop.permute.xlu0 %7192
        %v7210 = vadd.f32 %v6986, %v7163
        %v7211 = vadd.f32 %v6987, %v7165
        %v7212 = vadd.f32 %v6988, %v7167
        %v7213 = vadd.f32 %v6989, %v7169
        %v7214 = vadd.f32 %v6990, %v7171
        %v7215 = vadd.f32 %v6991, %v7173
        %v7216 = vadd.f32 %v6992, %v7175
        %v7217 = vadd.f32 %v6993, %v7177
        %v7218 = vadd.f32 %v6994, %v7179
        %v7219 = vadd.f32 %v6995, %v7181
        %v7220 = vadd.f32 %v6996, %v7183
        %v7221 = vadd.f32 %v6997, %v7185
        %v7222 = vadd.f32 %v6998, %v7187
        %v7223 = vadd.f32 %v6999, %v7189
        %v7224 = vadd.f32 %v7000, %v7191
        %v7225 = vadd.f32 %v7001, %v7193
        %v7226 = vsub.f32 %v5454, %v6363
        %v7227 = vsub.f32 %v5460, %v6365
        %v7228 = vsub.f32 %v5466, %v6367
        %v7229 = vsub.f32 %v5472, %v6369
        %v7230 = vsub.f32 %v5478, %v6371
        %v7231 = vsub.f32 %v5484, %v6373
        %v7232 = vsub.f32 %v5490, %v6375
        %v7233 = vsub.f32 %v5496, %v6377
        %v7234 = vsub.f32 %v5502, %v6379
        %v7235 = vsub.f32 %v5508, %v6381
        %v7236 = vsub.f32 %v5514, %v6383
        %v7237 = vsub.f32 %v5520, %v6385
        %v7238 = vsub.f32 %v5526, %v6387
        %v7239 = vsub.f32 %v5532, %v6389
        %v7240 = vsub.f32 %v5538, %v6391
        %v7241 = vsub.f32 %v5544, %v6393
        %v7242 = vmul.f32 %v7226, 1.442695
        %v7243 = vpow.pop %v7242
        %v7244 = vmul.f32 %v7227, 1.442695
        %v7245 = vpow.pop %v7244
        %v7246 = vmul.f32 %v7228, 1.442695
        %v7247 = vpow.pop %v7246
        %v7248 = vmul.f32 %v7229, 1.442695
        %v7249 = vpow.pop %v7248
        %v7250 = vmul.f32 %v7230, 1.442695
        %v7251 = vpow.pop %v7250
        %v7252 = vmul.f32 %v7231, 1.442695
        %v7253 = vpow.pop %v7252
        %v7254 = vmul.f32 %v7232, 1.442695
        %v7255 = vpow.pop %v7254
        %v7256 = vmul.f32 %v7233, 1.442695
        %v7257 = vpow.pop %v7256
        %v7258 = vmul.f32 %v7234, 1.442695
        %v7259 = vpow.pop %v7258
        %v7260 = vmul.f32 %v7235, 1.442695
        %v7261 = vpow.pop %v7260
        %v7262 = vmul.f32 %v7236, 1.442695
        %v7263 = vpow.pop %v7262
        %v7264 = vmul.f32 %v7237, 1.442695
        %v7265 = vpow.pop %v7264
        %v7266 = vmul.f32 %v7238, 1.442695
        %v7267 = vpow.pop %v7266
        %v7268 = vmul.f32 %v7239, 1.442695
        %v7269 = vpow.pop %v7268
        %v7270 = vmul.f32 %v7240, 1.442695
        %v7271 = vpow.pop %v7270
        %v7272 = vmul.f32 %v7241, 1.442695
        %v7273 = vpow.pop %v7272
        %7290 = vrot.lane.b32.xlu0 %v7243, 64
        %v7291 = vpop.permute.xlu0 %7290
        %7292 = vrot.lane.b32.xlu0 %v7245, 64
        %v7293 = vpop.permute.xlu0 %7292
        %7294 = vrot.lane.b32.xlu0 %v7247, 64
        %v7295 = vpop.permute.xlu0 %7294
        %7296 = vrot.lane.b32.xlu0 %v7249, 64
        %v7297 = vpop.permute.xlu0 %7296
        %7298 = vrot.lane.b32.xlu0 %v7251, 64
        %v7299 = vpop.permute.xlu0 %7298
        %7300 = vrot.lane.b32.xlu0 %v7253, 64
        %v7301 = vpop.permute.xlu0 %7300
        %7302 = vrot.lane.b32.xlu0 %v7255, 64
        %v7303 = vpop.permute.xlu0 %7302
        %7304 = vrot.lane.b32.xlu0 %v7257, 64
        %v7305 = vpop.permute.xlu0 %7304
        %7306 = vrot.lane.b32.xlu0 %v7259, 64
        %v7307 = vpop.permute.xlu0 %7306
        %7308 = vrot.lane.b32.xlu0 %v7261, 64
        %v7309 = vpop.permute.xlu0 %7308
        %7310 = vrot.lane.b32.xlu0 %v7263, 64
        %v7311 = vpop.permute.xlu0 %7310
        %7312 = vrot.lane.b32.xlu0 %v7265, 64
        %v7313 = vpop.permute.xlu0 %7312
        %7314 = vrot.lane.b32.xlu0 %v7267, 64
        %v7315 = vpop.permute.xlu0 %7314
        %7316 = vrot.lane.b32.xlu0 %v7269, 64
        %v7317 = vpop.permute.xlu0 %7316
        %7318 = vrot.lane.b32.xlu0 %v7271, 64
        %v7319 = vpop.permute.xlu0 %7318
        %7320 = vrot.lane.b32.xlu0 %v7273, 64
        %v7321 = vpop.permute.xlu0 %7320
        %v7338 = vadd.f32 %v7114, %v7291
        %v7339 = vadd.f32 %v7115, %v7293
        %v7340 = vadd.f32 %v7116, %v7295
        %v7341 = vadd.f32 %v7117, %v7297
        %v7342 = vadd.f32 %v7118, %v7299
        %v7343 = vadd.f32 %v7119, %v7301
        %v7344 = vadd.f32 %v7120, %v7303
        %v7345 = vadd.f32 %v7121, %v7305
        %v7346 = vadd.f32 %v7122, %v7307
        %v7347 = vadd.f32 %v7123, %v7309
        %v7348 = vadd.f32 %v7124, %v7311
        %v7349 = vadd.f32 %v7125, %v7313
        %v7350 = vadd.f32 %v7126, %v7315
        %v7351 = vadd.f32 %v7127, %v7317
        %v7352 = vadd.f32 %v7128, %v7319
        %v7353 = vadd.f32 %v7129, %v7321
        %v7354 = vmul.f32 %v7243, %v5277
        %v7355 = vmul.f32 %v7245, %v5283
        %v7356 = vmul.f32 %v7247, %v5289
        %v7357 = vmul.f32 %v7249, %v5295
        %v7358 = vmul.f32 %v7251, %v5301
        %v7359 = vmul.f32 %v7253, %v5307
        %v7360 = vmul.f32 %v7255, %v5313
        %v7361 = vmul.f32 %v7257, %v5319
        %v7362 = vmul.f32 %v7259, %v5325
        %v7363 = vmul.f32 %v7261, %v5331
        %v7364 = vmul.f32 %v7263, %v5337
        %v7365 = vmul.f32 %v7265, %v5343
        %v7366 = vmul.f32 %v7267, %v5349
        %v7367 = vmul.f32 %v7269, %v5355
        %v7368 = vmul.f32 %v7271, %v5361
        %v7369 = vmul.f32 %v7273, %v5367
        %7386 = vrot.lane.b32.xlu0 %v7354, 64
        %v7387 = vpop.permute.xlu0 %7386
        %7388 = vrot.lane.b32.xlu0 %v7355, 64
        %v7389 = vpop.permute.xlu0 %7388
        %7390 = vrot.lane.b32.xlu0 %v7356, 64
        %v7391 = vpop.permute.xlu0 %7390
        %7392 = vrot.lane.b32.xlu0 %v7357, 64
        %v7393 = vpop.permute.xlu0 %7392
        %7394 = vrot.lane.b32.xlu0 %v7358, 64
        %v7395 = vpop.permute.xlu0 %7394
        %7396 = vrot.lane.b32.xlu0 %v7359, 64
        %v7397 = vpop.permute.xlu0 %7396
        %7398 = vrot.lane.b32.xlu0 %v7360, 64
        %v7399 = vpop.permute.xlu0 %7398
        %7400 = vrot.lane.b32.xlu0 %v7361, 64
        %v7401 = vpop.permute.xlu0 %7400
        %7402 = vrot.lane.b32.xlu0 %v7362, 64
        %v7403 = vpop.permute.xlu0 %7402
        %7404 = vrot.lane.b32.xlu0 %v7363, 64
        %v7405 = vpop.permute.xlu0 %7404
        %7406 = vrot.lane.b32.xlu0 %v7364, 64
        %v7407 = vpop.permute.xlu0 %7406
        %7408 = vrot.lane.b32.xlu0 %v7365, 64
        %v7409 = vpop.permute.xlu0 %7408
        %7410 = vrot.lane.b32.xlu0 %v7366, 64
        %v7411 = vpop.permute.xlu0 %7410
        %7412 = vrot.lane.b32.xlu0 %v7367, 64
        %v7413 = vpop.permute.xlu0 %7412
        %7414 = vrot.lane.b32.xlu0 %v7368, 64
        %v7415 = vpop.permute.xlu0 %7414
        %7416 = vrot.lane.b32.xlu0 %v7369, 64
        %v7417 = vpop.permute.xlu0 %7416
        %v7434 = vadd.f32 %v7210, %v7387
        %v7435 = vadd.f32 %v7211, %v7389
        %v7436 = vadd.f32 %v7212, %v7391
        %v7437 = vadd.f32 %v7213, %v7393
        %v7438 = vadd.f32 %v7214, %v7395
        %v7439 = vadd.f32 %v7215, %v7397
        %v7440 = vadd.f32 %v7216, %v7399
        %v7441 = vadd.f32 %v7217, %v7401
        %v7442 = vadd.f32 %v7218, %v7403
        %v7443 = vadd.f32 %v7219, %v7405
        %v7444 = vadd.f32 %v7220, %v7407
        %v7445 = vadd.f32 %v7221, %v7409
        %v7446 = vadd.f32 %v7222, %v7411
        %v7447 = vadd.f32 %v7223, %v7413
        %v7448 = vadd.f32 %v7224, %v7415
        %v7449 = vadd.f32 %v7225, %v7417
        %v7450 = vsub.f32 %v5454, %v6635
        %v7451 = vsub.f32 %v5460, %v6637
        %v7452 = vsub.f32 %v5466, %v6639
        %v7453 = vsub.f32 %v5472, %v6641
        %v7454 = vsub.f32 %v5478, %v6643
        %v7455 = vsub.f32 %v5484, %v6645
        %v7456 = vsub.f32 %v5490, %v6647
        %v7457 = vsub.f32 %v5496, %v6649
        %v7458 = vsub.f32 %v5502, %v6651
        %v7459 = vsub.f32 %v5508, %v6653
        %v7460 = vsub.f32 %v5514, %v6655
        %v7461 = vsub.f32 %v5520, %v6657
        %v7462 = vsub.f32 %v5526, %v6659
        %v7463 = vsub.f32 %v5532, %v6661
        %v7464 = vsub.f32 %v5538, %v6663
        %v7465 = vsub.f32 %v5544, %v6665
        %v7466 = vmul.f32 %v7450, 1.442695
        %v7467 = vpow.pop %v7466
        %v7468 = vmul.f32 %v7451, 1.442695
        %v7469 = vpow.pop %v7468
        %v7470 = vmul.f32 %v7452, 1.442695
        %v7471 = vpow.pop %v7470
        %v7472 = vmul.f32 %v7453, 1.442695
        %v7473 = vpow.pop %v7472
        %v7474 = vmul.f32 %v7454, 1.442695
        %v7475 = vpow.pop %v7474
        %v7476 = vmul.f32 %v7455, 1.442695
        %v7477 = vpow.pop %v7476
        %v7478 = vmul.f32 %v7456, 1.442695
        %v7479 = vpow.pop %v7478
        %v7480 = vmul.f32 %v7457, 1.442695
        %v7481 = vpow.pop %v7480
        %v7482 = vmul.f32 %v7458, 1.442695
        %v7483 = vpow.pop %v7482
        %v7484 = vmul.f32 %v7459, 1.442695
        %v7485 = vpow.pop %v7484
        %v7486 = vmul.f32 %v7460, 1.442695
        %v7487 = vpow.pop %v7486
        %v7488 = vmul.f32 %v7461, 1.442695
        %v7489 = vpow.pop %v7488
        %v7490 = vmul.f32 %v7462, 1.442695
        %v7491 = vpow.pop %v7490
        %v7492 = vmul.f32 %v7463, 1.442695
        %v7493 = vpow.pop %v7492
        %v7494 = vmul.f32 %v7464, 1.442695
        %v7495 = vpow.pop %v7494
        %v7496 = vmul.f32 %v7465, 1.442695
        %v7497 = vpow.pop %v7496
        %7514 = vrot.lane.b32.xlu0 %v7467, 32
        %v7515 = vpop.permute.xlu0 %7514
        %7516 = vrot.lane.b32.xlu0 %v7469, 32
        %v7517 = vpop.permute.xlu0 %7516
        %7518 = vrot.lane.b32.xlu0 %v7471, 32
        %v7519 = vpop.permute.xlu0 %7518
        %7520 = vrot.lane.b32.xlu0 %v7473, 32
        %v7521 = vpop.permute.xlu0 %7520
        %7522 = vrot.lane.b32.xlu0 %v7475, 32
        %v7523 = vpop.permute.xlu0 %7522
        %7524 = vrot.lane.b32.xlu0 %v7477, 32
        %v7525 = vpop.permute.xlu0 %7524
        %7526 = vrot.lane.b32.xlu0 %v7479, 32
        %v7527 = vpop.permute.xlu0 %7526
        %7528 = vrot.lane.b32.xlu0 %v7481, 32
        %v7529 = vpop.permute.xlu0 %7528
        %7530 = vrot.lane.b32.xlu0 %v7483, 32
        %v7531 = vpop.permute.xlu0 %7530
        %7532 = vrot.lane.b32.xlu0 %v7485, 32
        %v7533 = vpop.permute.xlu0 %7532
        %7534 = vrot.lane.b32.xlu0 %v7487, 32
        %v7535 = vpop.permute.xlu0 %7534
        %7536 = vrot.lane.b32.xlu0 %v7489, 32
        %v7537 = vpop.permute.xlu0 %7536
        %7538 = vrot.lane.b32.xlu0 %v7491, 32
        %v7539 = vpop.permute.xlu0 %7538
        %7540 = vrot.lane.b32.xlu0 %v7493, 32
        %v7541 = vpop.permute.xlu0 %7540
        %7542 = vrot.lane.b32.xlu0 %v7495, 32
        %v7543 = vpop.permute.xlu0 %7542
        %7544 = vrot.lane.b32.xlu0 %v7497, 32
        %v7545 = vpop.permute.xlu0 %7544
        %v7562 = vadd.f32 %v7338, %v7515
        %v7563 = vadd.f32 %v7339, %v7517
        %v7564 = vadd.f32 %v7340, %v7519
        %v7565 = vadd.f32 %v7341, %v7521
        %v7566 = vadd.f32 %v7342, %v7523
        %v7567 = vadd.f32 %v7343, %v7525
        %v7568 = vadd.f32 %v7344, %v7527
        %v7569 = vadd.f32 %v7345, %v7529
        %v7570 = vadd.f32 %v7346, %v7531
        %v7571 = vadd.f32 %v7347, %v7533
        %v7572 = vadd.f32 %v7348, %v7535
        %v7573 = vadd.f32 %v7349, %v7537
        %v7574 = vadd.f32 %v7350, %v7539
        %v7575 = vadd.f32 %v7351, %v7541
        %v7576 = vadd.f32 %v7352, %v7543
        %v7577 = vadd.f32 %v7353, %v7545
        %v7578 = vmul.f32 %v7467, %v5277
        %v7579 = vmul.f32 %v7469, %v5283
        %v7580 = vmul.f32 %v7471, %v5289
        %v7581 = vmul.f32 %v7473, %v5295
        %v7582 = vmul.f32 %v7475, %v5301
        %v7583 = vmul.f32 %v7477, %v5307
        %v7584 = vmul.f32 %v7479, %v5313
        %v7585 = vmul.f32 %v7481, %v5319
        %v7586 = vmul.f32 %v7483, %v5325
        %v7587 = vmul.f32 %v7485, %v5331
        %v7588 = vmul.f32 %v7487, %v5337
        %v7589 = vmul.f32 %v7489, %v5343
        %v7590 = vmul.f32 %v7491, %v5349
        %v7591 = vmul.f32 %v7493, %v5355
        %v7592 = vmul.f32 %v7495, %v5361
        %v7593 = vmul.f32 %v7497, %v5367
        %7610 = vrot.lane.b32.xlu0 %v7578, 32
        %v7611 = vpop.permute.xlu0 %7610
        %7612 = vrot.lane.b32.xlu0 %v7579, 32
        %v7613 = vpop.permute.xlu0 %7612
        %7614 = vrot.lane.b32.xlu0 %v7580, 32
        %v7615 = vpop.permute.xlu0 %7614
        %7616 = vrot.lane.b32.xlu0 %v7581, 32
        %v7617 = vpop.permute.xlu0 %7616
        %7618 = vrot.lane.b32.xlu0 %v7582, 32
        %v7619 = vpop.permute.xlu0 %7618
        %7620 = vrot.lane.b32.xlu0 %v7583, 32
        %v7621 = vpop.permute.xlu0 %7620
        %7622 = vrot.lane.b32.xlu0 %v7584, 32
        %v7623 = vpop.permute.xlu0 %7622
        %7624 = vrot.lane.b32.xlu0 %v7585, 32
        %v7625 = vpop.permute.xlu0 %7624
        %7626 = vrot.lane.b32.xlu0 %v7586, 32
        %v7627 = vpop.permute.xlu0 %7626
        %7628 = vrot.lane.b32.xlu0 %v7587, 32
        %v7629 = vpop.permute.xlu0 %7628
        %7630 = vrot.lane.b32.xlu0 %v7588, 32
        %v7631 = vpop.permute.xlu0 %7630
        %7632 = vrot.lane.b32.xlu0 %v7589, 32
        %v7633 = vpop.permute.xlu0 %7632
        %7634 = vrot.lane.b32.xlu0 %v7590, 32
        %v7635 = vpop.permute.xlu0 %7634
        %7636 = vrot.lane.b32.xlu0 %v7591, 32
        %v7637 = vpop.permute.xlu0 %7636
        %7638 = vrot.lane.b32.xlu0 %v7592, 32
        %v7639 = vpop.permute.xlu0 %7638
        %7640 = vrot.lane.b32.xlu0 %v7593, 32
        %v7641 = vpop.permute.xlu0 %7640
        %v7658 = vadd.f32 %v7434, %v7611
        %v7659 = vadd.f32 %v7435, %v7613
        %v7660 = vadd.f32 %v7436, %v7615
        %v7661 = vadd.f32 %v7437, %v7617
        %v7662 = vadd.f32 %v7438, %v7619
        %v7663 = vadd.f32 %v7439, %v7621
        %v7664 = vadd.f32 %v7440, %v7623
        %v7665 = vadd.f32 %v7441, %v7625
        %v7666 = vadd.f32 %v7442, %v7627
        %v7667 = vadd.f32 %v7443, %v7629
        %v7668 = vadd.f32 %v7444, %v7631
        %v7669 = vadd.f32 %v7445, %v7633
        %v7670 = vadd.f32 %v7446, %v7635
        %v7671 = vadd.f32 %v7447, %v7637
        %v7672 = vadd.f32 %v7448, %v7639
        %v7673 = vadd.f32 %v7449, %v7641
        %v7674 = vrcp.pop %v7562
        %v7675 = vmul.f32 %v7658, %v7674
        %v7676 = vrcp.pop %v7563
        %v7677 = vmul.f32 %v7659, %v7676
        %v7678 = vrcp.pop %v7564
        %v7679 = vmul.f32 %v7660, %v7678
        %v7680 = vrcp.pop %v7565
        %v7681 = vmul.f32 %v7661, %v7680
        %v7682 = vrcp.pop %v7566
        %v7683 = vmul.f32 %v7662, %v7682
        %v7684 = vrcp.pop %v7567
        %v7685 = vmul.f32 %v7663, %v7684
        %v7686 = vrcp.pop %v7568
        %v7687 = vmul.f32 %v7664, %v7686
        %v7688 = vrcp.pop %v7569
        %v7689 = vmul.f32 %v7665, %v7688
        %v7690 = vrcp.pop %v7570
        %v7691 = vmul.f32 %v7666, %v7690
        %v7692 = vrcp.pop %v7571
        %v7693 = vmul.f32 %v7667, %v7692
        %v7694 = vrcp.pop %v7572
        %v7695 = vmul.f32 %v7668, %v7694
        %v7696 = vrcp.pop %v7573
        %v7697 = vmul.f32 %v7669, %v7696
        %v7698 = vrcp.pop %v7574
        %v7699 = vmul.f32 %v7670, %v7698
        %v7700 = vrcp.pop %v7575
        %v7701 = vmul.f32 %v7671, %v7700
        %v7702 = vrcp.pop %v7576
        %v7703 = vmul.f32 %v7672, %v7702
        %v7704 = vrcp.pop %v7577
        %v7705 = vmul.f32 %v7673, %v7704
        %vm7706 = vcmp.ge.f32.partialorder %v7675, 0.0
        %vm7707 = vcmp.ge.f32.partialorder %v7677, 0.0
        %vm7708 = vcmp.ge.f32.partialorder %v7679, 0.0
        %vm7709 = vcmp.ge.f32.partialorder %v7681, 0.0
        %vm7710 = vcmp.ge.f32.partialorder %v7683, 0.0
        %vm7711 = vcmp.ge.f32.partialorder %v7685, 0.0
        %vm7712 = vcmp.ge.f32.partialorder %v7687, 0.0
        %vm7713 = vcmp.ge.f32.partialorder %v7689, 0.0
        %vm7714 = vcmp.ge.f32.partialorder %v7691, 0.0
        %vm7715 = vcmp.ge.f32.partialorder %v7693, 0.0
        %vm7716 = vcmp.ge.f32.partialorder %v7695, 0.0
        %vm7717 = vcmp.ge.f32.partialorder %v7697, 0.0
        %vm7718 = vcmp.ge.f32.partialorder %v7699, 0.0
        %vm7719 = vcmp.ge.f32.partialorder %v7701, 0.0
        %vm7720 = vcmp.ge.f32.partialorder %v7703, 0.0
        %vm7721 = vcmp.ge.f32.partialorder %v7705, 0.0
        %v7722 = vmul.f32 %v7675, 0.01
        %v7723 = vmul.f32 %v7677, 0.01
        %v7724 = vmul.f32 %v7679, 0.01
        %v7725 = vmul.f32 %v7681, 0.01
        %v7726 = vmul.f32 %v7683, 0.01
        %v7727 = vmul.f32 %v7685, 0.01
        %v7728 = vmul.f32 %v7687, 0.01
        %v7729 = vmul.f32 %v7689, 0.01
        %v7730 = vmul.f32 %v7691, 0.01
        %v7731 = vmul.f32 %v7693, 0.01
        %v7732 = vmul.f32 %v7695, 0.01
        %v7733 = vmul.f32 %v7697, 0.01
        %v7734 = vmul.f32 %v7699, 0.01
        %v7735 = vmul.f32 %v7701, 0.01
        %v7736 = vmul.f32 %v7703, 0.01
        %v7737 = vmul.f32 %v7705, 0.01
        %v7738 = vsel %vm7706, %v7675, %v7722
        %v7739 = vsel %vm7707, %v7677, %v7723
        %v7740 = vsel %vm7708, %v7679, %v7724
        %v7741 = vsel %vm7709, %v7681, %v7725
        %v7742 = vsel %vm7710, %v7683, %v7726
        %v7743 = vsel %vm7711, %v7685, %v7727
        %v7744 = vsel %vm7712, %v7687, %v7728
        %v7745 = vsel %vm7713, %v7689, %v7729
        %v7746 = vsel %vm7714, %v7691, %v7730
        %v7747 = vsel %vm7715, %v7693, %v7731
        %v7748 = vsel %vm7716, %v7695, %v7732
        %v7749 = vsel %vm7717, %v7697, %v7733
        %v7750 = vsel %vm7718, %v7699, %v7734
        %v7751 = vsel %vm7719, %v7701, %v7735
        %v7752 = vsel %vm7720, %v7703, %v7736
        %v7753 = vsel %vm7721, %v7705, %v7737
        %v7754 = vld [vmem:[#allocation19] sm:$0xff]
        %v7755 = vld [vmem:[#allocation19 + $0x8] sm:$0xff]
        %v7756 = vld [vmem:[#allocation19 + $0x10] sm:$0xff]
        %v7757 = vld [vmem:[#allocation19 + $0x18] sm:$0xff]
        %v7758 = vld [vmem:[#allocation21] sm:$0x1]
        %v7760 = vlaneseq
        %v7761 = vshrl.u32 %v7760, 7
        %v7762 = vsub.s32 0, %v7761
        %v7763 = vrot.slane %v7758, %v7762
        %v7766 = vsel %vm928, %v7738, 0
        %v7769 = vsel %vm928, %v7739, 0
        %v7772 = vsel %vm928, %v7740, 0
        %v7775 = vsel %vm928, %v7741, 0
        %v7778 = vsel %vm928, %v7742, 0
        %v7781 = vsel %vm928, %v7743, 0
        %v7784 = vsel %vm928, %v7744, 0
        %v7787 = vsel %vm928, %v7745, 0
        %v7790 = vsel %vm928, %v7746, 0
        %v7793 = vsel %vm928, %v7747, 0
        %v7796 = vsel %vm928, %v7748, 0
        %v7799 = vsel %vm928, %v7749, 0
        %v7802 = vsel %vm928, %v7750, 0
        %v7805 = vsel %vm928, %v7751, 0
        %v7808 = vsel %vm928, %v7752, 0
        %v7811 = vsel %vm928, %v7753, 0
        %7813 = vmatprep.subr.mxu0 0.0
        %7814 = vmatpush1.msra.mxu0 %v7754
        %7815 = vmatprep.subr.mxu0 0.0
        %7816 = vmatpush1.msra.mxu0 %v7755
        %7817 = vmatprep.subr.mxu0 0.0
        %7818 = vmatpush1.msra.mxu0 %v7756
        %7819 = vmatprep.subr.mxu0 0.0
        %7820 = vmatpush1.msra.mxu0 %v7757
        %7821 = vmatprep.subr.mxu0 0.0
        %7822 = vmatpush1.msra.mxu0 0.0
        %7823 = vmatprep.subr.mxu0 0.0
        %7824 = vmatpush1.msra.mxu0 0.0
        %7825 = vmatprep.subr.mxu0 0.0
        %7826 = vmatpush1.msra.mxu0 0.0
        %7827 = vmatprep.subr.mxu0 0.0
        %7828 = vmatpush1.msra.mxu0 0.0
        %7829 = vmatprep.subr.mxu0 0.0
        %7830 = vmatpush1.msra.mxu0 0.0
        %7831 = vmatprep.subr.mxu0 0.0
        %7832 = vmatpush1.msra.mxu0 0.0
        %7833 = vmatprep.subr.mxu0 0.0
        %7834 = vmatpush1.msra.mxu0 0.0
        %7835 = vmatprep.subr.mxu0 0.0
        %7836 = vmatpush1.msra.mxu0 0.0
        %7837 = vmatprep.subr.mxu0 0.0
        %7838 = vmatpush1.msra.mxu0 0.0
        %7839 = vmatprep.subr.mxu0 0.0
        %7840 = vmatpush1.msra.mxu0 0.0
        %7841 = vmatprep.subr.mxu0 0.0
        %7842 = vmatpush1.msra.mxu0 0.0
        %7843 = vmatprep.subr.mxu0 0.0
        %7844 = vmatpush1.msra.mxu0 0.0
        %7845 = vmatprep.subr.mxu0 0.0
        %7846 = vmatpush1.msra.mxu0 0.0
        %7847 = vmatprep.subr.mxu0 0.0
        %7848 = vmatpush1.msra.mxu0 0.0
        %7849 = vmatprep.subr.mxu0 0.0
        %7850 = vmatpush1.msra.mxu0 0.0
        %7851 = vmatprep.subr.mxu0 0.0
        %7852 = vmatpush1.msra.mxu0 0.0
        %7853 = vmatprep.subr.mxu0 0.0
        %7854 = vmatpush1.msra.mxu0 0.0
        %7855 = vmatprep.subr.mxu0 0.0
        %7856 = vmatpush1.msra.mxu0 0.0
        %7857 = vmatprep.subr.mxu0 0.0
        %7858 = vmatpush1.msra.mxu0 0.0
        %7859 = vmatprep.subr.mxu0 0.0
        %7860 = vmatpush1.msra.mxu0 0.0
        %7861 = vmatprep.subr.mxu0 0.0
        %7862 = vmatpush1.msra.mxu0 0.0
        %7863 = vmatprep.subr.mxu0 0.0
        %7864 = vmatpush1.msra.mxu0 0.0
        %7865 = vmatprep.subr.mxu0 0.0
        %7866 = vmatpush1.msra.mxu0 0.0
        %7867 = vmatprep.subr.mxu0 0.0
        %7868 = vmatpush1.msra.mxu0 0.0
        %7869 = vmatprep.subr.mxu0 0.0
        %7870 = vmatpush1.msra.mxu0 0.0
        %7871 = vmatprep.subr.mxu0 0.0
        %7872 = vmatpush1.msra.mxu0 0.0
        %7873 = vmatprep.subr.mxu0 0.0
        %7874 = vmatpush1.msra.mxu0 0.0
        %7875 = vmatprep.subr.mxu0 0.0
        %7876 = vmatpush1.msra.mxu0 0.0
        %7877 = vmatprep.mubr.f32.mxu0 0.0
        %7878 = vmatmul.mubr.f32.gmra.mrb[0].mxu0 %v7766
        %v7879 = vpop.f32.mrb[0].mxu0
        %v7880 = vadd.f32 %v7763, %v7879
        %v7881 = vpop.f32.mrb[0].mxu0
        %7882 = vmatprep.mubr.f32.mxu0 0.0
        %7883 = vmatmul.mubr.f32.gmra.mrb[0].mxu0 %v7769
        %v7884 = vpop.f32.mrb[0].mxu0
        %v7885 = vadd.f32 %v7763, %v7884
        %v7886 = vpop.f32.mrb[0].mxu0
        %7887 = vmatprep.mubr.f32.mxu0 0.0
        %7888 = vmatmul.mubr.f32.gmra.mrb[0].mxu0 %v7772
        %v7889 = vpop.f32.mrb[0].mxu0
        %v7890 = vadd.f32 %v7763, %v7889
        %v7891 = vpop.f32.mrb[0].mxu0
        %7892 = vmatprep.mubr.f32.mxu0 0.0
        %7893 = vmatmul.mubr.f32.gmra.mrb[0].mxu0 %v7775
        %v7894 = vpop.f32.mrb[0].mxu0
        %v7895 = vadd.f32 %v7763, %v7894
        %v7896 = vpop.f32.mrb[0].mxu0
        %7897 = vmatprep.mubr.f32.mxu0 0.0
        %7898 = vmatmul.mubr.f32.gmra.mrb[0].mxu0 %v7778
        %v7899 = vpop.f32.mrb[0].mxu0
        %v7900 = vadd.f32 %v7763, %v7899
        %v7901 = vpop.f32.mrb[0].mxu0
        %7902 = vmatprep.mubr.f32.mxu0 0.0
        %7903 = vmatmul.mubr.f32.gmra.mrb[0].mxu0 %v7781
        %v7904 = vpop.f32.mrb[0].mxu0
        %v7905 = vadd.f32 %v7763, %v7904
        %v7906 = vpop.f32.mrb[0].mxu0
        %7907 = vmatprep.mubr.f32.mxu0 0.0
        %7908 = vmatmul.mubr.f32.gmra.mrb[0].mxu0 %v7784
        %v7909 = vpop.f32.mrb[0].mxu0
        %v7910 = vadd.f32 %v7763, %v7909
        %v7911 = vpop.f32.mrb[0].mxu0
        %7912 = vmatprep.mubr.f32.mxu0 0.0
        %7913 = vmatmul.mubr.f32.gmra.mrb[0].mxu0 %v7787
        %v7914 = vpop.f32.mrb[0].mxu0
        %v7915 = vadd.f32 %v7763, %v7914
        %v7916 = vpop.f32.mrb[0].mxu0
        %7917 = vmatprep.mubr.f32.mxu0 0.0
        %7918 = vmatmul.mubr.f32.gmra.mrb[0].mxu0 %v7790
        %v7919 = vpop.f32.mrb[0].mxu0
        %v7920 = vadd.f32 %v7763, %v7919
        %v7921 = vpop.f32.mrb[0].mxu0
        %7922 = vmatprep.mubr.f32.mxu0 0.0
        %7923 = vmatmul.mubr.f32.gmra.mrb[0].mxu0 %v7793
        %v7924 = vpop.f32.mrb[0].mxu0
        %v7925 = vadd.f32 %v7763, %v7924
        %v7926 = vpop.f32.mrb[0].mxu0
        %7927 = vmatprep.mubr.f32.mxu0 0.0
        %7928 = vmatmul.mubr.f32.gmra.mrb[0].mxu0 %v7796
        %v7929 = vpop.f32.mrb[0].mxu0
        %v7930 = vadd.f32 %v7763, %v7929
        %v7931 = vpop.f32.mrb[0].mxu0
        %7932 = vmatprep.mubr.f32.mxu0 0.0
        %7933 = vmatmul.mubr.f32.gmra.mrb[0].mxu0 %v7799
        %v7934 = vpop.f32.mrb[0].mxu0
        %v7935 = vadd.f32 %v7763, %v7934
        %v7936 = vpop.f32.mrb[0].mxu0
        %7937 = vmatprep.mubr.f32.mxu0 0.0
        %7938 = vmatmul.mubr.f32.gmra.mrb[0].mxu0 %v7802
        %v7939 = vpop.f32.mrb[0].mxu0
        %v7940 = vadd.f32 %v7763, %v7939
        %v7941 = vpop.f32.mrb[0].mxu0
        %7942 = vmatprep.mubr.f32.mxu0 0.0
        %7943 = vmatmul.mubr.f32.gmra.mrb[0].mxu0 %v7805
        %v7944 = vpop.f32.mrb[0].mxu0
        %v7945 = vadd.f32 %v7763, %v7944
        %v7946 = vpop.f32.mrb[0].mxu0
        %7947 = vmatprep.mubr.f32.mxu0 0.0
        %7948 = vmatmul.mubr.f32.gmra.mrb[0].mxu0 %v7808
        %v7949 = vpop.f32.mrb[0].mxu0
        %v7950 = vadd.f32 %v7763, %v7949
        %v7951 = vpop.f32.mrb[0].mxu0
        %7952 = vmatprep.mubr.f32.mxu0 0.0
        %7953 = vmatmul.mubr.f32.gmra.mrb[0].mxu0 %v7811
        %v7954 = vpop.f32.mrb[0].mxu0
        %v7955 = vadd.f32 %v7763, %v7954
        %v7956 = vpop.f32.mrb[0].mxu0
        %7957 = vdwg.mxu0
        %vm7958 = vcmp.ge.f32.partialorder %v7880, 0.0
        %vm7959 = vcmp.ge.f32.partialorder %v7885, 0.0
        %vm7960 = vcmp.ge.f32.partialorder %v7890, 0.0
        %vm7961 = vcmp.ge.f32.partialorder %v7895, 0.0
        %vm7962 = vcmp.ge.f32.partialorder %v7900, 0.0
        %vm7963 = vcmp.ge.f32.partialorder %v7905, 0.0
        %vm7964 = vcmp.ge.f32.partialorder %v7910, 0.0
        %vm7965 = vcmp.ge.f32.partialorder %v7915, 0.0
        %vm7966 = vcmp.ge.f32.partialorder %v7920, 0.0
        %vm7967 = vcmp.ge.f32.partialorder %v7925, 0.0
        %vm7968 = vcmp.ge.f32.partialorder %v7930, 0.0
        %vm7969 = vcmp.ge.f32.partialorder %v7935, 0.0
        %vm7970 = vcmp.ge.f32.partialorder %v7940, 0.0
        %vm7971 = vcmp.ge.f32.partialorder %v7945, 0.0
        %vm7972 = vcmp.ge.f32.partialorder %v7950, 0.0
        %vm7973 = vcmp.ge.f32.partialorder %v7955, 0.0
        %v7974 = vmul.f32 %v7880, 0.01
        %v7975 = vmul.f32 %v7885, 0.01
        %v7976 = vmul.f32 %v7890, 0.01
        %v7977 = vmul.f32 %v7895, 0.01
        %v7978 = vmul.f32 %v7900, 0.01
        %v7979 = vmul.f32 %v7905, 0.01
        %v7980 = vmul.f32 %v7910, 0.01
        %v7981 = vmul.f32 %v7915, 0.01
        %v7982 = vmul.f32 %v7920, 0.01
        %v7983 = vmul.f32 %v7925, 0.01
        %v7984 = vmul.f32 %v7930, 0.01
        %v7985 = vmul.f32 %v7935, 0.01
        %v7986 = vmul.f32 %v7940, 0.01
        %v7987 = vmul.f32 %v7945, 0.01
        %v7988 = vmul.f32 %v7950, 0.01
        %v7989 = vmul.f32 %v7955, 0.01
        %v7990 = vsel %vm7958, %v7880, %v7974
        %v7991 = vsel %vm7959, %v7885, %v7975
        %v7992 = vsel %vm7960, %v7890, %v7976
        %v7993 = vsel %vm7961, %v7895, %v7977
        %v7994 = vsel %vm7962, %v7900, %v7978
        %v7995 = vsel %vm7963, %v7905, %v7979
        %v7996 = vsel %vm7964, %v7910, %v7980
        %v7997 = vsel %vm7965, %v7915, %v7981
        %v7998 = vsel %vm7966, %v7920, %v7982
        %v7999 = vsel %vm7967, %v7925, %v7983
        %v8000 = vsel %vm7968, %v7930, %v7984
        %v8001 = vsel %vm7969, %v7935, %v7985
        %v8002 = vsel %vm7970, %v7940, %v7986
        %v8003 = vsel %vm7971, %v7945, %v7987
        %v8004 = vsel %vm7972, %v7950, %v7988
        %v8005 = vsel %vm7973, %v7955, %v7989
        %v8006 = vld [vmem:[%s16] sm:$0xff]
        %v8007 = vld [vmem:[%s16 + $0x8] sm:$0xff]
        %v8008 = vld [vmem:[%s16 + $0x10] sm:$0xff]
        %v8009 = vld [vmem:[%s16 + $0x18] sm:$0xff]
        %v8010 = vld [vmem:[%s16 + $0x20] sm:$0xff]
        %v8011 = vld [vmem:[%s16 + $0x28] sm:$0xff]
        %v8012 = vld [vmem:[%s16 + $0x30] sm:$0xff]
        %v8013 = vld [vmem:[%s16 + $0x38] sm:$0xff]
        %v8014 = vld [vmem:[%s16 + $0x40] sm:$0xff]
        %v8015 = vld [vmem:[%s16 + $0x48] sm:$0xff]
        %v8016 = vld [vmem:[%s16 + $0x50] sm:$0xff]
        %v8017 = vld [vmem:[%s16 + $0x58] sm:$0xff]
        %v8018 = vld [vmem:[%s16 + $0x60] sm:$0xff]
        %v8019 = vld [vmem:[%s16 + $0x68] sm:$0xff]
        %v8020 = vld [vmem:[%s16 + $0x70] sm:$0xff]
        %v8021 = vld [vmem:[%s16 + $0x78] sm:$0xff]
        %v8022 = vld [vmem:[#allocation22] sm:$0x1]
        %v8024 = vlaneseq
        %v8025 = vshrl.u32 %v8024, 7
        %v8026 = vsub.s32 0, %v8025
        %v8027 = vrot.slane %v8022, %v8026
        %8029 = vmatprep.subr.mxu0 0.0
        %8030 = vmatpush1.msra.mxu0 %v8006
        %8031 = vmatprep.subr.mxu0 0.0
        %8032 = vmatpush1.msra.mxu0 %v8007
        %8033 = vmatprep.subr.mxu0 0.0
        %8034 = vmatpush1.msra.mxu0 %v8008
        %8035 = vmatprep.subr.mxu0 0.0
        %8036 = vmatpush1.msra.mxu0 %v8009
        %8037 = vmatprep.subr.mxu0 0.0
        %8038 = vmatpush1.msra.mxu0 %v8010
        %8039 = vmatprep.subr.mxu0 0.0
        %8040 = vmatpush1.msra.mxu0 %v8011
        %8041 = vmatprep.subr.mxu0 0.0
        %8042 = vmatpush1.msra.mxu0 %v8012
        %8043 = vmatprep.subr.mxu0 0.0
        %8044 = vmatpush1.msra.mxu0 %v8013
        %8045 = vmatprep.subr.mxu0 0.0
        %8046 = vmatpush1.msra.mxu0 %v8014
        %8047 = vmatprep.subr.mxu0 0.0
        %8048 = vmatpush1.msra.mxu0 %v8015
        %8049 = vmatprep.subr.mxu0 0.0
        %8050 = vmatpush1.msra.mxu0 %v8016
        %8051 = vmatprep.subr.mxu0 0.0
        %8052 = vmatpush1.msra.mxu0 %v8017
        %8053 = vmatprep.subr.mxu0 0.0
        %8054 = vmatpush1.msra.mxu0 %v8018
        %8055 = vmatprep.subr.mxu0 0.0
        %8056 = vmatpush1.msra.mxu0 %v8019
        %8057 = vmatprep.subr.mxu0 0.0
        %8058 = vmatpush1.msra.mxu0 %v8020
        %8059 = vmatprep.subr.mxu0 0.0
        %8060 = vmatpush1.msra.mxu0 %v8021
        %8061 = vmatprep.subr.mxu0 0.0
        %8062 = vmatpush1.msra.mxu0 0.0
        %8063 = vmatprep.subr.mxu0 0.0
        %8064 = vmatpush1.msra.mxu0 0.0
        %8065 = vmatprep.subr.mxu0 0.0
        %8066 = vmatpush1.msra.mxu0 0.0
        %8067 = vmatprep.subr.mxu0 0.0
        %8068 = vmatpush1.msra.mxu0 0.0
        %8069 = vmatprep.subr.mxu0 0.0
        %8070 = vmatpush1.msra.mxu0 0.0
        %8071 = vmatprep.subr.mxu0 0.0
        %8072 = vmatpush1.msra.mxu0 0.0
        %8073 = vmatprep.subr.mxu0 0.0
        %8074 = vmatpush1.msra.mxu0 0.0
        %8075 = vmatprep.subr.mxu0 0.0
        %8076 = vmatpush1.msra.mxu0 0.0
        %8077 = vmatprep.subr.mxu0 0.0
        %8078 = vmatpush1.msra.mxu0 0.0
        %8079 = vmatprep.subr.mxu0 0.0
        %8080 = vmatpush1.msra.mxu0 0.0
        %8081 = vmatprep.subr.mxu0 0.0
        %8082 = vmatpush1.msra.mxu0 0.0
        %8083 = vmatprep.subr.mxu0 0.0
        %8084 = vmatpush1.msra.mxu0 0.0
        %8085 = vmatprep.subr.mxu0 0.0
        %8086 = vmatpush1.msra.mxu0 0.0
        %8087 = vmatprep.subr.mxu0 0.0
        %8088 = vmatpush1.msra.mxu0 0.0
        %8089 = vmatprep.subr.mxu0 0.0
        %8090 = vmatpush1.msra.mxu0 0.0
        %8091 = vmatprep.subr.mxu0 0.0
        %8092 = vmatpush1.msra.mxu0 0.0
        %8093 = vmatprep.mubr.f32.mxu0 0.0
        %8094 = vmatmul.mubr.f32.gmra.mrb[0].mxu0 %v7990
        %v8095 = vpop.f32.mrb[0].mxu0
        %v8096 = vadd.f32 %v8027, %v8095
        %v8097 = vpop.f32.mrb[0].mxu0
        %8098 = vmatprep.mubr.f32.mxu0 0.0
        %8099 = vmatmul.mubr.f32.gmra.mrb[0].mxu0 %v7991
        %v8100 = vpop.f32.mrb[0].mxu0
        %v8101 = vadd.f32 %v8027, %v8100
        %v8102 = vpop.f32.mrb[0].mxu0
        %8103 = vmatprep.mubr.f32.mxu0 0.0
        %8104 = vmatmul.mubr.f32.gmra.mrb[0].mxu0 %v7992
        %v8105 = vpop.f32.mrb[0].mxu0
        %v8106 = vadd.f32 %v8027, %v8105
        %v8107 = vpop.f32.mrb[0].mxu0
        %8108 = vmatprep.mubr.f32.mxu0 0.0
        %8109 = vmatmul.mubr.f32.gmra.mrb[0].mxu0 %v7993
        %v8110 = vpop.f32.mrb[0].mxu0
        %v8111 = vadd.f32 %v8027, %v8110
        %v8112 = vpop.f32.mrb[0].mxu0
        %8113 = vmatprep.mubr.f32.mxu0 0.0
        %8114 = vmatmul.mubr.f32.gmra.mrb[0].mxu0 %v7994
        %v8115 = vpop.f32.mrb[0].mxu0
        %v8116 = vadd.f32 %v8027, %v8115
        %v8117 = vpop.f32.mrb[0].mxu0
        %8118 = vmatprep.mubr.f32.mxu0 0.0
        %8119 = vmatmul.mubr.f32.gmra.mrb[0].mxu0 %v7995
        %v8120 = vpop.f32.mrb[0].mxu0
        %v8121 = vadd.f32 %v8027, %v8120
        %v8122 = vpop.f32.mrb[0].mxu0
        %8123 = vmatprep.mubr.f32.mxu0 0.0
        %8124 = vmatmul.mubr.f32.gmra.mrb[0].mxu0 %v7996
        %v8125 = vpop.f32.mrb[0].mxu0
        %v8126 = vadd.f32 %v8027, %v8125
        %v8127 = vpop.f32.mrb[0].mxu0
        %8128 = vmatprep.mubr.f32.mxu0 0.0
        %8129 = vmatmul.mubr.f32.gmra.mrb[0].mxu0 %v7997
        %v8130 = vpop.f32.mrb[0].mxu0
        %v8131 = vadd.f32 %v8027, %v8130
        %v8132 = vpop.f32.mrb[0].mxu0
        %8133 = vmatprep.mubr.f32.mxu0 0.0
        %8134 = vmatmul.mubr.f32.gmra.mrb[0].mxu0 %v7998
        %v8135 = vpop.f32.mrb[0].mxu0
        %v8136 = vadd.f32 %v8027, %v8135
        %v8137 = vpop.f32.mrb[0].mxu0
        %8138 = vmatprep.mubr.f32.mxu0 0.0
        %8139 = vmatmul.mubr.f32.gmra.mrb[0].mxu0 %v7999
        %v8140 = vpop.f32.mrb[0].mxu0
        %v8141 = vadd.f32 %v8027, %v8140
        %v8142 = vpop.f32.mrb[0].mxu0
        %8143 = vmatprep.mubr.f32.mxu0 0.0
        %8144 = vmatmul.mubr.f32.gmra.mrb[0].mxu0 %v8000
        %v8145 = vpop.f32.mrb[0].mxu0
        %v8146 = vadd.f32 %v8027, %v8145
        %v8147 = vpop.f32.mrb[0].mxu0
        %8148 = vmatprep.mubr.f32.mxu0 0.0
        %8149 = vmatmul.mubr.f32.gmra.mrb[0].mxu0 %v8001
        %v8150 = vpop.f32.mrb[0].mxu0
        %v8151 = vadd.f32 %v8027, %v8150
        %v8152 = vpop.f32.mrb[0].mxu0
        %8153 = vmatprep.mubr.f32.mxu0 0.0
        %8154 = vmatmul.mubr.f32.gmra.mrb[0].mxu0 %v8002
        %v8155 = vpop.f32.mrb[0].mxu0
        %v8156 = vadd.f32 %v8027, %v8155
        %v8157 = vpop.f32.mrb[0].mxu0
        %8158 = vmatprep.mubr.f32.mxu0 0.0
        %8159 = vmatmul.mubr.f32.gmra.mrb[0].mxu0 %v8003
        %v8160 = vpop.f32.mrb[0].mxu0
        %v8161 = vadd.f32 %v8027, %v8160
        %v8162 = vpop.f32.mrb[0].mxu0
        %8163 = vmatprep.mubr.f32.mxu0 0.0
        %8164 = vmatmul.mubr.f32.gmra.mrb[0].mxu0 %v8004
        %v8165 = vpop.f32.mrb[0].mxu0
        %v8166 = vadd.f32 %v8027, %v8165
        %v8167 = vpop.f32.mrb[0].mxu0
        %8168 = vmatprep.mubr.f32.mxu0 0.0
        %8169 = vmatmul.mubr.f32.gmra.mrb[0].mxu0 %v8005
        %v8170 = vpop.f32.mrb[0].mxu0
        %v8171 = vadd.f32 %v8027, %v8170
        %v8172 = vpop.f32.mrb[0].mxu0
        %8173 = vdwg.mxu0
        %vm8174 = vcmp.ge.f32.partialorder %v8096, 0.0
        %vm8175 = vcmp.ge.f32.partialorder %v8101, 0.0
        %vm8176 = vcmp.ge.f32.partialorder %v8106, 0.0
        %vm8177 = vcmp.ge.f32.partialorder %v8111, 0.0
        %vm8178 = vcmp.ge.f32.partialorder %v8116, 0.0
        %vm8179 = vcmp.ge.f32.partialorder %v8121, 0.0
        %vm8180 = vcmp.ge.f32.partialorder %v8126, 0.0
        %vm8181 = vcmp.ge.f32.partialorder %v8131, 0.0
        %vm8182 = vcmp.ge.f32.partialorder %v8136, 0.0
        %vm8183 = vcmp.ge.f32.partialorder %v8141, 0.0
        %vm8184 = vcmp.ge.f32.partialorder %v8146, 0.0
        %vm8185 = vcmp.ge.f32.partialorder %v8151, 0.0
        %vm8186 = vcmp.ge.f32.partialorder %v8156, 0.0
        %vm8187 = vcmp.ge.f32.partialorder %v8161, 0.0
        %vm8188 = vcmp.ge.f32.partialorder %v8166, 0.0
        %vm8189 = vcmp.ge.f32.partialorder %v8171, 0.0
        %v8190 = vmul.f32 %v8096, 0.01
        %v8191 = vmul.f32 %v8101, 0.01
        %v8192 = vmul.f32 %v8106, 0.01
        %v8193 = vmul.f32 %v8111, 0.01
        %v8194 = vmul.f32 %v8116, 0.01
        %v8195 = vmul.f32 %v8121, 0.01
        %v8196 = vmul.f32 %v8126, 0.01
        %v8197 = vmul.f32 %v8131, 0.01
        %v8198 = vmul.f32 %v8136, 0.01
        %v8199 = vmul.f32 %v8141, 0.01
        %v8200 = vmul.f32 %v8146, 0.01
        %v8201 = vmul.f32 %v8151, 0.01
        %v8202 = vmul.f32 %v8156, 0.01
        %v8203 = vmul.f32 %v8161, 0.01
        %v8204 = vmul.f32 %v8166, 0.01
        %v8205 = vmul.f32 %v8171, 0.01
        %v8206 = vsel %vm8174, %v8096, %v8190
        %v8207 = vsel %vm8175, %v8101, %v8191
        %v8208 = vsel %vm8176, %v8106, %v8192
        %v8209 = vsel %vm8177, %v8111, %v8193
        %v8210 = vsel %vm8178, %v8116, %v8194
        %v8211 = vsel %vm8179, %v8121, %v8195
        %v8212 = vsel %vm8180, %v8126, %v8196
        %v8213 = vsel %vm8181, %v8131, %v8197
        %v8214 = vsel %vm8182, %v8136, %v8198
        %v8215 = vsel %vm8183, %v8141, %v8199
        %v8216 = vsel %vm8184, %v8146, %v8200
        %v8217 = vsel %vm8185, %v8151, %v8201
        %v8218 = vsel %vm8186, %v8156, %v8202
        %v8219 = vsel %vm8187, %v8161, %v8203
        %v8220 = vsel %vm8188, %v8166, %v8204
        %v8221 = vsel %vm8189, %v8171, %v8205
        %v8222 = vld [vmem:[%s18] sm:$0xff]
        %v8223 = vld [vmem:[%s18 + $0x8] sm:$0xff]
        %v8224 = vld [vmem:[%s18 + $0x10] sm:$0xff]
        %v8225 = vld [vmem:[%s18 + $0x18] sm:$0xff]
        %v8226 = vld [vmem:[%s18 + $0x20] sm:$0xff]
        %v8227 = vld [vmem:[%s18 + $0x28] sm:$0xff]
        %v8228 = vld [vmem:[%s18 + $0x30] sm:$0xff]
        %v8229 = vld [vmem:[%s18 + $0x38] sm:$0xff]
        %v8230 = vld [vmem:[#allocation24] sm:$0x1]
        %v8232 = vlaneseq
        %v8233 = vshrl.u32 %v8232, 7
        %v8234 = vsub.s32 0, %v8233
        %v8235 = vrot.slane %v8230, %v8234
        %vm8237 = vcmask 523264
        %v8239 = vsel %vm8237, %v8206, 0
        %v8242 = vsel %vm8237, %v8207, 0
        %v8245 = vsel %vm8237, %v8208, 0
        %v8248 = vsel %vm8237, %v8209, 0
        %v8251 = vsel %vm8237, %v8210, 0
        %v8254 = vsel %vm8237, %v8211, 0
        %v8257 = vsel %vm8237, %v8212, 0
        %v8260 = vsel %vm8237, %v8213, 0
        %v8263 = vsel %vm8237, %v8214, 0
        %v8266 = vsel %vm8237, %v8215, 0
        %v8269 = vsel %vm8237, %v8216, 0
        %v8272 = vsel %vm8237, %v8217, 0
        %v8275 = vsel %vm8237, %v8218, 0
        %v8278 = vsel %vm8237, %v8219, 0
        %v8281 = vsel %vm8237, %v8220, 0
        %v8284 = vsel %vm8237, %v8221, 0
        %8286 = vmatprep.subr.mxu0 0.0
        %8287 = vmatpush1.msra.mxu0 %v8222
        %8288 = vmatprep.subr.mxu0 0.0
        %8289 = vmatpush1.msra.mxu0 %v8223
        %8290 = vmatprep.subr.mxu0 0.0
        %8291 = vmatpush1.msra.mxu0 %v8224
        %8292 = vmatprep.subr.mxu0 0.0
        %8293 = vmatpush1.msra.mxu0 %v8225
        %8294 = vmatprep.subr.mxu0 0.0
        %8295 = vmatpush1.msra.mxu0 %v8226
        %8296 = vmatprep.subr.mxu0 0.0
        %8297 = vmatpush1.msra.mxu0 %v8227
        %8298 = vmatprep.subr.mxu0 0.0
        %8299 = vmatpush1.msra.mxu0 %v8228
        %8300 = vmatprep.subr.mxu0 0.0
        %8301 = vmatpush1.msra.mxu0 %v8229
        %8302 = vmatprep.subr.mxu0 0.0
        %8303 = vmatpush1.msra.mxu0 0.0
        %8304 = vmatprep.subr.mxu0 0.0
        %8305 = vmatpush1.msra.mxu0 0.0
        %8306 = vmatprep.subr.mxu0 0.0
        %8307 = vmatpush1.msra.mxu0 0.0
        %8308 = vmatprep.subr.mxu0 0.0
        %8309 = vmatpush1.msra.mxu0 0.0
        %8310 = vmatprep.subr.mxu0 0.0
        %8311 = vmatpush1.msra.mxu0 0.0
        %8312 = vmatprep.subr.mxu0 0.0
        %8313 = vmatpush1.msra.mxu0 0.0
        %8314 = vmatprep.subr.mxu0 0.0
        %8315 = vmatpush1.msra.mxu0 0.0
        %8316 = vmatprep.subr.mxu0 0.0
        %8317 = vmatpush1.msra.mxu0 0.0
        %8318 = vmatprep.subr.mxu0 0.0
        %8319 = vmatpush1.msra.mxu0 0.0
        %8320 = vmatprep.subr.mxu0 0.0
        %8321 = vmatpush1.msra.mxu0 0.0
        %8322 = vmatprep.subr.mxu0 0.0
        %8323 = vmatpush1.msra.mxu0 0.0
        %8324 = vmatprep.subr.mxu0 0.0
        %8325 = vmatpush1.msra.mxu0 0.0
        %8326 = vmatprep.subr.mxu0 0.0
        %8327 = vmatpush1.msra.mxu0 0.0
        %8328 = vmatprep.subr.mxu0 0.0
        %8329 = vmatpush1.msra.mxu0 0.0
        %8330 = vmatprep.subr.mxu0 0.0
        %8331 = vmatpush1.msra.mxu0 0.0
        %8332 = vmatprep.subr.mxu0 0.0
        %8333 = vmatpush1.msra.mxu0 0.0
        %8334 = vmatprep.subr.mxu0 0.0
        %8335 = vmatpush1.msra.mxu0 0.0
        %8336 = vmatprep.subr.mxu0 0.0
        %8337 = vmatpush1.msra.mxu0 0.0
        %8338 = vmatprep.subr.mxu0 0.0
        %8339 = vmatpush1.msra.mxu0 0.0
        %8340 = vmatprep.subr.mxu0 0.0
        %8341 = vmatpush1.msra.mxu0 0.0
        %8342 = vmatprep.subr.mxu0 0.0
        %8343 = vmatpush1.msra.mxu0 0.0
        %8344 = vmatprep.subr.mxu0 0.0
        %8345 = vmatpush1.msra.mxu0 0.0
        %8346 = vmatprep.subr.mxu0 0.0
        %8347 = vmatpush1.msra.mxu0 0.0
        %8348 = vmatprep.subr.mxu0 0.0
        %8349 = vmatpush1.msra.mxu0 0.0
        %8350 = vmatprep.mubr.f32.mxu0 0.0
        %8351 = vmatmul.mubr.f32.gmra.mrb[0].mxu0 %v8239
        %v8352 = vpop.f32.mrb[0].mxu0
        %v8353 = vadd.f32 %v8235, %v8352
        %v8354 = vpop.f32.mrb[0].mxu0
        %8355 = vmatprep.mubr.f32.mxu0 0.0
        %8356 = vmatmul.mubr.f32.gmra.mrb[0].mxu0 %v8242
        %v8357 = vpop.f32.mrb[0].mxu0
        %v8358 = vadd.f32 %v8235, %v8357
        %v8359 = vpop.f32.mrb[0].mxu0
        %8360 = vmatprep.mubr.f32.mxu0 0.0
        %8361 = vmatmul.mubr.f32.gmra.mrb[0].mxu0 %v8245
        %v8362 = vpop.f32.mrb[0].mxu0
        %v8363 = vadd.f32 %v8235, %v8362
        %v8364 = vpop.f32.mrb[0].mxu0
        %8365 = vmatprep.mubr.f32.mxu0 0.0
        %8366 = vmatmul.mubr.f32.gmra.mrb[0].mxu0 %v8248
        %v8367 = vpop.f32.mrb[0].mxu0
        %v8368 = vadd.f32 %v8235, %v8367
        %v8369 = vpop.f32.mrb[0].mxu0
        %8370 = vmatprep.mubr.f32.mxu0 0.0
        %8371 = vmatmul.mubr.f32.gmra.mrb[0].mxu0 %v8251
        %v8372 = vpop.f32.mrb[0].mxu0
        %v8373 = vadd.f32 %v8235, %v8372
        %v8374 = vpop.f32.mrb[0].mxu0
        %8375 = vmatprep.mubr.f32.mxu0 0.0
        %8376 = vmatmul.mubr.f32.gmra.mrb[0].mxu0 %v8254
        %v8377 = vpop.f32.mrb[0].mxu0
        %v8378 = vadd.f32 %v8235, %v8377
        %v8379 = vpop.f32.mrb[0].mxu0
        %8380 = vmatprep.mubr.f32.mxu0 0.0
        %8381 = vmatmul.mubr.f32.gmra.mrb[0].mxu0 %v8257
        %v8382 = vpop.f32.mrb[0].mxu0
        %v8383 = vadd.f32 %v8235, %v8382
        %v8384 = vpop.f32.mrb[0].mxu0
        %8385 = vmatprep.mubr.f32.mxu0 0.0
        %8386 = vmatmul.mubr.f32.gmra.mrb[0].mxu0 %v8260
        %v8387 = vpop.f32.mrb[0].mxu0
        %v8388 = vadd.f32 %v8235, %v8387
        %v8389 = vpop.f32.mrb[0].mxu0
        %8390 = vmatprep.mubr.f32.mxu0 0.0
        %8391 = vmatmul.mubr.f32.gmra.mrb[0].mxu0 %v8263
        %v8392 = vpop.f32.mrb[0].mxu0
        %v8393 = vadd.f32 %v8235, %v8392
        %v8394 = vpop.f32.mrb[0].mxu0
        %8395 = vmatprep.mubr.f32.mxu0 0.0
        %8396 = vmatmul.mubr.f32.gmra.mrb[0].mxu0 %v8266
        %v8397 = vpop.f32.mrb[0].mxu0
        %v8398 = vadd.f32 %v8235, %v8397
        %v8399 = vpop.f32.mrb[0].mxu0
        %8400 = vmatprep.mubr.f32.mxu0 0.0
        %8401 = vmatmul.mubr.f32.gmra.mrb[0].mxu0 %v8269
        %v8402 = vpop.f32.mrb[0].mxu0
        %v8403 = vadd.f32 %v8235, %v8402
        %v8404 = vpop.f32.mrb[0].mxu0
        %8405 = vmatprep.mubr.f32.mxu0 0.0
        %8406 = vmatmul.mubr.f32.gmra.mrb[0].mxu0 %v8272
        %v8407 = vpop.f32.mrb[0].mxu0
        %v8408 = vadd.f32 %v8235, %v8407
        %v8409 = vpop.f32.mrb[0].mxu0
        %8410 = vmatprep.mubr.f32.mxu0 0.0
        %8411 = vmatmul.mubr.f32.gmra.mrb[0].mxu0 %v8275
        %v8412 = vpop.f32.mrb[0].mxu0
        %v8413 = vadd.f32 %v8235, %v8412
        %v8414 = vpop.f32.mrb[0].mxu0
        %8415 = vmatprep.mubr.f32.mxu0 0.0
        %8416 = vmatmul.mubr.f32.gmra.mrb[0].mxu0 %v8278
        %v8417 = vpop.f32.mrb[0].mxu0
        %v8418 = vadd.f32 %v8235, %v8417
        %v8419 = vpop.f32.mrb[0].mxu0
        %8420 = vmatprep.mubr.f32.mxu0 0.0
        %8421 = vmatmul.mubr.f32.gmra.mrb[0].mxu0 %v8281
        %v8422 = vpop.f32.mrb[0].mxu0
        %v8423 = vadd.f32 %v8235, %v8422
        %v8424 = vpop.f32.mrb[0].mxu0
        %8425 = vmatprep.mubr.f32.mxu0 0.0
        %8426 = vmatmul.mubr.f32.gmra.mrb[0].mxu0 %v8284
        %v8427 = vpop.f32.mrb[0].mxu0
        %v8428 = vadd.f32 %v8235, %v8427
        %v8429 = vpop.f32.mrb[0].mxu0
        %8430 = vdwg.mxu0
        %8431 = vst.msk [vmem:[%s888] sm:$0xff] %vm928, %v8353
        %8432 = vst.msk [vmem:[%s888 + $0x8] sm:$0xff] %vm928, %v8358
        %8433 = vst.msk [vmem:[%s888 + $0x10] sm:$0xff] %vm928, %v8363
        %8434 = vst.msk [vmem:[%s888 + $0x18] sm:$0xff] %vm928, %v8368
        %8435 = vst.msk [vmem:[%s888 + $0x20] sm:$0xff] %vm928, %v8373
        %8436 = vst.msk [vmem:[%s888 + $0x28] sm:$0xff] %vm928, %v8378
        %8437 = vst.msk [vmem:[%s888 + $0x30] sm:$0xff] %vm928, %v8383
        %8438 = vst.msk [vmem:[%s888 + $0x38] sm:$0xff] %vm928, %v8388
        %8439 = vst.msk [vmem:[%s888 + $0x40] sm:$0xff] %vm928, %v8393
        %8440 = vst.msk [vmem:[%s888 + $0x48] sm:$0xff] %vm928, %v8398
        %8441 = vst.msk [vmem:[%s888 + $0x50] sm:$0xff] %vm928, %v8403
        %8442 = vst.msk [vmem:[%s888 + $0x58] sm:$0xff] %vm928, %v8408
        %8443 = vst.msk [vmem:[%s888 + $0x60] sm:$0xff] %vm928, %v8413
        %8444 = vst.msk [vmem:[%s888 + $0x68] sm:$0xff] %vm928, %v8418
        %8445 = vst.msk [vmem:[%s888 + $0x70] sm:$0xff] %vm928, %v8423
        %8446 = vst.msk [vmem:[%s888 + $0x78] sm:$0xff] %vm928, %v8428
        %s8447 = smul.u32 16, %s41
        %p8448 = scmp.lt.s32.totalorder %s8447, 31
        %s8449 = scalar_select %p8448, %s8447, 31
        %s8450 = smul.addr %s8449, 8
        %s8451 = scalar_lea.vmem %s20, %s8450
        %s8452 = smul.u32 16, %s41
        %p8453 = scmp.lt.s32.totalorder %s8452, 31
        %s8454 = scalar_select %p8453, %s8452, 31
        %s8455 = smul.addr %s8454, 8
        %s8456 = scalar_lea.vmem %s21, %s8455
        // Predicated region
        $region161: #{tpu_custom_call.1} parent=99 // pred_check
          %p8457 = pneg %p489
        $region162: #{tpu_custom_call.1} parent=99 // pred_check_branch
          %8459 = sbr.rel (%p8457) target = $region164
        $region163: #{tpu_custom_call.1} parent=99 // pred_region
          %s8460 = smul.u32 16, %s41
        $region164: #{tpu_custom_call.1} parent=99 // pred_fallthru
          _
        // Predicated region
        $region165: #{tpu_custom_call.1} parent=99 // pred_check
          %p8461 = pneg %p515
        $region166: #{tpu_custom_call.1} parent=99 // pred_check_branch
          %8463 = sbr.rel (%p8461) target = $region168
        $region167: #{tpu_custom_call.1} parent=99 // pred_region
          %s8464 = smul.u32 16, %s41
        $region168: #{tpu_custom_call.1} parent=99 // pred_fallthru
          _
      $region100: #{tpu_custom_call.1} parent=5 // pred_fallthru
        _
      %p8465 = scmp.le.s32.totalorder 2, %s36
      // Predicated region
      $region169: #{tpu_custom_call.1} parent=5 // pred_check
        %p8466 = pneg %p8465
      $region170: #{tpu_custom_call.1} parent=5 // pred_check_branch
        %8468 = sbr.rel (%p8466) target = $region172
      $region171: #{tpu_custom_call.1} parent=5 // pred_region
        %s8469 = ssub.s32 %s36, 2
        // Predicated region
        $region173: #{tpu_custom_call.1} parent=171 // pred_check
          %p8470 = pneg %p495
        $region174: #{tpu_custom_call.1} parent=171 // pred_check_branch
          %8472 = sbr.rel (%p8470) target = $region176
        $region175: #{tpu_custom_call.1} parent=171 // pred_region
          %s8473 = smul.u32 16, %s42
          %p8474 = scmp.lt.s32.totalorder %s8473, 31
          %s8475 = scalar_select %p8474, %s8473, 31
          %s8476 = smul.addr %s8475, 8
          %s8477 = scalar_lea.vmem %s20, %s8476
        $region176: #{tpu_custom_call.1} parent=171 // pred_fallthru
          _
        // Predicated region
        $region177: #{tpu_custom_call.1} parent=171 // pred_check
          %p8478 = pneg %p521
        $region178: #{tpu_custom_call.1} parent=171 // pred_check_branch
          %8480 = sbr.rel (%p8478) target = $region180
        $region179: #{tpu_custom_call.1} parent=171 // pred_region
          %s8481 = smul.u32 16, %s42
          %p8482 = scmp.lt.s32.totalorder %s8481, 31
          %s8483 = scalar_select %p8482, %s8481, 31
          %s8484 = smul.addr %s8483, 8
          %s8485 = scalar_lea.vmem %s21, %s8484
        $region180: #{tpu_custom_call.1} parent=171 // pred_fallthru
          _
      $region172: #{tpu_custom_call.1} parent=5 // pred_fallthru
        _
    $region6: #{tpu_custom_call.1} parent=1 // loop_footer
      %s40 = sadd.s32 1, %s36
    $region7: #{tpu_custom_call.1} parent=1 // loop_footer_branch
      %35 = sbr.rel target = $region3
    $region8: #{tpu_custom_call.1} parent=1 // loop_exit
      _
    %8486 = vsyncpa [#allocation3], 1
    %s8487 = scalar_lea.sflag [#allocation3], 1
    %8488 = vsyncpa %s8487, 1
    %8489 = vsyncpa [#allocation5], 1
    %8490 = vsyncpa [#allocation8], 1
    %8491 = vsyncpa [#allocation11], 1
    %8492 = vsyncpa [#allocation14], 1
    %8493 = vsyncpa [#allocation17], 1
    %8494 = vsyncpa [#allocation20], 1
    %8495 = vsyncpa [#allocation23], 1

</llo_original>
